<compile_context>
chip_gen: v5e
topology: v5e:2x2
jax: 0.10.0
libtpu: 0.0.40
codegen_flags: <defaults>
</compile_context>

<pallas_src>
import jax
import jax.numpy as jnp
from jax.experimental import pallas as pl
from jax.experimental.pallas import tpu as pltpu

LEAKY_SLOPE = 0.01      # F.leaky_relu default negative_slope
FEAT = 512              # per-backbone feature size (ResNet18 final feature dim)


def _leaky_relu(x):
    return jnp.where(x > 0, x, LEAKY_SLOPE * x)


def _round_up(x, m):
    return ((x + m - 1) // m) * m


def critic_kernel(img_ref, depth_ref, mpt_ref, ga_ref,
                  wr_ref, wd_ref, wm_ref, w1_ref, b1_ref,
                  w2r_ref, w2d_ref, w2m_ref, w2s_ref, b2_ref,
                  out_ref):
    """One batch tile of the fused forward pass.

    final = lrelu(rgb_f) @ w2[0:512]    + lrelu(dep_f) @ w2[512:1024]
          + lrelu(mpt_f) @ w2[1024:1536] + lrelu(lrelu(lin1)) @ w2[1536:3072]
          + b2
    """

    def branch(x_ref, wbig_ref, w2_ref_):
        # GAP fused into the projection: x(TB, C*HW) @ Wbig(C*HW, 512).
        # Cast native-dtype pixels to bf16 at the MXU operand only.
        x = x_ref[...].astype(jnp.bfloat16)
        feat = jnp.dot(x, wbig_ref[...],
                       preferred_element_type=jnp.float32)          # (TB, 512) f32
        act = _leaky_relu(feat).astype(jnp.bfloat16)                 # outer lrelu(cat)
        return jnp.dot(act, w2_ref_[...],
                       preferred_element_type=jnp.float32)           # (TB, OUT_PAD)

    acc = branch(img_ref, wr_ref, w2r_ref)
    acc += branch(depth_ref, wd_ref, w2d_ref)
    acc += branch(mpt_ref, wm_ref, w2m_ref)

    # Scalar branch: lin1 over 3 inputs as VPU broadcast FMAs (no MXU push for
    # K=3), goal/angle packed in lanes 0..2 of one (TB, 128) operand.
    w1 = w1_ref[...]                                                  # (3, 1536) f32
    ga = ga_ref[...]                                                  # (TB, 128) f32
    s_pre = (ga[:, 0:1] * w1[0:1, :]
             + ga[:, 1:2] * w1[1:2, :]
             + ga[:, 2:3] * w1[2:3, :]
             + b1_ref[...])                                           # (TB, 1536)
    # lrelu(lrelu(x)) fused: x>0 -> x, else slope^2 * x  (do NOT "simplify"
    # to a single lrelu -- the reference applies lrelu twice on this branch).
    scal = jnp.where(s_pre > 0, s_pre, (LEAKY_SLOPE * LEAKY_SLOPE) * s_pre)

    acc += jnp.dot(scal.astype(jnp.bfloat16), w2s_ref[...],
                   preferred_element_type=jnp.float32)

    out_ref[...] = acc + b2_ref[...]


def _hw_budgets():
    """Returns (vmem_limit_bytes, image_tile_budget_bytes, tb_cap, force_two_tiles)."""
    try:
        vmem_cap = int(pltpu.get_tpu_info().vmem_capacity_bytes)
    except Exception:
        vmem_cap = 64 * 1024 * 1024          # conservative (v7x-class) fallback
    if vmem_cap >= 128 * 1024 * 1024:        # v5e / v6e: 128 MiB VMEM
        return 100 * 1024 * 1024, 88 * 1024 * 1024, 256, False
    # v7x-class (64 MiB per TensorCore): smaller tiles, leave compiler headroom,
    # force grid >= 2 so the parallel batch axis shards across the 2 TCs.
    return 48 * 1024 * 1024, 28 * 1024 * 1024, 128, True


def init_params(key, in_channels, out_dim):
    """Deterministic synthetic parameters (PyTorch-Linear-style uniform init)."""
    ks = jax.random.split(key, 7)

    def unif(k, shape, fan_in):
        bound = 1.0 / jnp.sqrt(jnp.float32(fan_in))
        return jax.random.uniform(k, shape, jnp.float32, -bound, bound)

    return {
        # stand-in backbone projections (C -> 512) for rgb / depth / mpt
        "wr": unif(ks[0], (in_channels, FEAT), in_channels),
        "wd": unif(ks[1], (in_channels, FEAT), in_channels),
        "wm": unif(ks[2], (in_channels, FEAT), in_channels),
        # lin1: nn.Linear(3, 1536)  (stored as (in, out))
        "w1": unif(ks[3], (3, 3 * FEAT), 3),
        "b1": unif(ks[4], (1, 3 * FEAT), 3),
        # lin2: nn.Linear(3072, out_dim)
        "w2": unif(ks[5], (6 * FEAT, out_dim), 6 * FEAT),
        "b2": unif(ks[6], (1, out_dim), 6 * FEAT),
    }


def critic_net(img, depth, mpt, local_goal_point, angle, params):
    B, C, H, W = img.shape
    HW = H * W
    CHW = C * HW
    out_dim = params["w2"].shape[1]
    OUT_PAD = _round_up(out_dim, 128)            # lane-dense output

    # --- glue: 2-D image layout, NATIVE dtype (no wrapper cast, no batch pad).
    img2 = img.reshape(B, CHW)
    dep2 = depth.reshape(B, CHW)
    mpt2 = mpt.reshape(B, CHW)

    goal_f = local_goal_point.astype(jnp.float32).reshape(-1, 2)
    angle_f = angle.astype(jnp.float32).reshape(-1, 1)
    # goal/angle merged into one lane-padded (B, 128) operand: lanes 0-1 = goal,
    # lane 2 = angle.
    ga = jnp.zeros((B, 128), jnp.float32)
    ga = ga.at[:, 0:2].set(goal_f).at[:, 2:3].set(angle_f)

    # --- weights: GAP fused into the projection, lin2 pre-split across the
    # concat boundaries, lane-padded, bf16 MXU operands (f32 accumulation).
    def big_proj(wproj):
        # Wbig[c*HW + p, f] = wproj[c, f] / HW   (row-major flatten of (C, HW))
        return jnp.repeat(wproj / HW, HW, axis=0).astype(jnp.bfloat16)

    wr_big = big_proj(params["wr"])
    wd_big = big_proj(params["wd"])
    wm_big = big_proj(params["wm"])

    def pad_lane(x):
        return jnp.pad(x, ((0, 0), (0, OUT_PAD - out_dim)))

    w2 = params["w2"]
    w2r = pad_lane(w2[0 * FEAT:1 * FEAT]).astype(jnp.bfloat16)
    w2d = pad_lane(w2[1 * FEAT:2 * FEAT]).astype(jnp.bfloat16)
    w2m = pad_lane(w2[2 * FEAT:3 * FEAT]).astype(jnp.bfloat16)
    w2s = pad_lane(w2[3 * FEAT:6 * FEAT]).astype(jnp.bfloat16)
    b2p = pad_lane(params["b2"])                               # f32
    w1, b1 = params["w1"], params["b1"]                        # f32 (VPU branch)

    # --- batch tiling: generation-specific budgets; no image padding.
    vmem_limit, tile_budget, tb_hw_cap, force_two = _hw_budgets()
    img_bytes = img2.dtype.itemsize
    weight_bytes = ((3 * CHW * FEAT + 6 * FEAT * OUT_PAD) * 2      # bf16 weights
                    + 4 * (3 * FEAT) * 4 + OUT_PAD * 4)            # w1/b1/b2 f32
    # double-buffered per-batch-row traffic (3 images + scalar + output)
    row_bytes = 3 * 2 * CHW * img_bytes + 2 * (128 + OUT_PAD) * 4
    avail = max(tile_budget - weight_bytes, 8 * row_bytes)
    tb_cap = max(8, (avail // row_bytes) // 8 * 8)

    B8 = _round_up(B, 8)
    if B <= 8:
        TB = B                               # block equals full batch dim
    else:
        TB = max(8, min(B8, tb_hw_cap, tb_cap))
        if force_two and B8 >= 16:           # v7x: use both TensorCores
            TB = min(TB, _round_up(pl.cdiv(B8, 2), 8))
    grid = (pl.cdiv(B, TB),)

    # --- advisory cost estimate for XLA scheduling around the custom call
    flops = 2 * B * (3 * CHW * FEAT + 6 * FEAT * OUT_PAD) + 8 * B * 3 * FEAT
    bytes_accessed = (3 * B * CHW * img_bytes + B * 128 * 4 + B * OUT_PAD * 4
                      + weight_bytes)
    cost = pl.CostEstimate(flops=flops, transcendentals=0,
                           bytes_accessed=bytes_accessed)

    out = pl.pallas_call(
        critic_kernel,
        out_shape=jax.ShapeDtypeStruct((B, OUT_PAD), jnp.float32),
        grid=grid,
        in_specs=[
            pl.BlockSpec((TB, CHW), lambda i: (i, 0)),            # img (native dtype)
            pl.BlockSpec((TB, CHW), lambda i: (i, 0)),            # depth
            pl.BlockSpec((TB, CHW), lambda i: (i, 0)),            # mpt
            pl.BlockSpec((TB, 128), lambda i: (i, 0)),            # goal|angle
            pl.BlockSpec((CHW, FEAT), lambda i: (0, 0)),          # Wbig rgb
            pl.BlockSpec((CHW, FEAT), lambda i: (0, 0)),          # Wbig depth
            pl.BlockSpec((CHW, FEAT), lambda i: (0, 0)),          # Wbig mpt
            pl.BlockSpec((3, 3 * FEAT), lambda i: (0, 0)),        # w1
            pl.BlockSpec((1, 3 * FEAT), lambda i: (0, 0)),        # b1
            pl.BlockSpec((FEAT, OUT_PAD), lambda i: (0, 0)),      # w2 rows 0:512
            pl.BlockSpec((FEAT, OUT_PAD), lambda i: (0, 0)),      # w2 rows 512:1024
            pl.BlockSpec((FEAT, OUT_PAD), lambda i: (0, 0)),      # w2 rows 1024:1536
            pl.BlockSpec((3 * FEAT, OUT_PAD), lambda i: (0, 0)),  # w2 rows 1536:3072
            pl.BlockSpec((1, OUT_PAD), lambda i: (0, 0)),         # b2
        ],
        out_specs=pl.BlockSpec((TB, OUT_PAD), lambda i: (i, 0)),
        compiler_params=pltpu.CompilerParams(
            dimension_semantics=("parallel",),      # batch tiles are independent
            vmem_limit_bytes=vmem_limit,
        ),
        cost_estimate=cost,
    )(img2, dep2, mpt2, ga,
      wr_big, wd_big, wm_big, w1, b1, w2r, w2d, w2m, w2s, b2p)

    return out[:, :out_dim]


def critic_net_ref(img, depth, mpt, goal, angle, params):
    """Pure-JAX f32 reference (same stand-in backbones) for correctness check."""
    B = img.shape[0]

    def backbone(x, w):
        pooled = jnp.mean(x.reshape(B, x.shape[1], -1).astype(jnp.float32), -1)
        return pooled @ w

    fuse = jnp.concatenate([backbone(img, params["wr"]),
                            backbone(depth, params["wd"]),
                            backbone(mpt, params["wm"])], axis=1)
    scal = jnp.concatenate([goal.astype(jnp.float32).reshape(-1, 2),
                            angle.astype(jnp.float32).reshape(-1, 1)], axis=1)
    s = _leaky_relu(scal @ params["w1"] + params["b1"])
    cat = _leaky_relu(jnp.concatenate([fuse, s], axis=1))
    return cat @ params["w2"] + params["b2"]


if __name__ == "__main__":
    key = jax.random.PRNGKey(0)
    B, C, H, W = 2, 4, 16, 16
    OUT_DIM = 1

    k_img, k_dep, k_mpt, k_goal, k_ang, k_par = jax.random.split(key, 6)
    img = jax.random.normal(k_img, (B, C, H, W), jnp.float32)
    depth = jax.random.normal(k_dep, (B, C, H, W), jnp.float32)
    mpt = jax.random.normal(k_mpt, (B, C, H, W), jnp.float32)
    local_goal_point = jax.random.normal(k_goal, (B, 2), jnp.float32)
    angle = jax.random.normal(k_ang, (B,), jnp.float32)

    params = init_params(k_par, C, OUT_DIM)

    out = critic_net(img, depth, mpt, local_goal_point, angle, params)
    out = jax.block_until_ready(out)

    ref = critic_net_ref(img, depth, mpt, local_goal_point, angle, params)
    assert out.shape == (B, OUT_DIM), out.shape
    # bf16 MXU operands -> relaxed tolerance vs the pure-f32 reference
    assert jnp.allclose(out, ref, atol=2e-2, rtol=2e-2), (out, ref)

    print("KERNEL_OK")
</pallas_src>

<mosaic_0001>
module attributes {stable_mosaic.version = 11 : i64} {
  func.func @critic_kernel(%arg0: i32, %arg1: memref<2x1024xf32, #tpu.memory_space<vmem>>, %arg2: memref<2x1024xf32, #tpu.memory_space<vmem>>, %arg3: memref<2x1024xf32, #tpu.memory_space<vmem>>, %arg4: memref<2x128xf32, #tpu.memory_space<vmem>>, %arg5: memref<1024x512xbf16, #tpu.memory_space<vmem>>, %arg6: memref<1024x512xbf16, #tpu.memory_space<vmem>>, %arg7: memref<1024x512xbf16, #tpu.memory_space<vmem>>, %arg8: memref<3x1536xf32, #tpu.memory_space<vmem>>, %arg9: memref<1x1536xf32, #tpu.memory_space<vmem>>, %arg10: memref<512x128xbf16, #tpu.memory_space<vmem>>, %arg11: memref<512x128xbf16, #tpu.memory_space<vmem>>, %arg12: memref<512x128xbf16, #tpu.memory_space<vmem>>, %arg13: memref<1536x128xbf16, #tpu.memory_space<vmem>>, %arg14: memref<1x128xf32, #tpu.memory_space<vmem>>, %arg15: memref<2x128xf32, #tpu.memory_space<vmem>>) attributes {dimension_semantics = [#tpu.dimension_semantics<parallel>], iteration_bounds = array<i64: 1>, scalar_prefetch = 0 : i64, scratch_operands = 0 : i64, tpu.core_type = #tpu.core_type<tc>, window_params = [{transform_indices = @transform_0, window_bounds = array<i64: 2, 1024>}, {transform_indices = @transform_1, window_bounds = array<i64: 2, 1024>}, {transform_indices = @transform_2, window_bounds = array<i64: 2, 1024>}, {transform_indices = @transform_3, window_bounds = array<i64: 2, 128>}, {pipeline_mode = #tpu.pipeline_mode<synchronous>, transform_indices = @transform_4, window_bounds = array<i64: 1024, 512>}, {pipeline_mode = #tpu.pipeline_mode<synchronous>, transform_indices = @transform_5, window_bounds = array<i64: 1024, 512>}, {pipeline_mode = #tpu.pipeline_mode<synchronous>, transform_indices = @transform_6, window_bounds = array<i64: 1024, 512>}, {pipeline_mode = #tpu.pipeline_mode<synchronous>, transform_indices = @transform_7, window_bounds = array<i64: 3, 1536>}, {pipeline_mode = #tpu.pipeline_mode<synchronous>, transform_indices = @transform_8, window_bounds = array<i64: 1, 1536>}, {pipeline_mode = #tpu.pipeline_mode<synchronous>, transform_indices = @transform_9, window_bounds = array<i64: 512, 128>}, {pipeline_mode = #tpu.pipeline_mode<synchronous>, transform_indices = @transform_10, window_bounds = array<i64: 512, 128>}, {pipeline_mode = #tpu.pipeline_mode<synchronous>, transform_indices = @transform_11, window_bounds = array<i64: 512, 128>}, {pipeline_mode = #tpu.pipeline_mode<synchronous>, transform_indices = @transform_12, window_bounds = array<i64: 1536, 128>}, {pipeline_mode = #tpu.pipeline_mode<synchronous>, transform_indices = @transform_13, window_bounds = array<i64: 1, 128>}, {transform_indices = @transform_14, window_bounds = array<i64: 2, 128>}]} {
    %c0 = arith.constant 0 : index
    %c0_0 = arith.constant 0 : index
    %0 = vector.load %arg1[%c0, %c0_0] : memref<2x1024xf32, #tpu.memory_space<vmem>>, vector<2x1024xf32>
    %1 = arith.truncf %0 : vector<2x1024xf32> to vector<2x1024xbf16>
    %c0_1 = arith.constant 0 : index
    %c0_2 = arith.constant 0 : index
    %2 = vector.load %arg5[%c0_1, %c0_2] : memref<1024x512xbf16, #tpu.memory_space<vmem>>, vector<1024x512xbf16>
    %cst = arith.constant dense<0.000000e+00> : vector<2x512xf32>
    %3 = tpu.matmul %1, %2, %cst {dimension_numbers = #tpu.dot_dimension_numbers<[1], [0], [0], [1], [0, 0, 1, 1], [], []>} : vector<2x1024xbf16>, vector<1024x512xbf16>, vector<2x512xf32> -> vector<2x512xf32>
    %cst_3 = arith.constant 0.000000e+00 : f32
    %4 = vector.broadcast %cst_3 : f32 to vector<2x512xf32>
    %5 = arith.cmpf ogt, %3, %4 : vector<2x512xf32>
    %cst_4 = arith.constant 0.00999999977 : f32
    %6 = vector.broadcast %cst_4 : f32 to vector<2x512xf32>
    %7 = arith.mulf %6, %3 : vector<2x512xf32>
    %8 = arith.select %5, %3, %7 : vector<2x512xi1>, vector<2x512xf32>
    %9 = arith.truncf %8 : vector<2x512xf32> to vector<2x512xbf16>
    %c0_5 = arith.constant 0 : index
    %c0_6 = arith.constant 0 : index
    %10 = vector.load %arg10[%c0_5, %c0_6] : memref<512x128xbf16, #tpu.memory_space<vmem>>, vector<512x128xbf16>
    %cst_7 = arith.constant dense<0.000000e+00> : vector<2x128xf32>
    %11 = tpu.matmul %9, %10, %cst_7 {dimension_numbers = #tpu.dot_dimension_numbers<[1], [0], [0], [1], [0, 0, 1, 1], [], []>} : vector<2x512xbf16>, vector<512x128xbf16>, vector<2x128xf32> -> vector<2x128xf32>
    %c0_8 = arith.constant 0 : index
    %c0_9 = arith.constant 0 : index
    %12 = vector.load %arg2[%c0_8, %c0_9] : memref<2x1024xf32, #tpu.memory_space<vmem>>, vector<2x1024xf32>
    %13 = arith.truncf %12 : vector<2x1024xf32> to vector<2x1024xbf16>
    %c0_10 = arith.constant 0 : index
    %c0_11 = arith.constant 0 : index
    %14 = vector.load %arg6[%c0_10, %c0_11] : memref<1024x512xbf16, #tpu.memory_space<vmem>>, vector<1024x512xbf16>
    %cst_12 = arith.constant dense<0.000000e+00> : vector<2x512xf32>
    %15 = tpu.matmul %13, %14, %cst_12 {dimension_numbers = #tpu.dot_dimension_numbers<[1], [0], [0], [1], [0, 0, 1, 1], [], []>} : vector<2x1024xbf16>, vector<1024x512xbf16>, vector<2x512xf32> -> vector<2x512xf32>
    %cst_13 = arith.constant 0.000000e+00 : f32
    %16 = vector.broadcast %cst_13 : f32 to vector<2x512xf32>
    %17 = arith.cmpf ogt, %15, %16 : vector<2x512xf32>
    %cst_14 = arith.constant 0.00999999977 : f32
    %18 = vector.broadcast %cst_14 : f32 to vector<2x512xf32>
    %19 = arith.mulf %18, %15 : vector<2x512xf32>
    %20 = arith.select %17, %15, %19 : vector<2x512xi1>, vector<2x512xf32>
    %21 = arith.truncf %20 : vector<2x512xf32> to vector<2x512xbf16>
    %c0_15 = arith.constant 0 : index
    %c0_16 = arith.constant 0 : index
    %22 = vector.load %arg11[%c0_15, %c0_16] : memref<512x128xbf16, #tpu.memory_space<vmem>>, vector<512x128xbf16>
    %cst_17 = arith.constant dense<0.000000e+00> : vector<2x128xf32>
    %23 = tpu.matmul %21, %22, %cst_17 {dimension_numbers = #tpu.dot_dimension_numbers<[1], [0], [0], [1], [0, 0, 1, 1], [], []>} : vector<2x512xbf16>, vector<512x128xbf16>, vector<2x128xf32> -> vector<2x128xf32>
    %24 = arith.addf %11, %23 : vector<2x128xf32>
    %c0_18 = arith.constant 0 : index
    %c0_19 = arith.constant 0 : index
    %25 = vector.load %arg3[%c0_18, %c0_19] : memref<2x1024xf32, #tpu.memory_space<vmem>>, vector<2x1024xf32>
    %26 = arith.truncf %25 : vector<2x1024xf32> to vector<2x1024xbf16>
    %c0_20 = arith.constant 0 : index
    %c0_21 = arith.constant 0 : index
    %27 = vector.load %arg7[%c0_20, %c0_21] : memref<1024x512xbf16, #tpu.memory_space<vmem>>, vector<1024x512xbf16>
    %cst_22 = arith.constant dense<0.000000e+00> : vector<2x512xf32>
    %28 = tpu.matmul %26, %27, %cst_22 {dimension_numbers = #tpu.dot_dimension_numbers<[1], [0], [0], [1], [0, 0, 1, 1], [], []>} : vector<2x1024xbf16>, vector<1024x512xbf16>, vector<2x512xf32> -> vector<2x512xf32>
    %cst_23 = arith.constant 0.000000e+00 : f32
    %29 = vector.broadcast %cst_23 : f32 to vector<2x512xf32>
    %30 = arith.cmpf ogt, %28, %29 : vector<2x512xf32>
    %cst_24 = arith.constant 0.00999999977 : f32
    %31 = vector.broadcast %cst_24 : f32 to vector<2x512xf32>
    %32 = arith.mulf %31, %28 : vector<2x512xf32>
    %33 = arith.select %30, %28, %32 : vector<2x512xi1>, vector<2x512xf32>
    %34 = arith.truncf %33 : vector<2x512xf32> to vector<2x512xbf16>
    %c0_25 = arith.constant 0 : index
    %c0_26 = arith.constant 0 : index
    %35 = vector.load %arg12[%c0_25, %c0_26] : memref<512x128xbf16, #tpu.memory_space<vmem>>, vector<512x128xbf16>
    %cst_27 = arith.constant dense<0.000000e+00> : vector<2x128xf32>
    %36 = tpu.matmul %34, %35, %cst_27 {dimension_numbers = #tpu.dot_dimension_numbers<[1], [0], [0], [1], [0, 0, 1, 1], [], []>} : vector<2x512xbf16>, vector<512x128xbf16>, vector<2x128xf32> -> vector<2x128xf32>
    %37 = arith.addf %24, %36 : vector<2x128xf32>
    %c0_28 = arith.constant 0 : index
    %c0_29 = arith.constant 0 : index
    %38 = vector.load %arg8[%c0_28, %c0_29] : memref<3x1536xf32, #tpu.memory_space<vmem>>, vector<3x1536xf32>
    %c0_30 = arith.constant 0 : index
    %c0_31 = arith.constant 0 : index
    %39 = vector.load %arg4[%c0_30, %c0_31] : memref<2x128xf32, #tpu.memory_space<vmem>>, vector<2x128xf32>
    %40 = vector.extract_strided_slice %39 {offsets = [0, 0], sizes = [2, 1], strides = [1, 1]} : vector<2x128xf32> to vector<2x1xf32>
    %41 = vector.extract_strided_slice %38 {offsets = [0, 0], sizes = [1, 1536], strides = [1, 1]} : vector<3x1536xf32> to vector<1x1536xf32>
    %42 = vector.broadcast %40 : vector<2x1xf32> to vector<2x1536xf32>
    %43 = vector.broadcast %41 : vector<1x1536xf32> to vector<2x1536xf32>
    %44 = arith.mulf %42, %43 : vector<2x1536xf32>
    %45 = vector.extract_strided_slice %39 {offsets = [0, 1], sizes = [2, 1], strides = [1, 1]} : vector<2x128xf32> to vector<2x1xf32>
    %46 = vector.extract_strided_slice %38 {offsets = [1, 0], sizes = [1, 1536], strides = [1, 1]} : vector<3x1536xf32> to vector<1x1536xf32>
    %47 = vector.broadcast %45 : vector<2x1xf32> to vector<2x1536xf32>
    %48 = vector.broadcast %46 : vector<1x1536xf32> to vector<2x1536xf32>
    %49 = arith.mulf %47, %48 : vector<2x1536xf32>
    %50 = arith.addf %44, %49 : vector<2x1536xf32>
    %51 = vector.extract_strided_slice %39 {offsets = [0, 2], sizes = [2, 1], strides = [1, 1]} : vector<2x128xf32> to vector<2x1xf32>
    %52 = vector.extract_strided_slice %38 {offsets = [2, 0], sizes = [1, 1536], strides = [1, 1]} : vector<3x1536xf32> to vector<1x1536xf32>
    %53 = vector.broadcast %51 : vector<2x1xf32> to vector<2x1536xf32>
    %54 = vector.broadcast %52 : vector<1x1536xf32> to vector<2x1536xf32>
    %55 = arith.mulf %53, %54 : vector<2x1536xf32>
    %56 = arith.addf %50, %55 : vector<2x1536xf32>
    %c0_32 = arith.constant 0 : index
    %c0_33 = arith.constant 0 : index
    %57 = vector.load %arg9[%c0_32, %c0_33] : memref<1x1536xf32, #tpu.memory_space<vmem>>, vector<1x1536xf32>
    %58 = vector.broadcast %57 : vector<1x1536xf32> to vector<2x1536xf32>
    %59 = arith.addf %56, %58 : vector<2x1536xf32>
    %cst_34 = arith.constant 0.000000e+00 : f32
    %60 = vector.broadcast %cst_34 : f32 to vector<2x1536xf32>
    %61 = arith.cmpf ogt, %59, %60 : vector<2x1536xf32>
    %cst_35 = arith.constant 9.99999974E-5 : f32
    %62 = vector.broadcast %cst_35 : f32 to vector<2x1536xf32>
    %63 = arith.mulf %62, %59 : vector<2x1536xf32>
    %64 = arith.select %61, %59, %63 : vector<2x1536xi1>, vector<2x1536xf32>
    %65 = arith.truncf %64 : vector<2x1536xf32> to vector<2x1536xbf16>
    %c0_36 = arith.constant 0 : index
    %c0_37 = arith.constant 0 : index
    %66 = vector.load %arg13[%c0_36, %c0_37] : memref<1536x128xbf16, #tpu.memory_space<vmem>>, vector<1536x128xbf16>
    %cst_38 = arith.constant dense<0.000000e+00> : vector<2x128xf32>
    %67 = tpu.matmul %65, %66, %cst_38 {dimension_numbers = #tpu.dot_dimension_numbers<[1], [0], [0], [1], [0, 0, 1, 1], [], []>} : vector<2x1536xbf16>, vector<1536x128xbf16>, vector<2x128xf32> -> vector<2x128xf32>
    %68 = arith.addf %37, %67 : vector<2x128xf32>
    %c0_39 = arith.constant 0 : index
    %c0_40 = arith.constant 0 : index
    %69 = vector.load %arg14[%c0_39, %c0_40] : memref<1x128xf32, #tpu.memory_space<vmem>>, vector<1x128xf32>
    %70 = vector.broadcast %69 : vector<1x128xf32> to vector<2x128xf32>
    %71 = arith.addf %68, %70 : vector<2x128xf32>
    %c0_41 = arith.constant 0 : index
    %c0_42 = arith.constant 0 : index
    %72 = vector.load %arg15[%c0_41, %c0_42] : memref<2x128xf32, #tpu.memory_space<vmem>>, vector<2x128xf32>
    tpu.vector_store %arg15[%c0_41, %c0_42], %71 {strides = array<i32>} : memref<2x128xf32, #tpu.memory_space<vmem>>, vector<2x128xf32>,
    return
  }
  func.func @transform_0(%arg0: i32) -> (i32, i32) {
    %c0_i32 = arith.constant 0 : i32
    %c0_i32_0 = arith.constant 0 : i32
    return %arg0, %c0_i32 : i32, i32
  }
  func.func @transform_1(%arg0: i32) -> (i32, i32) {
    %c0_i32 = arith.constant 0 : i32
    %c0_i32_0 = arith.constant 0 : i32
    return %arg0, %c0_i32 : i32, i32
  }
  func.func @transform_2(%arg0: i32) -> (i32, i32) {
    %c0_i32 = arith.constant 0 : i32
    %c0_i32_0 = arith.constant 0 : i32
    return %arg0, %c0_i32 : i32, i32
  }
  func.func @transform_3(%arg0: i32) -> (i32, i32) {
    %c0_i32 = arith.constant 0 : i32
    %c0_i32_0 = arith.constant 0 : i32
    return %arg0, %c0_i32 : i32, i32
  }
  func.func @transform_4(%arg0: i32) -> (i32, i32) {
    %c0_i32 = arith.constant 0 : i32
    %c0_i32_0 = arith.constant 0 : i32
    %c0_i32_1 = arith.constant 0 : i32
    return %c0_i32, %c0_i32_0 : i32, i32
  }
  func.func @transform_5(%arg0: i32) -> (i32, i32) {
    %c0_i32 = arith.constant 0 : i32
    %c0_i32_0 = arith.constant 0 : i32
    %c0_i32_1 = arith.constant 0 : i32
    return %c0_i32, %c0_i32_0 : i32, i32
  }
  func.func @transform_6(%arg0: i32) -> (i32, i32) {
    %c0_i32 = arith.constant 0 : i32
    %c0_i32_0 = arith.constant 0 : i32
    %c0_i32_1 = arith.constant 0 : i32
    return %c0_i32, %c0_i32_0 : i32, i32
  }
  func.func @transform_7(%arg0: i32) -> (i32, i32) {
    %c0_i32 = arith.constant 0 : i32
    %c0_i32_0 = arith.constant 0 : i32
    %c0_i32_1 = arith.constant 0 : i32
    return %c0_i32, %c0_i32_0 : i32, i32
  }
  func.func @transform_8(%arg0: i32) -> (i32, i32) {
    %c0_i32 = arith.constant 0 : i32
    %c0_i32_0 = arith.constant 0 : i32
    %c0_i32_1 = arith.constant 0 : i32
    return %c0_i32, %c0_i32_0 : i32, i32
  }
  func.func @transform_9(%arg0: i32) -> (i32, i32) {
    %c0_i32 = arith.constant 0 : i32
    %c0_i32_0 = arith.constant 0 : i32
    %c0_i32_1 = arith.constant 0 : i32
    return %c0_i32, %c0_i32_0 : i32, i32
  }
  func.func @transform_10(%arg0: i32) -> (i32, i32) {
    %c0_i32 = arith.constant 0 : i32
    %c0_i32_0 = arith.constant 0 : i32
    %c0_i32_1 = arith.constant 0 : i32
    return %c0_i32, %c0_i32_0 : i32, i32
  }
  func.func @transform_11(%arg0: i32) -> (i32, i32) {
    %c0_i32 = arith.constant 0 : i32
    %c0_i32_0 = arith.constant 0 : i32
    %c0_i32_1 = arith.constant 0 : i32
    return %c0_i32, %c0_i32_0 : i32, i32
  }
  func.func @transform_12(%arg0: i32) -> (i32, i32) {
    %c0_i32 = arith.constant 0 : i32
    %c0_i32_0 = arith.constant 0 : i32
    %c0_i32_1 = arith.constant 0 : i32
    return %c0_i32, %c0_i32_0 : i32, i32
  }
  func.func @transform_13(%arg0: i32) -> (i32, i32) {
    %c0_i32 = arith.constant 0 : i32
    %c0_i32_0 = arith.constant 0 : i32
    %c0_i32_1 = arith.constant 0 : i32
    return %c0_i32, %c0_i32_0 : i32, i32
  }
  func.func @transform_14(%arg0: i32) -> (i32, i32) {
    %c0_i32 = arith.constant 0 : i32
    %c0_i32_0 = arith.constant 0 : i32
    return %arg0, %c0_i32 : i32, i32
  }
}

</mosaic_0001>

<llo_original>
// kernel: tpu_custom_call.1
$region0: #{tpu_custom_call.1}
  #allocation0 [shape = 'u32[]', space=smem, size = 0x4, offset = 0x4, fixed_abs, tag = 'smem constant byte address 0x4 - core index']
  #allocation1 [shape = 'u32[72,128]{1,0:T(1,128)}', space=vmem, size = 0x9000, scoped, tag = 'internal scratch']
  %s0 = inlined_call_operand.hbm [shape: f32[2,1024], index: 0, kind: input, shape index: {}]
  %s1 = inlined_call_operand.hbm [shape: f32[2,1024], index: 1, kind: input, shape index: {}]
  %s2 = inlined_call_operand.hbm [shape: f32[2,1024], index: 2, kind: input, shape index: {}]
  %s3 = inlined_call_operand.vmem [shape: f32[2,128], index: 3, kind: input, shape index: {}]
  %s4 = inlined_call_operand.hbm [shape: bf16[1024,512], index: 4, kind: input, shape index: {}]
  %s5 = inlined_call_operand.hbm [shape: bf16[1024,512], index: 5, kind: input, shape index: {}]
  %s6 = inlined_call_operand.hbm [shape: bf16[1024,512], index: 6, kind: input, shape index: {}]
  %s7 = inlined_call_operand.hbm [shape: f32[3,1536], index: 7, kind: input, shape index: {}]
  %s8 = inlined_call_operand.hbm [shape: f32[1,1536], index: 8, kind: input, shape index: {}]
  %s9 = inlined_call_operand.hbm [shape: bf16[512,128], index: 9, kind: input, shape index: {}]
  %s10 = inlined_call_operand.hbm [shape: bf16[512,128], index: 10, kind: input, shape index: {}]
  %s11 = inlined_call_operand.hbm [shape: bf16[512,128], index: 11, kind: input, shape index: {}]
  %s12 = inlined_call_operand.hbm [shape: bf16[1536,128], index: 12, kind: input, shape index: {}]
  %s13 = inlined_call_operand.vmem [shape: f32[1,128], index: 13, kind: input, shape index: {}]
  %s14 = inlined_call_operand.hbm [shape: f32[2,128], index: 14, kind: output, shape index: {}]
  %s15 = sld [smem:[#allocation0]]
  $region114: #{tpu_custom_call.1} parent=0
    _
  %s17 = ssub.s32 1, %s15
  %s18 = scalar_select 0, %s17, %s15
  $region1: #{tpu_custom_call.1} parent=0
    #allocation2 [shape = 'u8[8192]{0}', space=vmem, size = 0x2000, scoped, tag = 'input window, operand 0, single buffered']
    #allocation3 [shape = 's32[1]{0}', space=sflag, size = 0x4, scoped, tag = 'scoped memory for tpu_custom_call.1']
    #allocation4 [shape = 's32[1]{0}', space=sflag, size = 0x4, scoped, tag = 'scoped memory for tpu_custom_call.1']
    #allocation5 [shape = 'u8[8192]{0}', space=vmem, size = 0x2000, scoped, tag = 'input window, operand 1, single buffered']
    #allocation6 [shape = 's32[1]{0}', space=sflag, size = 0x4, scoped, tag = 'scoped memory for tpu_custom_call.1']
    #allocation7 [shape = 'u8[8192]{0}', space=vmem, size = 0x2000, scoped, tag = 'input window, operand 2, single buffered']
    #allocation8 [shape = 'u8[1048576]{0}', space=vmem, size = 0x100000, scoped, tag = 'input window, operand 4, single buffered']
    #allocation9 [shape = 's32[1]{0}', space=sflag, size = 0x4, scoped, tag = 'scoped memory for tpu_custom_call.1']
    #allocation10 [shape = 'u8[1048576]{0}', space=vmem, size = 0x100000, scoped, tag = 'input window, operand 5, single buffered']
    #allocation11 [shape = 'u8[1048576]{0}', space=vmem, size = 0x100000, scoped, tag = 'input window, operand 6, single buffered']
    #allocation12 [shape = 's32[1]{0}', space=sflag, size = 0x4, scoped, tag = 'scoped memory for tpu_custom_call.1']
    #allocation13 [shape = 'u8[24576]{0}', space=vmem, size = 0x6000, scoped, tag = 'input window, operand 7, single buffered']
    #allocation14 [shape = 'u8[6144]{0}', space=vmem, size = 0x1800, scoped, tag = 'input window, operand 8, single buffered']
    #allocation15 [shape = 's32[1]{0}', space=sflag, size = 0x4, scoped, tag = 'scoped memory for tpu_custom_call.1']
    #allocation16 [shape = 'u8[131072]{0}', space=vmem, size = 0x20000, scoped, tag = 'input window, operand 9, single buffered']
    #allocation17 [shape = 'u8[131072]{0}', space=vmem, size = 0x20000, scoped, tag = 'input window, operand 10, single buffered']
    #allocation18 [shape = 's32[1]{0}', space=sflag, size = 0x4, scoped, tag = 'scoped memory for tpu_custom_call.1']
    #allocation19 [shape = 'u8[131072]{0}', space=vmem, size = 0x20000, scoped, tag = 'input window, operand 11, single buffered']
    #allocation20 [shape = 'u8[393216]{0}', space=vmem, size = 0x60000, scoped, tag = 'input window, operand 12, single buffered']
    #allocation21 [shape = 's32[1]{0}', space=sflag, size = 0x4, scoped, tag = 'scoped memory for tpu_custom_call.1']
    #allocation22 [shape = 'u8[1024]{0}', space=vmem, size = 0x400, scoped, tag = 'output window, operand 0, single buffered']
    %19 = vsyncpa [#allocation3], 0
    %20 = vsyncpa [#allocation6], 0
    %21 = vsyncpa [#allocation9], 0
    %22 = vsyncpa [#allocation12], 0
    %23 = vsyncpa [#allocation15], 0
    %24 = vsyncpa [#allocation18], 0
    %25 = vsyncpa [#allocation21], 0
    %26 = vsyncpa [#allocation4], 0
    // Predicated region
    $region2: #{tpu_custom_call.1} parent=1 // pred_check
      _
    $region3: #{tpu_custom_call.1} parent=1 // pred_check_branch
      %28 = sbr.rel (0) target = $region5
    $region4: #{tpu_custom_call.1} parent=1 // pred_region
      %30 = vsyncadd [#allocation3], 0
      %s32 = sshll.u32 %s0, 4
      %s33 = int_to_ptr.hbm [resolvable:$true] %s32
      %s34 = sshll.u32 [#allocation2], 4
      %s35 = int_to_ptr.vmem [resolvable:$true] %s34
      %37 = dma.hbm_to_vmem [thread:$0]  %s33, 256, %s35, [#allocation3]
    $region5: #{tpu_custom_call.1} parent=1 // pred_fallthru
      _
    // Predicated region
    $region6: #{tpu_custom_call.1} parent=1 // pred_check
      _
    $region7: #{tpu_custom_call.1} parent=1 // pred_check_branch
      %39 = sbr.rel (0) target = $region9
    $region8: #{tpu_custom_call.1} parent=1 // pred_region
      %41 = vsyncadd [#allocation6], 0
      %s43 = sshll.u32 %s1, 4
      %s44 = int_to_ptr.hbm [resolvable:$true] %s43
      %s45 = sshll.u32 [#allocation5], 4
      %s46 = int_to_ptr.vmem [resolvable:$true] %s45
      %48 = dma.hbm_to_vmem [thread:$0]  %s44, 256, %s46, [#allocation6]
    $region9: #{tpu_custom_call.1} parent=1 // pred_fallthru
      _
    // Predicated region
    $region10: #{tpu_custom_call.1} parent=1 // pred_check
      _
    $region11: #{tpu_custom_call.1} parent=1 // pred_check_branch
      %50 = sbr.rel (0) target = $region13
    $region12: #{tpu_custom_call.1} parent=1 // pred_region
      %52 = vsyncadd [#allocation6], 0
      %s54 = sshll.u32 %s2, 4
      %s55 = int_to_ptr.hbm [resolvable:$true] %s54
      %s56 = sshll.u32 [#allocation7], 4
      %s57 = int_to_ptr.vmem [resolvable:$true] %s56
      %59 = dma.hbm_to_vmem [thread:$0]  %s55, 256, %s57, [#allocation6]
    $region13: #{tpu_custom_call.1} parent=1 // pred_fallthru
      _
    // Predicated region
    $region14: #{tpu_custom_call.1} parent=1 // pred_check
      _
    $region15: #{tpu_custom_call.1} parent=1 // pred_check_branch
      %61 = sbr.rel (0) target = $region17
    $region16: #{tpu_custom_call.1} parent=1 // pred_region
      _
    $region17: #{tpu_custom_call.1} parent=1 // pred_fallthru
      _
    // Predicated region
    $region18: #{tpu_custom_call.1} parent=1 // pred_check
      _
    $region19: #{tpu_custom_call.1} parent=1 // pred_check_branch
      %63 = sbr.rel (0) target = $region21
    $region20: #{tpu_custom_call.1} parent=1 // pred_region
      %65 = vsyncadd [#allocation9], 0
      %s66 = sshll.u32 %s4, 4
      %s67 = int_to_ptr.hbm [resolvable:$true] %s66
      %s68 = sshll.u32 [#allocation8], 4
      %s69 = int_to_ptr.vmem [resolvable:$true] %s68
      %74 = dma.hbm_to_vmem [thread:$0]  %s67, 32768, %s69, [#allocation9], 256, 256, 16
    $region21: #{tpu_custom_call.1} parent=1 // pred_fallthru
      _
    // Predicated region
    $region22: #{tpu_custom_call.1} parent=1 // pred_check
      _
    $region23: #{tpu_custom_call.1} parent=1 // pred_check_branch
      %76 = sbr.rel (0) target = $region25
    $region24: #{tpu_custom_call.1} parent=1 // pred_region
      %78 = vsyncadd [#allocation9], 0
      %s79 = sshll.u32 %s5, 4
      %s80 = int_to_ptr.hbm [resolvable:$true] %s79
      %s81 = sshll.u32 [#allocation10], 4
      %s82 = int_to_ptr.vmem [resolvable:$true] %s81
      %87 = dma.hbm_to_vmem [thread:$0]  %s80, 32768, %s82, [#allocation9], 256, 256, 16
    $region25: #{tpu_custom_call.1} parent=1 // pred_fallthru
      _
    // Predicated region
    $region26: #{tpu_custom_call.1} parent=1 // pred_check
      _
    $region27: #{tpu_custom_call.1} parent=1 // pred_check_branch
      %89 = sbr.rel (0) target = $region29
    $region28: #{tpu_custom_call.1} parent=1 // pred_region
      %91 = vsyncadd [#allocation12], 0
      %s92 = sshll.u32 %s6, 4
      %s93 = int_to_ptr.hbm [resolvable:$true] %s92
      %s94 = sshll.u32 [#allocation11], 4
      %s95 = int_to_ptr.vmem [resolvable:$true] %s94
      %100 = dma.hbm_to_vmem [thread:$0]  %s93, 32768, %s95, [#allocation12], 256, 256, 16
    $region29: #{tpu_custom_call.1} parent=1 // pred_fallthru
      _
    // Predicated region
    $region30: #{tpu_custom_call.1} parent=1 // pred_check
      _
    $region31: #{tpu_custom_call.1} parent=1 // pred_check_branch
      %102 = sbr.rel (0) target = $region33
    $region32: #{tpu_custom_call.1} parent=1 // pred_region
      %104 = vsyncadd [#allocation12], 0
      %s106 = sshll.u32 %s7, 4
      %s107 = int_to_ptr.hbm [resolvable:$true] %s106
      %s108 = sshll.u32 [#allocation13], 4
      %s109 = int_to_ptr.vmem [resolvable:$true] %s108
      %111 = dma.hbm_to_vmem [thread:$0]  %s107, 768, %s109, [#allocation12]
    $region33: #{tpu_custom_call.1} parent=1 // pred_fallthru
      _
    // Predicated region
    $region34: #{tpu_custom_call.1} parent=1 // pred_check
      _
    $region35: #{tpu_custom_call.1} parent=1 // pred_check_branch
      %113 = sbr.rel (0) target = $region37
    $region36: #{tpu_custom_call.1} parent=1 // pred_region
      %115 = vsyncadd [#allocation15], 0
      %s117 = sshll.u32 %s8, 4
      %s118 = int_to_ptr.hbm [resolvable:$true] %s117
      %s119 = sshll.u32 [#allocation14], 4
      %s120 = int_to_ptr.vmem [resolvable:$true] %s119
      %122 = dma.hbm_to_vmem [thread:$0]  %s118, 192, %s120, [#allocation15]
    $region37: #{tpu_custom_call.1} parent=1 // pred_fallthru
      _
    // Predicated region
    $region38: #{tpu_custom_call.1} parent=1 // pred_check
      _
    $region39: #{tpu_custom_call.1} parent=1 // pred_check_branch
      %124 = sbr.rel (0) target = $region41
    $region40: #{tpu_custom_call.1} parent=1 // pred_region
      %126 = vsyncadd [#allocation15], 0
      %s127 = sshll.u32 %s9, 4
      %s128 = int_to_ptr.hbm [resolvable:$true] %s127
      %s129 = sshll.u32 [#allocation16], 4
      %s130 = int_to_ptr.vmem [resolvable:$true] %s129
      %135 = dma.hbm_to_vmem [thread:$0]  %s128, 4096, %s130, [#allocation15], 64, 64, 4
    $region41: #{tpu_custom_call.1} parent=1 // pred_fallthru
      _
    // Predicated region
    $region42: #{tpu_custom_call.1} parent=1 // pred_check
      _
    $region43: #{tpu_custom_call.1} parent=1 // pred_check_branch
      %137 = sbr.rel (0) target = $region45
    $region44: #{tpu_custom_call.1} parent=1 // pred_region
      %139 = vsyncadd [#allocation18], 0
      %s140 = sshll.u32 %s10, 4
      %s141 = int_to_ptr.hbm [resolvable:$true] %s140
      %s142 = sshll.u32 [#allocation17], 4
      %s143 = int_to_ptr.vmem [resolvable:$true] %s142
      %148 = dma.hbm_to_vmem [thread:$0]  %s141, 4096, %s143, [#allocation18], 64, 64, 4
    $region45: #{tpu_custom_call.1} parent=1 // pred_fallthru
      _
    // Predicated region
    $region46: #{tpu_custom_call.1} parent=1 // pred_check
      _
    $region47: #{tpu_custom_call.1} parent=1 // pred_check_branch
      %150 = sbr.rel (0) target = $region49
    $region48: #{tpu_custom_call.1} parent=1 // pred_region
      %152 = vsyncadd [#allocation18], 0
      %s153 = sshll.u32 %s11, 4
      %s154 = int_to_ptr.hbm [resolvable:$true] %s153
      %s155 = sshll.u32 [#allocation19], 4
      %s156 = int_to_ptr.vmem [resolvable:$true] %s155
      %161 = dma.hbm_to_vmem [thread:$0]  %s154, 4096, %s156, [#allocation18], 64, 64, 4
    $region49: #{tpu_custom_call.1} parent=1 // pred_fallthru
      _
    // Predicated region
    $region50: #{tpu_custom_call.1} parent=1 // pred_check
      _
    $region51: #{tpu_custom_call.1} parent=1 // pred_check_branch
      %163 = sbr.rel (0) target = $region53
    $region52: #{tpu_custom_call.1} parent=1 // pred_region
      %165 = vsyncadd [#allocation21], 0
      %s166 = sshll.u32 %s12, 4
      %s167 = int_to_ptr.hbm [resolvable:$true] %s166
      %s168 = sshll.u32 [#allocation20], 4
      %s169 = int_to_ptr.vmem [resolvable:$true] %s168
      %174 = dma.hbm_to_vmem [thread:$0]  %s167, 12288, %s169, [#allocation21], 64, 64, 4
    $region53: #{tpu_custom_call.1} parent=1 // pred_fallthru
      _
    // Predicated region
    $region54: #{tpu_custom_call.1} parent=1 // pred_check
      _
    $region55: #{tpu_custom_call.1} parent=1 // pred_check_branch
      %176 = sbr.rel (0) target = $region57
    $region56: #{tpu_custom_call.1} parent=1 // pred_region
      _
    $region57: #{tpu_custom_call.1} parent=1 // pred_fallthru
      _
    // Predicated region
    $region58: #{tpu_custom_call.1} parent=1 // pred_check
      _
    $region59: #{tpu_custom_call.1} parent=1 // pred_check_branch
      %178 = sbr.rel (0) target = $region61
    $region60: #{tpu_custom_call.1} parent=1 // pred_region
      %180 = dma.done [#allocation3], 256
    $region61: #{tpu_custom_call.1} parent=1 // pred_fallthru
      _
    // Predicated region
    $region62: #{tpu_custom_call.1} parent=1 // pred_check
      _
    $region63: #{tpu_custom_call.1} parent=1 // pred_check_branch
      %182 = sbr.rel (0) target = $region65
    $region64: #{tpu_custom_call.1} parent=1 // pred_region
      %184 = dma.done [#allocation6], 256
    $region65: #{tpu_custom_call.1} parent=1 // pred_fallthru
      _
    // Predicated region
    $region66: #{tpu_custom_call.1} parent=1 // pred_check
      _
    $region67: #{tpu_custom_call.1} parent=1 // pred_check_branch
      %186 = sbr.rel (0) target = $region69
    $region68: #{tpu_custom_call.1} parent=1 // pred_region
      %188 = dma.done [#allocation6], 256
    $region69: #{tpu_custom_call.1} parent=1 // pred_fallthru
      _
    // Predicated region
    $region70: #{tpu_custom_call.1} parent=1 // pred_check
      _
    $region71: #{tpu_custom_call.1} parent=1 // pred_check_branch
      %190 = sbr.rel (0) target = $region73
    $region72: #{tpu_custom_call.1} parent=1 // pred_region
      %192 = dma.done [#allocation9], 32768
    $region73: #{tpu_custom_call.1} parent=1 // pred_fallthru
      _
    // Predicated region
    $region74: #{tpu_custom_call.1} parent=1 // pred_check
      _
    $region75: #{tpu_custom_call.1} parent=1 // pred_check_branch
      %194 = sbr.rel (0) target = $region77
    $region76: #{tpu_custom_call.1} parent=1 // pred_region
      %196 = dma.done [#allocation9], 32768
    $region77: #{tpu_custom_call.1} parent=1 // pred_fallthru
      _
    // Predicated region
    $region78: #{tpu_custom_call.1} parent=1 // pred_check
      _
    $region79: #{tpu_custom_call.1} parent=1 // pred_check_branch
      %198 = sbr.rel (0) target = $region81
    $region80: #{tpu_custom_call.1} parent=1 // pred_region
      %200 = dma.done [#allocation12], 32768
    $region81: #{tpu_custom_call.1} parent=1 // pred_fallthru
      _
    // Predicated region
    $region82: #{tpu_custom_call.1} parent=1 // pred_check
      _
    $region83: #{tpu_custom_call.1} parent=1 // pred_check_branch
      %202 = sbr.rel (0) target = $region85
    $region84: #{tpu_custom_call.1} parent=1 // pred_region
      %204 = dma.done [#allocation12], 768
    $region85: #{tpu_custom_call.1} parent=1 // pred_fallthru
      _
    // Predicated region
    $region86: #{tpu_custom_call.1} parent=1 // pred_check
      _
    $region87: #{tpu_custom_call.1} parent=1 // pred_check_branch
      %206 = sbr.rel (0) target = $region89
    $region88: #{tpu_custom_call.1} parent=1 // pred_region
      %208 = dma.done [#allocation15], 192
    $region89: #{tpu_custom_call.1} parent=1 // pred_fallthru
      _
    // Predicated region
    $region90: #{tpu_custom_call.1} parent=1 // pred_check
      _
    $region91: #{tpu_custom_call.1} parent=1 // pred_check_branch
      %210 = sbr.rel (0) target = $region93
    $region92: #{tpu_custom_call.1} parent=1 // pred_region
      %212 = dma.done [#allocation15], 4096
    $region93: #{tpu_custom_call.1} parent=1 // pred_fallthru
      _
    // Predicated region
    $region94: #{tpu_custom_call.1} parent=1 // pred_check
      _
    $region95: #{tpu_custom_call.1} parent=1 // pred_check_branch
      %214 = sbr.rel (0) target = $region97
    $region96: #{tpu_custom_call.1} parent=1 // pred_region
      %216 = dma.done [#allocation18], 4096
    $region97: #{tpu_custom_call.1} parent=1 // pred_fallthru
      _
    // Predicated region
    $region98: #{tpu_custom_call.1} parent=1 // pred_check
      _
    $region99: #{tpu_custom_call.1} parent=1 // pred_check_branch
      %218 = sbr.rel (0) target = $region101
    $region100: #{tpu_custom_call.1} parent=1 // pred_region
      %220 = dma.done [#allocation18], 4096
    $region101: #{tpu_custom_call.1} parent=1 // pred_fallthru
      _
    // Predicated region
    $region102: #{tpu_custom_call.1} parent=1 // pred_check
      _
    $region103: #{tpu_custom_call.1} parent=1 // pred_check_branch
      %222 = sbr.rel (0) target = $region105
    $region104: #{tpu_custom_call.1} parent=1 // pred_region
      %224 = dma.done [#allocation21], 12288
    $region105: #{tpu_custom_call.1} parent=1 // pred_fallthru
      _
    %v225 = vld [vmem:[#allocation2] sm:$0xff]
    %v226 = vld [vmem:[#allocation2 + $0x8] sm:$0xff]
    %229 = vst [vmem:[#allocation1] ss:$4 sm:$0xff] %v225
    %s230 = scalar_lea.vmem [#allocation1], 32
    %231 = vst [vmem:[%s230] ss:$4 sm:$0xff] %v226
    %v232 = vld.sshfl [vmem:[#allocation1] sm:$0xff pattern:$0x73625140]
    %v233 = vld.sshfl [vmem:[#allocation1 + $0x8] sm:$0xff pattern:$0x73625140]
    %v234 = vld.sshfl [vmem:[#allocation1 + $0x10] sm:$0xff pattern:$0x73625140]
    %v235 = vld.sshfl [vmem:[#allocation1 + $0x18] sm:$0xff pattern:$0x73625140]
    %v236 = vld.sshfl [vmem:[#allocation1 + $0x20] sm:$0xff pattern:$0x73625140]
    %v237 = vld.sshfl [vmem:[#allocation1 + $0x28] sm:$0xff pattern:$0x73625140]
    %v238 = vld.sshfl [vmem:[#allocation1 + $0x30] sm:$0xff pattern:$0x73625140]
    %v239 = vld.sshfl [vmem:[#allocation1 + $0x38] sm:$0xff pattern:$0x73625140]
    %v248 = vpack.c.bf16 %v232, %v232
    %v249 = vpack.c.bf16 %v233, %v233
    %v250 = vpack.c.bf16 %v234, %v234
    %v251 = vpack.c.bf16 %v235, %v235
    %v252 = vpack.c.bf16 %v236, %v236
    %v253 = vpack.c.bf16 %v237, %v237
    %v254 = vpack.c.bf16 %v238, %v238
    %v255 = vpack.c.bf16 %v239, %v239
    %v256 = vld [vmem:[#allocation8] sm:$0xff]
    %v257 = vld [vmem:[#allocation8 + $0x8] sm:$0xff]
    %v258 = vld [vmem:[#allocation8 + $0x10] sm:$0xff]
    %v259 = vld [vmem:[#allocation8 + $0x18] sm:$0xff]
    %v260 = vld [vmem:[#allocation8 + $0x20] sm:$0xff]
    %v261 = vld [vmem:[#allocation8 + $0x28] sm:$0xff]
    %v262 = vld [vmem:[#allocation8 + $0x30] sm:$0xff]
    %v263 = vld [vmem:[#allocation8 + $0x38] sm:$0xff]
    %v264 = vld [vmem:[#allocation8 + $0x40] sm:$0xff]
    %v265 = vld [vmem:[#allocation8 + $0x48] sm:$0xff]
    %v266 = vld [vmem:[#allocation8 + $0x50] sm:$0xff]
    %v267 = vld [vmem:[#allocation8 + $0x58] sm:$0xff]
    %v268 = vld [vmem:[#allocation8 + $0x60] sm:$0xff]
    %v269 = vld [vmem:[#allocation8 + $0x68] sm:$0xff]
    %v270 = vld [vmem:[#allocation8 + $0x70] sm:$0xff]
    %v271 = vld [vmem:[#allocation8 + $0x78] sm:$0xff]
    %v272 = vld [vmem:[#allocation8 + $0x80] sm:$0xff]
    %v273 = vld [vmem:[#allocation8 + $0x88] sm:$0xff]
    %v274 = vld [vmem:[#allocation8 + $0x90] sm:$0xff]
    %v275 = vld [vmem:[#allocation8 + $0x98] sm:$0xff]
    %v276 = vld [vmem:[#allocation8 + $0xa0] sm:$0xff]
    %v277 = vld [vmem:[#allocation8 + $0xa8] sm:$0xff]
    %v278 = vld [vmem:[#allocation8 + $0xb0] sm:$0xff]
    %v279 = vld [vmem:[#allocation8 + $0xb8] sm:$0xff]
    %v280 = vld [vmem:[#allocation8 + $0xc0] sm:$0xff]
    %v281 = vld [vmem:[#allocation8 + $0xc8] sm:$0xff]
    %v282 = vld [vmem:[#allocation8 + $0xd0] sm:$0xff]
    %v283 = vld [vmem:[#allocation8 + $0xd8] sm:$0xff]
    %v284 = vld [vmem:[#allocation8 + $0xe0] sm:$0xff]
    %v285 = vld [vmem:[#allocation8 + $0xe8] sm:$0xff]
    %v286 = vld [vmem:[#allocation8 + $0xf0] sm:$0xff]
    %v287 = vld [vmem:[#allocation8 + $0xf8] sm:$0xff]
    %v288 = vld [vmem:[#allocation8 + $0x100] sm:$0xff]
    %v289 = vld [vmem:[#allocation8 + $0x108] sm:$0xff]
    %v290 = vld [vmem:[#allocation8 + $0x110] sm:$0xff]
    %v291 = vld [vmem:[#allocation8 + $0x118] sm:$0xff]
    %v292 = vld [vmem:[#allocation8 + $0x120] sm:$0xff]
    %v293 = vld [vmem:[#allocation8 + $0x128] sm:$0xff]
    %v294 = vld [vmem:[#allocation8 + $0x130] sm:$0xff]
    %v295 = vld [vmem:[#allocation8 + $0x138] sm:$0xff]
    %v296 = vld [vmem:[#allocation8 + $0x140] sm:$0xff]
    %v297 = vld [vmem:[#allocation8 + $0x148] sm:$0xff]
    %v298 = vld [vmem:[#allocation8 + $0x150] sm:$0xff]
    %v299 = vld [vmem:[#allocation8 + $0x158] sm:$0xff]
    %v300 = vld [vmem:[#allocation8 + $0x160] sm:$0xff]
    %v301 = vld [vmem:[#allocation8 + $0x168] sm:$0xff]
    %v302 = vld [vmem:[#allocation8 + $0x170] sm:$0xff]
    %v303 = vld [vmem:[#allocation8 + $0x178] sm:$0xff]
    %v304 = vld [vmem:[#allocation8 + $0x180] sm:$0xff]
    %v305 = vld [vmem:[#allocation8 + $0x188] sm:$0xff]
    %v306 = vld [vmem:[#allocation8 + $0x190] sm:$0xff]
    %v307 = vld [vmem:[#allocation8 + $0x198] sm:$0xff]
    %v308 = vld [vmem:[#allocation8 + $0x1a0] sm:$0xff]
    %v309 = vld [vmem:[#allocation8 + $0x1a8] sm:$0xff]
    %v310 = vld [vmem:[#allocation8 + $0x1b0] sm:$0xff]
    %v311 = vld [vmem:[#allocation8 + $0x1b8] sm:$0xff]
    %v312 = vld [vmem:[#allocation8 + $0x1c0] sm:$0xff]
    %v313 = vld [vmem:[#allocation8 + $0x1c8] sm:$0xff]
    %v314 = vld [vmem:[#allocation8 + $0x1d0] sm:$0xff]
    %v315 = vld [vmem:[#allocation8 + $0x1d8] sm:$0xff]
    %v316 = vld [vmem:[#allocation8 + $0x1e0] sm:$0xff]
    %v317 = vld [vmem:[#allocation8 + $0x1e8] sm:$0xff]
    %v318 = vld [vmem:[#allocation8 + $0x1f0] sm:$0xff]
    %v319 = vld [vmem:[#allocation8 + $0x1f8] sm:$0xff]
    %v320 = vld [vmem:[#allocation8 + $0x200] sm:$0xff]
    %v321 = vld [vmem:[#allocation8 + $0x208] sm:$0xff]
    %v322 = vld [vmem:[#allocation8 + $0x210] sm:$0xff]
    %v323 = vld [vmem:[#allocation8 + $0x218] sm:$0xff]
    %v324 = vld [vmem:[#allocation8 + $0x220] sm:$0xff]
    %v325 = vld [vmem:[#allocation8 + $0x228] sm:$0xff]
    %v326 = vld [vmem:[#allocation8 + $0x230] sm:$0xff]
    %v327 = vld [vmem:[#allocation8 + $0x238] sm:$0xff]
    %v328 = vld [vmem:[#allocation8 + $0x240] sm:$0xff]
    %v329 = vld [vmem:[#allocation8 + $0x248] sm:$0xff]
    %v330 = vld [vmem:[#allocation8 + $0x250] sm:$0xff]
    %v331 = vld [vmem:[#allocation8 + $0x258] sm:$0xff]
    %v332 = vld [vmem:[#allocation8 + $0x260] sm:$0xff]
    %v333 = vld [vmem:[#allocation8 + $0x268] sm:$0xff]
    %v334 = vld [vmem:[#allocation8 + $0x270] sm:$0xff]
    %v335 = vld [vmem:[#allocation8 + $0x278] sm:$0xff]
    %v336 = vld [vmem:[#allocation8 + $0x280] sm:$0xff]
    %v337 = vld [vmem:[#allocation8 + $0x288] sm:$0xff]
    %v338 = vld [vmem:[#allocation8 + $0x290] sm:$0xff]
    %v339 = vld [vmem:[#allocation8 + $0x298] sm:$0xff]
    %v340 = vld [vmem:[#allocation8 + $0x2a0] sm:$0xff]
    %v341 = vld [vmem:[#allocation8 + $0x2a8] sm:$0xff]
    %v342 = vld [vmem:[#allocation8 + $0x2b0] sm:$0xff]
    %v343 = vld [vmem:[#allocation8 + $0x2b8] sm:$0xff]
    %v344 = vld [vmem:[#allocation8 + $0x2c0] sm:$0xff]
    %v345 = vld [vmem:[#allocation8 + $0x2c8] sm:$0xff]
    %v346 = vld [vmem:[#allocation8 + $0x2d0] sm:$0xff]
    %v347 = vld [vmem:[#allocation8 + $0x2d8] sm:$0xff]
    %v348 = vld [vmem:[#allocation8 + $0x2e0] sm:$0xff]
    %v349 = vld [vmem:[#allocation8 + $0x2e8] sm:$0xff]
    %v350 = vld [vmem:[#allocation8 + $0x2f0] sm:$0xff]
    %v351 = vld [vmem:[#allocation8 + $0x2f8] sm:$0xff]
    %v352 = vld [vmem:[#allocation8 + $0x300] sm:$0xff]
    %v353 = vld [vmem:[#allocation8 + $0x308] sm:$0xff]
    %v354 = vld [vmem:[#allocation8 + $0x310] sm:$0xff]
    %v355 = vld [vmem:[#allocation8 + $0x318] sm:$0xff]
    %v356 = vld [vmem:[#allocation8 + $0x320] sm:$0xff]
    %v357 = vld [vmem:[#allocation8 + $0x328] sm:$0xff]
    %v358 = vld [vmem:[#allocation8 + $0x330] sm:$0xff]
    %v359 = vld [vmem:[#allocation8 + $0x338] sm:$0xff]
    %v360 = vld [vmem:[#allocation8 + $0x340] sm:$0xff]
    %v361 = vld [vmem:[#allocation8 + $0x348] sm:$0xff]
    %v362 = vld [vmem:[#allocation8 + $0x350] sm:$0xff]
    %v363 = vld [vmem:[#allocation8 + $0x358] sm:$0xff]
    %v364 = vld [vmem:[#allocation8 + $0x360] sm:$0xff]
    %v365 = vld [vmem:[#allocation8 + $0x368] sm:$0xff]
    %v366 = vld [vmem:[#allocation8 + $0x370] sm:$0xff]
    %v367 = vld [vmem:[#allocation8 + $0x378] sm:$0xff]
    %v368 = vld [vmem:[#allocation8 + $0x380] sm:$0xff]
    %v369 = vld [vmem:[#allocation8 + $0x388] sm:$0xff]
    %v370 = vld [vmem:[#allocation8 + $0x390] sm:$0xff]
    %v371 = vld [vmem:[#allocation8 + $0x398] sm:$0xff]
    %v372 = vld [vmem:[#allocation8 + $0x3a0] sm:$0xff]
    %v373 = vld [vmem:[#allocation8 + $0x3a8] sm:$0xff]
    %v374 = vld [vmem:[#allocation8 + $0x3b0] sm:$0xff]
    %v375 = vld [vmem:[#allocation8 + $0x3b8] sm:$0xff]
    %v376 = vld [vmem:[#allocation8 + $0x3c0] sm:$0xff]
    %v377 = vld [vmem:[#allocation8 + $0x3c8] sm:$0xff]
    %v378 = vld [vmem:[#allocation8 + $0x3d0] sm:$0xff]
    %v379 = vld [vmem:[#allocation8 + $0x3d8] sm:$0xff]
    %v380 = vld [vmem:[#allocation8 + $0x3e0] sm:$0xff]
    %v381 = vld [vmem:[#allocation8 + $0x3e8] sm:$0xff]
    %v382 = vld [vmem:[#allocation8 + $0x3f0] sm:$0xff]
    %v383 = vld [vmem:[#allocation8 + $0x3f8] sm:$0xff]
    %v384 = vld [vmem:[#allocation8 + $0x400] sm:$0xff]
    %v385 = vld [vmem:[#allocation8 + $0x408] sm:$0xff]
    %v386 = vld [vmem:[#allocation8 + $0x410] sm:$0xff]
    %v387 = vld [vmem:[#allocation8 + $0x418] sm:$0xff]
    %v388 = vld [vmem:[#allocation8 + $0x420] sm:$0xff]
    %v389 = vld [vmem:[#allocation8 + $0x428] sm:$0xff]
    %v390 = vld [vmem:[#allocation8 + $0x430] sm:$0xff]
    %v391 = vld [vmem:[#allocation8 + $0x438] sm:$0xff]
    %v392 = vld [vmem:[#allocation8 + $0x440] sm:$0xff]
    %v393 = vld [vmem:[#allocation8 + $0x448] sm:$0xff]
    %v394 = vld [vmem:[#allocation8 + $0x450] sm:$0xff]
    %v395 = vld [vmem:[#allocation8 + $0x458] sm:$0xff]
    %v396 = vld [vmem:[#allocation8 + $0x460] sm:$0xff]
    %v397 = vld [vmem:[#allocation8 + $0x468] sm:$0xff]
    %v398 = vld [vmem:[#allocation8 + $0x470] sm:$0xff]
    %v399 = vld [vmem:[#allocation8 + $0x478] sm:$0xff]
    %v400 = vld [vmem:[#allocation8 + $0x480] sm:$0xff]
    %v401 = vld [vmem:[#allocation8 + $0x488] sm:$0xff]
    %v402 = vld [vmem:[#allocation8 + $0x490] sm:$0xff]
    %v403 = vld [vmem:[#allocation8 + $0x498] sm:$0xff]
    %v404 = vld [vmem:[#allocation8 + $0x4a0] sm:$0xff]
    %v405 = vld [vmem:[#allocation8 + $0x4a8] sm:$0xff]
    %v406 = vld [vmem:[#allocation8 + $0x4b0] sm:$0xff]
    %v407 = vld [vmem:[#allocation8 + $0x4b8] sm:$0xff]
    %v408 = vld [vmem:[#allocation8 + $0x4c0] sm:$0xff]
    %v409 = vld [vmem:[#allocation8 + $0x4c8] sm:$0xff]
    %v410 = vld [vmem:[#allocation8 + $0x4d0] sm:$0xff]
    %v411 = vld [vmem:[#allocation8 + $0x4d8] sm:$0xff]
    %v412 = vld [vmem:[#allocation8 + $0x4e0] sm:$0xff]
    %v413 = vld [vmem:[#allocation8 + $0x4e8] sm:$0xff]
    %v414 = vld [vmem:[#allocation8 + $0x4f0] sm:$0xff]
    %v415 = vld [vmem:[#allocation8 + $0x4f8] sm:$0xff]
    %v416 = vld [vmem:[#allocation8 + $0x500] sm:$0xff]
    %v417 = vld [vmem:[#allocation8 + $0x508] sm:$0xff]
    %v418 = vld [vmem:[#allocation8 + $0x510] sm:$0xff]
    %v419 = vld [vmem:[#allocation8 + $0x518] sm:$0xff]
    %v420 = vld [vmem:[#allocation8 + $0x520] sm:$0xff]
    %v421 = vld [vmem:[#allocation8 + $0x528] sm:$0xff]
    %v422 = vld [vmem:[#allocation8 + $0x530] sm:$0xff]
    %v423 = vld [vmem:[#allocation8 + $0x538] sm:$0xff]
    %v424 = vld [vmem:[#allocation8 + $0x540] sm:$0xff]
    %v425 = vld [vmem:[#allocation8 + $0x548] sm:$0xff]
    %v426 = vld [vmem:[#allocation8 + $0x550] sm:$0xff]
    %v427 = vld [vmem:[#allocation8 + $0x558] sm:$0xff]
    %v428 = vld [vmem:[#allocation8 + $0x560] sm:$0xff]
    %v429 = vld [vmem:[#allocation8 + $0x568] sm:$0xff]
    %v430 = vld [vmem:[#allocation8 + $0x570] sm:$0xff]
    %v431 = vld [vmem:[#allocation8 + $0x578] sm:$0xff]
    %v432 = vld [vmem:[#allocation8 + $0x580] sm:$0xff]
    %v433 = vld [vmem:[#allocation8 + $0x588] sm:$0xff]
    %v434 = vld [vmem:[#allocation8 + $0x590] sm:$0xff]
    %v435 = vld [vmem:[#allocation8 + $0x598] sm:$0xff]
    %v436 = vld [vmem:[#allocation8 + $0x5a0] sm:$0xff]
    %v437 = vld [vmem:[#allocation8 + $0x5a8] sm:$0xff]
    %v438 = vld [vmem:[#allocation8 + $0x5b0] sm:$0xff]
    %v439 = vld [vmem:[#allocation8 + $0x5b8] sm:$0xff]
    %v440 = vld [vmem:[#allocation8 + $0x5c0] sm:$0xff]
    %v441 = vld [vmem:[#allocation8 + $0x5c8] sm:$0xff]
    %v442 = vld [vmem:[#allocation8 + $0x5d0] sm:$0xff]
    %v443 = vld [vmem:[#allocation8 + $0x5d8] sm:$0xff]
    %v444 = vld [vmem:[#allocation8 + $0x5e0] sm:$0xff]
    %v445 = vld [vmem:[#allocation8 + $0x5e8] sm:$0xff]
    %v446 = vld [vmem:[#allocation8 + $0x5f0] sm:$0xff]
    %v447 = vld [vmem:[#allocation8 + $0x5f8] sm:$0xff]
    %v448 = vld [vmem:[#allocation8 + $0x600] sm:$0xff]
    %v449 = vld [vmem:[#allocation8 + $0x608] sm:$0xff]
    %v450 = vld [vmem:[#allocation8 + $0x610] sm:$0xff]
    %v451 = vld [vmem:[#allocation8 + $0x618] sm:$0xff]
    %v452 = vld [vmem:[#allocation8 + $0x620] sm:$0xff]
    %v453 = vld [vmem:[#allocation8 + $0x628] sm:$0xff]
    %v454 = vld [vmem:[#allocation8 + $0x630] sm:$0xff]
    %v455 = vld [vmem:[#allocation8 + $0x638] sm:$0xff]
    %v456 = vld [vmem:[#allocation8 + $0x640] sm:$0xff]
    %v457 = vld [vmem:[#allocation8 + $0x648] sm:$0xff]
    %v458 = vld [vmem:[#allocation8 + $0x650] sm:$0xff]
    %v459 = vld [vmem:[#allocation8 + $0x658] sm:$0xff]
    %v460 = vld [vmem:[#allocation8 + $0x660] sm:$0xff]
    %v461 = vld [vmem:[#allocation8 + $0x668] sm:$0xff]
    %v462 = vld [vmem:[#allocation8 + $0x670] sm:$0xff]
    %v463 = vld [vmem:[#allocation8 + $0x678] sm:$0xff]
    %v464 = vld [vmem:[#allocation8 + $0x680] sm:$0xff]
    %v465 = vld [vmem:[#allocation8 + $0x688] sm:$0xff]
    %v466 = vld [vmem:[#allocation8 + $0x690] sm:$0xff]
    %v467 = vld [vmem:[#allocation8 + $0x698] sm:$0xff]
    %v468 = vld [vmem:[#allocation8 + $0x6a0] sm:$0xff]
    %v469 = vld [vmem:[#allocation8 + $0x6a8] sm:$0xff]
    %v470 = vld [vmem:[#allocation8 + $0x6b0] sm:$0xff]
    %v471 = vld [vmem:[#allocation8 + $0x6b8] sm:$0xff]
    %v472 = vld [vmem:[#allocation8 + $0x6c0] sm:$0xff]
    %v473 = vld [vmem:[#allocation8 + $0x6c8] sm:$0xff]
    %v474 = vld [vmem:[#allocation8 + $0x6d0] sm:$0xff]
    %v475 = vld [vmem:[#allocation8 + $0x6d8] sm:$0xff]
    %v476 = vld [vmem:[#allocation8 + $0x6e0] sm:$0xff]
    %v477 = vld [vmem:[#allocation8 + $0x6e8] sm:$0xff]
    %v478 = vld [vmem:[#allocation8 + $0x6f0] sm:$0xff]
    %v479 = vld [vmem:[#allocation8 + $0x6f8] sm:$0xff]
    %v480 = vld [vmem:[#allocation8 + $0x700] sm:$0xff]
    %v481 = vld [vmem:[#allocation8 + $0x708] sm:$0xff]
    %v482 = vld [vmem:[#allocation8 + $0x710] sm:$0xff]
    %v483 = vld [vmem:[#allocation8 + $0x718] sm:$0xff]
    %v484 = vld [vmem:[#allocation8 + $0x720] sm:$0xff]
    %v485 = vld [vmem:[#allocation8 + $0x728] sm:$0xff]
    %v486 = vld [vmem:[#allocation8 + $0x730] sm:$0xff]
    %v487 = vld [vmem:[#allocation8 + $0x738] sm:$0xff]
    %v488 = vld [vmem:[#allocation8 + $0x740] sm:$0xff]
    %v489 = vld [vmem:[#allocation8 + $0x748] sm:$0xff]
    %v490 = vld [vmem:[#allocation8 + $0x750] sm:$0xff]
    %v491 = vld [vmem:[#allocation8 + $0x758] sm:$0xff]
    %v492 = vld [vmem:[#allocation8 + $0x760] sm:$0xff]
    %v493 = vld [vmem:[#allocation8 + $0x768] sm:$0xff]
    %v494 = vld [vmem:[#allocation8 + $0x770] sm:$0xff]
    %v495 = vld [vmem:[#allocation8 + $0x778] sm:$0xff]
    %v496 = vld [vmem:[#allocation8 + $0x780] sm:$0xff]
    %v497 = vld [vmem:[#allocation8 + $0x788] sm:$0xff]
    %v498 = vld [vmem:[#allocation8 + $0x790] sm:$0xff]
    %v499 = vld [vmem:[#allocation8 + $0x798] sm:$0xff]
    %v500 = vld [vmem:[#allocation8 + $0x7a0] sm:$0xff]
    %v501 = vld [vmem:[#allocation8 + $0x7a8] sm:$0xff]
    %v502 = vld [vmem:[#allocation8 + $0x7b0] sm:$0xff]
    %v503 = vld [vmem:[#allocation8 + $0x7b8] sm:$0xff]
    %v504 = vld [vmem:[#allocation8 + $0x7c0] sm:$0xff]
    %v505 = vld [vmem:[#allocation8 + $0x7c8] sm:$0xff]
    %v506 = vld [vmem:[#allocation8 + $0x7d0] sm:$0xff]
    %v507 = vld [vmem:[#allocation8 + $0x7d8] sm:$0xff]
    %v508 = vld [vmem:[#allocation8 + $0x7e0] sm:$0xff]
    %v509 = vld [vmem:[#allocation8 + $0x7e8] sm:$0xff]
    %v510 = vld [vmem:[#allocation8 + $0x7f0] sm:$0xff]
    %v511 = vld [vmem:[#allocation8 + $0x7f8] sm:$0xff]
    %v768 = vunpack.c.l.b16 %v256
    %v769 = vunpack.c.h.b16 %v256
    %v770 = vunpack.c.l.b16 %v257
    %v771 = vunpack.c.h.b16 %v257
    %v772 = vunpack.c.l.b16 %v258
    %v773 = vunpack.c.h.b16 %v258
    %v774 = vunpack.c.l.b16 %v259
    %v775 = vunpack.c.h.b16 %v259
    %v776 = vunpack.c.l.b16 %v260
    %v777 = vunpack.c.h.b16 %v260
    %v778 = vunpack.c.l.b16 %v261
    %v779 = vunpack.c.h.b16 %v261
    %v780 = vunpack.c.l.b16 %v262
    %v781 = vunpack.c.h.b16 %v262
    %v782 = vunpack.c.l.b16 %v263
    %v783 = vunpack.c.h.b16 %v263
    %v784 = vunpack.c.l.b16 %v264
    %v785 = vunpack.c.h.b16 %v264
    %v786 = vunpack.c.l.b16 %v265
    %v787 = vunpack.c.h.b16 %v265
    %v788 = vunpack.c.l.b16 %v266
    %v789 = vunpack.c.h.b16 %v266
    %v790 = vunpack.c.l.b16 %v267
    %v791 = vunpack.c.h.b16 %v267
    %v792 = vunpack.c.l.b16 %v268
    %v793 = vunpack.c.h.b16 %v268
    %v794 = vunpack.c.l.b16 %v269
    %v795 = vunpack.c.h.b16 %v269
    %v796 = vunpack.c.l.b16 %v270
    %v797 = vunpack.c.h.b16 %v270
    %v798 = vunpack.c.l.b16 %v271
    %v799 = vunpack.c.h.b16 %v271
    %v800 = vunpack.c.l.b16 %v272
    %v801 = vunpack.c.h.b16 %v272
    %v802 = vunpack.c.l.b16 %v273
    %v803 = vunpack.c.h.b16 %v273
    %v804 = vunpack.c.l.b16 %v274
    %v805 = vunpack.c.h.b16 %v274
    %v806 = vunpack.c.l.b16 %v275
    %v807 = vunpack.c.h.b16 %v275
    %v808 = vunpack.c.l.b16 %v276
    %v809 = vunpack.c.h.b16 %v276
    %v810 = vunpack.c.l.b16 %v277
    %v811 = vunpack.c.h.b16 %v277
    %v812 = vunpack.c.l.b16 %v278
    %v813 = vunpack.c.h.b16 %v278
    %v814 = vunpack.c.l.b16 %v279
    %v815 = vunpack.c.h.b16 %v279
    %v816 = vunpack.c.l.b16 %v280
    %v817 = vunpack.c.h.b16 %v280
    %v818 = vunpack.c.l.b16 %v281
    %v819 = vunpack.c.h.b16 %v281
    %v820 = vunpack.c.l.b16 %v282
    %v821 = vunpack.c.h.b16 %v282
    %v822 = vunpack.c.l.b16 %v283
    %v823 = vunpack.c.h.b16 %v283
    %v824 = vunpack.c.l.b16 %v284
    %v825 = vunpack.c.h.b16 %v284
    %v826 = vunpack.c.l.b16 %v285
    %v827 = vunpack.c.h.b16 %v285
    %v828 = vunpack.c.l.b16 %v286
    %v829 = vunpack.c.h.b16 %v286
    %v830 = vunpack.c.l.b16 %v287
    %v831 = vunpack.c.h.b16 %v287
    %v832 = vunpack.c.l.b16 %v288
    %v833 = vunpack.c.h.b16 %v288
    %v834 = vunpack.c.l.b16 %v289
    %v835 = vunpack.c.h.b16 %v289
    %v836 = vunpack.c.l.b16 %v290
    %v837 = vunpack.c.h.b16 %v290
    %v838 = vunpack.c.l.b16 %v291
    %v839 = vunpack.c.h.b16 %v291
    %v840 = vunpack.c.l.b16 %v292
    %v841 = vunpack.c.h.b16 %v292
    %v842 = vunpack.c.l.b16 %v293
    %v843 = vunpack.c.h.b16 %v293
    %v844 = vunpack.c.l.b16 %v294
    %v845 = vunpack.c.h.b16 %v294
    %v846 = vunpack.c.l.b16 %v295
    %v847 = vunpack.c.h.b16 %v295
    %v848 = vunpack.c.l.b16 %v296
    %v849 = vunpack.c.h.b16 %v296
    %v850 = vunpack.c.l.b16 %v297
    %v851 = vunpack.c.h.b16 %v297
    %v852 = vunpack.c.l.b16 %v298
    %v853 = vunpack.c.h.b16 %v298
    %v854 = vunpack.c.l.b16 %v299
    %v855 = vunpack.c.h.b16 %v299
    %v856 = vunpack.c.l.b16 %v300
    %v857 = vunpack.c.h.b16 %v300
    %v858 = vunpack.c.l.b16 %v301
    %v859 = vunpack.c.h.b16 %v301
    %v860 = vunpack.c.l.b16 %v302
    %v861 = vunpack.c.h.b16 %v302
    %v862 = vunpack.c.l.b16 %v303
    %v863 = vunpack.c.h.b16 %v303
    %v864 = vunpack.c.l.b16 %v304
    %v865 = vunpack.c.h.b16 %v304
    %v866 = vunpack.c.l.b16 %v305
    %v867 = vunpack.c.h.b16 %v305
    %v868 = vunpack.c.l.b16 %v306
    %v869 = vunpack.c.h.b16 %v306
    %v870 = vunpack.c.l.b16 %v307
    %v871 = vunpack.c.h.b16 %v307
    %v872 = vunpack.c.l.b16 %v308
    %v873 = vunpack.c.h.b16 %v308
    %v874 = vunpack.c.l.b16 %v309
    %v875 = vunpack.c.h.b16 %v309
    %v876 = vunpack.c.l.b16 %v310
    %v877 = vunpack.c.h.b16 %v310
    %v878 = vunpack.c.l.b16 %v311
    %v879 = vunpack.c.h.b16 %v311
    %v880 = vunpack.c.l.b16 %v312
    %v881 = vunpack.c.h.b16 %v312
    %v882 = vunpack.c.l.b16 %v313
    %v883 = vunpack.c.h.b16 %v313
    %v884 = vunpack.c.l.b16 %v314
    %v885 = vunpack.c.h.b16 %v314
    %v886 = vunpack.c.l.b16 %v315
    %v887 = vunpack.c.h.b16 %v315
    %v888 = vunpack.c.l.b16 %v316
    %v889 = vunpack.c.h.b16 %v316
    %v890 = vunpack.c.l.b16 %v317
    %v891 = vunpack.c.h.b16 %v317
    %v892 = vunpack.c.l.b16 %v318
    %v893 = vunpack.c.h.b16 %v318
    %v894 = vunpack.c.l.b16 %v319
    %v895 = vunpack.c.h.b16 %v319
    %v896 = vunpack.c.l.b16 %v320
    %v897 = vunpack.c.h.b16 %v320
    %v898 = vunpack.c.l.b16 %v321
    %v899 = vunpack.c.h.b16 %v321
    %v900 = vunpack.c.l.b16 %v322
    %v901 = vunpack.c.h.b16 %v322
    %v902 = vunpack.c.l.b16 %v323
    %v903 = vunpack.c.h.b16 %v323
    %v904 = vunpack.c.l.b16 %v324
    %v905 = vunpack.c.h.b16 %v324
    %v906 = vunpack.c.l.b16 %v325
    %v907 = vunpack.c.h.b16 %v325
    %v908 = vunpack.c.l.b16 %v326
    %v909 = vunpack.c.h.b16 %v326
    %v910 = vunpack.c.l.b16 %v327
    %v911 = vunpack.c.h.b16 %v327
    %v912 = vunpack.c.l.b16 %v328
    %v913 = vunpack.c.h.b16 %v328
    %v914 = vunpack.c.l.b16 %v329
    %v915 = vunpack.c.h.b16 %v329
    %v916 = vunpack.c.l.b16 %v330
    %v917 = vunpack.c.h.b16 %v330
    %v918 = vunpack.c.l.b16 %v331
    %v919 = vunpack.c.h.b16 %v331
    %v920 = vunpack.c.l.b16 %v332
    %v921 = vunpack.c.h.b16 %v332
    %v922 = vunpack.c.l.b16 %v333
    %v923 = vunpack.c.h.b16 %v333
    %v924 = vunpack.c.l.b16 %v334
    %v925 = vunpack.c.h.b16 %v334
    %v926 = vunpack.c.l.b16 %v335
    %v927 = vunpack.c.h.b16 %v335
    %v928 = vunpack.c.l.b16 %v336
    %v929 = vunpack.c.h.b16 %v336
    %v930 = vunpack.c.l.b16 %v337
    %v931 = vunpack.c.h.b16 %v337
    %v932 = vunpack.c.l.b16 %v338
    %v933 = vunpack.c.h.b16 %v338
    %v934 = vunpack.c.l.b16 %v339
    %v935 = vunpack.c.h.b16 %v339
    %v936 = vunpack.c.l.b16 %v340
    %v937 = vunpack.c.h.b16 %v340
    %v938 = vunpack.c.l.b16 %v341
    %v939 = vunpack.c.h.b16 %v341
    %v940 = vunpack.c.l.b16 %v342
    %v941 = vunpack.c.h.b16 %v342
    %v942 = vunpack.c.l.b16 %v343
    %v943 = vunpack.c.h.b16 %v343
    %v944 = vunpack.c.l.b16 %v344
    %v945 = vunpack.c.h.b16 %v344
    %v946 = vunpack.c.l.b16 %v345
    %v947 = vunpack.c.h.b16 %v345
    %v948 = vunpack.c.l.b16 %v346
    %v949 = vunpack.c.h.b16 %v346
    %v950 = vunpack.c.l.b16 %v347
    %v951 = vunpack.c.h.b16 %v347
    %v952 = vunpack.c.l.b16 %v348
    %v953 = vunpack.c.h.b16 %v348
    %v954 = vunpack.c.l.b16 %v349
    %v955 = vunpack.c.h.b16 %v349
    %v956 = vunpack.c.l.b16 %v350
    %v957 = vunpack.c.h.b16 %v350
    %v958 = vunpack.c.l.b16 %v351
    %v959 = vunpack.c.h.b16 %v351
    %v960 = vunpack.c.l.b16 %v352
    %v961 = vunpack.c.h.b16 %v352
    %v962 = vunpack.c.l.b16 %v353
    %v963 = vunpack.c.h.b16 %v353
    %v964 = vunpack.c.l.b16 %v354
    %v965 = vunpack.c.h.b16 %v354
    %v966 = vunpack.c.l.b16 %v355
    %v967 = vunpack.c.h.b16 %v355
    %v968 = vunpack.c.l.b16 %v356
    %v969 = vunpack.c.h.b16 %v356
    %v970 = vunpack.c.l.b16 %v357
    %v971 = vunpack.c.h.b16 %v357
    %v972 = vunpack.c.l.b16 %v358
    %v973 = vunpack.c.h.b16 %v358
    %v974 = vunpack.c.l.b16 %v359
    %v975 = vunpack.c.h.b16 %v359
    %v976 = vunpack.c.l.b16 %v360
    %v977 = vunpack.c.h.b16 %v360
    %v978 = vunpack.c.l.b16 %v361
    %v979 = vunpack.c.h.b16 %v361
    %v980 = vunpack.c.l.b16 %v362
    %v981 = vunpack.c.h.b16 %v362
    %v982 = vunpack.c.l.b16 %v363
    %v983 = vunpack.c.h.b16 %v363
    %v984 = vunpack.c.l.b16 %v364
    %v985 = vunpack.c.h.b16 %v364
    %v986 = vunpack.c.l.b16 %v365
    %v987 = vunpack.c.h.b16 %v365
    %v988 = vunpack.c.l.b16 %v366
    %v989 = vunpack.c.h.b16 %v366
    %v990 = vunpack.c.l.b16 %v367
    %v991 = vunpack.c.h.b16 %v367
    %v992 = vunpack.c.l.b16 %v368
    %v993 = vunpack.c.h.b16 %v368
    %v994 = vunpack.c.l.b16 %v369
    %v995 = vunpack.c.h.b16 %v369
    %v996 = vunpack.c.l.b16 %v370
    %v997 = vunpack.c.h.b16 %v370
    %v998 = vunpack.c.l.b16 %v371
    %v999 = vunpack.c.h.b16 %v371
    %v1000 = vunpack.c.l.b16 %v372
    %v1001 = vunpack.c.h.b16 %v372
    %v1002 = vunpack.c.l.b16 %v373
    %v1003 = vunpack.c.h.b16 %v373
    %v1004 = vunpack.c.l.b16 %v374
    %v1005 = vunpack.c.h.b16 %v374
    %v1006 = vunpack.c.l.b16 %v375
    %v1007 = vunpack.c.h.b16 %v375
    %v1008 = vunpack.c.l.b16 %v376
    %v1009 = vunpack.c.h.b16 %v376
    %v1010 = vunpack.c.l.b16 %v377
    %v1011 = vunpack.c.h.b16 %v377
    %v1012 = vunpack.c.l.b16 %v378
    %v1013 = vunpack.c.h.b16 %v378
    %v1014 = vunpack.c.l.b16 %v379
    %v1015 = vunpack.c.h.b16 %v379
    %v1016 = vunpack.c.l.b16 %v380
    %v1017 = vunpack.c.h.b16 %v380
    %v1018 = vunpack.c.l.b16 %v381
    %v1019 = vunpack.c.h.b16 %v381
    %v1020 = vunpack.c.l.b16 %v382
    %v1021 = vunpack.c.h.b16 %v382
    %v1022 = vunpack.c.l.b16 %v383
    %v1023 = vunpack.c.h.b16 %v383
    %v1024 = vunpack.c.l.b16 %v384
    %v1025 = vunpack.c.h.b16 %v384
    %v1026 = vunpack.c.l.b16 %v385
    %v1027 = vunpack.c.h.b16 %v385
    %v1028 = vunpack.c.l.b16 %v386
    %v1029 = vunpack.c.h.b16 %v386
    %v1030 = vunpack.c.l.b16 %v387
    %v1031 = vunpack.c.h.b16 %v387
    %v1032 = vunpack.c.l.b16 %v388
    %v1033 = vunpack.c.h.b16 %v388
    %v1034 = vunpack.c.l.b16 %v389
    %v1035 = vunpack.c.h.b16 %v389
    %v1036 = vunpack.c.l.b16 %v390
    %v1037 = vunpack.c.h.b16 %v390
    %v1038 = vunpack.c.l.b16 %v391
    %v1039 = vunpack.c.h.b16 %v391
    %v1040 = vunpack.c.l.b16 %v392
    %v1041 = vunpack.c.h.b16 %v392
    %v1042 = vunpack.c.l.b16 %v393
    %v1043 = vunpack.c.h.b16 %v393
    %v1044 = vunpack.c.l.b16 %v394
    %v1045 = vunpack.c.h.b16 %v394
    %v1046 = vunpack.c.l.b16 %v395
    %v1047 = vunpack.c.h.b16 %v395
    %v1048 = vunpack.c.l.b16 %v396
    %v1049 = vunpack.c.h.b16 %v396
    %v1050 = vunpack.c.l.b16 %v397
    %v1051 = vunpack.c.h.b16 %v397
    %v1052 = vunpack.c.l.b16 %v398
    %v1053 = vunpack.c.h.b16 %v398
    %v1054 = vunpack.c.l.b16 %v399
    %v1055 = vunpack.c.h.b16 %v399
    %v1056 = vunpack.c.l.b16 %v400
    %v1057 = vunpack.c.h.b16 %v400
    %v1058 = vunpack.c.l.b16 %v401
    %v1059 = vunpack.c.h.b16 %v401
    %v1060 = vunpack.c.l.b16 %v402
    %v1061 = vunpack.c.h.b16 %v402
    %v1062 = vunpack.c.l.b16 %v403
    %v1063 = vunpack.c.h.b16 %v403
    %v1064 = vunpack.c.l.b16 %v404
    %v1065 = vunpack.c.h.b16 %v404
    %v1066 = vunpack.c.l.b16 %v405
    %v1067 = vunpack.c.h.b16 %v405
    %v1068 = vunpack.c.l.b16 %v406
    %v1069 = vunpack.c.h.b16 %v406
    %v1070 = vunpack.c.l.b16 %v407
    %v1071 = vunpack.c.h.b16 %v407
    %v1072 = vunpack.c.l.b16 %v408
    %v1073 = vunpack.c.h.b16 %v408
    %v1074 = vunpack.c.l.b16 %v409
    %v1075 = vunpack.c.h.b16 %v409
    %v1076 = vunpack.c.l.b16 %v410
    %v1077 = vunpack.c.h.b16 %v410
    %v1078 = vunpack.c.l.b16 %v411
    %v1079 = vunpack.c.h.b16 %v411
    %v1080 = vunpack.c.l.b16 %v412
    %v1081 = vunpack.c.h.b16 %v412
    %v1082 = vunpack.c.l.b16 %v413
    %v1083 = vunpack.c.h.b16 %v413
    %v1084 = vunpack.c.l.b16 %v414
    %v1085 = vunpack.c.h.b16 %v414
    %v1086 = vunpack.c.l.b16 %v415
    %v1087 = vunpack.c.h.b16 %v415
    %v1088 = vunpack.c.l.b16 %v416
    %v1089 = vunpack.c.h.b16 %v416
    %v1090 = vunpack.c.l.b16 %v417
    %v1091 = vunpack.c.h.b16 %v417
    %v1092 = vunpack.c.l.b16 %v418
    %v1093 = vunpack.c.h.b16 %v418
    %v1094 = vunpack.c.l.b16 %v419
    %v1095 = vunpack.c.h.b16 %v419
    %v1096 = vunpack.c.l.b16 %v420
    %v1097 = vunpack.c.h.b16 %v420
    %v1098 = vunpack.c.l.b16 %v421
    %v1099 = vunpack.c.h.b16 %v421
    %v1100 = vunpack.c.l.b16 %v422
    %v1101 = vunpack.c.h.b16 %v422
    %v1102 = vunpack.c.l.b16 %v423
    %v1103 = vunpack.c.h.b16 %v423
    %v1104 = vunpack.c.l.b16 %v424
    %v1105 = vunpack.c.h.b16 %v424
    %v1106 = vunpack.c.l.b16 %v425
    %v1107 = vunpack.c.h.b16 %v425
    %v1108 = vunpack.c.l.b16 %v426
    %v1109 = vunpack.c.h.b16 %v426
    %v1110 = vunpack.c.l.b16 %v427
    %v1111 = vunpack.c.h.b16 %v427
    %v1112 = vunpack.c.l.b16 %v428
    %v1113 = vunpack.c.h.b16 %v428
    %v1114 = vunpack.c.l.b16 %v429
    %v1115 = vunpack.c.h.b16 %v429
    %v1116 = vunpack.c.l.b16 %v430
    %v1117 = vunpack.c.h.b16 %v430
    %v1118 = vunpack.c.l.b16 %v431
    %v1119 = vunpack.c.h.b16 %v431
    %v1120 = vunpack.c.l.b16 %v432
    %v1121 = vunpack.c.h.b16 %v432
    %v1122 = vunpack.c.l.b16 %v433
    %v1123 = vunpack.c.h.b16 %v433
    %v1124 = vunpack.c.l.b16 %v434
    %v1125 = vunpack.c.h.b16 %v434
    %v1126 = vunpack.c.l.b16 %v435
    %v1127 = vunpack.c.h.b16 %v435
    %v1128 = vunpack.c.l.b16 %v436
    %v1129 = vunpack.c.h.b16 %v436
    %v1130 = vunpack.c.l.b16 %v437
    %v1131 = vunpack.c.h.b16 %v437
    %v1132 = vunpack.c.l.b16 %v438
    %v1133 = vunpack.c.h.b16 %v438
    %v1134 = vunpack.c.l.b16 %v439
    %v1135 = vunpack.c.h.b16 %v439
    %v1136 = vunpack.c.l.b16 %v440
    %v1137 = vunpack.c.h.b16 %v440
    %v1138 = vunpack.c.l.b16 %v441
    %v1139 = vunpack.c.h.b16 %v441
    %v1140 = vunpack.c.l.b16 %v442
    %v1141 = vunpack.c.h.b16 %v442
    %v1142 = vunpack.c.l.b16 %v443
    %v1143 = vunpack.c.h.b16 %v443
    %v1144 = vunpack.c.l.b16 %v444
    %v1145 = vunpack.c.h.b16 %v444
    %v1146 = vunpack.c.l.b16 %v445
    %v1147 = vunpack.c.h.b16 %v445
    %v1148 = vunpack.c.l.b16 %v446
    %v1149 = vunpack.c.h.b16 %v446
    %v1150 = vunpack.c.l.b16 %v447
    %v1151 = vunpack.c.h.b16 %v447
    %v1152 = vunpack.c.l.b16 %v448
    %v1153 = vunpack.c.h.b16 %v448
    %v1154 = vunpack.c.l.b16 %v449
    %v1155 = vunpack.c.h.b16 %v449
    %v1156 = vunpack.c.l.b16 %v450
    %v1157 = vunpack.c.h.b16 %v450
    %v1158 = vunpack.c.l.b16 %v451
    %v1159 = vunpack.c.h.b16 %v451
    %v1160 = vunpack.c.l.b16 %v452
    %v1161 = vunpack.c.h.b16 %v452
    %v1162 = vunpack.c.l.b16 %v453
    %v1163 = vunpack.c.h.b16 %v453
    %v1164 = vunpack.c.l.b16 %v454
    %v1165 = vunpack.c.h.b16 %v454
    %v1166 = vunpack.c.l.b16 %v455
    %v1167 = vunpack.c.h.b16 %v455
    %v1168 = vunpack.c.l.b16 %v456
    %v1169 = vunpack.c.h.b16 %v456
    %v1170 = vunpack.c.l.b16 %v457
    %v1171 = vunpack.c.h.b16 %v457
    %v1172 = vunpack.c.l.b16 %v458
    %v1173 = vunpack.c.h.b16 %v458
    %v1174 = vunpack.c.l.b16 %v459
    %v1175 = vunpack.c.h.b16 %v459
    %v1176 = vunpack.c.l.b16 %v460
    %v1177 = vunpack.c.h.b16 %v460
    %v1178 = vunpack.c.l.b16 %v461
    %v1179 = vunpack.c.h.b16 %v461
    %v1180 = vunpack.c.l.b16 %v462
    %v1181 = vunpack.c.h.b16 %v462
    %v1182 = vunpack.c.l.b16 %v463
    %v1183 = vunpack.c.h.b16 %v463
    %v1184 = vunpack.c.l.b16 %v464
    %v1185 = vunpack.c.h.b16 %v464
    %v1186 = vunpack.c.l.b16 %v465
    %v1187 = vunpack.c.h.b16 %v465
    %v1188 = vunpack.c.l.b16 %v466
    %v1189 = vunpack.c.h.b16 %v466
    %v1190 = vunpack.c.l.b16 %v467
    %v1191 = vunpack.c.h.b16 %v467
    %v1192 = vunpack.c.l.b16 %v468
    %v1193 = vunpack.c.h.b16 %v468
    %v1194 = vunpack.c.l.b16 %v469
    %v1195 = vunpack.c.h.b16 %v469
    %v1196 = vunpack.c.l.b16 %v470
    %v1197 = vunpack.c.h.b16 %v470
    %v1198 = vunpack.c.l.b16 %v471
    %v1199 = vunpack.c.h.b16 %v471
    %v1200 = vunpack.c.l.b16 %v472
    %v1201 = vunpack.c.h.b16 %v472
    %v1202 = vunpack.c.l.b16 %v473
    %v1203 = vunpack.c.h.b16 %v473
    %v1204 = vunpack.c.l.b16 %v474
    %v1205 = vunpack.c.h.b16 %v474
    %v1206 = vunpack.c.l.b16 %v475
    %v1207 = vunpack.c.h.b16 %v475
    %v1208 = vunpack.c.l.b16 %v476
    %v1209 = vunpack.c.h.b16 %v476
    %v1210 = vunpack.c.l.b16 %v477
    %v1211 = vunpack.c.h.b16 %v477
    %v1212 = vunpack.c.l.b16 %v478
    %v1213 = vunpack.c.h.b16 %v478
    %v1214 = vunpack.c.l.b16 %v479
    %v1215 = vunpack.c.h.b16 %v479
    %v1216 = vunpack.c.l.b16 %v480
    %v1217 = vunpack.c.h.b16 %v480
    %v1218 = vunpack.c.l.b16 %v481
    %v1219 = vunpack.c.h.b16 %v481
    %v1220 = vunpack.c.l.b16 %v482
    %v1221 = vunpack.c.h.b16 %v482
    %v1222 = vunpack.c.l.b16 %v483
    %v1223 = vunpack.c.h.b16 %v483
    %v1224 = vunpack.c.l.b16 %v484
    %v1225 = vunpack.c.h.b16 %v484
    %v1226 = vunpack.c.l.b16 %v485
    %v1227 = vunpack.c.h.b16 %v485
    %v1228 = vunpack.c.l.b16 %v486
    %v1229 = vunpack.c.h.b16 %v486
    %v1230 = vunpack.c.l.b16 %v487
    %v1231 = vunpack.c.h.b16 %v487
    %v1232 = vunpack.c.l.b16 %v488
    %v1233 = vunpack.c.h.b16 %v488
    %v1234 = vunpack.c.l.b16 %v489
    %v1235 = vunpack.c.h.b16 %v489
    %v1236 = vunpack.c.l.b16 %v490
    %v1237 = vunpack.c.h.b16 %v490
    %v1238 = vunpack.c.l.b16 %v491
    %v1239 = vunpack.c.h.b16 %v491
    %v1240 = vunpack.c.l.b16 %v492
    %v1241 = vunpack.c.h.b16 %v492
    %v1242 = vunpack.c.l.b16 %v493
    %v1243 = vunpack.c.h.b16 %v493
    %v1244 = vunpack.c.l.b16 %v494
    %v1245 = vunpack.c.h.b16 %v494
    %v1246 = vunpack.c.l.b16 %v495
    %v1247 = vunpack.c.h.b16 %v495
    %v1248 = vunpack.c.l.b16 %v496
    %v1249 = vunpack.c.h.b16 %v496
    %v1250 = vunpack.c.l.b16 %v497
    %v1251 = vunpack.c.h.b16 %v497
    %v1252 = vunpack.c.l.b16 %v498
    %v1253 = vunpack.c.h.b16 %v498
    %v1254 = vunpack.c.l.b16 %v499
    %v1255 = vunpack.c.h.b16 %v499
    %v1256 = vunpack.c.l.b16 %v500
    %v1257 = vunpack.c.h.b16 %v500
    %v1258 = vunpack.c.l.b16 %v501
    %v1259 = vunpack.c.h.b16 %v501
    %v1260 = vunpack.c.l.b16 %v502
    %v1261 = vunpack.c.h.b16 %v502
    %v1262 = vunpack.c.l.b16 %v503
    %v1263 = vunpack.c.h.b16 %v503
    %v1264 = vunpack.c.l.b16 %v504
    %v1265 = vunpack.c.h.b16 %v504
    %v1266 = vunpack.c.l.b16 %v505
    %v1267 = vunpack.c.h.b16 %v505
    %v1268 = vunpack.c.l.b16 %v506
    %v1269 = vunpack.c.h.b16 %v506
    %v1270 = vunpack.c.l.b16 %v507
    %v1271 = vunpack.c.h.b16 %v507
    %v1272 = vunpack.c.l.b16 %v508
    %v1273 = vunpack.c.h.b16 %v508
    %v1274 = vunpack.c.l.b16 %v509
    %v1275 = vunpack.c.h.b16 %v509
    %v1276 = vunpack.c.l.b16 %v510
    %v1277 = vunpack.c.h.b16 %v510
    %v1278 = vunpack.c.l.b16 %v511
    %v1279 = vunpack.c.h.b16 %v511
    %v1280 = vpack.c.b16 %v772, %v768
    %v1281 = vpack.c.b16 %v773, %v769
    %v1282 = vpack.c.b16 %v774, %v770
    %v1283 = vpack.c.b16 %v775, %v771
    %v1284 = vpack.c.b16 %v780, %v776
    %v1285 = vpack.c.b16 %v781, %v777
    %v1286 = vpack.c.b16 %v782, %v778
    %v1287 = vpack.c.b16 %v783, %v779
    %v1288 = vpack.c.b16 %v788, %v784
    %v1289 = vpack.c.b16 %v789, %v785
    %v1290 = vpack.c.b16 %v790, %v786
    %v1291 = vpack.c.b16 %v791, %v787
    %v1292 = vpack.c.b16 %v796, %v792
    %v1293 = vpack.c.b16 %v797, %v793
    %v1294 = vpack.c.b16 %v798, %v794
    %v1295 = vpack.c.b16 %v799, %v795
    %v1296 = vpack.c.b16 %v804, %v800
    %v1297 = vpack.c.b16 %v805, %v801
    %v1298 = vpack.c.b16 %v806, %v802
    %v1299 = vpack.c.b16 %v807, %v803
    %v1300 = vpack.c.b16 %v812, %v808
    %v1301 = vpack.c.b16 %v813, %v809
    %v1302 = vpack.c.b16 %v814, %v810
    %v1303 = vpack.c.b16 %v815, %v811
    %v1304 = vpack.c.b16 %v820, %v816
    %v1305 = vpack.c.b16 %v821, %v817
    %v1306 = vpack.c.b16 %v822, %v818
    %v1307 = vpack.c.b16 %v823, %v819
    %v1308 = vpack.c.b16 %v828, %v824
    %v1309 = vpack.c.b16 %v829, %v825
    %v1310 = vpack.c.b16 %v830, %v826
    %v1311 = vpack.c.b16 %v831, %v827
    %v1312 = vpack.c.b16 %v836, %v832
    %v1313 = vpack.c.b16 %v837, %v833
    %v1314 = vpack.c.b16 %v838, %v834
    %v1315 = vpack.c.b16 %v839, %v835
    %v1316 = vpack.c.b16 %v844, %v840
    %v1317 = vpack.c.b16 %v845, %v841
    %v1318 = vpack.c.b16 %v846, %v842
    %v1319 = vpack.c.b16 %v847, %v843
    %v1320 = vpack.c.b16 %v852, %v848
    %v1321 = vpack.c.b16 %v853, %v849
    %v1322 = vpack.c.b16 %v854, %v850
    %v1323 = vpack.c.b16 %v855, %v851
    %v1324 = vpack.c.b16 %v860, %v856
    %v1325 = vpack.c.b16 %v861, %v857
    %v1326 = vpack.c.b16 %v862, %v858
    %v1327 = vpack.c.b16 %v863, %v859
    %v1328 = vpack.c.b16 %v868, %v864
    %v1329 = vpack.c.b16 %v869, %v865
    %v1330 = vpack.c.b16 %v870, %v866
    %v1331 = vpack.c.b16 %v871, %v867
    %v1332 = vpack.c.b16 %v876, %v872
    %v1333 = vpack.c.b16 %v877, %v873
    %v1334 = vpack.c.b16 %v878, %v874
    %v1335 = vpack.c.b16 %v879, %v875
    %v1336 = vpack.c.b16 %v884, %v880
    %v1337 = vpack.c.b16 %v885, %v881
    %v1338 = vpack.c.b16 %v886, %v882
    %v1339 = vpack.c.b16 %v887, %v883
    %v1340 = vpack.c.b16 %v892, %v888
    %v1341 = vpack.c.b16 %v893, %v889
    %v1342 = vpack.c.b16 %v894, %v890
    %v1343 = vpack.c.b16 %v895, %v891
    %v1344 = vpack.c.b16 %v900, %v896
    %v1345 = vpack.c.b16 %v901, %v897
    %v1346 = vpack.c.b16 %v902, %v898
    %v1347 = vpack.c.b16 %v903, %v899
    %v1348 = vpack.c.b16 %v908, %v904
    %v1349 = vpack.c.b16 %v909, %v905
    %v1350 = vpack.c.b16 %v910, %v906
    %v1351 = vpack.c.b16 %v911, %v907
    %v1352 = vpack.c.b16 %v916, %v912
    %v1353 = vpack.c.b16 %v917, %v913
    %v1354 = vpack.c.b16 %v918, %v914
    %v1355 = vpack.c.b16 %v919, %v915
    %v1356 = vpack.c.b16 %v924, %v920
    %v1357 = vpack.c.b16 %v925, %v921
    %v1358 = vpack.c.b16 %v926, %v922
    %v1359 = vpack.c.b16 %v927, %v923
    %v1360 = vpack.c.b16 %v932, %v928
    %v1361 = vpack.c.b16 %v933, %v929
    %v1362 = vpack.c.b16 %v934, %v930
    %v1363 = vpack.c.b16 %v935, %v931
    %v1364 = vpack.c.b16 %v940, %v936
    %v1365 = vpack.c.b16 %v941, %v937
    %v1366 = vpack.c.b16 %v942, %v938
    %v1367 = vpack.c.b16 %v943, %v939
    %v1368 = vpack.c.b16 %v948, %v944
    %v1369 = vpack.c.b16 %v949, %v945
    %v1370 = vpack.c.b16 %v950, %v946
    %v1371 = vpack.c.b16 %v951, %v947
    %v1372 = vpack.c.b16 %v956, %v952
    %v1373 = vpack.c.b16 %v957, %v953
    %v1374 = vpack.c.b16 %v958, %v954
    %v1375 = vpack.c.b16 %v959, %v955
    %v1376 = vpack.c.b16 %v964, %v960
    %v1377 = vpack.c.b16 %v965, %v961
    %v1378 = vpack.c.b16 %v966, %v962
    %v1379 = vpack.c.b16 %v967, %v963
    %v1380 = vpack.c.b16 %v972, %v968
    %v1381 = vpack.c.b16 %v973, %v969
    %v1382 = vpack.c.b16 %v974, %v970
    %v1383 = vpack.c.b16 %v975, %v971
    %v1384 = vpack.c.b16 %v980, %v976
    %v1385 = vpack.c.b16 %v981, %v977
    %v1386 = vpack.c.b16 %v982, %v978
    %v1387 = vpack.c.b16 %v983, %v979
    %v1388 = vpack.c.b16 %v988, %v984
    %v1389 = vpack.c.b16 %v989, %v985
    %v1390 = vpack.c.b16 %v990, %v986
    %v1391 = vpack.c.b16 %v991, %v987
    %v1392 = vpack.c.b16 %v996, %v992
    %v1393 = vpack.c.b16 %v997, %v993
    %v1394 = vpack.c.b16 %v998, %v994
    %v1395 = vpack.c.b16 %v999, %v995
    %v1396 = vpack.c.b16 %v1004, %v1000
    %v1397 = vpack.c.b16 %v1005, %v1001
    %v1398 = vpack.c.b16 %v1006, %v1002
    %v1399 = vpack.c.b16 %v1007, %v1003
    %v1400 = vpack.c.b16 %v1012, %v1008
    %v1401 = vpack.c.b16 %v1013, %v1009
    %v1402 = vpack.c.b16 %v1014, %v1010
    %v1403 = vpack.c.b16 %v1015, %v1011
    %v1404 = vpack.c.b16 %v1020, %v1016
    %v1405 = vpack.c.b16 %v1021, %v1017
    %v1406 = vpack.c.b16 %v1022, %v1018
    %v1407 = vpack.c.b16 %v1023, %v1019
    %v1408 = vpack.c.b16 %v1028, %v1024
    %v1409 = vpack.c.b16 %v1029, %v1025
    %v1410 = vpack.c.b16 %v1030, %v1026
    %v1411 = vpack.c.b16 %v1031, %v1027
    %v1412 = vpack.c.b16 %v1036, %v1032
    %v1413 = vpack.c.b16 %v1037, %v1033
    %v1414 = vpack.c.b16 %v1038, %v1034
    %v1415 = vpack.c.b16 %v1039, %v1035
    %v1416 = vpack.c.b16 %v1044, %v1040
    %v1417 = vpack.c.b16 %v1045, %v1041
    %v1418 = vpack.c.b16 %v1046, %v1042
    %v1419 = vpack.c.b16 %v1047, %v1043
    %v1420 = vpack.c.b16 %v1052, %v1048
    %v1421 = vpack.c.b16 %v1053, %v1049
    %v1422 = vpack.c.b16 %v1054, %v1050
    %v1423 = vpack.c.b16 %v1055, %v1051
    %v1424 = vpack.c.b16 %v1060, %v1056
    %v1425 = vpack.c.b16 %v1061, %v1057
    %v1426 = vpack.c.b16 %v1062, %v1058
    %v1427 = vpack.c.b16 %v1063, %v1059
    %v1428 = vpack.c.b16 %v1068, %v1064
    %v1429 = vpack.c.b16 %v1069, %v1065
    %v1430 = vpack.c.b16 %v1070, %v1066
    %v1431 = vpack.c.b16 %v1071, %v1067
    %v1432 = vpack.c.b16 %v1076, %v1072
    %v1433 = vpack.c.b16 %v1077, %v1073
    %v1434 = vpack.c.b16 %v1078, %v1074
    %v1435 = vpack.c.b16 %v1079, %v1075
    %v1436 = vpack.c.b16 %v1084, %v1080
    %v1437 = vpack.c.b16 %v1085, %v1081
    %v1438 = vpack.c.b16 %v1086, %v1082
    %v1439 = vpack.c.b16 %v1087, %v1083
    %v1440 = vpack.c.b16 %v1092, %v1088
    %v1441 = vpack.c.b16 %v1093, %v1089
    %v1442 = vpack.c.b16 %v1094, %v1090
    %v1443 = vpack.c.b16 %v1095, %v1091
    %v1444 = vpack.c.b16 %v1100, %v1096
    %v1445 = vpack.c.b16 %v1101, %v1097
    %v1446 = vpack.c.b16 %v1102, %v1098
    %v1447 = vpack.c.b16 %v1103, %v1099
    %v1448 = vpack.c.b16 %v1108, %v1104
    %v1449 = vpack.c.b16 %v1109, %v1105
    %v1450 = vpack.c.b16 %v1110, %v1106
    %v1451 = vpack.c.b16 %v1111, %v1107
    %v1452 = vpack.c.b16 %v1116, %v1112
    %v1453 = vpack.c.b16 %v1117, %v1113
    %v1454 = vpack.c.b16 %v1118, %v1114
    %v1455 = vpack.c.b16 %v1119, %v1115
    %v1456 = vpack.c.b16 %v1124, %v1120
    %v1457 = vpack.c.b16 %v1125, %v1121
    %v1458 = vpack.c.b16 %v1126, %v1122
    %v1459 = vpack.c.b16 %v1127, %v1123
    %v1460 = vpack.c.b16 %v1132, %v1128
    %v1461 = vpack.c.b16 %v1133, %v1129
    %v1462 = vpack.c.b16 %v1134, %v1130
    %v1463 = vpack.c.b16 %v1135, %v1131
    %v1464 = vpack.c.b16 %v1140, %v1136
    %v1465 = vpack.c.b16 %v1141, %v1137
    %v1466 = vpack.c.b16 %v1142, %v1138
    %v1467 = vpack.c.b16 %v1143, %v1139
    %v1468 = vpack.c.b16 %v1148, %v1144
    %v1469 = vpack.c.b16 %v1149, %v1145
    %v1470 = vpack.c.b16 %v1150, %v1146
    %v1471 = vpack.c.b16 %v1151, %v1147
    %v1472 = vpack.c.b16 %v1156, %v1152
    %v1473 = vpack.c.b16 %v1157, %v1153
    %v1474 = vpack.c.b16 %v1158, %v1154
    %v1475 = vpack.c.b16 %v1159, %v1155
    %v1476 = vpack.c.b16 %v1164, %v1160
    %v1477 = vpack.c.b16 %v1165, %v1161
    %v1478 = vpack.c.b16 %v1166, %v1162
    %v1479 = vpack.c.b16 %v1167, %v1163
    %v1480 = vpack.c.b16 %v1172, %v1168
    %v1481 = vpack.c.b16 %v1173, %v1169
    %v1482 = vpack.c.b16 %v1174, %v1170
    %v1483 = vpack.c.b16 %v1175, %v1171
    %v1484 = vpack.c.b16 %v1180, %v1176
    %v1485 = vpack.c.b16 %v1181, %v1177
    %v1486 = vpack.c.b16 %v1182, %v1178
    %v1487 = vpack.c.b16 %v1183, %v1179
    %v1488 = vpack.c.b16 %v1188, %v1184
    %v1489 = vpack.c.b16 %v1189, %v1185
    %v1490 = vpack.c.b16 %v1190, %v1186
    %v1491 = vpack.c.b16 %v1191, %v1187
    %v1492 = vpack.c.b16 %v1196, %v1192
    %v1493 = vpack.c.b16 %v1197, %v1193
    %v1494 = vpack.c.b16 %v1198, %v1194
    %v1495 = vpack.c.b16 %v1199, %v1195
    %v1496 = vpack.c.b16 %v1204, %v1200
    %v1497 = vpack.c.b16 %v1205, %v1201
    %v1498 = vpack.c.b16 %v1206, %v1202
    %v1499 = vpack.c.b16 %v1207, %v1203
    %v1500 = vpack.c.b16 %v1212, %v1208
    %v1501 = vpack.c.b16 %v1213, %v1209
    %v1502 = vpack.c.b16 %v1214, %v1210
    %v1503 = vpack.c.b16 %v1215, %v1211
    %v1504 = vpack.c.b16 %v1220, %v1216
    %v1505 = vpack.c.b16 %v1221, %v1217
    %v1506 = vpack.c.b16 %v1222, %v1218
    %v1507 = vpack.c.b16 %v1223, %v1219
    %v1508 = vpack.c.b16 %v1228, %v1224
    %v1509 = vpack.c.b16 %v1229, %v1225
    %v1510 = vpack.c.b16 %v1230, %v1226
    %v1511 = vpack.c.b16 %v1231, %v1227
    %v1512 = vpack.c.b16 %v1236, %v1232
    %v1513 = vpack.c.b16 %v1237, %v1233
    %v1514 = vpack.c.b16 %v1238, %v1234
    %v1515 = vpack.c.b16 %v1239, %v1235
    %v1516 = vpack.c.b16 %v1244, %v1240
    %v1517 = vpack.c.b16 %v1245, %v1241
    %v1518 = vpack.c.b16 %v1246, %v1242
    %v1519 = vpack.c.b16 %v1247, %v1243
    %v1520 = vpack.c.b16 %v1252, %v1248
    %v1521 = vpack.c.b16 %v1253, %v1249
    %v1522 = vpack.c.b16 %v1254, %v1250
    %v1523 = vpack.c.b16 %v1255, %v1251
    %v1524 = vpack.c.b16 %v1260, %v1256
    %v1525 = vpack.c.b16 %v1261, %v1257
    %v1526 = vpack.c.b16 %v1262, %v1258
    %v1527 = vpack.c.b16 %v1263, %v1259
    %v1528 = vpack.c.b16 %v1268, %v1264
    %v1529 = vpack.c.b16 %v1269, %v1265
    %v1530 = vpack.c.b16 %v1270, %v1266
    %v1531 = vpack.c.b16 %v1271, %v1267
    %v1532 = vpack.c.b16 %v1276, %v1272
    %v1533 = vpack.c.b16 %v1277, %v1273
    %v1534 = vpack.c.b16 %v1278, %v1274
    %v1535 = vpack.c.b16 %v1279, %v1275
    %1792 = vmatpush.bf16.msra.mxu0 %v1308
    %1793 = vmatpush.bf16.msra.mxu0 %v1304
    %1794 = vmatpush.bf16.msra.mxu0 %v1300
    %1795 = vmatpush.bf16.msra.mxu0 %v1296
    %1796 = vmatpush.bf16.msra.mxu0 %v1292
    %1797 = vmatpush.bf16.msra.mxu0 %v1288
    %1798 = vmatpush.bf16.msra.mxu0 %v1284
    %1799 = vmatpush.bf16.msra.mxu0 %v1280
    %1800 = vmatmul.bf16.gmra.mxu0 %v248
    %v1801 = vpop.f32.mrf.mxu0
    %v1802 = vadd.f32 0.0, %v1801
    %v1803 = vpop.f32.mrf.mxu0
    %1804 = vdwg.mxu0
    %1805 = vmatpush.bf16.msra.mxu0 %v1340
    %1806 = vmatpush.bf16.msra.mxu0 %v1336
    %1807 = vmatpush.bf16.msra.mxu0 %v1332
    %1808 = vmatpush.bf16.msra.mxu0 %v1328
    %1809 = vmatpush.bf16.msra.mxu0 %v1324
    %1810 = vmatpush.bf16.msra.mxu0 %v1320
    %1811 = vmatpush.bf16.msra.mxu0 %v1316
    %1812 = vmatpush.bf16.msra.mxu0 %v1312
    %1813 = vmatmul.bf16.gmra.mxu0 %v249
    %v1814 = vpop.f32.mrf.mxu0
    %v1815 = vadd.f32 %v1802, %v1814
    %v1816 = vpop.f32.mrf.mxu0
    %1817 = vdwg.mxu0
    %1818 = vmatpush.bf16.msra.mxu0 %v1372
    %1819 = vmatpush.bf16.msra.mxu0 %v1368
    %1820 = vmatpush.bf16.msra.mxu0 %v1364
    %1821 = vmatpush.bf16.msra.mxu0 %v1360
    %1822 = vmatpush.bf16.msra.mxu0 %v1356
    %1823 = vmatpush.bf16.msra.mxu0 %v1352
    %1824 = vmatpush.bf16.msra.mxu0 %v1348
    %1825 = vmatpush.bf16.msra.mxu0 %v1344
    %1826 = vmatmul.bf16.gmra.mxu0 %v250
    %v1827 = vpop.f32.mrf.mxu0
    %v1828 = vadd.f32 %v1815, %v1827
    %v1829 = vpop.f32.mrf.mxu0
    %1830 = vdwg.mxu0
    %1831 = vmatpush.bf16.msra.mxu0 %v1404
    %1832 = vmatpush.bf16.msra.mxu0 %v1400
    %1833 = vmatpush.bf16.msra.mxu0 %v1396
    %1834 = vmatpush.bf16.msra.mxu0 %v1392
    %1835 = vmatpush.bf16.msra.mxu0 %v1388
    %1836 = vmatpush.bf16.msra.mxu0 %v1384
    %1837 = vmatpush.bf16.msra.mxu0 %v1380
    %1838 = vmatpush.bf16.msra.mxu0 %v1376
    %1839 = vmatmul.bf16.gmra.mxu0 %v251
    %v1840 = vpop.f32.mrf.mxu0
    %v1841 = vadd.f32 %v1828, %v1840
    %v1842 = vpop.f32.mrf.mxu0
    %1843 = vdwg.mxu0
    %1844 = vmatpush.bf16.msra.mxu0 %v1436
    %1845 = vmatpush.bf16.msra.mxu0 %v1432
    %1846 = vmatpush.bf16.msra.mxu0 %v1428
    %1847 = vmatpush.bf16.msra.mxu0 %v1424
    %1848 = vmatpush.bf16.msra.mxu0 %v1420
    %1849 = vmatpush.bf16.msra.mxu0 %v1416
    %1850 = vmatpush.bf16.msra.mxu0 %v1412
    %1851 = vmatpush.bf16.msra.mxu0 %v1408
    %1852 = vmatmul.bf16.gmra.mxu0 %v252
    %v1853 = vpop.f32.mrf.mxu0
    %v1854 = vadd.f32 %v1841, %v1853
    %v1855 = vpop.f32.mrf.mxu0
    %1856 = vdwg.mxu0
    %1857 = vmatpush.bf16.msra.mxu0 %v1468
    %1858 = vmatpush.bf16.msra.mxu0 %v1464
    %1859 = vmatpush.bf16.msra.mxu0 %v1460
    %1860 = vmatpush.bf16.msra.mxu0 %v1456
    %1861 = vmatpush.bf16.msra.mxu0 %v1452
    %1862 = vmatpush.bf16.msra.mxu0 %v1448
    %1863 = vmatpush.bf16.msra.mxu0 %v1444
    %1864 = vmatpush.bf16.msra.mxu0 %v1440
    %1865 = vmatmul.bf16.gmra.mxu0 %v253
    %v1866 = vpop.f32.mrf.mxu0
    %v1867 = vadd.f32 %v1854, %v1866
    %v1868 = vpop.f32.mrf.mxu0
    %1869 = vdwg.mxu0
    %1870 = vmatpush.bf16.msra.mxu0 %v1500
    %1871 = vmatpush.bf16.msra.mxu0 %v1496
    %1872 = vmatpush.bf16.msra.mxu0 %v1492
    %1873 = vmatpush.bf16.msra.mxu0 %v1488
    %1874 = vmatpush.bf16.msra.mxu0 %v1484
    %1875 = vmatpush.bf16.msra.mxu0 %v1480
    %1876 = vmatpush.bf16.msra.mxu0 %v1476
    %1877 = vmatpush.bf16.msra.mxu0 %v1472
    %1878 = vmatmul.bf16.gmra.mxu0 %v254
    %v1879 = vpop.f32.mrf.mxu0
    %v1880 = vadd.f32 %v1867, %v1879
    %v1881 = vpop.f32.mrf.mxu0
    %1882 = vdwg.mxu0
    %1883 = vmatpush.bf16.msra.mxu0 %v1532
    %1884 = vmatpush.bf16.msra.mxu0 %v1528
    %1885 = vmatpush.bf16.msra.mxu0 %v1524
    %1886 = vmatpush.bf16.msra.mxu0 %v1520
    %1887 = vmatpush.bf16.msra.mxu0 %v1516
    %1888 = vmatpush.bf16.msra.mxu0 %v1512
    %1889 = vmatpush.bf16.msra.mxu0 %v1508
    %1890 = vmatpush.bf16.msra.mxu0 %v1504
    %1891 = vmatmul.bf16.gmra.mxu0 %v255
    %v1892 = vpop.f32.mrf.mxu0
    %v1893 = vadd.f32 %v1880, %v1892
    %v1894 = vpop.f32.mrf.mxu0
    %1895 = vdwg.mxu0
    %1896 = vmatpush.bf16.msra.mxu0 %v1309
    %1897 = vmatpush.bf16.msra.mxu0 %v1305
    %1898 = vmatpush.bf16.msra.mxu0 %v1301
    %1899 = vmatpush.bf16.msra.mxu0 %v1297
    %1900 = vmatpush.bf16.msra.mxu0 %v1293
    %1901 = vmatpush.bf16.msra.mxu0 %v1289
    %1902 = vmatpush.bf16.msra.mxu0 %v1285
    %1903 = vmatpush.bf16.msra.mxu0 %v1281
    %1904 = vmatmul.bf16.gmra.mxu0 %v248
    %v1905 = vpop.f32.mrf.mxu0
    %v1906 = vadd.f32 0.0, %v1905
    %v1907 = vpop.f32.mrf.mxu0
    %1908 = vdwg.mxu0
    %1909 = vmatpush.bf16.msra.mxu0 %v1341
    %1910 = vmatpush.bf16.msra.mxu0 %v1337
    %1911 = vmatpush.bf16.msra.mxu0 %v1333
    %1912 = vmatpush.bf16.msra.mxu0 %v1329
    %1913 = vmatpush.bf16.msra.mxu0 %v1325
    %1914 = vmatpush.bf16.msra.mxu0 %v1321
    %1915 = vmatpush.bf16.msra.mxu0 %v1317
    %1916 = vmatpush.bf16.msra.mxu0 %v1313
    %1917 = vmatmul.bf16.gmra.mxu0 %v249
    %v1918 = vpop.f32.mrf.mxu0
    %v1919 = vadd.f32 %v1906, %v1918
    %v1920 = vpop.f32.mrf.mxu0
    %1921 = vdwg.mxu0
    %1922 = vmatpush.bf16.msra.mxu0 %v1373
    %1923 = vmatpush.bf16.msra.mxu0 %v1369
    %1924 = vmatpush.bf16.msra.mxu0 %v1365
    %1925 = vmatpush.bf16.msra.mxu0 %v1361
    %1926 = vmatpush.bf16.msra.mxu0 %v1357
    %1927 = vmatpush.bf16.msra.mxu0 %v1353
    %1928 = vmatpush.bf16.msra.mxu0 %v1349
    %1929 = vmatpush.bf16.msra.mxu0 %v1345
    %1930 = vmatmul.bf16.gmra.mxu0 %v250
    %v1931 = vpop.f32.mrf.mxu0
    %v1932 = vadd.f32 %v1919, %v1931
    %v1933 = vpop.f32.mrf.mxu0
    %1934 = vdwg.mxu0
    %1935 = vmatpush.bf16.msra.mxu0 %v1405
    %1936 = vmatpush.bf16.msra.mxu0 %v1401
    %1937 = vmatpush.bf16.msra.mxu0 %v1397
    %1938 = vmatpush.bf16.msra.mxu0 %v1393
    %1939 = vmatpush.bf16.msra.mxu0 %v1389
    %1940 = vmatpush.bf16.msra.mxu0 %v1385
    %1941 = vmatpush.bf16.msra.mxu0 %v1381
    %1942 = vmatpush.bf16.msra.mxu0 %v1377
    %1943 = vmatmul.bf16.gmra.mxu0 %v251
    %v1944 = vpop.f32.mrf.mxu0
    %v1945 = vadd.f32 %v1932, %v1944
    %v1946 = vpop.f32.mrf.mxu0
    %1947 = vdwg.mxu0
    %1948 = vmatpush.bf16.msra.mxu0 %v1437
    %1949 = vmatpush.bf16.msra.mxu0 %v1433
    %1950 = vmatpush.bf16.msra.mxu0 %v1429
    %1951 = vmatpush.bf16.msra.mxu0 %v1425
    %1952 = vmatpush.bf16.msra.mxu0 %v1421
    %1953 = vmatpush.bf16.msra.mxu0 %v1417
    %1954 = vmatpush.bf16.msra.mxu0 %v1413
    %1955 = vmatpush.bf16.msra.mxu0 %v1409
    %1956 = vmatmul.bf16.gmra.mxu0 %v252
    %v1957 = vpop.f32.mrf.mxu0
    %v1958 = vadd.f32 %v1945, %v1957
    %v1959 = vpop.f32.mrf.mxu0
    %1960 = vdwg.mxu0
    %1961 = vmatpush.bf16.msra.mxu0 %v1469
    %1962 = vmatpush.bf16.msra.mxu0 %v1465
    %1963 = vmatpush.bf16.msra.mxu0 %v1461
    %1964 = vmatpush.bf16.msra.mxu0 %v1457
    %1965 = vmatpush.bf16.msra.mxu0 %v1453
    %1966 = vmatpush.bf16.msra.mxu0 %v1449
    %1967 = vmatpush.bf16.msra.mxu0 %v1445
    %1968 = vmatpush.bf16.msra.mxu0 %v1441
    %1969 = vmatmul.bf16.gmra.mxu0 %v253
    %v1970 = vpop.f32.mrf.mxu0
    %v1971 = vadd.f32 %v1958, %v1970
    %v1972 = vpop.f32.mrf.mxu0
    %1973 = vdwg.mxu0
    %1974 = vmatpush.bf16.msra.mxu0 %v1501
    %1975 = vmatpush.bf16.msra.mxu0 %v1497
    %1976 = vmatpush.bf16.msra.mxu0 %v1493
    %1977 = vmatpush.bf16.msra.mxu0 %v1489
    %1978 = vmatpush.bf16.msra.mxu0 %v1485
    %1979 = vmatpush.bf16.msra.mxu0 %v1481
    %1980 = vmatpush.bf16.msra.mxu0 %v1477
    %1981 = vmatpush.bf16.msra.mxu0 %v1473
    %1982 = vmatmul.bf16.gmra.mxu0 %v254
    %v1983 = vpop.f32.mrf.mxu0
    %v1984 = vadd.f32 %v1971, %v1983
    %v1985 = vpop.f32.mrf.mxu0
    %1986 = vdwg.mxu0
    %1987 = vmatpush.bf16.msra.mxu0 %v1533
    %1988 = vmatpush.bf16.msra.mxu0 %v1529
    %1989 = vmatpush.bf16.msra.mxu0 %v1525
    %1990 = vmatpush.bf16.msra.mxu0 %v1521
    %1991 = vmatpush.bf16.msra.mxu0 %v1517
    %1992 = vmatpush.bf16.msra.mxu0 %v1513
    %1993 = vmatpush.bf16.msra.mxu0 %v1509
    %1994 = vmatpush.bf16.msra.mxu0 %v1505
    %1995 = vmatmul.bf16.gmra.mxu0 %v255
    %v1996 = vpop.f32.mrf.mxu0
    %v1997 = vadd.f32 %v1984, %v1996
    %v1998 = vpop.f32.mrf.mxu0
    %1999 = vdwg.mxu0
    %2000 = vmatpush.bf16.msra.mxu0 %v1310
    %2001 = vmatpush.bf16.msra.mxu0 %v1306
    %2002 = vmatpush.bf16.msra.mxu0 %v1302
    %2003 = vmatpush.bf16.msra.mxu0 %v1298
    %2004 = vmatpush.bf16.msra.mxu0 %v1294
    %2005 = vmatpush.bf16.msra.mxu0 %v1290
    %2006 = vmatpush.bf16.msra.mxu0 %v1286
    %2007 = vmatpush.bf16.msra.mxu0 %v1282
    %2008 = vmatmul.bf16.gmra.mxu0 %v248
    %v2009 = vpop.f32.mrf.mxu0
    %v2010 = vadd.f32 0.0, %v2009
    %v2011 = vpop.f32.mrf.mxu0
    %2012 = vdwg.mxu0
    %2013 = vmatpush.bf16.msra.mxu0 %v1342
    %2014 = vmatpush.bf16.msra.mxu0 %v1338
    %2015 = vmatpush.bf16.msra.mxu0 %v1334
    %2016 = vmatpush.bf16.msra.mxu0 %v1330
    %2017 = vmatpush.bf16.msra.mxu0 %v1326
    %2018 = vmatpush.bf16.msra.mxu0 %v1322
    %2019 = vmatpush.bf16.msra.mxu0 %v1318
    %2020 = vmatpush.bf16.msra.mxu0 %v1314
    %2021 = vmatmul.bf16.gmra.mxu0 %v249
    %v2022 = vpop.f32.mrf.mxu0
    %v2023 = vadd.f32 %v2010, %v2022
    %v2024 = vpop.f32.mrf.mxu0
    %2025 = vdwg.mxu0
    %2026 = vmatpush.bf16.msra.mxu0 %v1374
    %2027 = vmatpush.bf16.msra.mxu0 %v1370
    %2028 = vmatpush.bf16.msra.mxu0 %v1366
    %2029 = vmatpush.bf16.msra.mxu0 %v1362
    %2030 = vmatpush.bf16.msra.mxu0 %v1358
    %2031 = vmatpush.bf16.msra.mxu0 %v1354
    %2032 = vmatpush.bf16.msra.mxu0 %v1350
    %2033 = vmatpush.bf16.msra.mxu0 %v1346
    %2034 = vmatmul.bf16.gmra.mxu0 %v250
    %v2035 = vpop.f32.mrf.mxu0
    %v2036 = vadd.f32 %v2023, %v2035
    %v2037 = vpop.f32.mrf.mxu0
    %2038 = vdwg.mxu0
    %2039 = vmatpush.bf16.msra.mxu0 %v1406
    %2040 = vmatpush.bf16.msra.mxu0 %v1402
    %2041 = vmatpush.bf16.msra.mxu0 %v1398
    %2042 = vmatpush.bf16.msra.mxu0 %v1394
    %2043 = vmatpush.bf16.msra.mxu0 %v1390
    %2044 = vmatpush.bf16.msra.mxu0 %v1386
    %2045 = vmatpush.bf16.msra.mxu0 %v1382
    %2046 = vmatpush.bf16.msra.mxu0 %v1378
    %2047 = vmatmul.bf16.gmra.mxu0 %v251
    %v2048 = vpop.f32.mrf.mxu0
    %v2049 = vadd.f32 %v2036, %v2048
    %v2050 = vpop.f32.mrf.mxu0
    %2051 = vdwg.mxu0
    %2052 = vmatpush.bf16.msra.mxu0 %v1438
    %2053 = vmatpush.bf16.msra.mxu0 %v1434
    %2054 = vmatpush.bf16.msra.mxu0 %v1430
    %2055 = vmatpush.bf16.msra.mxu0 %v1426
    %2056 = vmatpush.bf16.msra.mxu0 %v1422
    %2057 = vmatpush.bf16.msra.mxu0 %v1418
    %2058 = vmatpush.bf16.msra.mxu0 %v1414
    %2059 = vmatpush.bf16.msra.mxu0 %v1410
    %2060 = vmatmul.bf16.gmra.mxu0 %v252
    %v2061 = vpop.f32.mrf.mxu0
    %v2062 = vadd.f32 %v2049, %v2061
    %v2063 = vpop.f32.mrf.mxu0
    %2064 = vdwg.mxu0
    %2065 = vmatpush.bf16.msra.mxu0 %v1470
    %2066 = vmatpush.bf16.msra.mxu0 %v1466
    %2067 = vmatpush.bf16.msra.mxu0 %v1462
    %2068 = vmatpush.bf16.msra.mxu0 %v1458
    %2069 = vmatpush.bf16.msra.mxu0 %v1454
    %2070 = vmatpush.bf16.msra.mxu0 %v1450
    %2071 = vmatpush.bf16.msra.mxu0 %v1446
    %2072 = vmatpush.bf16.msra.mxu0 %v1442
    %2073 = vmatmul.bf16.gmra.mxu0 %v253
    %v2074 = vpop.f32.mrf.mxu0
    %v2075 = vadd.f32 %v2062, %v2074
    %v2076 = vpop.f32.mrf.mxu0
    %2077 = vdwg.mxu0
    %2078 = vmatpush.bf16.msra.mxu0 %v1502
    %2079 = vmatpush.bf16.msra.mxu0 %v1498
    %2080 = vmatpush.bf16.msra.mxu0 %v1494
    %2081 = vmatpush.bf16.msra.mxu0 %v1490
    %2082 = vmatpush.bf16.msra.mxu0 %v1486
    %2083 = vmatpush.bf16.msra.mxu0 %v1482
    %2084 = vmatpush.bf16.msra.mxu0 %v1478
    %2085 = vmatpush.bf16.msra.mxu0 %v1474
    %2086 = vmatmul.bf16.gmra.mxu0 %v254
    %v2087 = vpop.f32.mrf.mxu0
    %v2088 = vadd.f32 %v2075, %v2087
    %v2089 = vpop.f32.mrf.mxu0
    %2090 = vdwg.mxu0
    %2091 = vmatpush.bf16.msra.mxu0 %v1534
    %2092 = vmatpush.bf16.msra.mxu0 %v1530
    %2093 = vmatpush.bf16.msra.mxu0 %v1526
    %2094 = vmatpush.bf16.msra.mxu0 %v1522
    %2095 = vmatpush.bf16.msra.mxu0 %v1518
    %2096 = vmatpush.bf16.msra.mxu0 %v1514
    %2097 = vmatpush.bf16.msra.mxu0 %v1510
    %2098 = vmatpush.bf16.msra.mxu0 %v1506
    %2099 = vmatmul.bf16.gmra.mxu0 %v255
    %v2100 = vpop.f32.mrf.mxu0
    %v2101 = vadd.f32 %v2088, %v2100
    %v2102 = vpop.f32.mrf.mxu0
    %2103 = vdwg.mxu0
    %2104 = vmatpush.bf16.msra.mxu0 %v1311
    %2105 = vmatpush.bf16.msra.mxu0 %v1307
    %2106 = vmatpush.bf16.msra.mxu0 %v1303
    %2107 = vmatpush.bf16.msra.mxu0 %v1299
    %2108 = vmatpush.bf16.msra.mxu0 %v1295
    %2109 = vmatpush.bf16.msra.mxu0 %v1291
    %2110 = vmatpush.bf16.msra.mxu0 %v1287
    %2111 = vmatpush.bf16.msra.mxu0 %v1283
    %2112 = vmatmul.bf16.gmra.mxu0 %v248
    %v2113 = vpop.f32.mrf.mxu0
    %v2114 = vadd.f32 0.0, %v2113
    %v2115 = vpop.f32.mrf.mxu0
    %2116 = vdwg.mxu0
    %2117 = vmatpush.bf16.msra.mxu0 %v1343
    %2118 = vmatpush.bf16.msra.mxu0 %v1339
    %2119 = vmatpush.bf16.msra.mxu0 %v1335
    %2120 = vmatpush.bf16.msra.mxu0 %v1331
    %2121 = vmatpush.bf16.msra.mxu0 %v1327
    %2122 = vmatpush.bf16.msra.mxu0 %v1323
    %2123 = vmatpush.bf16.msra.mxu0 %v1319
    %2124 = vmatpush.bf16.msra.mxu0 %v1315
    %2125 = vmatmul.bf16.gmra.mxu0 %v249
    %v2126 = vpop.f32.mrf.mxu0
    %v2127 = vadd.f32 %v2114, %v2126
    %v2128 = vpop.f32.mrf.mxu0
    %2129 = vdwg.mxu0
    %2130 = vmatpush.bf16.msra.mxu0 %v1375
    %2131 = vmatpush.bf16.msra.mxu0 %v1371
    %2132 = vmatpush.bf16.msra.mxu0 %v1367
    %2133 = vmatpush.bf16.msra.mxu0 %v1363
    %2134 = vmatpush.bf16.msra.mxu0 %v1359
    %2135 = vmatpush.bf16.msra.mxu0 %v1355
    %2136 = vmatpush.bf16.msra.mxu0 %v1351
    %2137 = vmatpush.bf16.msra.mxu0 %v1347
    %2138 = vmatmul.bf16.gmra.mxu0 %v250
    %v2139 = vpop.f32.mrf.mxu0
    %v2140 = vadd.f32 %v2127, %v2139
    %v2141 = vpop.f32.mrf.mxu0
    %2142 = vdwg.mxu0
    %2143 = vmatpush.bf16.msra.mxu0 %v1407
    %2144 = vmatpush.bf16.msra.mxu0 %v1403
    %2145 = vmatpush.bf16.msra.mxu0 %v1399
    %2146 = vmatpush.bf16.msra.mxu0 %v1395
    %2147 = vmatpush.bf16.msra.mxu0 %v1391
    %2148 = vmatpush.bf16.msra.mxu0 %v1387
    %2149 = vmatpush.bf16.msra.mxu0 %v1383
    %2150 = vmatpush.bf16.msra.mxu0 %v1379
    %2151 = vmatmul.bf16.gmra.mxu0 %v251
    %v2152 = vpop.f32.mrf.mxu0
    %v2153 = vadd.f32 %v2140, %v2152
    %v2154 = vpop.f32.mrf.mxu0
    %2155 = vdwg.mxu0
    %2156 = vmatpush.bf16.msra.mxu0 %v1439
    %2157 = vmatpush.bf16.msra.mxu0 %v1435
    %2158 = vmatpush.bf16.msra.mxu0 %v1431
    %2159 = vmatpush.bf16.msra.mxu0 %v1427
    %2160 = vmatpush.bf16.msra.mxu0 %v1423
    %2161 = vmatpush.bf16.msra.mxu0 %v1419
    %2162 = vmatpush.bf16.msra.mxu0 %v1415
    %2163 = vmatpush.bf16.msra.mxu0 %v1411
    %2164 = vmatmul.bf16.gmra.mxu0 %v252
    %v2165 = vpop.f32.mrf.mxu0
    %v2166 = vadd.f32 %v2153, %v2165
    %v2167 = vpop.f32.mrf.mxu0
    %2168 = vdwg.mxu0
    %2169 = vmatpush.bf16.msra.mxu0 %v1471
    %2170 = vmatpush.bf16.msra.mxu0 %v1467
    %2171 = vmatpush.bf16.msra.mxu0 %v1463
    %2172 = vmatpush.bf16.msra.mxu0 %v1459
    %2173 = vmatpush.bf16.msra.mxu0 %v1455
    %2174 = vmatpush.bf16.msra.mxu0 %v1451
    %2175 = vmatpush.bf16.msra.mxu0 %v1447
    %2176 = vmatpush.bf16.msra.mxu0 %v1443
    %2177 = vmatmul.bf16.gmra.mxu0 %v253
    %v2178 = vpop.f32.mrf.mxu0
    %v2179 = vadd.f32 %v2166, %v2178
    %v2180 = vpop.f32.mrf.mxu0
    %2181 = vdwg.mxu0
    %2182 = vmatpush.bf16.msra.mxu0 %v1503
    %2183 = vmatpush.bf16.msra.mxu0 %v1499
    %2184 = vmatpush.bf16.msra.mxu0 %v1495
    %2185 = vmatpush.bf16.msra.mxu0 %v1491
    %2186 = vmatpush.bf16.msra.mxu0 %v1487
    %2187 = vmatpush.bf16.msra.mxu0 %v1483
    %2188 = vmatpush.bf16.msra.mxu0 %v1479
    %2189 = vmatpush.bf16.msra.mxu0 %v1475
    %2190 = vmatmul.bf16.gmra.mxu0 %v254
    %v2191 = vpop.f32.mrf.mxu0
    %v2192 = vadd.f32 %v2179, %v2191
    %v2193 = vpop.f32.mrf.mxu0
    %2194 = vdwg.mxu0
    %2195 = vmatpush.bf16.msra.mxu0 %v1535
    %2196 = vmatpush.bf16.msra.mxu0 %v1531
    %2197 = vmatpush.bf16.msra.mxu0 %v1527
    %2198 = vmatpush.bf16.msra.mxu0 %v1523
    %2199 = vmatpush.bf16.msra.mxu0 %v1519
    %2200 = vmatpush.bf16.msra.mxu0 %v1515
    %2201 = vmatpush.bf16.msra.mxu0 %v1511
    %2202 = vmatpush.bf16.msra.mxu0 %v1507
    %2203 = vmatmul.bf16.gmra.mxu0 %v255
    %v2204 = vpop.f32.mrf.mxu0
    %v2205 = vadd.f32 %v2192, %v2204
    %v2206 = vpop.f32.mrf.mxu0
    %2207 = vdwg.mxu0
    %vm2208 = vcmp.gt.f32.partialorder %v1893, 0.0
    %vm2209 = vcmp.gt.f32.partialorder %v1997, 0.0
    %vm2210 = vcmp.gt.f32.partialorder %v2101, 0.0
    %vm2211 = vcmp.gt.f32.partialorder %v2205, 0.0
    %v2212 = vmul.f32 %v1893, 0.01
    %v2213 = vmul.f32 %v1997, 0.01
    %v2214 = vmul.f32 %v2101, 0.01
    %v2215 = vmul.f32 %v2205, 0.01
    %v2216 = vsel %vm2208, %v1893, %v2212
    %v2217 = vsel %vm2209, %v1997, %v2213
    %v2218 = vsel %vm2210, %v2101, %v2214
    %v2219 = vsel %vm2211, %v2205, %v2215
    %v2220 = vpack.c.bf16 %v2216, %v2216
    %v2221 = vpack.c.bf16 %v2217, %v2217
    %v2222 = vpack.c.bf16 %v2218, %v2218
    %v2223 = vpack.c.bf16 %v2219, %v2219
    %v2224 = vld [vmem:[#allocation16] sm:$0xf]
    %v2225 = vld [vmem:[#allocation16 + $0x4] sm:$0xf]
    %v2226 = vld [vmem:[#allocation16 + $0x8] sm:$0xf]
    %v2227 = vld [vmem:[#allocation16 + $0xc] sm:$0xf]
    %v2228 = vld [vmem:[#allocation16 + $0x10] sm:$0xf]
    %v2229 = vld [vmem:[#allocation16 + $0x14] sm:$0xf]
    %v2230 = vld [vmem:[#allocation16 + $0x18] sm:$0xf]
    %v2231 = vld [vmem:[#allocation16 + $0x1c] sm:$0xf]
    %v2232 = vld [vmem:[#allocation16 + $0x20] sm:$0xf]
    %v2233 = vld [vmem:[#allocation16 + $0x24] sm:$0xf]
    %v2234 = vld [vmem:[#allocation16 + $0x28] sm:$0xf]
    %v2235 = vld [vmem:[#allocation16 + $0x2c] sm:$0xf]
    %v2236 = vld [vmem:[#allocation16 + $0x30] sm:$0xf]
    %v2237 = vld [vmem:[#allocation16 + $0x34] sm:$0xf]
    %v2238 = vld [vmem:[#allocation16 + $0x38] sm:$0xf]
    %v2239 = vld [vmem:[#allocation16 + $0x3c] sm:$0xf]
    %v2240 = vld [vmem:[#allocation16 + $0x40] sm:$0xf]
    %v2241 = vld [vmem:[#allocation16 + $0x44] sm:$0xf]
    %v2242 = vld [vmem:[#allocation16 + $0x48] sm:$0xf]
    %v2243 = vld [vmem:[#allocation16 + $0x4c] sm:$0xf]
    %v2244 = vld [vmem:[#allocation16 + $0x50] sm:$0xf]
    %v2245 = vld [vmem:[#allocation16 + $0x54] sm:$0xf]
    %v2246 = vld [vmem:[#allocation16 + $0x58] sm:$0xf]
    %v2247 = vld [vmem:[#allocation16 + $0x5c] sm:$0xf]
    %v2248 = vld [vmem:[#allocation16 + $0x60] sm:$0xf]
    %v2249 = vld [vmem:[#allocation16 + $0x64] sm:$0xf]
    %v2250 = vld [vmem:[#allocation16 + $0x68] sm:$0xf]
    %v2251 = vld [vmem:[#allocation16 + $0x6c] sm:$0xf]
    %v2252 = vld [vmem:[#allocation16 + $0x70] sm:$0xf]
    %v2253 = vld [vmem:[#allocation16 + $0x74] sm:$0xf]
    %v2254 = vld [vmem:[#allocation16 + $0x78] sm:$0xf]
    %v2255 = vld [vmem:[#allocation16 + $0x7c] sm:$0xf]
    %v2256 = vld [vmem:[#allocation16 + $0x80] sm:$0xf]
    %v2257 = vld [vmem:[#allocation16 + $0x84] sm:$0xf]
    %v2258 = vld [vmem:[#allocation16 + $0x88] sm:$0xf]
    %v2259 = vld [vmem:[#allocation16 + $0x8c] sm:$0xf]
    %v2260 = vld [vmem:[#allocation16 + $0x90] sm:$0xf]
    %v2261 = vld [vmem:[#allocation16 + $0x94] sm:$0xf]
    %v2262 = vld [vmem:[#allocation16 + $0x98] sm:$0xf]
    %v2263 = vld [vmem:[#allocation16 + $0x9c] sm:$0xf]
    %v2264 = vld [vmem:[#allocation16 + $0xa0] sm:$0xf]
    %v2265 = vld [vmem:[#allocation16 + $0xa4] sm:$0xf]
    %v2266 = vld [vmem:[#allocation16 + $0xa8] sm:$0xf]
    %v2267 = vld [vmem:[#allocation16 + $0xac] sm:$0xf]
    %v2268 = vld [vmem:[#allocation16 + $0xb0] sm:$0xf]
    %v2269 = vld [vmem:[#allocation16 + $0xb4] sm:$0xf]
    %v2270 = vld [vmem:[#allocation16 + $0xb8] sm:$0xf]
    %v2271 = vld [vmem:[#allocation16 + $0xbc] sm:$0xf]
    %v2272 = vld [vmem:[#allocation16 + $0xc0] sm:$0xf]
    %v2273 = vld [vmem:[#allocation16 + $0xc4] sm:$0xf]
    %v2274 = vld [vmem:[#allocation16 + $0xc8] sm:$0xf]
    %v2275 = vld [vmem:[#allocation16 + $0xcc] sm:$0xf]
    %v2276 = vld [vmem:[#allocation16 + $0xd0] sm:$0xf]
    %v2277 = vld [vmem:[#allocation16 + $0xd4] sm:$0xf]
    %v2278 = vld [vmem:[#allocation16 + $0xd8] sm:$0xf]
    %v2279 = vld [vmem:[#allocation16 + $0xdc] sm:$0xf]
    %v2280 = vld [vmem:[#allocation16 + $0xe0] sm:$0xf]
    %v2281 = vld [vmem:[#allocation16 + $0xe4] sm:$0xf]
    %v2282 = vld [vmem:[#allocation16 + $0xe8] sm:$0xf]
    %v2283 = vld [vmem:[#allocation16 + $0xec] sm:$0xf]
    %v2284 = vld [vmem:[#allocation16 + $0xf0] sm:$0xf]
    %v2285 = vld [vmem:[#allocation16 + $0xf4] sm:$0xf]
    %v2286 = vld [vmem:[#allocation16 + $0xf8] sm:$0xf]
    %v2287 = vld [vmem:[#allocation16 + $0xfc] sm:$0xf]
    %v2288 = vld [vmem:[#allocation5] sm:$0xff]
    %v2289 = vld [vmem:[#allocation5 + $0x8] sm:$0xff]
    %2292 = vst [vmem:[#allocation1] ss:$4 sm:$0xff] %v2288
    %s2293 = scalar_lea.vmem [#allocation1], 32
    %2294 = vst [vmem:[%s2293] ss:$4 sm:$0xff] %v2289
    %v2295 = vld.sshfl [vmem:[#allocation1] sm:$0xff pattern:$0x73625140]
    %v2296 = vld.sshfl [vmem:[#allocation1 + $0x8] sm:$0xff pattern:$0x73625140]
    %v2297 = vld.sshfl [vmem:[#allocation1 + $0x10] sm:$0xff pattern:$0x73625140]
    %v2298 = vld.sshfl [vmem:[#allocation1 + $0x18] sm:$0xff pattern:$0x73625140]
    %v2299 = vld.sshfl [vmem:[#allocation1 + $0x20] sm:$0xff pattern:$0x73625140]
    %v2300 = vld.sshfl [vmem:[#allocation1 + $0x28] sm:$0xff pattern:$0x73625140]
    %v2301 = vld.sshfl [vmem:[#allocation1 + $0x30] sm:$0xff pattern:$0x73625140]
    %v2302 = vld.sshfl [vmem:[#allocation1 + $0x38] sm:$0xff pattern:$0x73625140]
    %v2311 = vpack.c.bf16 %v2295, %v2295
    %v2312 = vpack.c.bf16 %v2296, %v2296
    %v2313 = vpack.c.bf16 %v2297, %v2297
    %v2314 = vpack.c.bf16 %v2298, %v2298
    %v2315 = vpack.c.bf16 %v2299, %v2299
    %v2316 = vpack.c.bf16 %v2300, %v2300
    %v2317 = vpack.c.bf16 %v2301, %v2301
    %v2318 = vpack.c.bf16 %v2302, %v2302
    %v2319 = vld [vmem:[#allocation10] sm:$0xff]
    %v2320 = vld [vmem:[#allocation10 + $0x8] sm:$0xff]
    %v2321 = vld [vmem:[#allocation10 + $0x10] sm:$0xff]
    %v2322 = vld [vmem:[#allocation10 + $0x18] sm:$0xff]
    %v2323 = vld [vmem:[#allocation10 + $0x20] sm:$0xff]
    %v2324 = vld [vmem:[#allocation10 + $0x28] sm:$0xff]
    %v2325 = vld [vmem:[#allocation10 + $0x30] sm:$0xff]
    %v2326 = vld [vmem:[#allocation10 + $0x38] sm:$0xff]
    %v2327 = vld [vmem:[#allocation10 + $0x40] sm:$0xff]
    %v2328 = vld [vmem:[#allocation10 + $0x48] sm:$0xff]
    %v2329 = vld [vmem:[#allocation10 + $0x50] sm:$0xff]
    %v2330 = vld [vmem:[#allocation10 + $0x58] sm:$0xff]
    %v2331 = vld [vmem:[#allocation10 + $0x60] sm:$0xff]
    %v2332 = vld [vmem:[#allocation10 + $0x68] sm:$0xff]
    %v2333 = vld [vmem:[#allocation10 + $0x70] sm:$0xff]
    %v2334 = vld [vmem:[#allocation10 + $0x78] sm:$0xff]
    %v2335 = vld [vmem:[#allocation10 + $0x80] sm:$0xff]
    %v2336 = vld [vmem:[#allocation10 + $0x88] sm:$0xff]
    %v2337 = vld [vmem:[#allocation10 + $0x90] sm:$0xff]
    %v2338 = vld [vmem:[#allocation10 + $0x98] sm:$0xff]
    %v2339 = vld [vmem:[#allocation10 + $0xa0] sm:$0xff]
    %v2340 = vld [vmem:[#allocation10 + $0xa8] sm:$0xff]
    %v2341 = vld [vmem:[#allocation10 + $0xb0] sm:$0xff]
    %v2342 = vld [vmem:[#allocation10 + $0xb8] sm:$0xff]
    %v2343 = vld [vmem:[#allocation10 + $0xc0] sm:$0xff]
    %v2344 = vld [vmem:[#allocation10 + $0xc8] sm:$0xff]
    %v2345 = vld [vmem:[#allocation10 + $0xd0] sm:$0xff]
    %v2346 = vld [vmem:[#allocation10 + $0xd8] sm:$0xff]
    %v2347 = vld [vmem:[#allocation10 + $0xe0] sm:$0xff]
    %v2348 = vld [vmem:[#allocation10 + $0xe8] sm:$0xff]
    %v2349 = vld [vmem:[#allocation10 + $0xf0] sm:$0xff]
    %v2350 = vld [vmem:[#allocation10 + $0xf8] sm:$0xff]
    %v2351 = vld [vmem:[#allocation10 + $0x100] sm:$0xff]
    %v2352 = vld [vmem:[#allocation10 + $0x108] sm:$0xff]
    %v2353 = vld [vmem:[#allocation10 + $0x110] sm:$0xff]
    %v2354 = vld [vmem:[#allocation10 + $0x118] sm:$0xff]
    %v2355 = vld [vmem:[#allocation10 + $0x120] sm:$0xff]
    %v2356 = vld [vmem:[#allocation10 + $0x128] sm:$0xff]
    %v2357 = vld [vmem:[#allocation10 + $0x130] sm:$0xff]
    %v2358 = vld [vmem:[#allocation10 + $0x138] sm:$0xff]
    %v2359 = vld [vmem:[#allocation10 + $0x140] sm:$0xff]
    %v2360 = vld [vmem:[#allocation10 + $0x148] sm:$0xff]
    %v2361 = vld [vmem:[#allocation10 + $0x150] sm:$0xff]
    %v2362 = vld [vmem:[#allocation10 + $0x158] sm:$0xff]
    %v2363 = vld [vmem:[#allocation10 + $0x160] sm:$0xff]
    %v2364 = vld [vmem:[#allocation10 + $0x168] sm:$0xff]
    %v2365 = vld [vmem:[#allocation10 + $0x170] sm:$0xff]
    %v2366 = vld [vmem:[#allocation10 + $0x178] sm:$0xff]
    %v2367 = vld [vmem:[#allocation10 + $0x180] sm:$0xff]
    %v2368 = vld [vmem:[#allocation10 + $0x188] sm:$0xff]
    %v2369 = vld [vmem:[#allocation10 + $0x190] sm:$0xff]
    %v2370 = vld [vmem:[#allocation10 + $0x198] sm:$0xff]
    %v2371 = vld [vmem:[#allocation10 + $0x1a0] sm:$0xff]
    %v2372 = vld [vmem:[#allocation10 + $0x1a8] sm:$0xff]
    %v2373 = vld [vmem:[#allocation10 + $0x1b0] sm:$0xff]
    %v2374 = vld [vmem:[#allocation10 + $0x1b8] sm:$0xff]
    %v2375 = vld [vmem:[#allocation10 + $0x1c0] sm:$0xff]
    %v2376 = vld [vmem:[#allocation10 + $0x1c8] sm:$0xff]
    %v2377 = vld [vmem:[#allocation10 + $0x1d0] sm:$0xff]
    %v2378 = vld [vmem:[#allocation10 + $0x1d8] sm:$0xff]
    %v2379 = vld [vmem:[#allocation10 + $0x1e0] sm:$0xff]
    %v2380 = vld [vmem:[#allocation10 + $0x1e8] sm:$0xff]
    %v2381 = vld [vmem:[#allocation10 + $0x1f0] sm:$0xff]
    %v2382 = vld [vmem:[#allocation10 + $0x1f8] sm:$0xff]
    %v2383 = vld [vmem:[#allocation10 + $0x200] sm:$0xff]
    %v2384 = vld [vmem:[#allocation10 + $0x208] sm:$0xff]
    %v2385 = vld [vmem:[#allocation10 + $0x210] sm:$0xff]
    %v2386 = vld [vmem:[#allocation10 + $0x218] sm:$0xff]
    %v2387 = vld [vmem:[#allocation10 + $0x220] sm:$0xff]
    %v2388 = vld [vmem:[#allocation10 + $0x228] sm:$0xff]
    %v2389 = vld [vmem:[#allocation10 + $0x230] sm:$0xff]
    %v2390 = vld [vmem:[#allocation10 + $0x238] sm:$0xff]
    %v2391 = vld [vmem:[#allocation10 + $0x240] sm:$0xff]
    %v2392 = vld [vmem:[#allocation10 + $0x248] sm:$0xff]
    %v2393 = vld [vmem:[#allocation10 + $0x250] sm:$0xff]
    %v2394 = vld [vmem:[#allocation10 + $0x258] sm:$0xff]
    %v2395 = vld [vmem:[#allocation10 + $0x260] sm:$0xff]
    %v2396 = vld [vmem:[#allocation10 + $0x268] sm:$0xff]
    %v2397 = vld [vmem:[#allocation10 + $0x270] sm:$0xff]
    %v2398 = vld [vmem:[#allocation10 + $0x278] sm:$0xff]
    %v2399 = vld [vmem:[#allocation10 + $0x280] sm:$0xff]
    %v2400 = vld [vmem:[#allocation10 + $0x288] sm:$0xff]
    %v2401 = vld [vmem:[#allocation10 + $0x290] sm:$0xff]
    %v2402 = vld [vmem:[#allocation10 + $0x298] sm:$0xff]
    %v2403 = vld [vmem:[#allocation10 + $0x2a0] sm:$0xff]
    %v2404 = vld [vmem:[#allocation10 + $0x2a8] sm:$0xff]
    %v2405 = vld [vmem:[#allocation10 + $0x2b0] sm:$0xff]
    %v2406 = vld [vmem:[#allocation10 + $0x2b8] sm:$0xff]
    %v2407 = vld [vmem:[#allocation10 + $0x2c0] sm:$0xff]
    %v2408 = vld [vmem:[#allocation10 + $0x2c8] sm:$0xff]
    %v2409 = vld [vmem:[#allocation10 + $0x2d0] sm:$0xff]
    %v2410 = vld [vmem:[#allocation10 + $0x2d8] sm:$0xff]
    %v2411 = vld [vmem:[#allocation10 + $0x2e0] sm:$0xff]
    %v2412 = vld [vmem:[#allocation10 + $0x2e8] sm:$0xff]
    %v2413 = vld [vmem:[#allocation10 + $0x2f0] sm:$0xff]
    %v2414 = vld [vmem:[#allocation10 + $0x2f8] sm:$0xff]
    %v2415 = vld [vmem:[#allocation10 + $0x300] sm:$0xff]
    %v2416 = vld [vmem:[#allocation10 + $0x308] sm:$0xff]
    %v2417 = vld [vmem:[#allocation10 + $0x310] sm:$0xff]
    %v2418 = vld [vmem:[#allocation10 + $0x318] sm:$0xff]
    %v2419 = vld [vmem:[#allocation10 + $0x320] sm:$0xff]
    %v2420 = vld [vmem:[#allocation10 + $0x328] sm:$0xff]
    %v2421 = vld [vmem:[#allocation10 + $0x330] sm:$0xff]
    %v2422 = vld [vmem:[#allocation10 + $0x338] sm:$0xff]
    %v2423 = vld [vmem:[#allocation10 + $0x340] sm:$0xff]
    %v2424 = vld [vmem:[#allocation10 + $0x348] sm:$0xff]
    %v2425 = vld [vmem:[#allocation10 + $0x350] sm:$0xff]
    %v2426 = vld [vmem:[#allocation10 + $0x358] sm:$0xff]
    %v2427 = vld [vmem:[#allocation10 + $0x360] sm:$0xff]
    %v2428 = vld [vmem:[#allocation10 + $0x368] sm:$0xff]
    %v2429 = vld [vmem:[#allocation10 + $0x370] sm:$0xff]
    %v2430 = vld [vmem:[#allocation10 + $0x378] sm:$0xff]
    %v2431 = vld [vmem:[#allocation10 + $0x380] sm:$0xff]
    %v2432 = vld [vmem:[#allocation10 + $0x388] sm:$0xff]
    %v2433 = vld [vmem:[#allocation10 + $0x390] sm:$0xff]
    %v2434 = vld [vmem:[#allocation10 + $0x398] sm:$0xff]
    %v2435 = vld [vmem:[#allocation10 + $0x3a0] sm:$0xff]
    %v2436 = vld [vmem:[#allocation10 + $0x3a8] sm:$0xff]
    %v2437 = vld [vmem:[#allocation10 + $0x3b0] sm:$0xff]
    %v2438 = vld [vmem:[#allocation10 + $0x3b8] sm:$0xff]
    %v2439 = vld [vmem:[#allocation10 + $0x3c0] sm:$0xff]
    %v2440 = vld [vmem:[#allocation10 + $0x3c8] sm:$0xff]
    %v2441 = vld [vmem:[#allocation10 + $0x3d0] sm:$0xff]
    %v2442 = vld [vmem:[#allocation10 + $0x3d8] sm:$0xff]
    %v2443 = vld [vmem:[#allocation10 + $0x3e0] sm:$0xff]
    %v2444 = vld [vmem:[#allocation10 + $0x3e8] sm:$0xff]
    %v2445 = vld [vmem:[#allocation10 + $0x3f0] sm:$0xff]
    %v2446 = vld [vmem:[#allocation10 + $0x3f8] sm:$0xff]
    %v2447 = vld [vmem:[#allocation10 + $0x400] sm:$0xff]
    %v2448 = vld [vmem:[#allocation10 + $0x408] sm:$0xff]
    %v2449 = vld [vmem:[#allocation10 + $0x410] sm:$0xff]
    %v2450 = vld [vmem:[#allocation10 + $0x418] sm:$0xff]
    %v2451 = vld [vmem:[#allocation10 + $0x420] sm:$0xff]
    %v2452 = vld [vmem:[#allocation10 + $0x428] sm:$0xff]
    %v2453 = vld [vmem:[#allocation10 + $0x430] sm:$0xff]
    %v2454 = vld [vmem:[#allocation10 + $0x438] sm:$0xff]
    %v2455 = vld [vmem:[#allocation10 + $0x440] sm:$0xff]
    %v2456 = vld [vmem:[#allocation10 + $0x448] sm:$0xff]
    %v2457 = vld [vmem:[#allocation10 + $0x450] sm:$0xff]
    %v2458 = vld [vmem:[#allocation10 + $0x458] sm:$0xff]
    %v2459 = vld [vmem:[#allocation10 + $0x460] sm:$0xff]
    %v2460 = vld [vmem:[#allocation10 + $0x468] sm:$0xff]
    %v2461 = vld [vmem:[#allocation10 + $0x470] sm:$0xff]
    %v2462 = vld [vmem:[#allocation10 + $0x478] sm:$0xff]
    %v2463 = vld [vmem:[#allocation10 + $0x480] sm:$0xff]
    %v2464 = vld [vmem:[#allocation10 + $0x488] sm:$0xff]
    %v2465 = vld [vmem:[#allocation10 + $0x490] sm:$0xff]
    %v2466 = vld [vmem:[#allocation10 + $0x498] sm:$0xff]
    %v2467 = vld [vmem:[#allocation10 + $0x4a0] sm:$0xff]
    %v2468 = vld [vmem:[#allocation10 + $0x4a8] sm:$0xff]
    %v2469 = vld [vmem:[#allocation10 + $0x4b0] sm:$0xff]
    %v2470 = vld [vmem:[#allocation10 + $0x4b8] sm:$0xff]
    %v2471 = vld [vmem:[#allocation10 + $0x4c0] sm:$0xff]
    %v2472 = vld [vmem:[#allocation10 + $0x4c8] sm:$0xff]
    %v2473 = vld [vmem:[#allocation10 + $0x4d0] sm:$0xff]
    %v2474 = vld [vmem:[#allocation10 + $0x4d8] sm:$0xff]
    %v2475 = vld [vmem:[#allocation10 + $0x4e0] sm:$0xff]
    %v2476 = vld [vmem:[#allocation10 + $0x4e8] sm:$0xff]
    %v2477 = vld [vmem:[#allocation10 + $0x4f0] sm:$0xff]
    %v2478 = vld [vmem:[#allocation10 + $0x4f8] sm:$0xff]
    %v2479 = vld [vmem:[#allocation10 + $0x500] sm:$0xff]
    %v2480 = vld [vmem:[#allocation10 + $0x508] sm:$0xff]
    %v2481 = vld [vmem:[#allocation10 + $0x510] sm:$0xff]
    %v2482 = vld [vmem:[#allocation10 + $0x518] sm:$0xff]
    %v2483 = vld [vmem:[#allocation10 + $0x520] sm:$0xff]
    %v2484 = vld [vmem:[#allocation10 + $0x528] sm:$0xff]
    %v2485 = vld [vmem:[#allocation10 + $0x530] sm:$0xff]
    %v2486 = vld [vmem:[#allocation10 + $0x538] sm:$0xff]
    %v2487 = vld [vmem:[#allocation10 + $0x540] sm:$0xff]
    %v2488 = vld [vmem:[#allocation10 + $0x548] sm:$0xff]
    %v2489 = vld [vmem:[#allocation10 + $0x550] sm:$0xff]
    %v2490 = vld [vmem:[#allocation10 + $0x558] sm:$0xff]
    %v2491 = vld [vmem:[#allocation10 + $0x560] sm:$0xff]
    %v2492 = vld [vmem:[#allocation10 + $0x568] sm:$0xff]
    %v2493 = vld [vmem:[#allocation10 + $0x570] sm:$0xff]
    %v2494 = vld [vmem:[#allocation10 + $0x578] sm:$0xff]
    %v2495 = vld [vmem:[#allocation10 + $0x580] sm:$0xff]
    %v2496 = vld [vmem:[#allocation10 + $0x588] sm:$0xff]
    %v2497 = vld [vmem:[#allocation10 + $0x590] sm:$0xff]
    %v2498 = vld [vmem:[#allocation10 + $0x598] sm:$0xff]
    %v2499 = vld [vmem:[#allocation10 + $0x5a0] sm:$0xff]
    %v2500 = vld [vmem:[#allocation10 + $0x5a8] sm:$0xff]
    %v2501 = vld [vmem:[#allocation10 + $0x5b0] sm:$0xff]
    %v2502 = vld [vmem:[#allocation10 + $0x5b8] sm:$0xff]
    %v2503 = vld [vmem:[#allocation10 + $0x5c0] sm:$0xff]
    %v2504 = vld [vmem:[#allocation10 + $0x5c8] sm:$0xff]
    %v2505 = vld [vmem:[#allocation10 + $0x5d0] sm:$0xff]
    %v2506 = vld [vmem:[#allocation10 + $0x5d8] sm:$0xff]
    %v2507 = vld [vmem:[#allocation10 + $0x5e0] sm:$0xff]
    %v2508 = vld [vmem:[#allocation10 + $0x5e8] sm:$0xff]
    %v2509 = vld [vmem:[#allocation10 + $0x5f0] sm:$0xff]
    %v2510 = vld [vmem:[#allocation10 + $0x5f8] sm:$0xff]
    %v2511 = vld [vmem:[#allocation10 + $0x600] sm:$0xff]
    %v2512 = vld [vmem:[#allocation10 + $0x608] sm:$0xff]
    %v2513 = vld [vmem:[#allocation10 + $0x610] sm:$0xff]
    %v2514 = vld [vmem:[#allocation10 + $0x618] sm:$0xff]
    %v2515 = vld [vmem:[#allocation10 + $0x620] sm:$0xff]
    %v2516 = vld [vmem:[#allocation10 + $0x628] sm:$0xff]
    %v2517 = vld [vmem:[#allocation10 + $0x630] sm:$0xff]
    %v2518 = vld [vmem:[#allocation10 + $0x638] sm:$0xff]
    %v2519 = vld [vmem:[#allocation10 + $0x640] sm:$0xff]
    %v2520 = vld [vmem:[#allocation10 + $0x648] sm:$0xff]
    %v2521 = vld [vmem:[#allocation10 + $0x650] sm:$0xff]
    %v2522 = vld [vmem:[#allocation10 + $0x658] sm:$0xff]
    %v2523 = vld [vmem:[#allocation10 + $0x660] sm:$0xff]
    %v2524 = vld [vmem:[#allocation10 + $0x668] sm:$0xff]
    %v2525 = vld [vmem:[#allocation10 + $0x670] sm:$0xff]
    %v2526 = vld [vmem:[#allocation10 + $0x678] sm:$0xff]
    %v2527 = vld [vmem:[#allocation10 + $0x680] sm:$0xff]
    %v2528 = vld [vmem:[#allocation10 + $0x688] sm:$0xff]
    %v2529 = vld [vmem:[#allocation10 + $0x690] sm:$0xff]
    %v2530 = vld [vmem:[#allocation10 + $0x698] sm:$0xff]
    %v2531 = vld [vmem:[#allocation10 + $0x6a0] sm:$0xff]
    %v2532 = vld [vmem:[#allocation10 + $0x6a8] sm:$0xff]
    %v2533 = vld [vmem:[#allocation10 + $0x6b0] sm:$0xff]
    %v2534 = vld [vmem:[#allocation10 + $0x6b8] sm:$0xff]
    %v2535 = vld [vmem:[#allocation10 + $0x6c0] sm:$0xff]
    %v2536 = vld [vmem:[#allocation10 + $0x6c8] sm:$0xff]
    %v2537 = vld [vmem:[#allocation10 + $0x6d0] sm:$0xff]
    %v2538 = vld [vmem:[#allocation10 + $0x6d8] sm:$0xff]
    %v2539 = vld [vmem:[#allocation10 + $0x6e0] sm:$0xff]
    %v2540 = vld [vmem:[#allocation10 + $0x6e8] sm:$0xff]
    %v2541 = vld [vmem:[#allocation10 + $0x6f0] sm:$0xff]
    %v2542 = vld [vmem:[#allocation10 + $0x6f8] sm:$0xff]
    %v2543 = vld [vmem:[#allocation10 + $0x700] sm:$0xff]
    %v2544 = vld [vmem:[#allocation10 + $0x708] sm:$0xff]
    %v2545 = vld [vmem:[#allocation10 + $0x710] sm:$0xff]
    %v2546 = vld [vmem:[#allocation10 + $0x718] sm:$0xff]
    %v2547 = vld [vmem:[#allocation10 + $0x720] sm:$0xff]
    %v2548 = vld [vmem:[#allocation10 + $0x728] sm:$0xff]
    %v2549 = vld [vmem:[#allocation10 + $0x730] sm:$0xff]
    %v2550 = vld [vmem:[#allocation10 + $0x738] sm:$0xff]
    %v2551 = vld [vmem:[#allocation10 + $0x740] sm:$0xff]
    %v2552 = vld [vmem:[#allocation10 + $0x748] sm:$0xff]
    %v2553 = vld [vmem:[#allocation10 + $0x750] sm:$0xff]
    %v2554 = vld [vmem:[#allocation10 + $0x758] sm:$0xff]
    %v2555 = vld [vmem:[#allocation10 + $0x760] sm:$0xff]
    %v2556 = vld [vmem:[#allocation10 + $0x768] sm:$0xff]
    %v2557 = vld [vmem:[#allocation10 + $0x770] sm:$0xff]
    %v2558 = vld [vmem:[#allocation10 + $0x778] sm:$0xff]
    %v2559 = vld [vmem:[#allocation10 + $0x780] sm:$0xff]
    %v2560 = vld [vmem:[#allocation10 + $0x788] sm:$0xff]
    %v2561 = vld [vmem:[#allocation10 + $0x790] sm:$0xff]
    %v2562 = vld [vmem:[#allocation10 + $0x798] sm:$0xff]
    %v2563 = vld [vmem:[#allocation10 + $0x7a0] sm:$0xff]
    %v2564 = vld [vmem:[#allocation10 + $0x7a8] sm:$0xff]
    %v2565 = vld [vmem:[#allocation10 + $0x7b0] sm:$0xff]
    %v2566 = vld [vmem:[#allocation10 + $0x7b8] sm:$0xff]
    %v2567 = vld [vmem:[#allocation10 + $0x7c0] sm:$0xff]
    %v2568 = vld [vmem:[#allocation10 + $0x7c8] sm:$0xff]
    %v2569 = vld [vmem:[#allocation10 + $0x7d0] sm:$0xff]
    %v2570 = vld [vmem:[#allocation10 + $0x7d8] sm:$0xff]
    %v2571 = vld [vmem:[#allocation10 + $0x7e0] sm:$0xff]
    %v2572 = vld [vmem:[#allocation10 + $0x7e8] sm:$0xff]
    %v2573 = vld [vmem:[#allocation10 + $0x7f0] sm:$0xff]
    %v2574 = vld [vmem:[#allocation10 + $0x7f8] sm:$0xff]
    %v2831 = vunpack.c.l.b16 %v2319
    %v2832 = vunpack.c.h.b16 %v2319
    %v2833 = vunpack.c.l.b16 %v2320
    %v2834 = vunpack.c.h.b16 %v2320
    %v2835 = vunpack.c.l.b16 %v2321
    %v2836 = vunpack.c.h.b16 %v2321
    %v2837 = vunpack.c.l.b16 %v2322
    %v2838 = vunpack.c.h.b16 %v2322
    %v2839 = vunpack.c.l.b16 %v2323
    %v2840 = vunpack.c.h.b16 %v2323
    %v2841 = vunpack.c.l.b16 %v2324
    %v2842 = vunpack.c.h.b16 %v2324
    %v2843 = vunpack.c.l.b16 %v2325
    %v2844 = vunpack.c.h.b16 %v2325
    %v2845 = vunpack.c.l.b16 %v2326
    %v2846 = vunpack.c.h.b16 %v2326
    %v2847 = vunpack.c.l.b16 %v2327
    %v2848 = vunpack.c.h.b16 %v2327
    %v2849 = vunpack.c.l.b16 %v2328
    %v2850 = vunpack.c.h.b16 %v2328
    %v2851 = vunpack.c.l.b16 %v2329
    %v2852 = vunpack.c.h.b16 %v2329
    %v2853 = vunpack.c.l.b16 %v2330
    %v2854 = vunpack.c.h.b16 %v2330
    %v2855 = vunpack.c.l.b16 %v2331
    %v2856 = vunpack.c.h.b16 %v2331
    %v2857 = vunpack.c.l.b16 %v2332
    %v2858 = vunpack.c.h.b16 %v2332
    %v2859 = vunpack.c.l.b16 %v2333
    %v2860 = vunpack.c.h.b16 %v2333
    %v2861 = vunpack.c.l.b16 %v2334
    %v2862 = vunpack.c.h.b16 %v2334
    %v2863 = vunpack.c.l.b16 %v2335
    %v2864 = vunpack.c.h.b16 %v2335
    %v2865 = vunpack.c.l.b16 %v2336
    %v2866 = vunpack.c.h.b16 %v2336
    %v2867 = vunpack.c.l.b16 %v2337
    %v2868 = vunpack.c.h.b16 %v2337
    %v2869 = vunpack.c.l.b16 %v2338
    %v2870 = vunpack.c.h.b16 %v2338
    %v2871 = vunpack.c.l.b16 %v2339
    %v2872 = vunpack.c.h.b16 %v2339
    %v2873 = vunpack.c.l.b16 %v2340
    %v2874 = vunpack.c.h.b16 %v2340
    %v2875 = vunpack.c.l.b16 %v2341
    %v2876 = vunpack.c.h.b16 %v2341
    %v2877 = vunpack.c.l.b16 %v2342
    %v2878 = vunpack.c.h.b16 %v2342
    %v2879 = vunpack.c.l.b16 %v2343
    %v2880 = vunpack.c.h.b16 %v2343
    %v2881 = vunpack.c.l.b16 %v2344
    %v2882 = vunpack.c.h.b16 %v2344
    %v2883 = vunpack.c.l.b16 %v2345
    %v2884 = vunpack.c.h.b16 %v2345
    %v2885 = vunpack.c.l.b16 %v2346
    %v2886 = vunpack.c.h.b16 %v2346
    %v2887 = vunpack.c.l.b16 %v2347
    %v2888 = vunpack.c.h.b16 %v2347
    %v2889 = vunpack.c.l.b16 %v2348
    %v2890 = vunpack.c.h.b16 %v2348
    %v2891 = vunpack.c.l.b16 %v2349
    %v2892 = vunpack.c.h.b16 %v2349
    %v2893 = vunpack.c.l.b16 %v2350
    %v2894 = vunpack.c.h.b16 %v2350
    %v2895 = vunpack.c.l.b16 %v2351
    %v2896 = vunpack.c.h.b16 %v2351
    %v2897 = vunpack.c.l.b16 %v2352
    %v2898 = vunpack.c.h.b16 %v2352
    %v2899 = vunpack.c.l.b16 %v2353
    %v2900 = vunpack.c.h.b16 %v2353
    %v2901 = vunpack.c.l.b16 %v2354
    %v2902 = vunpack.c.h.b16 %v2354
    %v2903 = vunpack.c.l.b16 %v2355
    %v2904 = vunpack.c.h.b16 %v2355
    %v2905 = vunpack.c.l.b16 %v2356
    %v2906 = vunpack.c.h.b16 %v2356
    %v2907 = vunpack.c.l.b16 %v2357
    %v2908 = vunpack.c.h.b16 %v2357
    %v2909 = vunpack.c.l.b16 %v2358
    %v2910 = vunpack.c.h.b16 %v2358
    %v2911 = vunpack.c.l.b16 %v2359
    %v2912 = vunpack.c.h.b16 %v2359
    %v2913 = vunpack.c.l.b16 %v2360
    %v2914 = vunpack.c.h.b16 %v2360
    %v2915 = vunpack.c.l.b16 %v2361
    %v2916 = vunpack.c.h.b16 %v2361
    %v2917 = vunpack.c.l.b16 %v2362
    %v2918 = vunpack.c.h.b16 %v2362
    %v2919 = vunpack.c.l.b16 %v2363
    %v2920 = vunpack.c.h.b16 %v2363
    %v2921 = vunpack.c.l.b16 %v2364
    %v2922 = vunpack.c.h.b16 %v2364
    %v2923 = vunpack.c.l.b16 %v2365
    %v2924 = vunpack.c.h.b16 %v2365
    %v2925 = vunpack.c.l.b16 %v2366
    %v2926 = vunpack.c.h.b16 %v2366
    %v2927 = vunpack.c.l.b16 %v2367
    %v2928 = vunpack.c.h.b16 %v2367
    %v2929 = vunpack.c.l.b16 %v2368
    %v2930 = vunpack.c.h.b16 %v2368
    %v2931 = vunpack.c.l.b16 %v2369
    %v2932 = vunpack.c.h.b16 %v2369
    %v2933 = vunpack.c.l.b16 %v2370
    %v2934 = vunpack.c.h.b16 %v2370
    %v2935 = vunpack.c.l.b16 %v2371
    %v2936 = vunpack.c.h.b16 %v2371
    %v2937 = vunpack.c.l.b16 %v2372
    %v2938 = vunpack.c.h.b16 %v2372
    %v2939 = vunpack.c.l.b16 %v2373
    %v2940 = vunpack.c.h.b16 %v2373
    %v2941 = vunpack.c.l.b16 %v2374
    %v2942 = vunpack.c.h.b16 %v2374
    %v2943 = vunpack.c.l.b16 %v2375
    %v2944 = vunpack.c.h.b16 %v2375
    %v2945 = vunpack.c.l.b16 %v2376
    %v2946 = vunpack.c.h.b16 %v2376
    %v2947 = vunpack.c.l.b16 %v2377
    %v2948 = vunpack.c.h.b16 %v2377
    %v2949 = vunpack.c.l.b16 %v2378
    %v2950 = vunpack.c.h.b16 %v2378
    %v2951 = vunpack.c.l.b16 %v2379
    %v2952 = vunpack.c.h.b16 %v2379
    %v2953 = vunpack.c.l.b16 %v2380
    %v2954 = vunpack.c.h.b16 %v2380
    %v2955 = vunpack.c.l.b16 %v2381
    %v2956 = vunpack.c.h.b16 %v2381
    %v2957 = vunpack.c.l.b16 %v2382
    %v2958 = vunpack.c.h.b16 %v2382
    %v2959 = vunpack.c.l.b16 %v2383
    %v2960 = vunpack.c.h.b16 %v2383
    %v2961 = vunpack.c.l.b16 %v2384
    %v2962 = vunpack.c.h.b16 %v2384
    %v2963 = vunpack.c.l.b16 %v2385
    %v2964 = vunpack.c.h.b16 %v2385
    %v2965 = vunpack.c.l.b16 %v2386
    %v2966 = vunpack.c.h.b16 %v2386
    %v2967 = vunpack.c.l.b16 %v2387
    %v2968 = vunpack.c.h.b16 %v2387
    %v2969 = vunpack.c.l.b16 %v2388
    %v2970 = vunpack.c.h.b16 %v2388
    %v2971 = vunpack.c.l.b16 %v2389
    %v2972 = vunpack.c.h.b16 %v2389
    %v2973 = vunpack.c.l.b16 %v2390
    %v2974 = vunpack.c.h.b16 %v2390
    %v2975 = vunpack.c.l.b16 %v2391
    %v2976 = vunpack.c.h.b16 %v2391
    %v2977 = vunpack.c.l.b16 %v2392
    %v2978 = vunpack.c.h.b16 %v2392
    %v2979 = vunpack.c.l.b16 %v2393
    %v2980 = vunpack.c.h.b16 %v2393
    %v2981 = vunpack.c.l.b16 %v2394
    %v2982 = vunpack.c.h.b16 %v2394
    %v2983 = vunpack.c.l.b16 %v2395
    %v2984 = vunpack.c.h.b16 %v2395
    %v2985 = vunpack.c.l.b16 %v2396
    %v2986 = vunpack.c.h.b16 %v2396
    %v2987 = vunpack.c.l.b16 %v2397
    %v2988 = vunpack.c.h.b16 %v2397
    %v2989 = vunpack.c.l.b16 %v2398
    %v2990 = vunpack.c.h.b16 %v2398
    %v2991 = vunpack.c.l.b16 %v2399
    %v2992 = vunpack.c.h.b16 %v2399
    %v2993 = vunpack.c.l.b16 %v2400
    %v2994 = vunpack.c.h.b16 %v2400
    %v2995 = vunpack.c.l.b16 %v2401
    %v2996 = vunpack.c.h.b16 %v2401
    %v2997 = vunpack.c.l.b16 %v2402
    %v2998 = vunpack.c.h.b16 %v2402
    %v2999 = vunpack.c.l.b16 %v2403
    %v3000 = vunpack.c.h.b16 %v2403
    %v3001 = vunpack.c.l.b16 %v2404
    %v3002 = vunpack.c.h.b16 %v2404
    %v3003 = vunpack.c.l.b16 %v2405
    %v3004 = vunpack.c.h.b16 %v2405
    %v3005 = vunpack.c.l.b16 %v2406
    %v3006 = vunpack.c.h.b16 %v2406
    %v3007 = vunpack.c.l.b16 %v2407
    %v3008 = vunpack.c.h.b16 %v2407
    %v3009 = vunpack.c.l.b16 %v2408
    %v3010 = vunpack.c.h.b16 %v2408
    %v3011 = vunpack.c.l.b16 %v2409
    %v3012 = vunpack.c.h.b16 %v2409
    %v3013 = vunpack.c.l.b16 %v2410
    %v3014 = vunpack.c.h.b16 %v2410
    %v3015 = vunpack.c.l.b16 %v2411
    %v3016 = vunpack.c.h.b16 %v2411
    %v3017 = vunpack.c.l.b16 %v2412
    %v3018 = vunpack.c.h.b16 %v2412
    %v3019 = vunpack.c.l.b16 %v2413
    %v3020 = vunpack.c.h.b16 %v2413
    %v3021 = vunpack.c.l.b16 %v2414
    %v3022 = vunpack.c.h.b16 %v2414
    %v3023 = vunpack.c.l.b16 %v2415
    %v3024 = vunpack.c.h.b16 %v2415
    %v3025 = vunpack.c.l.b16 %v2416
    %v3026 = vunpack.c.h.b16 %v2416
    %v3027 = vunpack.c.l.b16 %v2417
    %v3028 = vunpack.c.h.b16 %v2417
    %v3029 = vunpack.c.l.b16 %v2418
    %v3030 = vunpack.c.h.b16 %v2418
    %v3031 = vunpack.c.l.b16 %v2419
    %v3032 = vunpack.c.h.b16 %v2419
    %v3033 = vunpack.c.l.b16 %v2420
    %v3034 = vunpack.c.h.b16 %v2420
    %v3035 = vunpack.c.l.b16 %v2421
    %v3036 = vunpack.c.h.b16 %v2421
    %v3037 = vunpack.c.l.b16 %v2422
    %v3038 = vunpack.c.h.b16 %v2422
    %v3039 = vunpack.c.l.b16 %v2423
    %v3040 = vunpack.c.h.b16 %v2423
    %v3041 = vunpack.c.l.b16 %v2424
    %v3042 = vunpack.c.h.b16 %v2424
    %v3043 = vunpack.c.l.b16 %v2425
    %v3044 = vunpack.c.h.b16 %v2425
    %v3045 = vunpack.c.l.b16 %v2426
    %v3046 = vunpack.c.h.b16 %v2426
    %v3047 = vunpack.c.l.b16 %v2427
    %v3048 = vunpack.c.h.b16 %v2427
    %v3049 = vunpack.c.l.b16 %v2428
    %v3050 = vunpack.c.h.b16 %v2428
    %v3051 = vunpack.c.l.b16 %v2429
    %v3052 = vunpack.c.h.b16 %v2429
    %v3053 = vunpack.c.l.b16 %v2430
    %v3054 = vunpack.c.h.b16 %v2430
    %v3055 = vunpack.c.l.b16 %v2431
    %v3056 = vunpack.c.h.b16 %v2431
    %v3057 = vunpack.c.l.b16 %v2432
    %v3058 = vunpack.c.h.b16 %v2432
    %v3059 = vunpack.c.l.b16 %v2433
    %v3060 = vunpack.c.h.b16 %v2433
    %v3061 = vunpack.c.l.b16 %v2434
    %v3062 = vunpack.c.h.b16 %v2434
    %v3063 = vunpack.c.l.b16 %v2435
    %v3064 = vunpack.c.h.b16 %v2435
    %v3065 = vunpack.c.l.b16 %v2436
    %v3066 = vunpack.c.h.b16 %v2436
    %v3067 = vunpack.c.l.b16 %v2437
    %v3068 = vunpack.c.h.b16 %v2437
    %v3069 = vunpack.c.l.b16 %v2438
    %v3070 = vunpack.c.h.b16 %v2438
    %v3071 = vunpack.c.l.b16 %v2439
    %v3072 = vunpack.c.h.b16 %v2439
    %v3073 = vunpack.c.l.b16 %v2440
    %v3074 = vunpack.c.h.b16 %v2440
    %v3075 = vunpack.c.l.b16 %v2441
    %v3076 = vunpack.c.h.b16 %v2441
    %v3077 = vunpack.c.l.b16 %v2442
    %v3078 = vunpack.c.h.b16 %v2442
    %v3079 = vunpack.c.l.b16 %v2443
    %v3080 = vunpack.c.h.b16 %v2443
    %v3081 = vunpack.c.l.b16 %v2444
    %v3082 = vunpack.c.h.b16 %v2444
    %v3083 = vunpack.c.l.b16 %v2445
    %v3084 = vunpack.c.h.b16 %v2445
    %v3085 = vunpack.c.l.b16 %v2446
    %v3086 = vunpack.c.h.b16 %v2446
    %v3087 = vunpack.c.l.b16 %v2447
    %v3088 = vunpack.c.h.b16 %v2447
    %v3089 = vunpack.c.l.b16 %v2448
    %v3090 = vunpack.c.h.b16 %v2448
    %v3091 = vunpack.c.l.b16 %v2449
    %v3092 = vunpack.c.h.b16 %v2449
    %v3093 = vunpack.c.l.b16 %v2450
    %v3094 = vunpack.c.h.b16 %v2450
    %v3095 = vunpack.c.l.b16 %v2451
    %v3096 = vunpack.c.h.b16 %v2451
    %v3097 = vunpack.c.l.b16 %v2452
    %v3098 = vunpack.c.h.b16 %v2452
    %v3099 = vunpack.c.l.b16 %v2453
    %v3100 = vunpack.c.h.b16 %v2453
    %v3101 = vunpack.c.l.b16 %v2454
    %v3102 = vunpack.c.h.b16 %v2454
    %v3103 = vunpack.c.l.b16 %v2455
    %v3104 = vunpack.c.h.b16 %v2455
    %v3105 = vunpack.c.l.b16 %v2456
    %v3106 = vunpack.c.h.b16 %v2456
    %v3107 = vunpack.c.l.b16 %v2457
    %v3108 = vunpack.c.h.b16 %v2457
    %v3109 = vunpack.c.l.b16 %v2458
    %v3110 = vunpack.c.h.b16 %v2458
    %v3111 = vunpack.c.l.b16 %v2459
    %v3112 = vunpack.c.h.b16 %v2459
    %v3113 = vunpack.c.l.b16 %v2460
    %v3114 = vunpack.c.h.b16 %v2460
    %v3115 = vunpack.c.l.b16 %v2461
    %v3116 = vunpack.c.h.b16 %v2461
    %v3117 = vunpack.c.l.b16 %v2462
    %v3118 = vunpack.c.h.b16 %v2462
    %v3119 = vunpack.c.l.b16 %v2463
    %v3120 = vunpack.c.h.b16 %v2463
    %v3121 = vunpack.c.l.b16 %v2464
    %v3122 = vunpack.c.h.b16 %v2464
    %v3123 = vunpack.c.l.b16 %v2465
    %v3124 = vunpack.c.h.b16 %v2465
    %v3125 = vunpack.c.l.b16 %v2466
    %v3126 = vunpack.c.h.b16 %v2466
    %v3127 = vunpack.c.l.b16 %v2467
    %v3128 = vunpack.c.h.b16 %v2467
    %v3129 = vunpack.c.l.b16 %v2468
    %v3130 = vunpack.c.h.b16 %v2468
    %v3131 = vunpack.c.l.b16 %v2469
    %v3132 = vunpack.c.h.b16 %v2469
    %v3133 = vunpack.c.l.b16 %v2470
    %v3134 = vunpack.c.h.b16 %v2470
    %v3135 = vunpack.c.l.b16 %v2471
    %v3136 = vunpack.c.h.b16 %v2471
    %v3137 = vunpack.c.l.b16 %v2472
    %v3138 = vunpack.c.h.b16 %v2472
    %v3139 = vunpack.c.l.b16 %v2473
    %v3140 = vunpack.c.h.b16 %v2473
    %v3141 = vunpack.c.l.b16 %v2474
    %v3142 = vunpack.c.h.b16 %v2474
    %v3143 = vunpack.c.l.b16 %v2475
    %v3144 = vunpack.c.h.b16 %v2475
    %v3145 = vunpack.c.l.b16 %v2476
    %v3146 = vunpack.c.h.b16 %v2476
    %v3147 = vunpack.c.l.b16 %v2477
    %v3148 = vunpack.c.h.b16 %v2477
    %v3149 = vunpack.c.l.b16 %v2478
    %v3150 = vunpack.c.h.b16 %v2478
    %v3151 = vunpack.c.l.b16 %v2479
    %v3152 = vunpack.c.h.b16 %v2479
    %v3153 = vunpack.c.l.b16 %v2480
    %v3154 = vunpack.c.h.b16 %v2480
    %v3155 = vunpack.c.l.b16 %v2481
    %v3156 = vunpack.c.h.b16 %v2481
    %v3157 = vunpack.c.l.b16 %v2482
    %v3158 = vunpack.c.h.b16 %v2482
    %v3159 = vunpack.c.l.b16 %v2483
    %v3160 = vunpack.c.h.b16 %v2483
    %v3161 = vunpack.c.l.b16 %v2484
    %v3162 = vunpack.c.h.b16 %v2484
    %v3163 = vunpack.c.l.b16 %v2485
    %v3164 = vunpack.c.h.b16 %v2485
    %v3165 = vunpack.c.l.b16 %v2486
    %v3166 = vunpack.c.h.b16 %v2486
    %v3167 = vunpack.c.l.b16 %v2487
    %v3168 = vunpack.c.h.b16 %v2487
    %v3169 = vunpack.c.l.b16 %v2488
    %v3170 = vunpack.c.h.b16 %v2488
    %v3171 = vunpack.c.l.b16 %v2489
    %v3172 = vunpack.c.h.b16 %v2489
    %v3173 = vunpack.c.l.b16 %v2490
    %v3174 = vunpack.c.h.b16 %v2490
    %v3175 = vunpack.c.l.b16 %v2491
    %v3176 = vunpack.c.h.b16 %v2491
    %v3177 = vunpack.c.l.b16 %v2492
    %v3178 = vunpack.c.h.b16 %v2492
    %v3179 = vunpack.c.l.b16 %v2493
    %v3180 = vunpack.c.h.b16 %v2493
    %v3181 = vunpack.c.l.b16 %v2494
    %v3182 = vunpack.c.h.b16 %v2494
    %v3183 = vunpack.c.l.b16 %v2495
    %v3184 = vunpack.c.h.b16 %v2495
    %v3185 = vunpack.c.l.b16 %v2496
    %v3186 = vunpack.c.h.b16 %v2496
    %v3187 = vunpack.c.l.b16 %v2497
    %v3188 = vunpack.c.h.b16 %v2497
    %v3189 = vunpack.c.l.b16 %v2498
    %v3190 = vunpack.c.h.b16 %v2498
    %v3191 = vunpack.c.l.b16 %v2499
    %v3192 = vunpack.c.h.b16 %v2499
    %v3193 = vunpack.c.l.b16 %v2500
    %v3194 = vunpack.c.h.b16 %v2500
    %v3195 = vunpack.c.l.b16 %v2501
    %v3196 = vunpack.c.h.b16 %v2501
    %v3197 = vunpack.c.l.b16 %v2502
    %v3198 = vunpack.c.h.b16 %v2502
    %v3199 = vunpack.c.l.b16 %v2503
    %v3200 = vunpack.c.h.b16 %v2503
    %v3201 = vunpack.c.l.b16 %v2504
    %v3202 = vunpack.c.h.b16 %v2504
    %v3203 = vunpack.c.l.b16 %v2505
    %v3204 = vunpack.c.h.b16 %v2505
    %v3205 = vunpack.c.l.b16 %v2506
    %v3206 = vunpack.c.h.b16 %v2506
    %v3207 = vunpack.c.l.b16 %v2507
    %v3208 = vunpack.c.h.b16 %v2507
    %v3209 = vunpack.c.l.b16 %v2508
    %v3210 = vunpack.c.h.b16 %v2508
    %v3211 = vunpack.c.l.b16 %v2509
    %v3212 = vunpack.c.h.b16 %v2509
    %v3213 = vunpack.c.l.b16 %v2510
    %v3214 = vunpack.c.h.b16 %v2510
    %v3215 = vunpack.c.l.b16 %v2511
    %v3216 = vunpack.c.h.b16 %v2511
    %v3217 = vunpack.c.l.b16 %v2512
    %v3218 = vunpack.c.h.b16 %v2512
    %v3219 = vunpack.c.l.b16 %v2513
    %v3220 = vunpack.c.h.b16 %v2513
    %v3221 = vunpack.c.l.b16 %v2514
    %v3222 = vunpack.c.h.b16 %v2514
    %v3223 = vunpack.c.l.b16 %v2515
    %v3224 = vunpack.c.h.b16 %v2515
    %v3225 = vunpack.c.l.b16 %v2516
    %v3226 = vunpack.c.h.b16 %v2516
    %v3227 = vunpack.c.l.b16 %v2517
    %v3228 = vunpack.c.h.b16 %v2517
    %v3229 = vunpack.c.l.b16 %v2518
    %v3230 = vunpack.c.h.b16 %v2518
    %v3231 = vunpack.c.l.b16 %v2519
    %v3232 = vunpack.c.h.b16 %v2519
    %v3233 = vunpack.c.l.b16 %v2520
    %v3234 = vunpack.c.h.b16 %v2520
    %v3235 = vunpack.c.l.b16 %v2521
    %v3236 = vunpack.c.h.b16 %v2521
    %v3237 = vunpack.c.l.b16 %v2522
    %v3238 = vunpack.c.h.b16 %v2522
    %v3239 = vunpack.c.l.b16 %v2523
    %v3240 = vunpack.c.h.b16 %v2523
    %v3241 = vunpack.c.l.b16 %v2524
    %v3242 = vunpack.c.h.b16 %v2524
    %v3243 = vunpack.c.l.b16 %v2525
    %v3244 = vunpack.c.h.b16 %v2525
    %v3245 = vunpack.c.l.b16 %v2526
    %v3246 = vunpack.c.h.b16 %v2526
    %v3247 = vunpack.c.l.b16 %v2527
    %v3248 = vunpack.c.h.b16 %v2527
    %v3249 = vunpack.c.l.b16 %v2528
    %v3250 = vunpack.c.h.b16 %v2528
    %v3251 = vunpack.c.l.b16 %v2529
    %v3252 = vunpack.c.h.b16 %v2529
    %v3253 = vunpack.c.l.b16 %v2530
    %v3254 = vunpack.c.h.b16 %v2530
    %v3255 = vunpack.c.l.b16 %v2531
    %v3256 = vunpack.c.h.b16 %v2531
    %v3257 = vunpack.c.l.b16 %v2532
    %v3258 = vunpack.c.h.b16 %v2532
    %v3259 = vunpack.c.l.b16 %v2533
    %v3260 = vunpack.c.h.b16 %v2533
    %v3261 = vunpack.c.l.b16 %v2534
    %v3262 = vunpack.c.h.b16 %v2534
    %v3263 = vunpack.c.l.b16 %v2535
    %v3264 = vunpack.c.h.b16 %v2535
    %v3265 = vunpack.c.l.b16 %v2536
    %v3266 = vunpack.c.h.b16 %v2536
    %v3267 = vunpack.c.l.b16 %v2537
    %v3268 = vunpack.c.h.b16 %v2537
    %v3269 = vunpack.c.l.b16 %v2538
    %v3270 = vunpack.c.h.b16 %v2538
    %v3271 = vunpack.c.l.b16 %v2539
    %v3272 = vunpack.c.h.b16 %v2539
    %v3273 = vunpack.c.l.b16 %v2540
    %v3274 = vunpack.c.h.b16 %v2540
    %v3275 = vunpack.c.l.b16 %v2541
    %v3276 = vunpack.c.h.b16 %v2541
    %v3277 = vunpack.c.l.b16 %v2542
    %v3278 = vunpack.c.h.b16 %v2542
    %v3279 = vunpack.c.l.b16 %v2543
    %v3280 = vunpack.c.h.b16 %v2543
    %v3281 = vunpack.c.l.b16 %v2544
    %v3282 = vunpack.c.h.b16 %v2544
    %v3283 = vunpack.c.l.b16 %v2545
    %v3284 = vunpack.c.h.b16 %v2545
    %v3285 = vunpack.c.l.b16 %v2546
    %v3286 = vunpack.c.h.b16 %v2546
    %v3287 = vunpack.c.l.b16 %v2547
    %v3288 = vunpack.c.h.b16 %v2547
    %v3289 = vunpack.c.l.b16 %v2548
    %v3290 = vunpack.c.h.b16 %v2548
    %v3291 = vunpack.c.l.b16 %v2549
    %v3292 = vunpack.c.h.b16 %v2549
    %v3293 = vunpack.c.l.b16 %v2550
    %v3294 = vunpack.c.h.b16 %v2550
    %v3295 = vunpack.c.l.b16 %v2551
    %v3296 = vunpack.c.h.b16 %v2551
    %v3297 = vunpack.c.l.b16 %v2552
    %v3298 = vunpack.c.h.b16 %v2552
    %v3299 = vunpack.c.l.b16 %v2553
    %v3300 = vunpack.c.h.b16 %v2553
    %v3301 = vunpack.c.l.b16 %v2554
    %v3302 = vunpack.c.h.b16 %v2554
    %v3303 = vunpack.c.l.b16 %v2555
    %v3304 = vunpack.c.h.b16 %v2555
    %v3305 = vunpack.c.l.b16 %v2556
    %v3306 = vunpack.c.h.b16 %v2556
    %v3307 = vunpack.c.l.b16 %v2557
    %v3308 = vunpack.c.h.b16 %v2557
    %v3309 = vunpack.c.l.b16 %v2558
    %v3310 = vunpack.c.h.b16 %v2558
    %v3311 = vunpack.c.l.b16 %v2559
    %v3312 = vunpack.c.h.b16 %v2559
    %v3313 = vunpack.c.l.b16 %v2560
    %v3314 = vunpack.c.h.b16 %v2560
    %v3315 = vunpack.c.l.b16 %v2561
    %v3316 = vunpack.c.h.b16 %v2561
    %v3317 = vunpack.c.l.b16 %v2562
    %v3318 = vunpack.c.h.b16 %v2562
    %v3319 = vunpack.c.l.b16 %v2563
    %v3320 = vunpack.c.h.b16 %v2563
    %v3321 = vunpack.c.l.b16 %v2564
    %v3322 = vunpack.c.h.b16 %v2564
    %v3323 = vunpack.c.l.b16 %v2565
    %v3324 = vunpack.c.h.b16 %v2565
    %v3325 = vunpack.c.l.b16 %v2566
    %v3326 = vunpack.c.h.b16 %v2566
    %v3327 = vunpack.c.l.b16 %v2567
    %v3328 = vunpack.c.h.b16 %v2567
    %v3329 = vunpack.c.l.b16 %v2568
    %v3330 = vunpack.c.h.b16 %v2568
    %v3331 = vunpack.c.l.b16 %v2569
    %v3332 = vunpack.c.h.b16 %v2569
    %v3333 = vunpack.c.l.b16 %v2570
    %v3334 = vunpack.c.h.b16 %v2570
    %v3335 = vunpack.c.l.b16 %v2571
    %v3336 = vunpack.c.h.b16 %v2571
    %v3337 = vunpack.c.l.b16 %v2572
    %v3338 = vunpack.c.h.b16 %v2572
    %v3339 = vunpack.c.l.b16 %v2573
    %v3340 = vunpack.c.h.b16 %v2573
    %v3341 = vunpack.c.l.b16 %v2574
    %v3342 = vunpack.c.h.b16 %v2574
    %v3343 = vpack.c.b16 %v2835, %v2831
    %v3344 = vpack.c.b16 %v2836, %v2832
    %v3345 = vpack.c.b16 %v2837, %v2833
    %v3346 = vpack.c.b16 %v2838, %v2834
    %v3347 = vpack.c.b16 %v2843, %v2839
    %v3348 = vpack.c.b16 %v2844, %v2840
    %v3349 = vpack.c.b16 %v2845, %v2841
    %v3350 = vpack.c.b16 %v2846, %v2842
    %v3351 = vpack.c.b16 %v2851, %v2847
    %v3352 = vpack.c.b16 %v2852, %v2848
    %v3353 = vpack.c.b16 %v2853, %v2849
    %v3354 = vpack.c.b16 %v2854, %v2850
    %v3355 = vpack.c.b16 %v2859, %v2855
    %v3356 = vpack.c.b16 %v2860, %v2856
    %v3357 = vpack.c.b16 %v2861, %v2857
    %v3358 = vpack.c.b16 %v2862, %v2858
    %v3359 = vpack.c.b16 %v2867, %v2863
    %v3360 = vpack.c.b16 %v2868, %v2864
    %v3361 = vpack.c.b16 %v2869, %v2865
    %v3362 = vpack.c.b16 %v2870, %v2866
    %v3363 = vpack.c.b16 %v2875, %v2871
    %v3364 = vpack.c.b16 %v2876, %v2872
    %v3365 = vpack.c.b16 %v2877, %v2873
    %v3366 = vpack.c.b16 %v2878, %v2874
    %v3367 = vpack.c.b16 %v2883, %v2879
    %v3368 = vpack.c.b16 %v2884, %v2880
    %v3369 = vpack.c.b16 %v2885, %v2881
    %v3370 = vpack.c.b16 %v2886, %v2882
    %v3371 = vpack.c.b16 %v2891, %v2887
    %v3372 = vpack.c.b16 %v2892, %v2888
    %v3373 = vpack.c.b16 %v2893, %v2889
    %v3374 = vpack.c.b16 %v2894, %v2890
    %v3375 = vpack.c.b16 %v2899, %v2895
    %v3376 = vpack.c.b16 %v2900, %v2896
    %v3377 = vpack.c.b16 %v2901, %v2897
    %v3378 = vpack.c.b16 %v2902, %v2898
    %v3379 = vpack.c.b16 %v2907, %v2903
    %v3380 = vpack.c.b16 %v2908, %v2904
    %v3381 = vpack.c.b16 %v2909, %v2905
    %v3382 = vpack.c.b16 %v2910, %v2906
    %v3383 = vpack.c.b16 %v2915, %v2911
    %v3384 = vpack.c.b16 %v2916, %v2912
    %v3385 = vpack.c.b16 %v2917, %v2913
    %v3386 = vpack.c.b16 %v2918, %v2914
    %v3387 = vpack.c.b16 %v2923, %v2919
    %v3388 = vpack.c.b16 %v2924, %v2920
    %v3389 = vpack.c.b16 %v2925, %v2921
    %v3390 = vpack.c.b16 %v2926, %v2922
    %v3391 = vpack.c.b16 %v2931, %v2927
    %v3392 = vpack.c.b16 %v2932, %v2928
    %v3393 = vpack.c.b16 %v2933, %v2929
    %v3394 = vpack.c.b16 %v2934, %v2930
    %v3395 = vpack.c.b16 %v2939, %v2935
    %v3396 = vpack.c.b16 %v2940, %v2936
    %v3397 = vpack.c.b16 %v2941, %v2937
    %v3398 = vpack.c.b16 %v2942, %v2938
    %v3399 = vpack.c.b16 %v2947, %v2943
    %v3400 = vpack.c.b16 %v2948, %v2944
    %v3401 = vpack.c.b16 %v2949, %v2945
    %v3402 = vpack.c.b16 %v2950, %v2946
    %v3403 = vpack.c.b16 %v2955, %v2951
    %v3404 = vpack.c.b16 %v2956, %v2952
    %v3405 = vpack.c.b16 %v2957, %v2953
    %v3406 = vpack.c.b16 %v2958, %v2954
    %v3407 = vpack.c.b16 %v2963, %v2959
    %v3408 = vpack.c.b16 %v2964, %v2960
    %v3409 = vpack.c.b16 %v2965, %v2961
    %v3410 = vpack.c.b16 %v2966, %v2962
    %v3411 = vpack.c.b16 %v2971, %v2967
    %v3412 = vpack.c.b16 %v2972, %v2968
    %v3413 = vpack.c.b16 %v2973, %v2969
    %v3414 = vpack.c.b16 %v2974, %v2970
    %v3415 = vpack.c.b16 %v2979, %v2975
    %v3416 = vpack.c.b16 %v2980, %v2976
    %v3417 = vpack.c.b16 %v2981, %v2977
    %v3418 = vpack.c.b16 %v2982, %v2978
    %v3419 = vpack.c.b16 %v2987, %v2983
    %v3420 = vpack.c.b16 %v2988, %v2984
    %v3421 = vpack.c.b16 %v2989, %v2985
    %v3422 = vpack.c.b16 %v2990, %v2986
    %v3423 = vpack.c.b16 %v2995, %v2991
    %v3424 = vpack.c.b16 %v2996, %v2992
    %v3425 = vpack.c.b16 %v2997, %v2993
    %v3426 = vpack.c.b16 %v2998, %v2994
    %v3427 = vpack.c.b16 %v3003, %v2999
    %v3428 = vpack.c.b16 %v3004, %v3000
    %v3429 = vpack.c.b16 %v3005, %v3001
    %v3430 = vpack.c.b16 %v3006, %v3002
    %v3431 = vpack.c.b16 %v3011, %v3007
    %v3432 = vpack.c.b16 %v3012, %v3008
    %v3433 = vpack.c.b16 %v3013, %v3009
    %v3434 = vpack.c.b16 %v3014, %v3010
    %v3435 = vpack.c.b16 %v3019, %v3015
    %v3436 = vpack.c.b16 %v3020, %v3016
    %v3437 = vpack.c.b16 %v3021, %v3017
    %v3438 = vpack.c.b16 %v3022, %v3018
    %v3439 = vpack.c.b16 %v3027, %v3023
    %v3440 = vpack.c.b16 %v3028, %v3024
    %v3441 = vpack.c.b16 %v3029, %v3025
    %v3442 = vpack.c.b16 %v3030, %v3026
    %v3443 = vpack.c.b16 %v3035, %v3031
    %v3444 = vpack.c.b16 %v3036, %v3032
    %v3445 = vpack.c.b16 %v3037, %v3033
    %v3446 = vpack.c.b16 %v3038, %v3034
    %v3447 = vpack.c.b16 %v3043, %v3039
    %v3448 = vpack.c.b16 %v3044, %v3040
    %v3449 = vpack.c.b16 %v3045, %v3041
    %v3450 = vpack.c.b16 %v3046, %v3042
    %v3451 = vpack.c.b16 %v3051, %v3047
    %v3452 = vpack.c.b16 %v3052, %v3048
    %v3453 = vpack.c.b16 %v3053, %v3049
    %v3454 = vpack.c.b16 %v3054, %v3050
    %v3455 = vpack.c.b16 %v3059, %v3055
    %v3456 = vpack.c.b16 %v3060, %v3056
    %v3457 = vpack.c.b16 %v3061, %v3057
    %v3458 = vpack.c.b16 %v3062, %v3058
    %v3459 = vpack.c.b16 %v3067, %v3063
    %v3460 = vpack.c.b16 %v3068, %v3064
    %v3461 = vpack.c.b16 %v3069, %v3065
    %v3462 = vpack.c.b16 %v3070, %v3066
    %v3463 = vpack.c.b16 %v3075, %v3071
    %v3464 = vpack.c.b16 %v3076, %v3072
    %v3465 = vpack.c.b16 %v3077, %v3073
    %v3466 = vpack.c.b16 %v3078, %v3074
    %v3467 = vpack.c.b16 %v3083, %v3079
    %v3468 = vpack.c.b16 %v3084, %v3080
    %v3469 = vpack.c.b16 %v3085, %v3081
    %v3470 = vpack.c.b16 %v3086, %v3082
    %v3471 = vpack.c.b16 %v3091, %v3087
    %v3472 = vpack.c.b16 %v3092, %v3088
    %v3473 = vpack.c.b16 %v3093, %v3089
    %v3474 = vpack.c.b16 %v3094, %v3090
    %v3475 = vpack.c.b16 %v3099, %v3095
    %v3476 = vpack.c.b16 %v3100, %v3096
    %v3477 = vpack.c.b16 %v3101, %v3097
    %v3478 = vpack.c.b16 %v3102, %v3098
    %v3479 = vpack.c.b16 %v3107, %v3103
    %v3480 = vpack.c.b16 %v3108, %v3104
    %v3481 = vpack.c.b16 %v3109, %v3105
    %v3482 = vpack.c.b16 %v3110, %v3106
    %v3483 = vpack.c.b16 %v3115, %v3111
    %v3484 = vpack.c.b16 %v3116, %v3112
    %v3485 = vpack.c.b16 %v3117, %v3113
    %v3486 = vpack.c.b16 %v3118, %v3114
    %v3487 = vpack.c.b16 %v3123, %v3119
    %v3488 = vpack.c.b16 %v3124, %v3120
    %v3489 = vpack.c.b16 %v3125, %v3121
    %v3490 = vpack.c.b16 %v3126, %v3122
    %v3491 = vpack.c.b16 %v3131, %v3127
    %v3492 = vpack.c.b16 %v3132, %v3128
    %v3493 = vpack.c.b16 %v3133, %v3129
    %v3494 = vpack.c.b16 %v3134, %v3130
    %v3495 = vpack.c.b16 %v3139, %v3135
    %v3496 = vpack.c.b16 %v3140, %v3136
    %v3497 = vpack.c.b16 %v3141, %v3137
    %v3498 = vpack.c.b16 %v3142, %v3138
    %v3499 = vpack.c.b16 %v3147, %v3143
    %v3500 = vpack.c.b16 %v3148, %v3144
    %v3501 = vpack.c.b16 %v3149, %v3145
    %v3502 = vpack.c.b16 %v3150, %v3146
    %v3503 = vpack.c.b16 %v3155, %v3151
    %v3504 = vpack.c.b16 %v3156, %v3152
    %v3505 = vpack.c.b16 %v3157, %v3153
    %v3506 = vpack.c.b16 %v3158, %v3154
    %v3507 = vpack.c.b16 %v3163, %v3159
    %v3508 = vpack.c.b16 %v3164, %v3160
    %v3509 = vpack.c.b16 %v3165, %v3161
    %v3510 = vpack.c.b16 %v3166, %v3162
    %v3511 = vpack.c.b16 %v3171, %v3167
    %v3512 = vpack.c.b16 %v3172, %v3168
    %v3513 = vpack.c.b16 %v3173, %v3169
    %v3514 = vpack.c.b16 %v3174, %v3170
    %v3515 = vpack.c.b16 %v3179, %v3175
    %v3516 = vpack.c.b16 %v3180, %v3176
    %v3517 = vpack.c.b16 %v3181, %v3177
    %v3518 = vpack.c.b16 %v3182, %v3178
    %v3519 = vpack.c.b16 %v3187, %v3183
    %v3520 = vpack.c.b16 %v3188, %v3184
    %v3521 = vpack.c.b16 %v3189, %v3185
    %v3522 = vpack.c.b16 %v3190, %v3186
    %v3523 = vpack.c.b16 %v3195, %v3191
    %v3524 = vpack.c.b16 %v3196, %v3192
    %v3525 = vpack.c.b16 %v3197, %v3193
    %v3526 = vpack.c.b16 %v3198, %v3194
    %v3527 = vpack.c.b16 %v3203, %v3199
    %v3528 = vpack.c.b16 %v3204, %v3200
    %v3529 = vpack.c.b16 %v3205, %v3201
    %v3530 = vpack.c.b16 %v3206, %v3202
    %v3531 = vpack.c.b16 %v3211, %v3207
    %v3532 = vpack.c.b16 %v3212, %v3208
    %v3533 = vpack.c.b16 %v3213, %v3209
    %v3534 = vpack.c.b16 %v3214, %v3210
    %v3535 = vpack.c.b16 %v3219, %v3215
    %v3536 = vpack.c.b16 %v3220, %v3216
    %v3537 = vpack.c.b16 %v3221, %v3217
    %v3538 = vpack.c.b16 %v3222, %v3218
    %v3539 = vpack.c.b16 %v3227, %v3223
    %v3540 = vpack.c.b16 %v3228, %v3224
    %v3541 = vpack.c.b16 %v3229, %v3225
    %v3542 = vpack.c.b16 %v3230, %v3226
    %v3543 = vpack.c.b16 %v3235, %v3231
    %v3544 = vpack.c.b16 %v3236, %v3232
    %v3545 = vpack.c.b16 %v3237, %v3233
    %v3546 = vpack.c.b16 %v3238, %v3234
    %v3547 = vpack.c.b16 %v3243, %v3239
    %v3548 = vpack.c.b16 %v3244, %v3240
    %v3549 = vpack.c.b16 %v3245, %v3241
    %v3550 = vpack.c.b16 %v3246, %v3242
    %v3551 = vpack.c.b16 %v3251, %v3247
    %v3552 = vpack.c.b16 %v3252, %v3248
    %v3553 = vpack.c.b16 %v3253, %v3249
    %v3554 = vpack.c.b16 %v3254, %v3250
    %v3555 = vpack.c.b16 %v3259, %v3255
    %v3556 = vpack.c.b16 %v3260, %v3256
    %v3557 = vpack.c.b16 %v3261, %v3257
    %v3558 = vpack.c.b16 %v3262, %v3258
    %v3559 = vpack.c.b16 %v3267, %v3263
    %v3560 = vpack.c.b16 %v3268, %v3264
    %v3561 = vpack.c.b16 %v3269, %v3265
    %v3562 = vpack.c.b16 %v3270, %v3266
    %v3563 = vpack.c.b16 %v3275, %v3271
    %v3564 = vpack.c.b16 %v3276, %v3272
    %v3565 = vpack.c.b16 %v3277, %v3273
    %v3566 = vpack.c.b16 %v3278, %v3274
    %v3567 = vpack.c.b16 %v3283, %v3279
    %v3568 = vpack.c.b16 %v3284, %v3280
    %v3569 = vpack.c.b16 %v3285, %v3281
    %v3570 = vpack.c.b16 %v3286, %v3282
    %v3571 = vpack.c.b16 %v3291, %v3287
    %v3572 = vpack.c.b16 %v3292, %v3288
    %v3573 = vpack.c.b16 %v3293, %v3289
    %v3574 = vpack.c.b16 %v3294, %v3290
    %v3575 = vpack.c.b16 %v3299, %v3295
    %v3576 = vpack.c.b16 %v3300, %v3296
    %v3577 = vpack.c.b16 %v3301, %v3297
    %v3578 = vpack.c.b16 %v3302, %v3298
    %v3579 = vpack.c.b16 %v3307, %v3303
    %v3580 = vpack.c.b16 %v3308, %v3304
    %v3581 = vpack.c.b16 %v3309, %v3305
    %v3582 = vpack.c.b16 %v3310, %v3306
    %v3583 = vpack.c.b16 %v3315, %v3311
    %v3584 = vpack.c.b16 %v3316, %v3312
    %v3585 = vpack.c.b16 %v3317, %v3313
    %v3586 = vpack.c.b16 %v3318, %v3314
    %v3587 = vpack.c.b16 %v3323, %v3319
    %v3588 = vpack.c.b16 %v3324, %v3320
    %v3589 = vpack.c.b16 %v3325, %v3321
    %v3590 = vpack.c.b16 %v3326, %v3322
    %v3591 = vpack.c.b16 %v3331, %v3327
    %v3592 = vpack.c.b16 %v3332, %v3328
    %v3593 = vpack.c.b16 %v3333, %v3329
    %v3594 = vpack.c.b16 %v3334, %v3330
    %v3595 = vpack.c.b16 %v3339, %v3335
    %v3596 = vpack.c.b16 %v3340, %v3336
    %v3597 = vpack.c.b16 %v3341, %v3337
    %v3598 = vpack.c.b16 %v3342, %v3338
    %3855 = vmatpush.bf16.msra.mxu0 %v3371
    %3856 = vmatpush.bf16.msra.mxu0 %v3367
    %3857 = vmatpush.bf16.msra.mxu0 %v3363
    %3858 = vmatpush.bf16.msra.mxu0 %v3359
    %3859 = vmatpush.bf16.msra.mxu0 %v3355
    %3860 = vmatpush.bf16.msra.mxu0 %v3351
    %3861 = vmatpush.bf16.msra.mxu0 %v3347
    %3862 = vmatpush.bf16.msra.mxu0 %v3343
    %3863 = vmatmul.bf16.gmra.mxu0 %v2311
    %v3864 = vpop.f32.mrf.mxu0
    %v3865 = vadd.f32 0.0, %v3864
    %v3866 = vpop.f32.mrf.mxu0
    %3867 = vdwg.mxu0
    %3868 = vmatpush.bf16.msra.mxu0 %v3403
    %3869 = vmatpush.bf16.msra.mxu0 %v3399
    %3870 = vmatpush.bf16.msra.mxu0 %v3395
    %3871 = vmatpush.bf16.msra.mxu0 %v3391
    %3872 = vmatpush.bf16.msra.mxu0 %v3387
    %3873 = vmatpush.bf16.msra.mxu0 %v3383
    %3874 = vmatpush.bf16.msra.mxu0 %v3379
    %3875 = vmatpush.bf16.msra.mxu0 %v3375
    %3876 = vmatmul.bf16.gmra.mxu0 %v2312
    %v3877 = vpop.f32.mrf.mxu0
    %v3878 = vadd.f32 %v3865, %v3877
    %v3879 = vpop.f32.mrf.mxu0
    %3880 = vdwg.mxu0
    %3881 = vmatpush.bf16.msra.mxu0 %v3435
    %3882 = vmatpush.bf16.msra.mxu0 %v3431
    %3883 = vmatpush.bf16.msra.mxu0 %v3427
    %3884 = vmatpush.bf16.msra.mxu0 %v3423
    %3885 = vmatpush.bf16.msra.mxu0 %v3419
    %3886 = vmatpush.bf16.msra.mxu0 %v3415
    %3887 = vmatpush.bf16.msra.mxu0 %v3411
    %3888 = vmatpush.bf16.msra.mxu0 %v3407
    %3889 = vmatmul.bf16.gmra.mxu0 %v2313
    %v3890 = vpop.f32.mrf.mxu0
    %v3891 = vadd.f32 %v3878, %v3890
    %v3892 = vpop.f32.mrf.mxu0
    %3893 = vdwg.mxu0
    %3894 = vmatpush.bf16.msra.mxu0 %v3467
    %3895 = vmatpush.bf16.msra.mxu0 %v3463
    %3896 = vmatpush.bf16.msra.mxu0 %v3459
    %3897 = vmatpush.bf16.msra.mxu0 %v3455
    %3898 = vmatpush.bf16.msra.mxu0 %v3451
    %3899 = vmatpush.bf16.msra.mxu0 %v3447
    %3900 = vmatpush.bf16.msra.mxu0 %v3443
    %3901 = vmatpush.bf16.msra.mxu0 %v3439
    %3902 = vmatmul.bf16.gmra.mxu0 %v2314
    %v3903 = vpop.f32.mrf.mxu0
    %v3904 = vadd.f32 %v3891, %v3903
    %v3905 = vpop.f32.mrf.mxu0
    %3906 = vdwg.mxu0
    %3907 = vmatpush.bf16.msra.mxu0 %v3499
    %3908 = vmatpush.bf16.msra.mxu0 %v3495
    %3909 = vmatpush.bf16.msra.mxu0 %v3491
    %3910 = vmatpush.bf16.msra.mxu0 %v3487
    %3911 = vmatpush.bf16.msra.mxu0 %v3483
    %3912 = vmatpush.bf16.msra.mxu0 %v3479
    %3913 = vmatpush.bf16.msra.mxu0 %v3475
    %3914 = vmatpush.bf16.msra.mxu0 %v3471
    %3915 = vmatmul.bf16.gmra.mxu0 %v2315
    %v3916 = vpop.f32.mrf.mxu0
    %v3917 = vadd.f32 %v3904, %v3916
    %v3918 = vpop.f32.mrf.mxu0
    %3919 = vdwg.mxu0
    %3920 = vmatpush.bf16.msra.mxu0 %v3531
    %3921 = vmatpush.bf16.msra.mxu0 %v3527
    %3922 = vmatpush.bf16.msra.mxu0 %v3523
    %3923 = vmatpush.bf16.msra.mxu0 %v3519
    %3924 = vmatpush.bf16.msra.mxu0 %v3515
    %3925 = vmatpush.bf16.msra.mxu0 %v3511
    %3926 = vmatpush.bf16.msra.mxu0 %v3507
    %3927 = vmatpush.bf16.msra.mxu0 %v3503
    %3928 = vmatmul.bf16.gmra.mxu0 %v2316
    %v3929 = vpop.f32.mrf.mxu0
    %v3930 = vadd.f32 %v3917, %v3929
    %v3931 = vpop.f32.mrf.mxu0
    %3932 = vdwg.mxu0
    %3933 = vmatpush.bf16.msra.mxu0 %v3563
    %3934 = vmatpush.bf16.msra.mxu0 %v3559
    %3935 = vmatpush.bf16.msra.mxu0 %v3555
    %3936 = vmatpush.bf16.msra.mxu0 %v3551
    %3937 = vmatpush.bf16.msra.mxu0 %v3547
    %3938 = vmatpush.bf16.msra.mxu0 %v3543
    %3939 = vmatpush.bf16.msra.mxu0 %v3539
    %3940 = vmatpush.bf16.msra.mxu0 %v3535
    %3941 = vmatmul.bf16.gmra.mxu0 %v2317
    %v3942 = vpop.f32.mrf.mxu0
    %v3943 = vadd.f32 %v3930, %v3942
    %v3944 = vpop.f32.mrf.mxu0
    %3945 = vdwg.mxu0
    %3946 = vmatpush.bf16.msra.mxu0 %v3595
    %3947 = vmatpush.bf16.msra.mxu0 %v3591
    %3948 = vmatpush.bf16.msra.mxu0 %v3587
    %3949 = vmatpush.bf16.msra.mxu0 %v3583
    %3950 = vmatpush.bf16.msra.mxu0 %v3579
    %3951 = vmatpush.bf16.msra.mxu0 %v3575
    %3952 = vmatpush.bf16.msra.mxu0 %v3571
    %3953 = vmatpush.bf16.msra.mxu0 %v3567
    %3954 = vmatmul.bf16.gmra.mxu0 %v2318
    %v3955 = vpop.f32.mrf.mxu0
    %v3956 = vadd.f32 %v3943, %v3955
    %v3957 = vpop.f32.mrf.mxu0
    %3958 = vdwg.mxu0
    %3959 = vmatpush.bf16.msra.mxu0 %v3372
    %3960 = vmatpush.bf16.msra.mxu0 %v3368
    %3961 = vmatpush.bf16.msra.mxu0 %v3364
    %3962 = vmatpush.bf16.msra.mxu0 %v3360
    %3963 = vmatpush.bf16.msra.mxu0 %v3356
    %3964 = vmatpush.bf16.msra.mxu0 %v3352
    %3965 = vmatpush.bf16.msra.mxu0 %v3348
    %3966 = vmatpush.bf16.msra.mxu0 %v3344
    %3967 = vmatmul.bf16.gmra.mxu0 %v2311
    %v3968 = vpop.f32.mrf.mxu0
    %v3969 = vadd.f32 0.0, %v3968
    %v3970 = vpop.f32.mrf.mxu0
    %3971 = vdwg.mxu0
    %3972 = vmatpush.bf16.msra.mxu0 %v3404
    %3973 = vmatpush.bf16.msra.mxu0 %v3400
    %3974 = vmatpush.bf16.msra.mxu0 %v3396
    %3975 = vmatpush.bf16.msra.mxu0 %v3392
    %3976 = vmatpush.bf16.msra.mxu0 %v3388
    %3977 = vmatpush.bf16.msra.mxu0 %v3384
    %3978 = vmatpush.bf16.msra.mxu0 %v3380
    %3979 = vmatpush.bf16.msra.mxu0 %v3376
    %3980 = vmatmul.bf16.gmra.mxu0 %v2312
    %v3981 = vpop.f32.mrf.mxu0
    %v3982 = vadd.f32 %v3969, %v3981
    %v3983 = vpop.f32.mrf.mxu0
    %3984 = vdwg.mxu0
    %3985 = vmatpush.bf16.msra.mxu0 %v3436
    %3986 = vmatpush.bf16.msra.mxu0 %v3432
    %3987 = vmatpush.bf16.msra.mxu0 %v3428
    %3988 = vmatpush.bf16.msra.mxu0 %v3424
    %3989 = vmatpush.bf16.msra.mxu0 %v3420
    %3990 = vmatpush.bf16.msra.mxu0 %v3416
    %3991 = vmatpush.bf16.msra.mxu0 %v3412
    %3992 = vmatpush.bf16.msra.mxu0 %v3408
    %3993 = vmatmul.bf16.gmra.mxu0 %v2313
    %v3994 = vpop.f32.mrf.mxu0
    %v3995 = vadd.f32 %v3982, %v3994
    %v3996 = vpop.f32.mrf.mxu0
    %3997 = vdwg.mxu0
    %3998 = vmatpush.bf16.msra.mxu0 %v3468
    %3999 = vmatpush.bf16.msra.mxu0 %v3464
    %4000 = vmatpush.bf16.msra.mxu0 %v3460
    %4001 = vmatpush.bf16.msra.mxu0 %v3456
    %4002 = vmatpush.bf16.msra.mxu0 %v3452
    %4003 = vmatpush.bf16.msra.mxu0 %v3448
    %4004 = vmatpush.bf16.msra.mxu0 %v3444
    %4005 = vmatpush.bf16.msra.mxu0 %v3440
    %4006 = vmatmul.bf16.gmra.mxu0 %v2314
    %v4007 = vpop.f32.mrf.mxu0
    %v4008 = vadd.f32 %v3995, %v4007
    %v4009 = vpop.f32.mrf.mxu0
    %4010 = vdwg.mxu0
    %4011 = vmatpush.bf16.msra.mxu0 %v3500
    %4012 = vmatpush.bf16.msra.mxu0 %v3496
    %4013 = vmatpush.bf16.msra.mxu0 %v3492
    %4014 = vmatpush.bf16.msra.mxu0 %v3488
    %4015 = vmatpush.bf16.msra.mxu0 %v3484
    %4016 = vmatpush.bf16.msra.mxu0 %v3480
    %4017 = vmatpush.bf16.msra.mxu0 %v3476
    %4018 = vmatpush.bf16.msra.mxu0 %v3472
    %4019 = vmatmul.bf16.gmra.mxu0 %v2315
    %v4020 = vpop.f32.mrf.mxu0
    %v4021 = vadd.f32 %v4008, %v4020
    %v4022 = vpop.f32.mrf.mxu0
    %4023 = vdwg.mxu0
    %4024 = vmatpush.bf16.msra.mxu0 %v3532
    %4025 = vmatpush.bf16.msra.mxu0 %v3528
    %4026 = vmatpush.bf16.msra.mxu0 %v3524
    %4027 = vmatpush.bf16.msra.mxu0 %v3520
    %4028 = vmatpush.bf16.msra.mxu0 %v3516
    %4029 = vmatpush.bf16.msra.mxu0 %v3512
    %4030 = vmatpush.bf16.msra.mxu0 %v3508
    %4031 = vmatpush.bf16.msra.mxu0 %v3504
    %4032 = vmatmul.bf16.gmra.mxu0 %v2316
    %v4033 = vpop.f32.mrf.mxu0
    %v4034 = vadd.f32 %v4021, %v4033
    %v4035 = vpop.f32.mrf.mxu0
    %4036 = vdwg.mxu0
    %4037 = vmatpush.bf16.msra.mxu0 %v3564
    %4038 = vmatpush.bf16.msra.mxu0 %v3560
    %4039 = vmatpush.bf16.msra.mxu0 %v3556
    %4040 = vmatpush.bf16.msra.mxu0 %v3552
    %4041 = vmatpush.bf16.msra.mxu0 %v3548
    %4042 = vmatpush.bf16.msra.mxu0 %v3544
    %4043 = vmatpush.bf16.msra.mxu0 %v3540
    %4044 = vmatpush.bf16.msra.mxu0 %v3536
    %4045 = vmatmul.bf16.gmra.mxu0 %v2317
    %v4046 = vpop.f32.mrf.mxu0
    %v4047 = vadd.f32 %v4034, %v4046
    %v4048 = vpop.f32.mrf.mxu0
    %4049 = vdwg.mxu0
    %4050 = vmatpush.bf16.msra.mxu0 %v3596
    %4051 = vmatpush.bf16.msra.mxu0 %v3592
    %4052 = vmatpush.bf16.msra.mxu0 %v3588
    %4053 = vmatpush.bf16.msra.mxu0 %v3584
    %4054 = vmatpush.bf16.msra.mxu0 %v3580
    %4055 = vmatpush.bf16.msra.mxu0 %v3576
    %4056 = vmatpush.bf16.msra.mxu0 %v3572
    %4057 = vmatpush.bf16.msra.mxu0 %v3568
    %4058 = vmatmul.bf16.gmra.mxu0 %v2318
    %v4059 = vpop.f32.mrf.mxu0
    %v4060 = vadd.f32 %v4047, %v4059
    %v4061 = vpop.f32.mrf.mxu0
    %4062 = vdwg.mxu0
    %4063 = vmatpush.bf16.msra.mxu0 %v3373
    %4064 = vmatpush.bf16.msra.mxu0 %v3369
    %4065 = vmatpush.bf16.msra.mxu0 %v3365
    %4066 = vmatpush.bf16.msra.mxu0 %v3361
    %4067 = vmatpush.bf16.msra.mxu0 %v3357
    %4068 = vmatpush.bf16.msra.mxu0 %v3353
    %4069 = vmatpush.bf16.msra.mxu0 %v3349
    %4070 = vmatpush.bf16.msra.mxu0 %v3345
    %4071 = vmatmul.bf16.gmra.mxu0 %v2311
    %v4072 = vpop.f32.mrf.mxu0
    %v4073 = vadd.f32 0.0, %v4072
    %v4074 = vpop.f32.mrf.mxu0
    %4075 = vdwg.mxu0
    %4076 = vmatpush.bf16.msra.mxu0 %v3405
    %4077 = vmatpush.bf16.msra.mxu0 %v3401
    %4078 = vmatpush.bf16.msra.mxu0 %v3397
    %4079 = vmatpush.bf16.msra.mxu0 %v3393
    %4080 = vmatpush.bf16.msra.mxu0 %v3389
    %4081 = vmatpush.bf16.msra.mxu0 %v3385
    %4082 = vmatpush.bf16.msra.mxu0 %v3381
    %4083 = vmatpush.bf16.msra.mxu0 %v3377
    %4084 = vmatmul.bf16.gmra.mxu0 %v2312
    %v4085 = vpop.f32.mrf.mxu0
    %v4086 = vadd.f32 %v4073, %v4085
    %v4087 = vpop.f32.mrf.mxu0
    %4088 = vdwg.mxu0
    %4089 = vmatpush.bf16.msra.mxu0 %v3437
    %4090 = vmatpush.bf16.msra.mxu0 %v3433
    %4091 = vmatpush.bf16.msra.mxu0 %v3429
    %4092 = vmatpush.bf16.msra.mxu0 %v3425
    %4093 = vmatpush.bf16.msra.mxu0 %v3421
    %4094 = vmatpush.bf16.msra.mxu0 %v3417
    %4095 = vmatpush.bf16.msra.mxu0 %v3413
    %4096 = vmatpush.bf16.msra.mxu0 %v3409
    %4097 = vmatmul.bf16.gmra.mxu0 %v2313
    %v4098 = vpop.f32.mrf.mxu0
    %v4099 = vadd.f32 %v4086, %v4098
    %v4100 = vpop.f32.mrf.mxu0
    %4101 = vdwg.mxu0
    %4102 = vmatpush.bf16.msra.mxu0 %v3469
    %4103 = vmatpush.bf16.msra.mxu0 %v3465
    %4104 = vmatpush.bf16.msra.mxu0 %v3461
    %4105 = vmatpush.bf16.msra.mxu0 %v3457
    %4106 = vmatpush.bf16.msra.mxu0 %v3453
    %4107 = vmatpush.bf16.msra.mxu0 %v3449
    %4108 = vmatpush.bf16.msra.mxu0 %v3445
    %4109 = vmatpush.bf16.msra.mxu0 %v3441
    %4110 = vmatmul.bf16.gmra.mxu0 %v2314
    %v4111 = vpop.f32.mrf.mxu0
    %v4112 = vadd.f32 %v4099, %v4111
    %v4113 = vpop.f32.mrf.mxu0
    %4114 = vdwg.mxu0
    %4115 = vmatpush.bf16.msra.mxu0 %v3501
    %4116 = vmatpush.bf16.msra.mxu0 %v3497
    %4117 = vmatpush.bf16.msra.mxu0 %v3493
    %4118 = vmatpush.bf16.msra.mxu0 %v3489
    %4119 = vmatpush.bf16.msra.mxu0 %v3485
    %4120 = vmatpush.bf16.msra.mxu0 %v3481
    %4121 = vmatpush.bf16.msra.mxu0 %v3477
    %4122 = vmatpush.bf16.msra.mxu0 %v3473
    %4123 = vmatmul.bf16.gmra.mxu0 %v2315
    %v4124 = vpop.f32.mrf.mxu0
    %v4125 = vadd.f32 %v4112, %v4124
    %v4126 = vpop.f32.mrf.mxu0
    %4127 = vdwg.mxu0
    %4128 = vmatpush.bf16.msra.mxu0 %v3533
    %4129 = vmatpush.bf16.msra.mxu0 %v3529
    %4130 = vmatpush.bf16.msra.mxu0 %v3525
    %4131 = vmatpush.bf16.msra.mxu0 %v3521
    %4132 = vmatpush.bf16.msra.mxu0 %v3517
    %4133 = vmatpush.bf16.msra.mxu0 %v3513
    %4134 = vmatpush.bf16.msra.mxu0 %v3509
    %4135 = vmatpush.bf16.msra.mxu0 %v3505
    %4136 = vmatmul.bf16.gmra.mxu0 %v2316
    %v4137 = vpop.f32.mrf.mxu0
    %v4138 = vadd.f32 %v4125, %v4137
    %v4139 = vpop.f32.mrf.mxu0
    %4140 = vdwg.mxu0
    %4141 = vmatpush.bf16.msra.mxu0 %v3565
    %4142 = vmatpush.bf16.msra.mxu0 %v3561
    %4143 = vmatpush.bf16.msra.mxu0 %v3557
    %4144 = vmatpush.bf16.msra.mxu0 %v3553
    %4145 = vmatpush.bf16.msra.mxu0 %v3549
    %4146 = vmatpush.bf16.msra.mxu0 %v3545
    %4147 = vmatpush.bf16.msra.mxu0 %v3541
    %4148 = vmatpush.bf16.msra.mxu0 %v3537
    %4149 = vmatmul.bf16.gmra.mxu0 %v2317
    %v4150 = vpop.f32.mrf.mxu0
    %v4151 = vadd.f32 %v4138, %v4150
    %v4152 = vpop.f32.mrf.mxu0
    %4153 = vdwg.mxu0
    %4154 = vmatpush.bf16.msra.mxu0 %v3597
    %4155 = vmatpush.bf16.msra.mxu0 %v3593
    %4156 = vmatpush.bf16.msra.mxu0 %v3589
    %4157 = vmatpush.bf16.msra.mxu0 %v3585
    %4158 = vmatpush.bf16.msra.mxu0 %v3581
    %4159 = vmatpush.bf16.msra.mxu0 %v3577
    %4160 = vmatpush.bf16.msra.mxu0 %v3573
    %4161 = vmatpush.bf16.msra.mxu0 %v3569
    %4162 = vmatmul.bf16.gmra.mxu0 %v2318
    %v4163 = vpop.f32.mrf.mxu0
    %v4164 = vadd.f32 %v4151, %v4163
    %v4165 = vpop.f32.mrf.mxu0
    %4166 = vdwg.mxu0
    %4167 = vmatpush.bf16.msra.mxu0 %v3374
    %4168 = vmatpush.bf16.msra.mxu0 %v3370
    %4169 = vmatpush.bf16.msra.mxu0 %v3366
    %4170 = vmatpush.bf16.msra.mxu0 %v3362
    %4171 = vmatpush.bf16.msra.mxu0 %v3358
    %4172 = vmatpush.bf16.msra.mxu0 %v3354
    %4173 = vmatpush.bf16.msra.mxu0 %v3350
    %4174 = vmatpush.bf16.msra.mxu0 %v3346
    %4175 = vmatmul.bf16.gmra.mxu0 %v2311
    %v4176 = vpop.f32.mrf.mxu0
    %v4177 = vadd.f32 0.0, %v4176
    %v4178 = vpop.f32.mrf.mxu0
    %4179 = vdwg.mxu0
    %4180 = vmatpush.bf16.msra.mxu0 %v3406
    %4181 = vmatpush.bf16.msra.mxu0 %v3402
    %4182 = vmatpush.bf16.msra.mxu0 %v3398
    %4183 = vmatpush.bf16.msra.mxu0 %v3394
    %4184 = vmatpush.bf16.msra.mxu0 %v3390
    %4185 = vmatpush.bf16.msra.mxu0 %v3386
    %4186 = vmatpush.bf16.msra.mxu0 %v3382
    %4187 = vmatpush.bf16.msra.mxu0 %v3378
    %4188 = vmatmul.bf16.gmra.mxu0 %v2312
    %v4189 = vpop.f32.mrf.mxu0
    %v4190 = vadd.f32 %v4177, %v4189
    %v4191 = vpop.f32.mrf.mxu0
    %4192 = vdwg.mxu0
    %4193 = vmatpush.bf16.msra.mxu0 %v3438
    %4194 = vmatpush.bf16.msra.mxu0 %v3434
    %4195 = vmatpush.bf16.msra.mxu0 %v3430
    %4196 = vmatpush.bf16.msra.mxu0 %v3426
    %4197 = vmatpush.bf16.msra.mxu0 %v3422
    %4198 = vmatpush.bf16.msra.mxu0 %v3418
    %4199 = vmatpush.bf16.msra.mxu0 %v3414
    %4200 = vmatpush.bf16.msra.mxu0 %v3410
    %4201 = vmatmul.bf16.gmra.mxu0 %v2313
    %v4202 = vpop.f32.mrf.mxu0
    %v4203 = vadd.f32 %v4190, %v4202
    %v4204 = vpop.f32.mrf.mxu0
    %4205 = vdwg.mxu0
    %4206 = vmatpush.bf16.msra.mxu0 %v3470
    %4207 = vmatpush.bf16.msra.mxu0 %v3466
    %4208 = vmatpush.bf16.msra.mxu0 %v3462
    %4209 = vmatpush.bf16.msra.mxu0 %v3458
    %4210 = vmatpush.bf16.msra.mxu0 %v3454
    %4211 = vmatpush.bf16.msra.mxu0 %v3450
    %4212 = vmatpush.bf16.msra.mxu0 %v3446
    %4213 = vmatpush.bf16.msra.mxu0 %v3442
    %4214 = vmatmul.bf16.gmra.mxu0 %v2314
    %v4215 = vpop.f32.mrf.mxu0
    %v4216 = vadd.f32 %v4203, %v4215
    %v4217 = vpop.f32.mrf.mxu0
    %4218 = vdwg.mxu0
    %4219 = vmatpush.bf16.msra.mxu0 %v3502
    %4220 = vmatpush.bf16.msra.mxu0 %v3498
    %4221 = vmatpush.bf16.msra.mxu0 %v3494
    %4222 = vmatpush.bf16.msra.mxu0 %v3490
    %4223 = vmatpush.bf16.msra.mxu0 %v3486
    %4224 = vmatpush.bf16.msra.mxu0 %v3482
    %4225 = vmatpush.bf16.msra.mxu0 %v3478
    %4226 = vmatpush.bf16.msra.mxu0 %v3474
    %4227 = vmatmul.bf16.gmra.mxu0 %v2315
    %v4228 = vpop.f32.mrf.mxu0
    %v4229 = vadd.f32 %v4216, %v4228
    %v4230 = vpop.f32.mrf.mxu0
    %4231 = vdwg.mxu0
    %4232 = vmatpush.bf16.msra.mxu0 %v3534
    %4233 = vmatpush.bf16.msra.mxu0 %v3530
    %4234 = vmatpush.bf16.msra.mxu0 %v3526
    %4235 = vmatpush.bf16.msra.mxu0 %v3522
    %4236 = vmatpush.bf16.msra.mxu0 %v3518
    %4237 = vmatpush.bf16.msra.mxu0 %v3514
    %4238 = vmatpush.bf16.msra.mxu0 %v3510
    %4239 = vmatpush.bf16.msra.mxu0 %v3506
    %4240 = vmatmul.bf16.gmra.mxu0 %v2316
    %v4241 = vpop.f32.mrf.mxu0
    %v4242 = vadd.f32 %v4229, %v4241
    %v4243 = vpop.f32.mrf.mxu0
    %4244 = vdwg.mxu0
    %4245 = vmatpush.bf16.msra.mxu0 %v3566
    %4246 = vmatpush.bf16.msra.mxu0 %v3562
    %4247 = vmatpush.bf16.msra.mxu0 %v3558
    %4248 = vmatpush.bf16.msra.mxu0 %v3554
    %4249 = vmatpush.bf16.msra.mxu0 %v3550
    %4250 = vmatpush.bf16.msra.mxu0 %v3546
    %4251 = vmatpush.bf16.msra.mxu0 %v3542
    %4252 = vmatpush.bf16.msra.mxu0 %v3538
    %4253 = vmatmul.bf16.gmra.mxu0 %v2317
    %v4254 = vpop.f32.mrf.mxu0
    %v4255 = vadd.f32 %v4242, %v4254
    %v4256 = vpop.f32.mrf.mxu0
    %4257 = vdwg.mxu0
    %4258 = vmatpush.bf16.msra.mxu0 %v3598
    %4259 = vmatpush.bf16.msra.mxu0 %v3594
    %4260 = vmatpush.bf16.msra.mxu0 %v3590
    %4261 = vmatpush.bf16.msra.mxu0 %v3586
    %4262 = vmatpush.bf16.msra.mxu0 %v3582
    %4263 = vmatpush.bf16.msra.mxu0 %v3578
    %4264 = vmatpush.bf16.msra.mxu0 %v3574
    %4265 = vmatpush.bf16.msra.mxu0 %v3570
    %4266 = vmatmul.bf16.gmra.mxu0 %v2318
    %v4267 = vpop.f32.mrf.mxu0
    %v4268 = vadd.f32 %v4255, %v4267
    %v4269 = vpop.f32.mrf.mxu0
    %4270 = vdwg.mxu0
    %vm4271 = vcmp.gt.f32.partialorder %v3956, 0.0
    %vm4272 = vcmp.gt.f32.partialorder %v4060, 0.0
    %vm4273 = vcmp.gt.f32.partialorder %v4164, 0.0
    %vm4274 = vcmp.gt.f32.partialorder %v4268, 0.0
    %v4275 = vmul.f32 %v3956, 0.01
    %v4276 = vmul.f32 %v4060, 0.01
    %v4277 = vmul.f32 %v4164, 0.01
    %v4278 = vmul.f32 %v4268, 0.01
    %v4279 = vsel %vm4271, %v3956, %v4275
    %v4280 = vsel %vm4272, %v4060, %v4276
    %v4281 = vsel %vm4273, %v4164, %v4277
    %v4282 = vsel %vm4274, %v4268, %v4278
    %v4283 = vpack.c.bf16 %v4279, %v4279
    %v4284 = vpack.c.bf16 %v4280, %v4280
    %v4285 = vpack.c.bf16 %v4281, %v4281
    %v4286 = vpack.c.bf16 %v4282, %v4282
    %v4287 = vld [vmem:[#allocation17] sm:$0xf]
    %v4288 = vld [vmem:[#allocation17 + $0x4] sm:$0xf]
    %v4289 = vld [vmem:[#allocation17 + $0x8] sm:$0xf]
    %v4290 = vld [vmem:[#allocation17 + $0xc] sm:$0xf]
    %v4291 = vld [vmem:[#allocation17 + $0x10] sm:$0xf]
    %v4292 = vld [vmem:[#allocation17 + $0x14] sm:$0xf]
    %v4293 = vld [vmem:[#allocation17 + $0x18] sm:$0xf]
    %v4294 = vld [vmem:[#allocation17 + $0x1c] sm:$0xf]
    %v4295 = vld [vmem:[#allocation17 + $0x20] sm:$0xf]
    %v4296 = vld [vmem:[#allocation17 + $0x24] sm:$0xf]
    %v4297 = vld [vmem:[#allocation17 + $0x28] sm:$0xf]
    %v4298 = vld [vmem:[#allocation17 + $0x2c] sm:$0xf]
    %v4299 = vld [vmem:[#allocation17 + $0x30] sm:$0xf]
    %v4300 = vld [vmem:[#allocation17 + $0x34] sm:$0xf]
    %v4301 = vld [vmem:[#allocation17 + $0x38] sm:$0xf]
    %v4302 = vld [vmem:[#allocation17 + $0x3c] sm:$0xf]
    %v4303 = vld [vmem:[#allocation17 + $0x40] sm:$0xf]
    %v4304 = vld [vmem:[#allocation17 + $0x44] sm:$0xf]
    %v4305 = vld [vmem:[#allocation17 + $0x48] sm:$0xf]
    %v4306 = vld [vmem:[#allocation17 + $0x4c] sm:$0xf]
    %v4307 = vld [vmem:[#allocation17 + $0x50] sm:$0xf]
    %v4308 = vld [vmem:[#allocation17 + $0x54] sm:$0xf]
    %v4309 = vld [vmem:[#allocation17 + $0x58] sm:$0xf]
    %v4310 = vld [vmem:[#allocation17 + $0x5c] sm:$0xf]
    %v4311 = vld [vmem:[#allocation17 + $0x60] sm:$0xf]
    %v4312 = vld [vmem:[#allocation17 + $0x64] sm:$0xf]
    %v4313 = vld [vmem:[#allocation17 + $0x68] sm:$0xf]
    %v4314 = vld [vmem:[#allocation17 + $0x6c] sm:$0xf]
    %v4315 = vld [vmem:[#allocation17 + $0x70] sm:$0xf]
    %v4316 = vld [vmem:[#allocation17 + $0x74] sm:$0xf]
    %v4317 = vld [vmem:[#allocation17 + $0x78] sm:$0xf]
    %v4318 = vld [vmem:[#allocation17 + $0x7c] sm:$0xf]
    %v4319 = vld [vmem:[#allocation17 + $0x80] sm:$0xf]
    %v4320 = vld [vmem:[#allocation17 + $0x84] sm:$0xf]
    %v4321 = vld [vmem:[#allocation17 + $0x88] sm:$0xf]
    %v4322 = vld [vmem:[#allocation17 + $0x8c] sm:$0xf]
    %v4323 = vld [vmem:[#allocation17 + $0x90] sm:$0xf]
    %v4324 = vld [vmem:[#allocation17 + $0x94] sm:$0xf]
    %v4325 = vld [vmem:[#allocation17 + $0x98] sm:$0xf]
    %v4326 = vld [vmem:[#allocation17 + $0x9c] sm:$0xf]
    %v4327 = vld [vmem:[#allocation17 + $0xa0] sm:$0xf]
    %v4328 = vld [vmem:[#allocation17 + $0xa4] sm:$0xf]
    %v4329 = vld [vmem:[#allocation17 + $0xa8] sm:$0xf]
    %v4330 = vld [vmem:[#allocation17 + $0xac] sm:$0xf]
    %v4331 = vld [vmem:[#allocation17 + $0xb0] sm:$0xf]
    %v4332 = vld [vmem:[#allocation17 + $0xb4] sm:$0xf]
    %v4333 = vld [vmem:[#allocation17 + $0xb8] sm:$0xf]
    %v4334 = vld [vmem:[#allocation17 + $0xbc] sm:$0xf]
    %v4335 = vld [vmem:[#allocation17 + $0xc0] sm:$0xf]
    %v4336 = vld [vmem:[#allocation17 + $0xc4] sm:$0xf]
    %v4337 = vld [vmem:[#allocation17 + $0xc8] sm:$0xf]
    %v4338 = vld [vmem:[#allocation17 + $0xcc] sm:$0xf]
    %v4339 = vld [vmem:[#allocation17 + $0xd0] sm:$0xf]
    %v4340 = vld [vmem:[#allocation17 + $0xd4] sm:$0xf]
    %v4341 = vld [vmem:[#allocation17 + $0xd8] sm:$0xf]
    %v4342 = vld [vmem:[#allocation17 + $0xdc] sm:$0xf]
    %v4343 = vld [vmem:[#allocation17 + $0xe0] sm:$0xf]
    %v4344 = vld [vmem:[#allocation17 + $0xe4] sm:$0xf]
    %v4345 = vld [vmem:[#allocation17 + $0xe8] sm:$0xf]
    %v4346 = vld [vmem:[#allocation17 + $0xec] sm:$0xf]
    %v4347 = vld [vmem:[#allocation17 + $0xf0] sm:$0xf]
    %v4348 = vld [vmem:[#allocation17 + $0xf4] sm:$0xf]
    %v4349 = vld [vmem:[#allocation17 + $0xf8] sm:$0xf]
    %v4350 = vld [vmem:[#allocation17 + $0xfc] sm:$0xf]
    %v4415 = vunpack.c.l.b16 %v4287
    %v4416 = vunpack.c.l.b16 %v4288
    %v4417 = vunpack.c.l.b16 %v4289
    %v4418 = vunpack.c.l.b16 %v4290
    %v4419 = vunpack.c.l.b16 %v4291
    %v4420 = vunpack.c.l.b16 %v4292
    %v4421 = vunpack.c.l.b16 %v4293
    %v4422 = vunpack.c.l.b16 %v4294
    %v4423 = vunpack.c.l.b16 %v4295
    %v4424 = vunpack.c.l.b16 %v4296
    %v4425 = vunpack.c.l.b16 %v4297
    %v4426 = vunpack.c.l.b16 %v4298
    %v4427 = vunpack.c.l.b16 %v4299
    %v4428 = vunpack.c.l.b16 %v4300
    %v4429 = vunpack.c.l.b16 %v4301
    %v4430 = vunpack.c.l.b16 %v4302
    %v4431 = vunpack.c.l.b16 %v4303
    %v4432 = vunpack.c.l.b16 %v4304
    %v4433 = vunpack.c.l.b16 %v4305
    %v4434 = vunpack.c.l.b16 %v4306
    %v4435 = vunpack.c.l.b16 %v4307
    %v4436 = vunpack.c.l.b16 %v4308
    %v4437 = vunpack.c.l.b16 %v4309
    %v4438 = vunpack.c.l.b16 %v4310
    %v4439 = vunpack.c.l.b16 %v4311
    %v4440 = vunpack.c.l.b16 %v4312
    %v4441 = vunpack.c.l.b16 %v4313
    %v4442 = vunpack.c.l.b16 %v4314
    %v4443 = vunpack.c.l.b16 %v4315
    %v4444 = vunpack.c.l.b16 %v4316
    %v4445 = vunpack.c.l.b16 %v4317
    %v4446 = vunpack.c.l.b16 %v4318
    %v4447 = vunpack.c.l.b16 %v4319
    %v4448 = vunpack.c.l.b16 %v4320
    %v4449 = vunpack.c.l.b16 %v4321
    %v4450 = vunpack.c.l.b16 %v4322
    %v4451 = vunpack.c.l.b16 %v4323
    %v4452 = vunpack.c.l.b16 %v4324
    %v4453 = vunpack.c.l.b16 %v4325
    %v4454 = vunpack.c.l.b16 %v4326
    %v4455 = vunpack.c.l.b16 %v4327
    %v4456 = vunpack.c.l.b16 %v4328
    %v4457 = vunpack.c.l.b16 %v4329
    %v4458 = vunpack.c.l.b16 %v4330
    %v4459 = vunpack.c.l.b16 %v4331
    %v4460 = vunpack.c.l.b16 %v4332
    %v4461 = vunpack.c.l.b16 %v4333
    %v4462 = vunpack.c.l.b16 %v4334
    %v4463 = vunpack.c.l.b16 %v4335
    %v4464 = vunpack.c.l.b16 %v4336
    %v4465 = vunpack.c.l.b16 %v4337
    %v4466 = vunpack.c.l.b16 %v4338
    %v4467 = vunpack.c.l.b16 %v4339
    %v4468 = vunpack.c.l.b16 %v4340
    %v4469 = vunpack.c.l.b16 %v4341
    %v4470 = vunpack.c.l.b16 %v4342
    %v4471 = vunpack.c.l.b16 %v4343
    %v4472 = vunpack.c.l.b16 %v4344
    %v4473 = vunpack.c.l.b16 %v4345
    %v4474 = vunpack.c.l.b16 %v4346
    %v4475 = vunpack.c.l.b16 %v4347
    %v4476 = vunpack.c.l.b16 %v4348
    %v4477 = vunpack.c.l.b16 %v4349
    %v4478 = vunpack.c.l.b16 %v4350
    %v4479 = vpack.c.b16 %v4416, %v4415
    %v4480 = vpack.c.b16 %v4418, %v4417
    %v4481 = vpack.c.b16 %v4420, %v4419
    %v4482 = vpack.c.b16 %v4422, %v4421
    %v4483 = vpack.c.b16 %v4424, %v4423
    %v4484 = vpack.c.b16 %v4426, %v4425
    %v4485 = vpack.c.b16 %v4428, %v4427
    %v4486 = vpack.c.b16 %v4430, %v4429
    %v4487 = vpack.c.b16 %v4432, %v4431
    %v4488 = vpack.c.b16 %v4434, %v4433
    %v4489 = vpack.c.b16 %v4436, %v4435
    %v4490 = vpack.c.b16 %v4438, %v4437
    %v4491 = vpack.c.b16 %v4440, %v4439
    %v4492 = vpack.c.b16 %v4442, %v4441
    %v4493 = vpack.c.b16 %v4444, %v4443
    %v4494 = vpack.c.b16 %v4446, %v4445
    %v4495 = vpack.c.b16 %v4448, %v4447
    %v4496 = vpack.c.b16 %v4450, %v4449
    %v4497 = vpack.c.b16 %v4452, %v4451
    %v4498 = vpack.c.b16 %v4454, %v4453
    %v4499 = vpack.c.b16 %v4456, %v4455
    %v4500 = vpack.c.b16 %v4458, %v4457
    %v4501 = vpack.c.b16 %v4460, %v4459
    %v4502 = vpack.c.b16 %v4462, %v4461
    %v4503 = vpack.c.b16 %v4464, %v4463
    %v4504 = vpack.c.b16 %v4466, %v4465
    %v4505 = vpack.c.b16 %v4468, %v4467
    %v4506 = vpack.c.b16 %v4470, %v4469
    %v4507 = vpack.c.b16 %v4472, %v4471
    %v4508 = vpack.c.b16 %v4474, %v4473
    %v4509 = vpack.c.b16 %v4476, %v4475
    %v4510 = vpack.c.b16 %v4478, %v4477
    %4543 = vmatpush.bf16.msra.mxu0 %v4486
    %4544 = vmatpush.bf16.msra.mxu0 %v4485
    %4545 = vmatpush.bf16.msra.mxu0 %v4484
    %4546 = vmatpush.bf16.msra.mxu0 %v4483
    %4547 = vmatpush.bf16.msra.mxu0 %v4482
    %4548 = vmatpush.bf16.msra.mxu0 %v4481
    %4549 = vmatpush.bf16.msra.mxu0 %v4480
    %4550 = vmatpush.bf16.msra.mxu0 %v4479
    %4551 = vmatmul.bf16.gmra.mxu0 %v4283
    %v4552 = vpop.f32.mrf.mxu0
    %v4553 = vadd.f32 0.0, %v4552
    %v4554 = vpop.f32.mrf.mxu0
    %4555 = vdwg.mxu0
    %4556 = vmatpush.bf16.msra.mxu0 %v4494
    %4557 = vmatpush.bf16.msra.mxu0 %v4493
    %4558 = vmatpush.bf16.msra.mxu0 %v4492
    %4559 = vmatpush.bf16.msra.mxu0 %v4491
    %4560 = vmatpush.bf16.msra.mxu0 %v4490
    %4561 = vmatpush.bf16.msra.mxu0 %v4489
    %4562 = vmatpush.bf16.msra.mxu0 %v4488
    %4563 = vmatpush.bf16.msra.mxu0 %v4487
    %4564 = vmatmul.bf16.gmra.mxu0 %v4284
    %v4565 = vpop.f32.mrf.mxu0
    %v4566 = vadd.f32 %v4553, %v4565
    %v4567 = vpop.f32.mrf.mxu0
    %4568 = vdwg.mxu0
    %4569 = vmatpush.bf16.msra.mxu0 %v4502
    %4570 = vmatpush.bf16.msra.mxu0 %v4501
    %4571 = vmatpush.bf16.msra.mxu0 %v4500
    %4572 = vmatpush.bf16.msra.mxu0 %v4499
    %4573 = vmatpush.bf16.msra.mxu0 %v4498
    %4574 = vmatpush.bf16.msra.mxu0 %v4497
    %4575 = vmatpush.bf16.msra.mxu0 %v4496
    %4576 = vmatpush.bf16.msra.mxu0 %v4495
    %4577 = vmatmul.bf16.gmra.mxu0 %v4285
    %v4578 = vpop.f32.mrf.mxu0
    %v4579 = vadd.f32 %v4566, %v4578
    %v4580 = vpop.f32.mrf.mxu0
    %4581 = vdwg.mxu0
    %4582 = vmatpush.bf16.msra.mxu0 %v4510
    %4583 = vmatpush.bf16.msra.mxu0 %v4509
    %4584 = vmatpush.bf16.msra.mxu0 %v4508
    %4585 = vmatpush.bf16.msra.mxu0 %v4507
    %4586 = vmatpush.bf16.msra.mxu0 %v4506
    %4587 = vmatpush.bf16.msra.mxu0 %v4505
    %4588 = vmatpush.bf16.msra.mxu0 %v4504
    %4589 = vmatpush.bf16.msra.mxu0 %v4503
    %4590 = vmatmul.bf16.gmra.mxu0 %v4286
    %v4591 = vpop.f32.mrf.mxu0
    %v4592 = vadd.f32 %v4579, %v4591
    %v4593 = vpop.f32.mrf.mxu0
    %4594 = vdwg.mxu0
    %v4659 = vunpack.c.l.b16 %v2224
    %v4660 = vunpack.c.l.b16 %v2225
    %v4661 = vunpack.c.l.b16 %v2226
    %v4662 = vunpack.c.l.b16 %v2227
    %v4663 = vunpack.c.l.b16 %v2228
    %v4664 = vunpack.c.l.b16 %v2229
    %v4665 = vunpack.c.l.b16 %v2230
    %v4666 = vunpack.c.l.b16 %v2231
    %v4667 = vunpack.c.l.b16 %v2232
    %v4668 = vunpack.c.l.b16 %v2233
    %v4669 = vunpack.c.l.b16 %v2234
    %v4670 = vunpack.c.l.b16 %v2235
    %v4671 = vunpack.c.l.b16 %v2236
    %v4672 = vunpack.c.l.b16 %v2237
    %v4673 = vunpack.c.l.b16 %v2238
    %v4674 = vunpack.c.l.b16 %v2239
    %v4675 = vunpack.c.l.b16 %v2240
    %v4676 = vunpack.c.l.b16 %v2241
    %v4677 = vunpack.c.l.b16 %v2242
    %v4678 = vunpack.c.l.b16 %v2243
    %v4679 = vunpack.c.l.b16 %v2244
    %v4680 = vunpack.c.l.b16 %v2245
    %v4681 = vunpack.c.l.b16 %v2246
    %v4682 = vunpack.c.l.b16 %v2247
    %v4683 = vunpack.c.l.b16 %v2248
    %v4684 = vunpack.c.l.b16 %v2249
    %v4685 = vunpack.c.l.b16 %v2250
    %v4686 = vunpack.c.l.b16 %v2251
    %v4687 = vunpack.c.l.b16 %v2252
    %v4688 = vunpack.c.l.b16 %v2253
    %v4689 = vunpack.c.l.b16 %v2254
    %v4690 = vunpack.c.l.b16 %v2255
    %v4691 = vunpack.c.l.b16 %v2256
    %v4692 = vunpack.c.l.b16 %v2257
    %v4693 = vunpack.c.l.b16 %v2258
    %v4694 = vunpack.c.l.b16 %v2259
    %v4695 = vunpack.c.l.b16 %v2260
    %v4696 = vunpack.c.l.b16 %v2261
    %v4697 = vunpack.c.l.b16 %v2262
    %v4698 = vunpack.c.l.b16 %v2263
    %v4699 = vunpack.c.l.b16 %v2264
    %v4700 = vunpack.c.l.b16 %v2265
    %v4701 = vunpack.c.l.b16 %v2266
    %v4702 = vunpack.c.l.b16 %v2267
    %v4703 = vunpack.c.l.b16 %v2268
    %v4704 = vunpack.c.l.b16 %v2269
    %v4705 = vunpack.c.l.b16 %v2270
    %v4706 = vunpack.c.l.b16 %v2271
    %v4707 = vunpack.c.l.b16 %v2272
    %v4708 = vunpack.c.l.b16 %v2273
    %v4709 = vunpack.c.l.b16 %v2274
    %v4710 = vunpack.c.l.b16 %v2275
    %v4711 = vunpack.c.l.b16 %v2276
    %v4712 = vunpack.c.l.b16 %v2277
    %v4713 = vunpack.c.l.b16 %v2278
    %v4714 = vunpack.c.l.b16 %v2279
    %v4715 = vunpack.c.l.b16 %v2280
    %v4716 = vunpack.c.l.b16 %v2281
    %v4717 = vunpack.c.l.b16 %v2282
    %v4718 = vunpack.c.l.b16 %v2283
    %v4719 = vunpack.c.l.b16 %v2284
    %v4720 = vunpack.c.l.b16 %v2285
    %v4721 = vunpack.c.l.b16 %v2286
    %v4722 = vunpack.c.l.b16 %v2287
    %v4723 = vpack.c.b16 %v4660, %v4659
    %v4724 = vpack.c.b16 %v4662, %v4661
    %v4725 = vpack.c.b16 %v4664, %v4663
    %v4726 = vpack.c.b16 %v4666, %v4665
    %v4727 = vpack.c.b16 %v4668, %v4667
    %v4728 = vpack.c.b16 %v4670, %v4669
    %v4729 = vpack.c.b16 %v4672, %v4671
    %v4730 = vpack.c.b16 %v4674, %v4673
    %v4731 = vpack.c.b16 %v4676, %v4675
    %v4732 = vpack.c.b16 %v4678, %v4677
    %v4733 = vpack.c.b16 %v4680, %v4679
    %v4734 = vpack.c.b16 %v4682, %v4681
    %v4735 = vpack.c.b16 %v4684, %v4683
    %v4736 = vpack.c.b16 %v4686, %v4685
    %v4737 = vpack.c.b16 %v4688, %v4687
    %v4738 = vpack.c.b16 %v4690, %v4689
    %v4739 = vpack.c.b16 %v4692, %v4691
    %v4740 = vpack.c.b16 %v4694, %v4693
    %v4741 = vpack.c.b16 %v4696, %v4695
    %v4742 = vpack.c.b16 %v4698, %v4697
    %v4743 = vpack.c.b16 %v4700, %v4699
    %v4744 = vpack.c.b16 %v4702, %v4701
    %v4745 = vpack.c.b16 %v4704, %v4703
    %v4746 = vpack.c.b16 %v4706, %v4705
    %v4747 = vpack.c.b16 %v4708, %v4707
    %v4748 = vpack.c.b16 %v4710, %v4709
    %v4749 = vpack.c.b16 %v4712, %v4711
    %v4750 = vpack.c.b16 %v4714, %v4713
    %v4751 = vpack.c.b16 %v4716, %v4715
    %v4752 = vpack.c.b16 %v4718, %v4717
    %v4753 = vpack.c.b16 %v4720, %v4719
    %v4754 = vpack.c.b16 %v4722, %v4721
    %4787 = vmatpush.bf16.msra.mxu0 %v4730
    %4788 = vmatpush.bf16.msra.mxu0 %v4729
    %4789 = vmatpush.bf16.msra.mxu0 %v4728
    %4790 = vmatpush.bf16.msra.mxu0 %v4727
    %4791 = vmatpush.bf16.msra.mxu0 %v4726
    %4792 = vmatpush.bf16.msra.mxu0 %v4725
    %4793 = vmatpush.bf16.msra.mxu0 %v4724
    %4794 = vmatpush.bf16.msra.mxu0 %v4723
    %4795 = vmatmul.bf16.gmra.mxu0 %v2220
    %v4796 = vpop.f32.mrf.mxu0
    %v4797 = vadd.f32 %v4592, %v4796
    %v4798 = vpop.f32.mrf.mxu0
    %4799 = vdwg.mxu0
    %4800 = vmatpush.bf16.msra.mxu0 %v4738
    %4801 = vmatpush.bf16.msra.mxu0 %v4737
    %4802 = vmatpush.bf16.msra.mxu0 %v4736
    %4803 = vmatpush.bf16.msra.mxu0 %v4735
    %4804 = vmatpush.bf16.msra.mxu0 %v4734
    %4805 = vmatpush.bf16.msra.mxu0 %v4733
    %4806 = vmatpush.bf16.msra.mxu0 %v4732
    %4807 = vmatpush.bf16.msra.mxu0 %v4731
    %4808 = vmatmul.bf16.gmra.mxu0 %v2221
    %v4809 = vpop.f32.mrf.mxu0
    %v4810 = vadd.f32 %v4797, %v4809
    %v4811 = vpop.f32.mrf.mxu0
    %4812 = vdwg.mxu0
    %4813 = vmatpush.bf16.msra.mxu0 %v4746
    %4814 = vmatpush.bf16.msra.mxu0 %v4745
    %4815 = vmatpush.bf16.msra.mxu0 %v4744
    %4816 = vmatpush.bf16.msra.mxu0 %v4743
    %4817 = vmatpush.bf16.msra.mxu0 %v4742
    %4818 = vmatpush.bf16.msra.mxu0 %v4741
    %4819 = vmatpush.bf16.msra.mxu0 %v4740
    %4820 = vmatpush.bf16.msra.mxu0 %v4739
    %4821 = vmatmul.bf16.gmra.mxu0 %v2222
    %v4822 = vpop.f32.mrf.mxu0
    %v4823 = vadd.f32 %v4810, %v4822
    %v4824 = vpop.f32.mrf.mxu0
    %4825 = vdwg.mxu0
    %4826 = vmatpush.bf16.msra.mxu0 %v4754
    %4827 = vmatpush.bf16.msra.mxu0 %v4753
    %4828 = vmatpush.bf16.msra.mxu0 %v4752
    %4829 = vmatpush.bf16.msra.mxu0 %v4751
    %4830 = vmatpush.bf16.msra.mxu0 %v4750
    %4831 = vmatpush.bf16.msra.mxu0 %v4749
    %4832 = vmatpush.bf16.msra.mxu0 %v4748
    %4833 = vmatpush.bf16.msra.mxu0 %v4747
    %4834 = vmatmul.bf16.gmra.mxu0 %v2223
    %v4835 = vpop.f32.mrf.mxu0
    %v4836 = vadd.f32 %v4823, %v4835
    %v4837 = vpop.f32.mrf.mxu0
    %4838 = vdwg.mxu0
    %v4839 = vld [vmem:[#allocation7] sm:$0xff]
    %v4840 = vld [vmem:[#allocation7 + $0x8] sm:$0xff]
    %4843 = vst [vmem:[#allocation1] ss:$4 sm:$0xff] %v4839
    %s4844 = scalar_lea.vmem [#allocation1], 32
    %4845 = vst [vmem:[%s4844] ss:$4 sm:$0xff] %v4840
    %v4846 = vld.sshfl [vmem:[#allocation1] sm:$0xff pattern:$0x73625140]
    %v4847 = vld.sshfl [vmem:[#allocation1 + $0x8] sm:$0xff pattern:$0x73625140]
    %v4848 = vld.sshfl [vmem:[#allocation1 + $0x10] sm:$0xff pattern:$0x73625140]
    %v4849 = vld.sshfl [vmem:[#allocation1 + $0x18] sm:$0xff pattern:$0x73625140]
    %v4850 = vld.sshfl [vmem:[#allocation1 + $0x20] sm:$0xff pattern:$0x73625140]
    %v4851 = vld.sshfl [vmem:[#allocation1 + $0x28] sm:$0xff pattern:$0x73625140]
    %v4852 = vld.sshfl [vmem:[#allocation1 + $0x30] sm:$0xff pattern:$0x73625140]
    %v4853 = vld.sshfl [vmem:[#allocation1 + $0x38] sm:$0xff pattern:$0x73625140]
    %v4862 = vpack.c.bf16 %v4846, %v4846
    %v4863 = vpack.c.bf16 %v4847, %v4847
    %v4864 = vpack.c.bf16 %v4848, %v4848
    %v4865 = vpack.c.bf16 %v4849, %v4849
    %v4866 = vpack.c.bf16 %v4850, %v4850
    %v4867 = vpack.c.bf16 %v4851, %v4851
    %v4868 = vpack.c.bf16 %v4852, %v4852
    %v4869 = vpack.c.bf16 %v4853, %v4853
    %v4870 = vld [vmem:[#allocation11] sm:$0xff]
    %v4871 = vld [vmem:[#allocation11 + $0x8] sm:$0xff]
    %v4872 = vld [vmem:[#allocation11 + $0x10] sm:$0xff]
    %v4873 = vld [vmem:[#allocation11 + $0x18] sm:$0xff]
    %v4874 = vld [vmem:[#allocation11 + $0x20] sm:$0xff]
    %v4875 = vld [vmem:[#allocation11 + $0x28] sm:$0xff]
    %v4876 = vld [vmem:[#allocation11 + $0x30] sm:$0xff]
    %v4877 = vld [vmem:[#allocation11 + $0x38] sm:$0xff]
    %v4878 = vld [vmem:[#allocation11 + $0x40] sm:$0xff]
    %v4879 = vld [vmem:[#allocation11 + $0x48] sm:$0xff]
    %v4880 = vld [vmem:[#allocation11 + $0x50] sm:$0xff]
    %v4881 = vld [vmem:[#allocation11 + $0x58] sm:$0xff]
    %v4882 = vld [vmem:[#allocation11 + $0x60] sm:$0xff]
    %v4883 = vld [vmem:[#allocation11 + $0x68] sm:$0xff]
    %v4884 = vld [vmem:[#allocation11 + $0x70] sm:$0xff]
    %v4885 = vld [vmem:[#allocation11 + $0x78] sm:$0xff]
    %v4886 = vld [vmem:[#allocation11 + $0x80] sm:$0xff]
    %v4887 = vld [vmem:[#allocation11 + $0x88] sm:$0xff]
    %v4888 = vld [vmem:[#allocation11 + $0x90] sm:$0xff]
    %v4889 = vld [vmem:[#allocation11 + $0x98] sm:$0xff]
    %v4890 = vld [vmem:[#allocation11 + $0xa0] sm:$0xff]
    %v4891 = vld [vmem:[#allocation11 + $0xa8] sm:$0xff]
    %v4892 = vld [vmem:[#allocation11 + $0xb0] sm:$0xff]
    %v4893 = vld [vmem:[#allocation11 + $0xb8] sm:$0xff]
    %v4894 = vld [vmem:[#allocation11 + $0xc0] sm:$0xff]
    %v4895 = vld [vmem:[#allocation11 + $0xc8] sm:$0xff]
    %v4896 = vld [vmem:[#allocation11 + $0xd0] sm:$0xff]
    %v4897 = vld [vmem:[#allocation11 + $0xd8] sm:$0xff]
    %v4898 = vld [vmem:[#allocation11 + $0xe0] sm:$0xff]
    %v4899 = vld [vmem:[#allocation11 + $0xe8] sm:$0xff]
    %v4900 = vld [vmem:[#allocation11 + $0xf0] sm:$0xff]
    %v4901 = vld [vmem:[#allocation11 + $0xf8] sm:$0xff]
    %v4902 = vld [vmem:[#allocation11 + $0x100] sm:$0xff]
    %v4903 = vld [vmem:[#allocation11 + $0x108] sm:$0xff]
    %v4904 = vld [vmem:[#allocation11 + $0x110] sm:$0xff]
    %v4905 = vld [vmem:[#allocation11 + $0x118] sm:$0xff]
    %v4906 = vld [vmem:[#allocation11 + $0x120] sm:$0xff]
    %v4907 = vld [vmem:[#allocation11 + $0x128] sm:$0xff]
    %v4908 = vld [vmem:[#allocation11 + $0x130] sm:$0xff]
    %v4909 = vld [vmem:[#allocation11 + $0x138] sm:$0xff]
    %v4910 = vld [vmem:[#allocation11 + $0x140] sm:$0xff]
    %v4911 = vld [vmem:[#allocation11 + $0x148] sm:$0xff]
    %v4912 = vld [vmem:[#allocation11 + $0x150] sm:$0xff]
    %v4913 = vld [vmem:[#allocation11 + $0x158] sm:$0xff]
    %v4914 = vld [vmem:[#allocation11 + $0x160] sm:$0xff]
    %v4915 = vld [vmem:[#allocation11 + $0x168] sm:$0xff]
    %v4916 = vld [vmem:[#allocation11 + $0x170] sm:$0xff]
    %v4917 = vld [vmem:[#allocation11 + $0x178] sm:$0xff]
    %v4918 = vld [vmem:[#allocation11 + $0x180] sm:$0xff]
    %v4919 = vld [vmem:[#allocation11 + $0x188] sm:$0xff]
    %v4920 = vld [vmem:[#allocation11 + $0x190] sm:$0xff]
    %v4921 = vld [vmem:[#allocation11 + $0x198] sm:$0xff]
    %v4922 = vld [vmem:[#allocation11 + $0x1a0] sm:$0xff]
    %v4923 = vld [vmem:[#allocation11 + $0x1a8] sm:$0xff]
    %v4924 = vld [vmem:[#allocation11 + $0x1b0] sm:$0xff]
    %v4925 = vld [vmem:[#allocation11 + $0x1b8] sm:$0xff]
    %v4926 = vld [vmem:[#allocation11 + $0x1c0] sm:$0xff]
    %v4927 = vld [vmem:[#allocation11 + $0x1c8] sm:$0xff]
    %v4928 = vld [vmem:[#allocation11 + $0x1d0] sm:$0xff]
    %v4929 = vld [vmem:[#allocation11 + $0x1d8] sm:$0xff]
    %v4930 = vld [vmem:[#allocation11 + $0x1e0] sm:$0xff]
    %v4931 = vld [vmem:[#allocation11 + $0x1e8] sm:$0xff]
    %v4932 = vld [vmem:[#allocation11 + $0x1f0] sm:$0xff]
    %v4933 = vld [vmem:[#allocation11 + $0x1f8] sm:$0xff]
    %v4934 = vld [vmem:[#allocation11 + $0x200] sm:$0xff]
    %v4935 = vld [vmem:[#allocation11 + $0x208] sm:$0xff]
    %v4936 = vld [vmem:[#allocation11 + $0x210] sm:$0xff]
    %v4937 = vld [vmem:[#allocation11 + $0x218] sm:$0xff]
    %v4938 = vld [vmem:[#allocation11 + $0x220] sm:$0xff]
    %v4939 = vld [vmem:[#allocation11 + $0x228] sm:$0xff]
    %v4940 = vld [vmem:[#allocation11 + $0x230] sm:$0xff]
    %v4941 = vld [vmem:[#allocation11 + $0x238] sm:$0xff]
    %v4942 = vld [vmem:[#allocation11 + $0x240] sm:$0xff]
    %v4943 = vld [vmem:[#allocation11 + $0x248] sm:$0xff]
    %v4944 = vld [vmem:[#allocation11 + $0x250] sm:$0xff]
    %v4945 = vld [vmem:[#allocation11 + $0x258] sm:$0xff]
    %v4946 = vld [vmem:[#allocation11 + $0x260] sm:$0xff]
    %v4947 = vld [vmem:[#allocation11 + $0x268] sm:$0xff]
    %v4948 = vld [vmem:[#allocation11 + $0x270] sm:$0xff]
    %v4949 = vld [vmem:[#allocation11 + $0x278] sm:$0xff]
    %v4950 = vld [vmem:[#allocation11 + $0x280] sm:$0xff]
    %v4951 = vld [vmem:[#allocation11 + $0x288] sm:$0xff]
    %v4952 = vld [vmem:[#allocation11 + $0x290] sm:$0xff]
    %v4953 = vld [vmem:[#allocation11 + $0x298] sm:$0xff]
    %v4954 = vld [vmem:[#allocation11 + $0x2a0] sm:$0xff]
    %v4955 = vld [vmem:[#allocation11 + $0x2a8] sm:$0xff]
    %v4956 = vld [vmem:[#allocation11 + $0x2b0] sm:$0xff]
    %v4957 = vld [vmem:[#allocation11 + $0x2b8] sm:$0xff]
    %v4958 = vld [vmem:[#allocation11 + $0x2c0] sm:$0xff]
    %v4959 = vld [vmem:[#allocation11 + $0x2c8] sm:$0xff]
    %v4960 = vld [vmem:[#allocation11 + $0x2d0] sm:$0xff]
    %v4961 = vld [vmem:[#allocation11 + $0x2d8] sm:$0xff]
    %v4962 = vld [vmem:[#allocation11 + $0x2e0] sm:$0xff]
    %v4963 = vld [vmem:[#allocation11 + $0x2e8] sm:$0xff]
    %v4964 = vld [vmem:[#allocation11 + $0x2f0] sm:$0xff]
    %v4965 = vld [vmem:[#allocation11 + $0x2f8] sm:$0xff]
    %v4966 = vld [vmem:[#allocation11 + $0x300] sm:$0xff]
    %v4967 = vld [vmem:[#allocation11 + $0x308] sm:$0xff]
    %v4968 = vld [vmem:[#allocation11 + $0x310] sm:$0xff]
    %v4969 = vld [vmem:[#allocation11 + $0x318] sm:$0xff]
    %v4970 = vld [vmem:[#allocation11 + $0x320] sm:$0xff]
    %v4971 = vld [vmem:[#allocation11 + $0x328] sm:$0xff]
    %v4972 = vld [vmem:[#allocation11 + $0x330] sm:$0xff]
    %v4973 = vld [vmem:[#allocation11 + $0x338] sm:$0xff]
    %v4974 = vld [vmem:[#allocation11 + $0x340] sm:$0xff]
    %v4975 = vld [vmem:[#allocation11 + $0x348] sm:$0xff]
    %v4976 = vld [vmem:[#allocation11 + $0x350] sm:$0xff]
    %v4977 = vld [vmem:[#allocation11 + $0x358] sm:$0xff]
    %v4978 = vld [vmem:[#allocation11 + $0x360] sm:$0xff]
    %v4979 = vld [vmem:[#allocation11 + $0x368] sm:$0xff]
    %v4980 = vld [vmem:[#allocation11 + $0x370] sm:$0xff]
    %v4981 = vld [vmem:[#allocation11 + $0x378] sm:$0xff]
    %v4982 = vld [vmem:[#allocation11 + $0x380] sm:$0xff]
    %v4983 = vld [vmem:[#allocation11 + $0x388] sm:$0xff]
    %v4984 = vld [vmem:[#allocation11 + $0x390] sm:$0xff]
    %v4985 = vld [vmem:[#allocation11 + $0x398] sm:$0xff]
    %v4986 = vld [vmem:[#allocation11 + $0x3a0] sm:$0xff]
    %v4987 = vld [vmem:[#allocation11 + $0x3a8] sm:$0xff]
    %v4988 = vld [vmem:[#allocation11 + $0x3b0] sm:$0xff]
    %v4989 = vld [vmem:[#allocation11 + $0x3b8] sm:$0xff]
    %v4990 = vld [vmem:[#allocation11 + $0x3c0] sm:$0xff]
    %v4991 = vld [vmem:[#allocation11 + $0x3c8] sm:$0xff]
    %v4992 = vld [vmem:[#allocation11 + $0x3d0] sm:$0xff]
    %v4993 = vld [vmem:[#allocation11 + $0x3d8] sm:$0xff]
    %v4994 = vld [vmem:[#allocation11 + $0x3e0] sm:$0xff]
    %v4995 = vld [vmem:[#allocation11 + $0x3e8] sm:$0xff]
    %v4996 = vld [vmem:[#allocation11 + $0x3f0] sm:$0xff]
    %v4997 = vld [vmem:[#allocation11 + $0x3f8] sm:$0xff]
    %v4998 = vld [vmem:[#allocation11 + $0x400] sm:$0xff]
    %v4999 = vld [vmem:[#allocation11 + $0x408] sm:$0xff]
    %v5000 = vld [vmem:[#allocation11 + $0x410] sm:$0xff]
    %v5001 = vld [vmem:[#allocation11 + $0x418] sm:$0xff]
    %v5002 = vld [vmem:[#allocation11 + $0x420] sm:$0xff]
    %v5003 = vld [vmem:[#allocation11 + $0x428] sm:$0xff]
    %v5004 = vld [vmem:[#allocation11 + $0x430] sm:$0xff]
    %v5005 = vld [vmem:[#allocation11 + $0x438] sm:$0xff]
    %v5006 = vld [vmem:[#allocation11 + $0x440] sm:$0xff]
    %v5007 = vld [vmem:[#allocation11 + $0x448] sm:$0xff]
    %v5008 = vld [vmem:[#allocation11 + $0x450] sm:$0xff]
    %v5009 = vld [vmem:[#allocation11 + $0x458] sm:$0xff]
    %v5010 = vld [vmem:[#allocation11 + $0x460] sm:$0xff]
    %v5011 = vld [vmem:[#allocation11 + $0x468] sm:$0xff]
    %v5012 = vld [vmem:[#allocation11 + $0x470] sm:$0xff]
    %v5013 = vld [vmem:[#allocation11 + $0x478] sm:$0xff]
    %v5014 = vld [vmem:[#allocation11 + $0x480] sm:$0xff]
    %v5015 = vld [vmem:[#allocation11 + $0x488] sm:$0xff]
    %v5016 = vld [vmem:[#allocation11 + $0x490] sm:$0xff]
    %v5017 = vld [vmem:[#allocation11 + $0x498] sm:$0xff]
    %v5018 = vld [vmem:[#allocation11 + $0x4a0] sm:$0xff]
    %v5019 = vld [vmem:[#allocation11 + $0x4a8] sm:$0xff]
    %v5020 = vld [vmem:[#allocation11 + $0x4b0] sm:$0xff]
    %v5021 = vld [vmem:[#allocation11 + $0x4b8] sm:$0xff]
    %v5022 = vld [vmem:[#allocation11 + $0x4c0] sm:$0xff]
    %v5023 = vld [vmem:[#allocation11 + $0x4c8] sm:$0xff]
    %v5024 = vld [vmem:[#allocation11 + $0x4d0] sm:$0xff]
    %v5025 = vld [vmem:[#allocation11 + $0x4d8] sm:$0xff]
    %v5026 = vld [vmem:[#allocation11 + $0x4e0] sm:$0xff]
    %v5027 = vld [vmem:[#allocation11 + $0x4e8] sm:$0xff]
    %v5028 = vld [vmem:[#allocation11 + $0x4f0] sm:$0xff]
    %v5029 = vld [vmem:[#allocation11 + $0x4f8] sm:$0xff]
    %v5030 = vld [vmem:[#allocation11 + $0x500] sm:$0xff]
    %v5031 = vld [vmem:[#allocation11 + $0x508] sm:$0xff]
    %v5032 = vld [vmem:[#allocation11 + $0x510] sm:$0xff]
    %v5033 = vld [vmem:[#allocation11 + $0x518] sm:$0xff]
    %v5034 = vld [vmem:[#allocation11 + $0x520] sm:$0xff]
    %v5035 = vld [vmem:[#allocation11 + $0x528] sm:$0xff]
    %v5036 = vld [vmem:[#allocation11 + $0x530] sm:$0xff]
    %v5037 = vld [vmem:[#allocation11 + $0x538] sm:$0xff]
    %v5038 = vld [vmem:[#allocation11 + $0x540] sm:$0xff]
    %v5039 = vld [vmem:[#allocation11 + $0x548] sm:$0xff]
    %v5040 = vld [vmem:[#allocation11 + $0x550] sm:$0xff]
    %v5041 = vld [vmem:[#allocation11 + $0x558] sm:$0xff]
    %v5042 = vld [vmem:[#allocation11 + $0x560] sm:$0xff]
    %v5043 = vld [vmem:[#allocation11 + $0x568] sm:$0xff]
    %v5044 = vld [vmem:[#allocation11 + $0x570] sm:$0xff]
    %v5045 = vld [vmem:[#allocation11 + $0x578] sm:$0xff]
    %v5046 = vld [vmem:[#allocation11 + $0x580] sm:$0xff]
    %v5047 = vld [vmem:[#allocation11 + $0x588] sm:$0xff]
    %v5048 = vld [vmem:[#allocation11 + $0x590] sm:$0xff]
    %v5049 = vld [vmem:[#allocation11 + $0x598] sm:$0xff]
    %v5050 = vld [vmem:[#allocation11 + $0x5a0] sm:$0xff]
    %v5051 = vld [vmem:[#allocation11 + $0x5a8] sm:$0xff]
    %v5052 = vld [vmem:[#allocation11 + $0x5b0] sm:$0xff]
    %v5053 = vld [vmem:[#allocation11 + $0x5b8] sm:$0xff]
    %v5054 = vld [vmem:[#allocation11 + $0x5c0] sm:$0xff]
    %v5055 = vld [vmem:[#allocation11 + $0x5c8] sm:$0xff]
    %v5056 = vld [vmem:[#allocation11 + $0x5d0] sm:$0xff]
    %v5057 = vld [vmem:[#allocation11 + $0x5d8] sm:$0xff]
    %v5058 = vld [vmem:[#allocation11 + $0x5e0] sm:$0xff]
    %v5059 = vld [vmem:[#allocation11 + $0x5e8] sm:$0xff]
    %v5060 = vld [vmem:[#allocation11 + $0x5f0] sm:$0xff]
    %v5061 = vld [vmem:[#allocation11 + $0x5f8] sm:$0xff]
    %v5062 = vld [vmem:[#allocation11 + $0x600] sm:$0xff]
    %v5063 = vld [vmem:[#allocation11 + $0x608] sm:$0xff]
    %v5064 = vld [vmem:[#allocation11 + $0x610] sm:$0xff]
    %v5065 = vld [vmem:[#allocation11 + $0x618] sm:$0xff]
    %v5066 = vld [vmem:[#allocation11 + $0x620] sm:$0xff]
    %v5067 = vld [vmem:[#allocation11 + $0x628] sm:$0xff]
    %v5068 = vld [vmem:[#allocation11 + $0x630] sm:$0xff]
    %v5069 = vld [vmem:[#allocation11 + $0x638] sm:$0xff]
    %v5070 = vld [vmem:[#allocation11 + $0x640] sm:$0xff]
    %v5071 = vld [vmem:[#allocation11 + $0x648] sm:$0xff]
    %v5072 = vld [vmem:[#allocation11 + $0x650] sm:$0xff]
    %v5073 = vld [vmem:[#allocation11 + $0x658] sm:$0xff]
    %v5074 = vld [vmem:[#allocation11 + $0x660] sm:$0xff]
    %v5075 = vld [vmem:[#allocation11 + $0x668] sm:$0xff]
    %v5076 = vld [vmem:[#allocation11 + $0x670] sm:$0xff]
    %v5077 = vld [vmem:[#allocation11 + $0x678] sm:$0xff]
    %v5078 = vld [vmem:[#allocation11 + $0x680] sm:$0xff]
    %v5079 = vld [vmem:[#allocation11 + $0x688] sm:$0xff]
    %v5080 = vld [vmem:[#allocation11 + $0x690] sm:$0xff]
    %v5081 = vld [vmem:[#allocation11 + $0x698] sm:$0xff]
    %v5082 = vld [vmem:[#allocation11 + $0x6a0] sm:$0xff]
    %v5083 = vld [vmem:[#allocation11 + $0x6a8] sm:$0xff]
    %v5084 = vld [vmem:[#allocation11 + $0x6b0] sm:$0xff]
    %v5085 = vld [vmem:[#allocation11 + $0x6b8] sm:$0xff]
    %v5086 = vld [vmem:[#allocation11 + $0x6c0] sm:$0xff]
    %v5087 = vld [vmem:[#allocation11 + $0x6c8] sm:$0xff]
    %v5088 = vld [vmem:[#allocation11 + $0x6d0] sm:$0xff]
    %v5089 = vld [vmem:[#allocation11 + $0x6d8] sm:$0xff]
    %v5090 = vld [vmem:[#allocation11 + $0x6e0] sm:$0xff]
    %v5091 = vld [vmem:[#allocation11 + $0x6e8] sm:$0xff]
    %v5092 = vld [vmem:[#allocation11 + $0x6f0] sm:$0xff]
    %v5093 = vld [vmem:[#allocation11 + $0x6f8] sm:$0xff]
    %v5094 = vld [vmem:[#allocation11 + $0x700] sm:$0xff]
    %v5095 = vld [vmem:[#allocation11 + $0x708] sm:$0xff]
    %v5096 = vld [vmem:[#allocation11 + $0x710] sm:$0xff]
    %v5097 = vld [vmem:[#allocation11 + $0x718] sm:$0xff]
    %v5098 = vld [vmem:[#allocation11 + $0x720] sm:$0xff]
    %v5099 = vld [vmem:[#allocation11 + $0x728] sm:$0xff]
    %v5100 = vld [vmem:[#allocation11 + $0x730] sm:$0xff]
    %v5101 = vld [vmem:[#allocation11 + $0x738] sm:$0xff]
    %v5102 = vld [vmem:[#allocation11 + $0x740] sm:$0xff]
    %v5103 = vld [vmem:[#allocation11 + $0x748] sm:$0xff]
    %v5104 = vld [vmem:[#allocation11 + $0x750] sm:$0xff]
    %v5105 = vld [vmem:[#allocation11 + $0x758] sm:$0xff]
    %v5106 = vld [vmem:[#allocation11 + $0x760] sm:$0xff]
    %v5107 = vld [vmem:[#allocation11 + $0x768] sm:$0xff]
    %v5108 = vld [vmem:[#allocation11 + $0x770] sm:$0xff]
    %v5109 = vld [vmem:[#allocation11 + $0x778] sm:$0xff]
    %v5110 = vld [vmem:[#allocation11 + $0x780] sm:$0xff]
    %v5111 = vld [vmem:[#allocation11 + $0x788] sm:$0xff]
    %v5112 = vld [vmem:[#allocation11 + $0x790] sm:$0xff]
    %v5113 = vld [vmem:[#allocation11 + $0x798] sm:$0xff]
    %v5114 = vld [vmem:[#allocation11 + $0x7a0] sm:$0xff]
    %v5115 = vld [vmem:[#allocation11 + $0x7a8] sm:$0xff]
    %v5116 = vld [vmem:[#allocation11 + $0x7b0] sm:$0xff]
    %v5117 = vld [vmem:[#allocation11 + $0x7b8] sm:$0xff]
    %v5118 = vld [vmem:[#allocation11 + $0x7c0] sm:$0xff]
    %v5119 = vld [vmem:[#allocation11 + $0x7c8] sm:$0xff]
    %v5120 = vld [vmem:[#allocation11 + $0x7d0] sm:$0xff]
    %v5121 = vld [vmem:[#allocation11 + $0x7d8] sm:$0xff]
    %v5122 = vld [vmem:[#allocation11 + $0x7e0] sm:$0xff]
    %v5123 = vld [vmem:[#allocation11 + $0x7e8] sm:$0xff]
    %v5124 = vld [vmem:[#allocation11 + $0x7f0] sm:$0xff]
    %v5125 = vld [vmem:[#allocation11 + $0x7f8] sm:$0xff]
    %v5382 = vunpack.c.l.b16 %v4870
    %v5383 = vunpack.c.h.b16 %v4870
    %v5384 = vunpack.c.l.b16 %v4871
    %v5385 = vunpack.c.h.b16 %v4871
    %v5386 = vunpack.c.l.b16 %v4872
    %v5387 = vunpack.c.h.b16 %v4872
    %v5388 = vunpack.c.l.b16 %v4873
    %v5389 = vunpack.c.h.b16 %v4873
    %v5390 = vunpack.c.l.b16 %v4874
    %v5391 = vunpack.c.h.b16 %v4874
    %v5392 = vunpack.c.l.b16 %v4875
    %v5393 = vunpack.c.h.b16 %v4875
    %v5394 = vunpack.c.l.b16 %v4876
    %v5395 = vunpack.c.h.b16 %v4876
    %v5396 = vunpack.c.l.b16 %v4877
    %v5397 = vunpack.c.h.b16 %v4877
    %v5398 = vunpack.c.l.b16 %v4878
    %v5399 = vunpack.c.h.b16 %v4878
    %v5400 = vunpack.c.l.b16 %v4879
    %v5401 = vunpack.c.h.b16 %v4879
    %v5402 = vunpack.c.l.b16 %v4880
    %v5403 = vunpack.c.h.b16 %v4880
    %v5404 = vunpack.c.l.b16 %v4881
    %v5405 = vunpack.c.h.b16 %v4881
    %v5406 = vunpack.c.l.b16 %v4882
    %v5407 = vunpack.c.h.b16 %v4882
    %v5408 = vunpack.c.l.b16 %v4883
    %v5409 = vunpack.c.h.b16 %v4883
    %v5410 = vunpack.c.l.b16 %v4884
    %v5411 = vunpack.c.h.b16 %v4884
    %v5412 = vunpack.c.l.b16 %v4885
    %v5413 = vunpack.c.h.b16 %v4885
    %v5414 = vunpack.c.l.b16 %v4886
    %v5415 = vunpack.c.h.b16 %v4886
    %v5416 = vunpack.c.l.b16 %v4887
    %v5417 = vunpack.c.h.b16 %v4887
    %v5418 = vunpack.c.l.b16 %v4888
    %v5419 = vunpack.c.h.b16 %v4888
    %v5420 = vunpack.c.l.b16 %v4889
    %v5421 = vunpack.c.h.b16 %v4889
    %v5422 = vunpack.c.l.b16 %v4890
    %v5423 = vunpack.c.h.b16 %v4890
    %v5424 = vunpack.c.l.b16 %v4891
    %v5425 = vunpack.c.h.b16 %v4891
    %v5426 = vunpack.c.l.b16 %v4892
    %v5427 = vunpack.c.h.b16 %v4892
    %v5428 = vunpack.c.l.b16 %v4893
    %v5429 = vunpack.c.h.b16 %v4893
    %v5430 = vunpack.c.l.b16 %v4894
    %v5431 = vunpack.c.h.b16 %v4894
    %v5432 = vunpack.c.l.b16 %v4895
    %v5433 = vunpack.c.h.b16 %v4895
    %v5434 = vunpack.c.l.b16 %v4896
    %v5435 = vunpack.c.h.b16 %v4896
    %v5436 = vunpack.c.l.b16 %v4897
    %v5437 = vunpack.c.h.b16 %v4897
    %v5438 = vunpack.c.l.b16 %v4898
    %v5439 = vunpack.c.h.b16 %v4898
    %v5440 = vunpack.c.l.b16 %v4899
    %v5441 = vunpack.c.h.b16 %v4899
    %v5442 = vunpack.c.l.b16 %v4900
    %v5443 = vunpack.c.h.b16 %v4900
    %v5444 = vunpack.c.l.b16 %v4901
    %v5445 = vunpack.c.h.b16 %v4901
    %v5446 = vunpack.c.l.b16 %v4902
    %v5447 = vunpack.c.h.b16 %v4902
    %v5448 = vunpack.c.l.b16 %v4903
    %v5449 = vunpack.c.h.b16 %v4903
    %v5450 = vunpack.c.l.b16 %v4904
    %v5451 = vunpack.c.h.b16 %v4904
    %v5452 = vunpack.c.l.b16 %v4905
    %v5453 = vunpack.c.h.b16 %v4905
    %v5454 = vunpack.c.l.b16 %v4906
    %v5455 = vunpack.c.h.b16 %v4906
    %v5456 = vunpack.c.l.b16 %v4907
    %v5457 = vunpack.c.h.b16 %v4907
    %v5458 = vunpack.c.l.b16 %v4908
    %v5459 = vunpack.c.h.b16 %v4908
    %v5460 = vunpack.c.l.b16 %v4909
    %v5461 = vunpack.c.h.b16 %v4909
    %v5462 = vunpack.c.l.b16 %v4910
    %v5463 = vunpack.c.h.b16 %v4910
    %v5464 = vunpack.c.l.b16 %v4911
    %v5465 = vunpack.c.h.b16 %v4911
    %v5466 = vunpack.c.l.b16 %v4912
    %v5467 = vunpack.c.h.b16 %v4912
    %v5468 = vunpack.c.l.b16 %v4913
    %v5469 = vunpack.c.h.b16 %v4913
    %v5470 = vunpack.c.l.b16 %v4914
    %v5471 = vunpack.c.h.b16 %v4914
    %v5472 = vunpack.c.l.b16 %v4915
    %v5473 = vunpack.c.h.b16 %v4915
    %v5474 = vunpack.c.l.b16 %v4916
    %v5475 = vunpack.c.h.b16 %v4916
    %v5476 = vunpack.c.l.b16 %v4917
    %v5477 = vunpack.c.h.b16 %v4917
    %v5478 = vunpack.c.l.b16 %v4918
    %v5479 = vunpack.c.h.b16 %v4918
    %v5480 = vunpack.c.l.b16 %v4919
    %v5481 = vunpack.c.h.b16 %v4919
    %v5482 = vunpack.c.l.b16 %v4920
    %v5483 = vunpack.c.h.b16 %v4920
    %v5484 = vunpack.c.l.b16 %v4921
    %v5485 = vunpack.c.h.b16 %v4921
    %v5486 = vunpack.c.l.b16 %v4922
    %v5487 = vunpack.c.h.b16 %v4922
    %v5488 = vunpack.c.l.b16 %v4923
    %v5489 = vunpack.c.h.b16 %v4923
    %v5490 = vunpack.c.l.b16 %v4924
    %v5491 = vunpack.c.h.b16 %v4924
    %v5492 = vunpack.c.l.b16 %v4925
    %v5493 = vunpack.c.h.b16 %v4925
    %v5494 = vunpack.c.l.b16 %v4926
    %v5495 = vunpack.c.h.b16 %v4926
    %v5496 = vunpack.c.l.b16 %v4927
    %v5497 = vunpack.c.h.b16 %v4927
    %v5498 = vunpack.c.l.b16 %v4928
    %v5499 = vunpack.c.h.b16 %v4928
    %v5500 = vunpack.c.l.b16 %v4929
    %v5501 = vunpack.c.h.b16 %v4929
    %v5502 = vunpack.c.l.b16 %v4930
    %v5503 = vunpack.c.h.b16 %v4930
    %v5504 = vunpack.c.l.b16 %v4931
    %v5505 = vunpack.c.h.b16 %v4931
    %v5506 = vunpack.c.l.b16 %v4932
    %v5507 = vunpack.c.h.b16 %v4932
    %v5508 = vunpack.c.l.b16 %v4933
    %v5509 = vunpack.c.h.b16 %v4933
    %v5510 = vunpack.c.l.b16 %v4934
    %v5511 = vunpack.c.h.b16 %v4934
    %v5512 = vunpack.c.l.b16 %v4935
    %v5513 = vunpack.c.h.b16 %v4935
    %v5514 = vunpack.c.l.b16 %v4936
    %v5515 = vunpack.c.h.b16 %v4936
    %v5516 = vunpack.c.l.b16 %v4937
    %v5517 = vunpack.c.h.b16 %v4937
    %v5518 = vunpack.c.l.b16 %v4938
    %v5519 = vunpack.c.h.b16 %v4938
    %v5520 = vunpack.c.l.b16 %v4939
    %v5521 = vunpack.c.h.b16 %v4939
    %v5522 = vunpack.c.l.b16 %v4940
    %v5523 = vunpack.c.h.b16 %v4940
    %v5524 = vunpack.c.l.b16 %v4941
    %v5525 = vunpack.c.h.b16 %v4941
    %v5526 = vunpack.c.l.b16 %v4942
    %v5527 = vunpack.c.h.b16 %v4942
    %v5528 = vunpack.c.l.b16 %v4943
    %v5529 = vunpack.c.h.b16 %v4943
    %v5530 = vunpack.c.l.b16 %v4944
    %v5531 = vunpack.c.h.b16 %v4944
    %v5532 = vunpack.c.l.b16 %v4945
    %v5533 = vunpack.c.h.b16 %v4945
    %v5534 = vunpack.c.l.b16 %v4946
    %v5535 = vunpack.c.h.b16 %v4946
    %v5536 = vunpack.c.l.b16 %v4947
    %v5537 = vunpack.c.h.b16 %v4947
    %v5538 = vunpack.c.l.b16 %v4948
    %v5539 = vunpack.c.h.b16 %v4948
    %v5540 = vunpack.c.l.b16 %v4949
    %v5541 = vunpack.c.h.b16 %v4949
    %v5542 = vunpack.c.l.b16 %v4950
    %v5543 = vunpack.c.h.b16 %v4950
    %v5544 = vunpack.c.l.b16 %v4951
    %v5545 = vunpack.c.h.b16 %v4951
    %v5546 = vunpack.c.l.b16 %v4952
    %v5547 = vunpack.c.h.b16 %v4952
    %v5548 = vunpack.c.l.b16 %v4953
    %v5549 = vunpack.c.h.b16 %v4953
    %v5550 = vunpack.c.l.b16 %v4954
    %v5551 = vunpack.c.h.b16 %v4954
    %v5552 = vunpack.c.l.b16 %v4955
    %v5553 = vunpack.c.h.b16 %v4955
    %v5554 = vunpack.c.l.b16 %v4956
    %v5555 = vunpack.c.h.b16 %v4956
    %v5556 = vunpack.c.l.b16 %v4957
    %v5557 = vunpack.c.h.b16 %v4957
    %v5558 = vunpack.c.l.b16 %v4958
    %v5559 = vunpack.c.h.b16 %v4958
    %v5560 = vunpack.c.l.b16 %v4959
    %v5561 = vunpack.c.h.b16 %v4959
    %v5562 = vunpack.c.l.b16 %v4960
    %v5563 = vunpack.c.h.b16 %v4960
    %v5564 = vunpack.c.l.b16 %v4961
    %v5565 = vunpack.c.h.b16 %v4961
    %v5566 = vunpack.c.l.b16 %v4962
    %v5567 = vunpack.c.h.b16 %v4962
    %v5568 = vunpack.c.l.b16 %v4963
    %v5569 = vunpack.c.h.b16 %v4963
    %v5570 = vunpack.c.l.b16 %v4964
    %v5571 = vunpack.c.h.b16 %v4964
    %v5572 = vunpack.c.l.b16 %v4965
    %v5573 = vunpack.c.h.b16 %v4965
    %v5574 = vunpack.c.l.b16 %v4966
    %v5575 = vunpack.c.h.b16 %v4966
    %v5576 = vunpack.c.l.b16 %v4967
    %v5577 = vunpack.c.h.b16 %v4967
    %v5578 = vunpack.c.l.b16 %v4968
    %v5579 = vunpack.c.h.b16 %v4968
    %v5580 = vunpack.c.l.b16 %v4969
    %v5581 = vunpack.c.h.b16 %v4969
    %v5582 = vunpack.c.l.b16 %v4970
    %v5583 = vunpack.c.h.b16 %v4970
    %v5584 = vunpack.c.l.b16 %v4971
    %v5585 = vunpack.c.h.b16 %v4971
    %v5586 = vunpack.c.l.b16 %v4972
    %v5587 = vunpack.c.h.b16 %v4972
    %v5588 = vunpack.c.l.b16 %v4973
    %v5589 = vunpack.c.h.b16 %v4973
    %v5590 = vunpack.c.l.b16 %v4974
    %v5591 = vunpack.c.h.b16 %v4974
    %v5592 = vunpack.c.l.b16 %v4975
    %v5593 = vunpack.c.h.b16 %v4975
    %v5594 = vunpack.c.l.b16 %v4976
    %v5595 = vunpack.c.h.b16 %v4976
    %v5596 = vunpack.c.l.b16 %v4977
    %v5597 = vunpack.c.h.b16 %v4977
    %v5598 = vunpack.c.l.b16 %v4978
    %v5599 = vunpack.c.h.b16 %v4978
    %v5600 = vunpack.c.l.b16 %v4979
    %v5601 = vunpack.c.h.b16 %v4979
    %v5602 = vunpack.c.l.b16 %v4980
    %v5603 = vunpack.c.h.b16 %v4980
    %v5604 = vunpack.c.l.b16 %v4981
    %v5605 = vunpack.c.h.b16 %v4981
    %v5606 = vunpack.c.l.b16 %v4982
    %v5607 = vunpack.c.h.b16 %v4982
    %v5608 = vunpack.c.l.b16 %v4983
    %v5609 = vunpack.c.h.b16 %v4983
    %v5610 = vunpack.c.l.b16 %v4984
    %v5611 = vunpack.c.h.b16 %v4984
    %v5612 = vunpack.c.l.b16 %v4985
    %v5613 = vunpack.c.h.b16 %v4985
    %v5614 = vunpack.c.l.b16 %v4986
    %v5615 = vunpack.c.h.b16 %v4986
    %v5616 = vunpack.c.l.b16 %v4987
    %v5617 = vunpack.c.h.b16 %v4987
    %v5618 = vunpack.c.l.b16 %v4988
    %v5619 = vunpack.c.h.b16 %v4988
    %v5620 = vunpack.c.l.b16 %v4989
    %v5621 = vunpack.c.h.b16 %v4989
    %v5622 = vunpack.c.l.b16 %v4990
    %v5623 = vunpack.c.h.b16 %v4990
    %v5624 = vunpack.c.l.b16 %v4991
    %v5625 = vunpack.c.h.b16 %v4991
    %v5626 = vunpack.c.l.b16 %v4992
    %v5627 = vunpack.c.h.b16 %v4992
    %v5628 = vunpack.c.l.b16 %v4993
    %v5629 = vunpack.c.h.b16 %v4993
    %v5630 = vunpack.c.l.b16 %v4994
    %v5631 = vunpack.c.h.b16 %v4994
    %v5632 = vunpack.c.l.b16 %v4995
    %v5633 = vunpack.c.h.b16 %v4995
    %v5634 = vunpack.c.l.b16 %v4996
    %v5635 = vunpack.c.h.b16 %v4996
    %v5636 = vunpack.c.l.b16 %v4997
    %v5637 = vunpack.c.h.b16 %v4997
    %v5638 = vunpack.c.l.b16 %v4998
    %v5639 = vunpack.c.h.b16 %v4998
    %v5640 = vunpack.c.l.b16 %v4999
    %v5641 = vunpack.c.h.b16 %v4999
    %v5642 = vunpack.c.l.b16 %v5000
    %v5643 = vunpack.c.h.b16 %v5000
    %v5644 = vunpack.c.l.b16 %v5001
    %v5645 = vunpack.c.h.b16 %v5001
    %v5646 = vunpack.c.l.b16 %v5002
    %v5647 = vunpack.c.h.b16 %v5002
    %v5648 = vunpack.c.l.b16 %v5003
    %v5649 = vunpack.c.h.b16 %v5003
    %v5650 = vunpack.c.l.b16 %v5004
    %v5651 = vunpack.c.h.b16 %v5004
    %v5652 = vunpack.c.l.b16 %v5005
    %v5653 = vunpack.c.h.b16 %v5005
    %v5654 = vunpack.c.l.b16 %v5006
    %v5655 = vunpack.c.h.b16 %v5006
    %v5656 = vunpack.c.l.b16 %v5007
    %v5657 = vunpack.c.h.b16 %v5007
    %v5658 = vunpack.c.l.b16 %v5008
    %v5659 = vunpack.c.h.b16 %v5008
    %v5660 = vunpack.c.l.b16 %v5009
    %v5661 = vunpack.c.h.b16 %v5009
    %v5662 = vunpack.c.l.b16 %v5010
    %v5663 = vunpack.c.h.b16 %v5010
    %v5664 = vunpack.c.l.b16 %v5011
    %v5665 = vunpack.c.h.b16 %v5011
    %v5666 = vunpack.c.l.b16 %v5012
    %v5667 = vunpack.c.h.b16 %v5012
    %v5668 = vunpack.c.l.b16 %v5013
    %v5669 = vunpack.c.h.b16 %v5013
    %v5670 = vunpack.c.l.b16 %v5014
    %v5671 = vunpack.c.h.b16 %v5014
    %v5672 = vunpack.c.l.b16 %v5015
    %v5673 = vunpack.c.h.b16 %v5015
    %v5674 = vunpack.c.l.b16 %v5016
    %v5675 = vunpack.c.h.b16 %v5016
    %v5676 = vunpack.c.l.b16 %v5017
    %v5677 = vunpack.c.h.b16 %v5017
    %v5678 = vunpack.c.l.b16 %v5018
    %v5679 = vunpack.c.h.b16 %v5018
    %v5680 = vunpack.c.l.b16 %v5019
    %v5681 = vunpack.c.h.b16 %v5019
    %v5682 = vunpack.c.l.b16 %v5020
    %v5683 = vunpack.c.h.b16 %v5020
    %v5684 = vunpack.c.l.b16 %v5021
    %v5685 = vunpack.c.h.b16 %v5021
    %v5686 = vunpack.c.l.b16 %v5022
    %v5687 = vunpack.c.h.b16 %v5022
    %v5688 = vunpack.c.l.b16 %v5023
    %v5689 = vunpack.c.h.b16 %v5023
    %v5690 = vunpack.c.l.b16 %v5024
    %v5691 = vunpack.c.h.b16 %v5024
    %v5692 = vunpack.c.l.b16 %v5025
    %v5693 = vunpack.c.h.b16 %v5025
    %v5694 = vunpack.c.l.b16 %v5026
    %v5695 = vunpack.c.h.b16 %v5026
    %v5696 = vunpack.c.l.b16 %v5027
    %v5697 = vunpack.c.h.b16 %v5027
    %v5698 = vunpack.c.l.b16 %v5028
    %v5699 = vunpack.c.h.b16 %v5028
    %v5700 = vunpack.c.l.b16 %v5029
    %v5701 = vunpack.c.h.b16 %v5029
    %v5702 = vunpack.c.l.b16 %v5030
    %v5703 = vunpack.c.h.b16 %v5030
    %v5704 = vunpack.c.l.b16 %v5031
    %v5705 = vunpack.c.h.b16 %v5031
    %v5706 = vunpack.c.l.b16 %v5032
    %v5707 = vunpack.c.h.b16 %v5032
    %v5708 = vunpack.c.l.b16 %v5033
    %v5709 = vunpack.c.h.b16 %v5033
    %v5710 = vunpack.c.l.b16 %v5034
    %v5711 = vunpack.c.h.b16 %v5034
    %v5712 = vunpack.c.l.b16 %v5035
    %v5713 = vunpack.c.h.b16 %v5035
    %v5714 = vunpack.c.l.b16 %v5036
    %v5715 = vunpack.c.h.b16 %v5036
    %v5716 = vunpack.c.l.b16 %v5037
    %v5717 = vunpack.c.h.b16 %v5037
    %v5718 = vunpack.c.l.b16 %v5038
    %v5719 = vunpack.c.h.b16 %v5038
    %v5720 = vunpack.c.l.b16 %v5039
    %v5721 = vunpack.c.h.b16 %v5039
    %v5722 = vunpack.c.l.b16 %v5040
    %v5723 = vunpack.c.h.b16 %v5040
    %v5724 = vunpack.c.l.b16 %v5041
    %v5725 = vunpack.c.h.b16 %v5041
    %v5726 = vunpack.c.l.b16 %v5042
    %v5727 = vunpack.c.h.b16 %v5042
    %v5728 = vunpack.c.l.b16 %v5043
    %v5729 = vunpack.c.h.b16 %v5043
    %v5730 = vunpack.c.l.b16 %v5044
    %v5731 = vunpack.c.h.b16 %v5044
    %v5732 = vunpack.c.l.b16 %v5045
    %v5733 = vunpack.c.h.b16 %v5045
    %v5734 = vunpack.c.l.b16 %v5046
    %v5735 = vunpack.c.h.b16 %v5046
    %v5736 = vunpack.c.l.b16 %v5047
    %v5737 = vunpack.c.h.b16 %v5047
    %v5738 = vunpack.c.l.b16 %v5048
    %v5739 = vunpack.c.h.b16 %v5048
    %v5740 = vunpack.c.l.b16 %v5049
    %v5741 = vunpack.c.h.b16 %v5049
    %v5742 = vunpack.c.l.b16 %v5050
    %v5743 = vunpack.c.h.b16 %v5050
    %v5744 = vunpack.c.l.b16 %v5051
    %v5745 = vunpack.c.h.b16 %v5051
    %v5746 = vunpack.c.l.b16 %v5052
    %v5747 = vunpack.c.h.b16 %v5052
    %v5748 = vunpack.c.l.b16 %v5053
    %v5749 = vunpack.c.h.b16 %v5053
    %v5750 = vunpack.c.l.b16 %v5054
    %v5751 = vunpack.c.h.b16 %v5054
    %v5752 = vunpack.c.l.b16 %v5055
    %v5753 = vunpack.c.h.b16 %v5055
    %v5754 = vunpack.c.l.b16 %v5056
    %v5755 = vunpack.c.h.b16 %v5056
    %v5756 = vunpack.c.l.b16 %v5057
    %v5757 = vunpack.c.h.b16 %v5057
    %v5758 = vunpack.c.l.b16 %v5058
    %v5759 = vunpack.c.h.b16 %v5058
    %v5760 = vunpack.c.l.b16 %v5059
    %v5761 = vunpack.c.h.b16 %v5059
    %v5762 = vunpack.c.l.b16 %v5060
    %v5763 = vunpack.c.h.b16 %v5060
    %v5764 = vunpack.c.l.b16 %v5061
    %v5765 = vunpack.c.h.b16 %v5061
    %v5766 = vunpack.c.l.b16 %v5062
    %v5767 = vunpack.c.h.b16 %v5062
    %v5768 = vunpack.c.l.b16 %v5063
    %v5769 = vunpack.c.h.b16 %v5063
    %v5770 = vunpack.c.l.b16 %v5064
    %v5771 = vunpack.c.h.b16 %v5064
    %v5772 = vunpack.c.l.b16 %v5065
    %v5773 = vunpack.c.h.b16 %v5065
    %v5774 = vunpack.c.l.b16 %v5066
    %v5775 = vunpack.c.h.b16 %v5066
    %v5776 = vunpack.c.l.b16 %v5067
    %v5777 = vunpack.c.h.b16 %v5067
    %v5778 = vunpack.c.l.b16 %v5068
    %v5779 = vunpack.c.h.b16 %v5068
    %v5780 = vunpack.c.l.b16 %v5069
    %v5781 = vunpack.c.h.b16 %v5069
    %v5782 = vunpack.c.l.b16 %v5070
    %v5783 = vunpack.c.h.b16 %v5070
    %v5784 = vunpack.c.l.b16 %v5071
    %v5785 = vunpack.c.h.b16 %v5071
    %v5786 = vunpack.c.l.b16 %v5072
    %v5787 = vunpack.c.h.b16 %v5072
    %v5788 = vunpack.c.l.b16 %v5073
    %v5789 = vunpack.c.h.b16 %v5073
    %v5790 = vunpack.c.l.b16 %v5074
    %v5791 = vunpack.c.h.b16 %v5074
    %v5792 = vunpack.c.l.b16 %v5075
    %v5793 = vunpack.c.h.b16 %v5075
    %v5794 = vunpack.c.l.b16 %v5076
    %v5795 = vunpack.c.h.b16 %v5076
    %v5796 = vunpack.c.l.b16 %v5077
    %v5797 = vunpack.c.h.b16 %v5077
    %v5798 = vunpack.c.l.b16 %v5078
    %v5799 = vunpack.c.h.b16 %v5078
    %v5800 = vunpack.c.l.b16 %v5079
    %v5801 = vunpack.c.h.b16 %v5079
    %v5802 = vunpack.c.l.b16 %v5080
    %v5803 = vunpack.c.h.b16 %v5080
    %v5804 = vunpack.c.l.b16 %v5081
    %v5805 = vunpack.c.h.b16 %v5081
    %v5806 = vunpack.c.l.b16 %v5082
    %v5807 = vunpack.c.h.b16 %v5082
    %v5808 = vunpack.c.l.b16 %v5083
    %v5809 = vunpack.c.h.b16 %v5083
    %v5810 = vunpack.c.l.b16 %v5084
    %v5811 = vunpack.c.h.b16 %v5084
    %v5812 = vunpack.c.l.b16 %v5085
    %v5813 = vunpack.c.h.b16 %v5085
    %v5814 = vunpack.c.l.b16 %v5086
    %v5815 = vunpack.c.h.b16 %v5086
    %v5816 = vunpack.c.l.b16 %v5087
    %v5817 = vunpack.c.h.b16 %v5087
    %v5818 = vunpack.c.l.b16 %v5088
    %v5819 = vunpack.c.h.b16 %v5088
    %v5820 = vunpack.c.l.b16 %v5089
    %v5821 = vunpack.c.h.b16 %v5089
    %v5822 = vunpack.c.l.b16 %v5090
    %v5823 = vunpack.c.h.b16 %v5090
    %v5824 = vunpack.c.l.b16 %v5091
    %v5825 = vunpack.c.h.b16 %v5091
    %v5826 = vunpack.c.l.b16 %v5092
    %v5827 = vunpack.c.h.b16 %v5092
    %v5828 = vunpack.c.l.b16 %v5093
    %v5829 = vunpack.c.h.b16 %v5093
    %v5830 = vunpack.c.l.b16 %v5094
    %v5831 = vunpack.c.h.b16 %v5094
    %v5832 = vunpack.c.l.b16 %v5095
    %v5833 = vunpack.c.h.b16 %v5095
    %v5834 = vunpack.c.l.b16 %v5096
    %v5835 = vunpack.c.h.b16 %v5096
    %v5836 = vunpack.c.l.b16 %v5097
    %v5837 = vunpack.c.h.b16 %v5097
    %v5838 = vunpack.c.l.b16 %v5098
    %v5839 = vunpack.c.h.b16 %v5098
    %v5840 = vunpack.c.l.b16 %v5099
    %v5841 = vunpack.c.h.b16 %v5099
    %v5842 = vunpack.c.l.b16 %v5100
    %v5843 = vunpack.c.h.b16 %v5100
    %v5844 = vunpack.c.l.b16 %v5101
    %v5845 = vunpack.c.h.b16 %v5101
    %v5846 = vunpack.c.l.b16 %v5102
    %v5847 = vunpack.c.h.b16 %v5102
    %v5848 = vunpack.c.l.b16 %v5103
    %v5849 = vunpack.c.h.b16 %v5103
    %v5850 = vunpack.c.l.b16 %v5104
    %v5851 = vunpack.c.h.b16 %v5104
    %v5852 = vunpack.c.l.b16 %v5105
    %v5853 = vunpack.c.h.b16 %v5105
    %v5854 = vunpack.c.l.b16 %v5106
    %v5855 = vunpack.c.h.b16 %v5106
    %v5856 = vunpack.c.l.b16 %v5107
    %v5857 = vunpack.c.h.b16 %v5107
    %v5858 = vunpack.c.l.b16 %v5108
    %v5859 = vunpack.c.h.b16 %v5108
    %v5860 = vunpack.c.l.b16 %v5109
    %v5861 = vunpack.c.h.b16 %v5109
    %v5862 = vunpack.c.l.b16 %v5110
    %v5863 = vunpack.c.h.b16 %v5110
    %v5864 = vunpack.c.l.b16 %v5111
    %v5865 = vunpack.c.h.b16 %v5111
    %v5866 = vunpack.c.l.b16 %v5112
    %v5867 = vunpack.c.h.b16 %v5112
    %v5868 = vunpack.c.l.b16 %v5113
    %v5869 = vunpack.c.h.b16 %v5113
    %v5870 = vunpack.c.l.b16 %v5114
    %v5871 = vunpack.c.h.b16 %v5114
    %v5872 = vunpack.c.l.b16 %v5115
    %v5873 = vunpack.c.h.b16 %v5115
    %v5874 = vunpack.c.l.b16 %v5116
    %v5875 = vunpack.c.h.b16 %v5116
    %v5876 = vunpack.c.l.b16 %v5117
    %v5877 = vunpack.c.h.b16 %v5117
    %v5878 = vunpack.c.l.b16 %v5118
    %v5879 = vunpack.c.h.b16 %v5118
    %v5880 = vunpack.c.l.b16 %v5119
    %v5881 = vunpack.c.h.b16 %v5119
    %v5882 = vunpack.c.l.b16 %v5120
    %v5883 = vunpack.c.h.b16 %v5120
    %v5884 = vunpack.c.l.b16 %v5121
    %v5885 = vunpack.c.h.b16 %v5121
    %v5886 = vunpack.c.l.b16 %v5122
    %v5887 = vunpack.c.h.b16 %v5122
    %v5888 = vunpack.c.l.b16 %v5123
    %v5889 = vunpack.c.h.b16 %v5123
    %v5890 = vunpack.c.l.b16 %v5124
    %v5891 = vunpack.c.h.b16 %v5124
    %v5892 = vunpack.c.l.b16 %v5125
    %v5893 = vunpack.c.h.b16 %v5125
    %v5894 = vpack.c.b16 %v5386, %v5382
    %v5895 = vpack.c.b16 %v5387, %v5383
    %v5896 = vpack.c.b16 %v5388, %v5384
    %v5897 = vpack.c.b16 %v5389, %v5385
    %v5898 = vpack.c.b16 %v5394, %v5390
    %v5899 = vpack.c.b16 %v5395, %v5391
    %v5900 = vpack.c.b16 %v5396, %v5392
    %v5901 = vpack.c.b16 %v5397, %v5393
    %v5902 = vpack.c.b16 %v5402, %v5398
    %v5903 = vpack.c.b16 %v5403, %v5399
    %v5904 = vpack.c.b16 %v5404, %v5400
    %v5905 = vpack.c.b16 %v5405, %v5401
    %v5906 = vpack.c.b16 %v5410, %v5406
    %v5907 = vpack.c.b16 %v5411, %v5407
    %v5908 = vpack.c.b16 %v5412, %v5408
    %v5909 = vpack.c.b16 %v5413, %v5409
    %v5910 = vpack.c.b16 %v5418, %v5414
    %v5911 = vpack.c.b16 %v5419, %v5415
    %v5912 = vpack.c.b16 %v5420, %v5416
    %v5913 = vpack.c.b16 %v5421, %v5417
    %v5914 = vpack.c.b16 %v5426, %v5422
    %v5915 = vpack.c.b16 %v5427, %v5423
    %v5916 = vpack.c.b16 %v5428, %v5424
    %v5917 = vpack.c.b16 %v5429, %v5425
    %v5918 = vpack.c.b16 %v5434, %v5430
    %v5919 = vpack.c.b16 %v5435, %v5431
    %v5920 = vpack.c.b16 %v5436, %v5432
    %v5921 = vpack.c.b16 %v5437, %v5433
    %v5922 = vpack.c.b16 %v5442, %v5438
    %v5923 = vpack.c.b16 %v5443, %v5439
    %v5924 = vpack.c.b16 %v5444, %v5440
    %v5925 = vpack.c.b16 %v5445, %v5441
    %v5926 = vpack.c.b16 %v5450, %v5446
    %v5927 = vpack.c.b16 %v5451, %v5447
    %v5928 = vpack.c.b16 %v5452, %v5448
    %v5929 = vpack.c.b16 %v5453, %v5449
    %v5930 = vpack.c.b16 %v5458, %v5454
    %v5931 = vpack.c.b16 %v5459, %v5455
    %v5932 = vpack.c.b16 %v5460, %v5456
    %v5933 = vpack.c.b16 %v5461, %v5457
    %v5934 = vpack.c.b16 %v5466, %v5462
    %v5935 = vpack.c.b16 %v5467, %v5463
    %v5936 = vpack.c.b16 %v5468, %v5464
    %v5937 = vpack.c.b16 %v5469, %v5465
    %v5938 = vpack.c.b16 %v5474, %v5470
    %v5939 = vpack.c.b16 %v5475, %v5471
    %v5940 = vpack.c.b16 %v5476, %v5472
    %v5941 = vpack.c.b16 %v5477, %v5473
    %v5942 = vpack.c.b16 %v5482, %v5478
    %v5943 = vpack.c.b16 %v5483, %v5479
    %v5944 = vpack.c.b16 %v5484, %v5480
    %v5945 = vpack.c.b16 %v5485, %v5481
    %v5946 = vpack.c.b16 %v5490, %v5486
    %v5947 = vpack.c.b16 %v5491, %v5487
    %v5948 = vpack.c.b16 %v5492, %v5488
    %v5949 = vpack.c.b16 %v5493, %v5489
    %v5950 = vpack.c.b16 %v5498, %v5494
    %v5951 = vpack.c.b16 %v5499, %v5495
    %v5952 = vpack.c.b16 %v5500, %v5496
    %v5953 = vpack.c.b16 %v5501, %v5497
    %v5954 = vpack.c.b16 %v5506, %v5502
    %v5955 = vpack.c.b16 %v5507, %v5503
    %v5956 = vpack.c.b16 %v5508, %v5504
    %v5957 = vpack.c.b16 %v5509, %v5505
    %v5958 = vpack.c.b16 %v5514, %v5510
    %v5959 = vpack.c.b16 %v5515, %v5511
    %v5960 = vpack.c.b16 %v5516, %v5512
    %v5961 = vpack.c.b16 %v5517, %v5513
    %v5962 = vpack.c.b16 %v5522, %v5518
    %v5963 = vpack.c.b16 %v5523, %v5519
    %v5964 = vpack.c.b16 %v5524, %v5520
    %v5965 = vpack.c.b16 %v5525, %v5521
    %v5966 = vpack.c.b16 %v5530, %v5526
    %v5967 = vpack.c.b16 %v5531, %v5527
    %v5968 = vpack.c.b16 %v5532, %v5528
    %v5969 = vpack.c.b16 %v5533, %v5529
    %v5970 = vpack.c.b16 %v5538, %v5534
    %v5971 = vpack.c.b16 %v5539, %v5535
    %v5972 = vpack.c.b16 %v5540, %v5536
    %v5973 = vpack.c.b16 %v5541, %v5537
    %v5974 = vpack.c.b16 %v5546, %v5542
    %v5975 = vpack.c.b16 %v5547, %v5543
    %v5976 = vpack.c.b16 %v5548, %v5544
    %v5977 = vpack.c.b16 %v5549, %v5545
    %v5978 = vpack.c.b16 %v5554, %v5550
    %v5979 = vpack.c.b16 %v5555, %v5551
    %v5980 = vpack.c.b16 %v5556, %v5552
    %v5981 = vpack.c.b16 %v5557, %v5553
    %v5982 = vpack.c.b16 %v5562, %v5558
    %v5983 = vpack.c.b16 %v5563, %v5559
    %v5984 = vpack.c.b16 %v5564, %v5560
    %v5985 = vpack.c.b16 %v5565, %v5561
    %v5986 = vpack.c.b16 %v5570, %v5566
    %v5987 = vpack.c.b16 %v5571, %v5567
    %v5988 = vpack.c.b16 %v5572, %v5568
    %v5989 = vpack.c.b16 %v5573, %v5569
    %v5990 = vpack.c.b16 %v5578, %v5574
    %v5991 = vpack.c.b16 %v5579, %v5575
    %v5992 = vpack.c.b16 %v5580, %v5576
    %v5993 = vpack.c.b16 %v5581, %v5577
    %v5994 = vpack.c.b16 %v5586, %v5582
    %v5995 = vpack.c.b16 %v5587, %v5583
    %v5996 = vpack.c.b16 %v5588, %v5584
    %v5997 = vpack.c.b16 %v5589, %v5585
    %v5998 = vpack.c.b16 %v5594, %v5590
    %v5999 = vpack.c.b16 %v5595, %v5591
    %v6000 = vpack.c.b16 %v5596, %v5592
    %v6001 = vpack.c.b16 %v5597, %v5593
    %v6002 = vpack.c.b16 %v5602, %v5598
    %v6003 = vpack.c.b16 %v5603, %v5599
    %v6004 = vpack.c.b16 %v5604, %v5600
    %v6005 = vpack.c.b16 %v5605, %v5601
    %v6006 = vpack.c.b16 %v5610, %v5606
    %v6007 = vpack.c.b16 %v5611, %v5607
    %v6008 = vpack.c.b16 %v5612, %v5608
    %v6009 = vpack.c.b16 %v5613, %v5609
    %v6010 = vpack.c.b16 %v5618, %v5614
    %v6011 = vpack.c.b16 %v5619, %v5615
    %v6012 = vpack.c.b16 %v5620, %v5616
    %v6013 = vpack.c.b16 %v5621, %v5617
    %v6014 = vpack.c.b16 %v5626, %v5622
    %v6015 = vpack.c.b16 %v5627, %v5623
    %v6016 = vpack.c.b16 %v5628, %v5624
    %v6017 = vpack.c.b16 %v5629, %v5625
    %v6018 = vpack.c.b16 %v5634, %v5630
    %v6019 = vpack.c.b16 %v5635, %v5631
    %v6020 = vpack.c.b16 %v5636, %v5632
    %v6021 = vpack.c.b16 %v5637, %v5633
    %v6022 = vpack.c.b16 %v5642, %v5638
    %v6023 = vpack.c.b16 %v5643, %v5639
    %v6024 = vpack.c.b16 %v5644, %v5640
    %v6025 = vpack.c.b16 %v5645, %v5641
    %v6026 = vpack.c.b16 %v5650, %v5646
    %v6027 = vpack.c.b16 %v5651, %v5647
    %v6028 = vpack.c.b16 %v5652, %v5648
    %v6029 = vpack.c.b16 %v5653, %v5649
    %v6030 = vpack.c.b16 %v5658, %v5654
    %v6031 = vpack.c.b16 %v5659, %v5655
    %v6032 = vpack.c.b16 %v5660, %v5656
    %v6033 = vpack.c.b16 %v5661, %v5657
    %v6034 = vpack.c.b16 %v5666, %v5662
    %v6035 = vpack.c.b16 %v5667, %v5663
    %v6036 = vpack.c.b16 %v5668, %v5664
    %v6037 = vpack.c.b16 %v5669, %v5665
    %v6038 = vpack.c.b16 %v5674, %v5670
    %v6039 = vpack.c.b16 %v5675, %v5671
    %v6040 = vpack.c.b16 %v5676, %v5672
    %v6041 = vpack.c.b16 %v5677, %v5673
    %v6042 = vpack.c.b16 %v5682, %v5678
    %v6043 = vpack.c.b16 %v5683, %v5679
    %v6044 = vpack.c.b16 %v5684, %v5680
    %v6045 = vpack.c.b16 %v5685, %v5681
    %v6046 = vpack.c.b16 %v5690, %v5686
    %v6047 = vpack.c.b16 %v5691, %v5687
    %v6048 = vpack.c.b16 %v5692, %v5688
    %v6049 = vpack.c.b16 %v5693, %v5689
    %v6050 = vpack.c.b16 %v5698, %v5694
    %v6051 = vpack.c.b16 %v5699, %v5695
    %v6052 = vpack.c.b16 %v5700, %v5696
    %v6053 = vpack.c.b16 %v5701, %v5697
    %v6054 = vpack.c.b16 %v5706, %v5702
    %v6055 = vpack.c.b16 %v5707, %v5703
    %v6056 = vpack.c.b16 %v5708, %v5704
    %v6057 = vpack.c.b16 %v5709, %v5705
    %v6058 = vpack.c.b16 %v5714, %v5710
    %v6059 = vpack.c.b16 %v5715, %v5711
    %v6060 = vpack.c.b16 %v5716, %v5712
    %v6061 = vpack.c.b16 %v5717, %v5713
    %v6062 = vpack.c.b16 %v5722, %v5718
    %v6063 = vpack.c.b16 %v5723, %v5719
    %v6064 = vpack.c.b16 %v5724, %v5720
    %v6065 = vpack.c.b16 %v5725, %v5721
    %v6066 = vpack.c.b16 %v5730, %v5726
    %v6067 = vpack.c.b16 %v5731, %v5727
    %v6068 = vpack.c.b16 %v5732, %v5728
    %v6069 = vpack.c.b16 %v5733, %v5729
    %v6070 = vpack.c.b16 %v5738, %v5734
    %v6071 = vpack.c.b16 %v5739, %v5735
    %v6072 = vpack.c.b16 %v5740, %v5736
    %v6073 = vpack.c.b16 %v5741, %v5737
    %v6074 = vpack.c.b16 %v5746, %v5742
    %v6075 = vpack.c.b16 %v5747, %v5743
    %v6076 = vpack.c.b16 %v5748, %v5744
    %v6077 = vpack.c.b16 %v5749, %v5745
    %v6078 = vpack.c.b16 %v5754, %v5750
    %v6079 = vpack.c.b16 %v5755, %v5751
    %v6080 = vpack.c.b16 %v5756, %v5752
    %v6081 = vpack.c.b16 %v5757, %v5753
    %v6082 = vpack.c.b16 %v5762, %v5758
    %v6083 = vpack.c.b16 %v5763, %v5759
    %v6084 = vpack.c.b16 %v5764, %v5760
    %v6085 = vpack.c.b16 %v5765, %v5761
    %v6086 = vpack.c.b16 %v5770, %v5766
    %v6087 = vpack.c.b16 %v5771, %v5767
    %v6088 = vpack.c.b16 %v5772, %v5768
    %v6089 = vpack.c.b16 %v5773, %v5769
    %v6090 = vpack.c.b16 %v5778, %v5774
    %v6091 = vpack.c.b16 %v5779, %v5775
    %v6092 = vpack.c.b16 %v5780, %v5776
    %v6093 = vpack.c.b16 %v5781, %v5777
    %v6094 = vpack.c.b16 %v5786, %v5782
    %v6095 = vpack.c.b16 %v5787, %v5783
    %v6096 = vpack.c.b16 %v5788, %v5784
    %v6097 = vpack.c.b16 %v5789, %v5785
    %v6098 = vpack.c.b16 %v5794, %v5790
    %v6099 = vpack.c.b16 %v5795, %v5791
    %v6100 = vpack.c.b16 %v5796, %v5792
    %v6101 = vpack.c.b16 %v5797, %v5793
    %v6102 = vpack.c.b16 %v5802, %v5798
    %v6103 = vpack.c.b16 %v5803, %v5799
    %v6104 = vpack.c.b16 %v5804, %v5800
    %v6105 = vpack.c.b16 %v5805, %v5801
    %v6106 = vpack.c.b16 %v5810, %v5806
    %v6107 = vpack.c.b16 %v5811, %v5807
    %v6108 = vpack.c.b16 %v5812, %v5808
    %v6109 = vpack.c.b16 %v5813, %v5809
    %v6110 = vpack.c.b16 %v5818, %v5814
    %v6111 = vpack.c.b16 %v5819, %v5815
    %v6112 = vpack.c.b16 %v5820, %v5816
    %v6113 = vpack.c.b16 %v5821, %v5817
    %v6114 = vpack.c.b16 %v5826, %v5822
    %v6115 = vpack.c.b16 %v5827, %v5823
    %v6116 = vpack.c.b16 %v5828, %v5824
    %v6117 = vpack.c.b16 %v5829, %v5825
    %v6118 = vpack.c.b16 %v5834, %v5830
    %v6119 = vpack.c.b16 %v5835, %v5831
    %v6120 = vpack.c.b16 %v5836, %v5832
    %v6121 = vpack.c.b16 %v5837, %v5833
    %v6122 = vpack.c.b16 %v5842, %v5838
    %v6123 = vpack.c.b16 %v5843, %v5839
    %v6124 = vpack.c.b16 %v5844, %v5840
    %v6125 = vpack.c.b16 %v5845, %v5841
    %v6126 = vpack.c.b16 %v5850, %v5846
    %v6127 = vpack.c.b16 %v5851, %v5847
    %v6128 = vpack.c.b16 %v5852, %v5848
    %v6129 = vpack.c.b16 %v5853, %v5849
    %v6130 = vpack.c.b16 %v5858, %v5854
    %v6131 = vpack.c.b16 %v5859, %v5855
    %v6132 = vpack.c.b16 %v5860, %v5856
    %v6133 = vpack.c.b16 %v5861, %v5857
    %v6134 = vpack.c.b16 %v5866, %v5862
    %v6135 = vpack.c.b16 %v5867, %v5863
    %v6136 = vpack.c.b16 %v5868, %v5864
    %v6137 = vpack.c.b16 %v5869, %v5865
    %v6138 = vpack.c.b16 %v5874, %v5870
    %v6139 = vpack.c.b16 %v5875, %v5871
    %v6140 = vpack.c.b16 %v5876, %v5872
    %v6141 = vpack.c.b16 %v5877, %v5873
    %v6142 = vpack.c.b16 %v5882, %v5878
    %v6143 = vpack.c.b16 %v5883, %v5879
    %v6144 = vpack.c.b16 %v5884, %v5880
    %v6145 = vpack.c.b16 %v5885, %v5881
    %v6146 = vpack.c.b16 %v5890, %v5886
    %v6147 = vpack.c.b16 %v5891, %v5887
    %v6148 = vpack.c.b16 %v5892, %v5888
    %v6149 = vpack.c.b16 %v5893, %v5889
    %6406 = vmatpush.bf16.msra.mxu0 %v5922
    %6407 = vmatpush.bf16.msra.mxu0 %v5918
    %6408 = vmatpush.bf16.msra.mxu0 %v5914
    %6409 = vmatpush.bf16.msra.mxu0 %v5910
    %6410 = vmatpush.bf16.msra.mxu0 %v5906
    %6411 = vmatpush.bf16.msra.mxu0 %v5902
    %6412 = vmatpush.bf16.msra.mxu0 %v5898
    %6413 = vmatpush.bf16.msra.mxu0 %v5894
    %6414 = vmatmul.bf16.gmra.mxu0 %v4862
    %v6415 = vpop.f32.mrf.mxu0
    %v6416 = vadd.f32 0.0, %v6415
    %v6417 = vpop.f32.mrf.mxu0
    %6418 = vdwg.mxu0
    %6419 = vmatpush.bf16.msra.mxu0 %v5954
    %6420 = vmatpush.bf16.msra.mxu0 %v5950
    %6421 = vmatpush.bf16.msra.mxu0 %v5946
    %6422 = vmatpush.bf16.msra.mxu0 %v5942
    %6423 = vmatpush.bf16.msra.mxu0 %v5938
    %6424 = vmatpush.bf16.msra.mxu0 %v5934
    %6425 = vmatpush.bf16.msra.mxu0 %v5930
    %6426 = vmatpush.bf16.msra.mxu0 %v5926
    %6427 = vmatmul.bf16.gmra.mxu0 %v4863
    %v6428 = vpop.f32.mrf.mxu0
    %v6429 = vadd.f32 %v6416, %v6428
    %v6430 = vpop.f32.mrf.mxu0
    %6431 = vdwg.mxu0
    %6432 = vmatpush.bf16.msra.mxu0 %v5986
    %6433 = vmatpush.bf16.msra.mxu0 %v5982
    %6434 = vmatpush.bf16.msra.mxu0 %v5978
    %6435 = vmatpush.bf16.msra.mxu0 %v5974
    %6436 = vmatpush.bf16.msra.mxu0 %v5970
    %6437 = vmatpush.bf16.msra.mxu0 %v5966
    %6438 = vmatpush.bf16.msra.mxu0 %v5962
    %6439 = vmatpush.bf16.msra.mxu0 %v5958
    %6440 = vmatmul.bf16.gmra.mxu0 %v4864
    %v6441 = vpop.f32.mrf.mxu0
    %v6442 = vadd.f32 %v6429, %v6441
    %v6443 = vpop.f32.mrf.mxu0
    %6444 = vdwg.mxu0
    %6445 = vmatpush.bf16.msra.mxu0 %v6018
    %6446 = vmatpush.bf16.msra.mxu0 %v6014
    %6447 = vmatpush.bf16.msra.mxu0 %v6010
    %6448 = vmatpush.bf16.msra.mxu0 %v6006
    %6449 = vmatpush.bf16.msra.mxu0 %v6002
    %6450 = vmatpush.bf16.msra.mxu0 %v5998
    %6451 = vmatpush.bf16.msra.mxu0 %v5994
    %6452 = vmatpush.bf16.msra.mxu0 %v5990
    %6453 = vmatmul.bf16.gmra.mxu0 %v4865
    %v6454 = vpop.f32.mrf.mxu0
    %v6455 = vadd.f32 %v6442, %v6454
    %v6456 = vpop.f32.mrf.mxu0
    %6457 = vdwg.mxu0
    %6458 = vmatpush.bf16.msra.mxu0 %v6050
    %6459 = vmatpush.bf16.msra.mxu0 %v6046
    %6460 = vmatpush.bf16.msra.mxu0 %v6042
    %6461 = vmatpush.bf16.msra.mxu0 %v6038
    %6462 = vmatpush.bf16.msra.mxu0 %v6034
    %6463 = vmatpush.bf16.msra.mxu0 %v6030
    %6464 = vmatpush.bf16.msra.mxu0 %v6026
    %6465 = vmatpush.bf16.msra.mxu0 %v6022
    %6466 = vmatmul.bf16.gmra.mxu0 %v4866
    %v6467 = vpop.f32.mrf.mxu0
    %v6468 = vadd.f32 %v6455, %v6467
    %v6469 = vpop.f32.mrf.mxu0
    %6470 = vdwg.mxu0
    %6471 = vmatpush.bf16.msra.mxu0 %v6082
    %6472 = vmatpush.bf16.msra.mxu0 %v6078
    %6473 = vmatpush.bf16.msra.mxu0 %v6074
    %6474 = vmatpush.bf16.msra.mxu0 %v6070
    %6475 = vmatpush.bf16.msra.mxu0 %v6066
    %6476 = vmatpush.bf16.msra.mxu0 %v6062
    %6477 = vmatpush.bf16.msra.mxu0 %v6058
    %6478 = vmatpush.bf16.msra.mxu0 %v6054
    %6479 = vmatmul.bf16.gmra.mxu0 %v4867
    %v6480 = vpop.f32.mrf.mxu0
    %v6481 = vadd.f32 %v6468, %v6480
    %v6482 = vpop.f32.mrf.mxu0
    %6483 = vdwg.mxu0
    %6484 = vmatpush.bf16.msra.mxu0 %v6114
    %6485 = vmatpush.bf16.msra.mxu0 %v6110
    %6486 = vmatpush.bf16.msra.mxu0 %v6106
    %6487 = vmatpush.bf16.msra.mxu0 %v6102
    %6488 = vmatpush.bf16.msra.mxu0 %v6098
    %6489 = vmatpush.bf16.msra.mxu0 %v6094
    %6490 = vmatpush.bf16.msra.mxu0 %v6090
    %6491 = vmatpush.bf16.msra.mxu0 %v6086
    %6492 = vmatmul.bf16.gmra.mxu0 %v4868
    %v6493 = vpop.f32.mrf.mxu0
    %v6494 = vadd.f32 %v6481, %v6493
    %v6495 = vpop.f32.mrf.mxu0
    %6496 = vdwg.mxu0
    %6497 = vmatpush.bf16.msra.mxu0 %v6146
    %6498 = vmatpush.bf16.msra.mxu0 %v6142
    %6499 = vmatpush.bf16.msra.mxu0 %v6138
    %6500 = vmatpush.bf16.msra.mxu0 %v6134
    %6501 = vmatpush.bf16.msra.mxu0 %v6130
    %6502 = vmatpush.bf16.msra.mxu0 %v6126
    %6503 = vmatpush.bf16.msra.mxu0 %v6122
    %6504 = vmatpush.bf16.msra.mxu0 %v6118
    %6505 = vmatmul.bf16.gmra.mxu0 %v4869
    %v6506 = vpop.f32.mrf.mxu0
    %v6507 = vadd.f32 %v6494, %v6506
    %v6508 = vpop.f32.mrf.mxu0
    %6509 = vdwg.mxu0
    %6510 = vmatpush.bf16.msra.mxu0 %v5923
    %6511 = vmatpush.bf16.msra.mxu0 %v5919
    %6512 = vmatpush.bf16.msra.mxu0 %v5915
    %6513 = vmatpush.bf16.msra.mxu0 %v5911
    %6514 = vmatpush.bf16.msra.mxu0 %v5907
    %6515 = vmatpush.bf16.msra.mxu0 %v5903
    %6516 = vmatpush.bf16.msra.mxu0 %v5899
    %6517 = vmatpush.bf16.msra.mxu0 %v5895
    %6518 = vmatmul.bf16.gmra.mxu0 %v4862
    %v6519 = vpop.f32.mrf.mxu0
    %v6520 = vadd.f32 0.0, %v6519
    %v6521 = vpop.f32.mrf.mxu0
    %6522 = vdwg.mxu0
    %6523 = vmatpush.bf16.msra.mxu0 %v5955
    %6524 = vmatpush.bf16.msra.mxu0 %v5951
    %6525 = vmatpush.bf16.msra.mxu0 %v5947
    %6526 = vmatpush.bf16.msra.mxu0 %v5943
    %6527 = vmatpush.bf16.msra.mxu0 %v5939
    %6528 = vmatpush.bf16.msra.mxu0 %v5935
    %6529 = vmatpush.bf16.msra.mxu0 %v5931
    %6530 = vmatpush.bf16.msra.mxu0 %v5927
    %6531 = vmatmul.bf16.gmra.mxu0 %v4863
    %v6532 = vpop.f32.mrf.mxu0
    %v6533 = vadd.f32 %v6520, %v6532
    %v6534 = vpop.f32.mrf.mxu0
    %6535 = vdwg.mxu0
    %6536 = vmatpush.bf16.msra.mxu0 %v5987
    %6537 = vmatpush.bf16.msra.mxu0 %v5983
    %6538 = vmatpush.bf16.msra.mxu0 %v5979
    %6539 = vmatpush.bf16.msra.mxu0 %v5975
    %6540 = vmatpush.bf16.msra.mxu0 %v5971
    %6541 = vmatpush.bf16.msra.mxu0 %v5967
    %6542 = vmatpush.bf16.msra.mxu0 %v5963
    %6543 = vmatpush.bf16.msra.mxu0 %v5959
    %6544 = vmatmul.bf16.gmra.mxu0 %v4864
    %v6545 = vpop.f32.mrf.mxu0
    %v6546 = vadd.f32 %v6533, %v6545
    %v6547 = vpop.f32.mrf.mxu0
    %6548 = vdwg.mxu0
    %6549 = vmatpush.bf16.msra.mxu0 %v6019
    %6550 = vmatpush.bf16.msra.mxu0 %v6015
    %6551 = vmatpush.bf16.msra.mxu0 %v6011
    %6552 = vmatpush.bf16.msra.mxu0 %v6007
    %6553 = vmatpush.bf16.msra.mxu0 %v6003
    %6554 = vmatpush.bf16.msra.mxu0 %v5999
    %6555 = vmatpush.bf16.msra.mxu0 %v5995
    %6556 = vmatpush.bf16.msra.mxu0 %v5991
    %6557 = vmatmul.bf16.gmra.mxu0 %v4865
    %v6558 = vpop.f32.mrf.mxu0
    %v6559 = vadd.f32 %v6546, %v6558
    %v6560 = vpop.f32.mrf.mxu0
    %6561 = vdwg.mxu0
    %6562 = vmatpush.bf16.msra.mxu0 %v6051
    %6563 = vmatpush.bf16.msra.mxu0 %v6047
    %6564 = vmatpush.bf16.msra.mxu0 %v6043
    %6565 = vmatpush.bf16.msra.mxu0 %v6039
    %6566 = vmatpush.bf16.msra.mxu0 %v6035
    %6567 = vmatpush.bf16.msra.mxu0 %v6031
    %6568 = vmatpush.bf16.msra.mxu0 %v6027
    %6569 = vmatpush.bf16.msra.mxu0 %v6023
    %6570 = vmatmul.bf16.gmra.mxu0 %v4866
    %v6571 = vpop.f32.mrf.mxu0
    %v6572 = vadd.f32 %v6559, %v6571
    %v6573 = vpop.f32.mrf.mxu0
    %6574 = vdwg.mxu0
    %6575 = vmatpush.bf16.msra.mxu0 %v6083
    %6576 = vmatpush.bf16.msra.mxu0 %v6079
    %6577 = vmatpush.bf16.msra.mxu0 %v6075
    %6578 = vmatpush.bf16.msra.mxu0 %v6071
    %6579 = vmatpush.bf16.msra.mxu0 %v6067
    %6580 = vmatpush.bf16.msra.mxu0 %v6063
    %6581 = vmatpush.bf16.msra.mxu0 %v6059
    %6582 = vmatpush.bf16.msra.mxu0 %v6055
    %6583 = vmatmul.bf16.gmra.mxu0 %v4867
    %v6584 = vpop.f32.mrf.mxu0
    %v6585 = vadd.f32 %v6572, %v6584
    %v6586 = vpop.f32.mrf.mxu0
    %6587 = vdwg.mxu0
    %6588 = vmatpush.bf16.msra.mxu0 %v6115
    %6589 = vmatpush.bf16.msra.mxu0 %v6111
    %6590 = vmatpush.bf16.msra.mxu0 %v6107
    %6591 = vmatpush.bf16.msra.mxu0 %v6103
    %6592 = vmatpush.bf16.msra.mxu0 %v6099
    %6593 = vmatpush.bf16.msra.mxu0 %v6095
    %6594 = vmatpush.bf16.msra.mxu0 %v6091
    %6595 = vmatpush.bf16.msra.mxu0 %v6087
    %6596 = vmatmul.bf16.gmra.mxu0 %v4868
    %v6597 = vpop.f32.mrf.mxu0
    %v6598 = vadd.f32 %v6585, %v6597
    %v6599 = vpop.f32.mrf.mxu0
    %6600 = vdwg.mxu0
    %6601 = vmatpush.bf16.msra.mxu0 %v6147
    %6602 = vmatpush.bf16.msra.mxu0 %v6143
    %6603 = vmatpush.bf16.msra.mxu0 %v6139
    %6604 = vmatpush.bf16.msra.mxu0 %v6135
    %6605 = vmatpush.bf16.msra.mxu0 %v6131
    %6606 = vmatpush.bf16.msra.mxu0 %v6127
    %6607 = vmatpush.bf16.msra.mxu0 %v6123
    %6608 = vmatpush.bf16.msra.mxu0 %v6119
    %6609 = vmatmul.bf16.gmra.mxu0 %v4869
    %v6610 = vpop.f32.mrf.mxu0
    %v6611 = vadd.f32 %v6598, %v6610
    %v6612 = vpop.f32.mrf.mxu0
    %6613 = vdwg.mxu0
    %6614 = vmatpush.bf16.msra.mxu0 %v5924
    %6615 = vmatpush.bf16.msra.mxu0 %v5920
    %6616 = vmatpush.bf16.msra.mxu0 %v5916
    %6617 = vmatpush.bf16.msra.mxu0 %v5912
    %6618 = vmatpush.bf16.msra.mxu0 %v5908
    %6619 = vmatpush.bf16.msra.mxu0 %v5904
    %6620 = vmatpush.bf16.msra.mxu0 %v5900
    %6621 = vmatpush.bf16.msra.mxu0 %v5896
    %6622 = vmatmul.bf16.gmra.mxu0 %v4862
    %v6623 = vpop.f32.mrf.mxu0
    %v6624 = vadd.f32 0.0, %v6623
    %v6625 = vpop.f32.mrf.mxu0
    %6626 = vdwg.mxu0
    %6627 = vmatpush.bf16.msra.mxu0 %v5956
    %6628 = vmatpush.bf16.msra.mxu0 %v5952
    %6629 = vmatpush.bf16.msra.mxu0 %v5948
    %6630 = vmatpush.bf16.msra.mxu0 %v5944
    %6631 = vmatpush.bf16.msra.mxu0 %v5940
    %6632 = vmatpush.bf16.msra.mxu0 %v5936
    %6633 = vmatpush.bf16.msra.mxu0 %v5932
    %6634 = vmatpush.bf16.msra.mxu0 %v5928
    %6635 = vmatmul.bf16.gmra.mxu0 %v4863
    %v6636 = vpop.f32.mrf.mxu0
    %v6637 = vadd.f32 %v6624, %v6636
    %v6638 = vpop.f32.mrf.mxu0
    %6639 = vdwg.mxu0
    %6640 = vmatpush.bf16.msra.mxu0 %v5988
    %6641 = vmatpush.bf16.msra.mxu0 %v5984
    %6642 = vmatpush.bf16.msra.mxu0 %v5980
    %6643 = vmatpush.bf16.msra.mxu0 %v5976
    %6644 = vmatpush.bf16.msra.mxu0 %v5972
    %6645 = vmatpush.bf16.msra.mxu0 %v5968
    %6646 = vmatpush.bf16.msra.mxu0 %v5964
    %6647 = vmatpush.bf16.msra.mxu0 %v5960
    %6648 = vmatmul.bf16.gmra.mxu0 %v4864
    %v6649 = vpop.f32.mrf.mxu0
    %v6650 = vadd.f32 %v6637, %v6649
    %v6651 = vpop.f32.mrf.mxu0
    %6652 = vdwg.mxu0
    %6653 = vmatpush.bf16.msra.mxu0 %v6020
    %6654 = vmatpush.bf16.msra.mxu0 %v6016
    %6655 = vmatpush.bf16.msra.mxu0 %v6012
    %6656 = vmatpush.bf16.msra.mxu0 %v6008
    %6657 = vmatpush.bf16.msra.mxu0 %v6004
    %6658 = vmatpush.bf16.msra.mxu0 %v6000
    %6659 = vmatpush.bf16.msra.mxu0 %v5996
    %6660 = vmatpush.bf16.msra.mxu0 %v5992
    %6661 = vmatmul.bf16.gmra.mxu0 %v4865
    %v6662 = vpop.f32.mrf.mxu0
    %v6663 = vadd.f32 %v6650, %v6662
    %v6664 = vpop.f32.mrf.mxu0
    %6665 = vdwg.mxu0
    %6666 = vmatpush.bf16.msra.mxu0 %v6052
    %6667 = vmatpush.bf16.msra.mxu0 %v6048
    %6668 = vmatpush.bf16.msra.mxu0 %v6044
    %6669 = vmatpush.bf16.msra.mxu0 %v6040
    %6670 = vmatpush.bf16.msra.mxu0 %v6036
    %6671 = vmatpush.bf16.msra.mxu0 %v6032
    %6672 = vmatpush.bf16.msra.mxu0 %v6028
    %6673 = vmatpush.bf16.msra.mxu0 %v6024
    %6674 = vmatmul.bf16.gmra.mxu0 %v4866
    %v6675 = vpop.f32.mrf.mxu0
    %v6676 = vadd.f32 %v6663, %v6675
    %v6677 = vpop.f32.mrf.mxu0
    %6678 = vdwg.mxu0
    %6679 = vmatpush.bf16.msra.mxu0 %v6084
    %6680 = vmatpush.bf16.msra.mxu0 %v6080
    %6681 = vmatpush.bf16.msra.mxu0 %v6076
    %6682 = vmatpush.bf16.msra.mxu0 %v6072
    %6683 = vmatpush.bf16.msra.mxu0 %v6068
    %6684 = vmatpush.bf16.msra.mxu0 %v6064
    %6685 = vmatpush.bf16.msra.mxu0 %v6060
    %6686 = vmatpush.bf16.msra.mxu0 %v6056
    %6687 = vmatmul.bf16.gmra.mxu0 %v4867
    %v6688 = vpop.f32.mrf.mxu0
    %v6689 = vadd.f32 %v6676, %v6688
    %v6690 = vpop.f32.mrf.mxu0
    %6691 = vdwg.mxu0
    %6692 = vmatpush.bf16.msra.mxu0 %v6116
    %6693 = vmatpush.bf16.msra.mxu0 %v6112
    %6694 = vmatpush.bf16.msra.mxu0 %v6108
    %6695 = vmatpush.bf16.msra.mxu0 %v6104
    %6696 = vmatpush.bf16.msra.mxu0 %v6100
    %6697 = vmatpush.bf16.msra.mxu0 %v6096
    %6698 = vmatpush.bf16.msra.mxu0 %v6092
    %6699 = vmatpush.bf16.msra.mxu0 %v6088
    %6700 = vmatmul.bf16.gmra.mxu0 %v4868
    %v6701 = vpop.f32.mrf.mxu0
    %v6702 = vadd.f32 %v6689, %v6701
    %v6703 = vpop.f32.mrf.mxu0
    %6704 = vdwg.mxu0
    %6705 = vmatpush.bf16.msra.mxu0 %v6148
    %6706 = vmatpush.bf16.msra.mxu0 %v6144
    %6707 = vmatpush.bf16.msra.mxu0 %v6140
    %6708 = vmatpush.bf16.msra.mxu0 %v6136
    %6709 = vmatpush.bf16.msra.mxu0 %v6132
    %6710 = vmatpush.bf16.msra.mxu0 %v6128
    %6711 = vmatpush.bf16.msra.mxu0 %v6124
    %6712 = vmatpush.bf16.msra.mxu0 %v6120
    %6713 = vmatmul.bf16.gmra.mxu0 %v4869
    %v6714 = vpop.f32.mrf.mxu0
    %v6715 = vadd.f32 %v6702, %v6714
    %v6716 = vpop.f32.mrf.mxu0
    %6717 = vdwg.mxu0
    %6718 = vmatpush.bf16.msra.mxu0 %v5925
    %6719 = vmatpush.bf16.msra.mxu0 %v5921
    %6720 = vmatpush.bf16.msra.mxu0 %v5917
    %6721 = vmatpush.bf16.msra.mxu0 %v5913
    %6722 = vmatpush.bf16.msra.mxu0 %v5909
    %6723 = vmatpush.bf16.msra.mxu0 %v5905
    %6724 = vmatpush.bf16.msra.mxu0 %v5901
    %6725 = vmatpush.bf16.msra.mxu0 %v5897
    %6726 = vmatmul.bf16.gmra.mxu0 %v4862
    %v6727 = vpop.f32.mrf.mxu0
    %v6728 = vadd.f32 0.0, %v6727
    %v6729 = vpop.f32.mrf.mxu0
    %6730 = vdwg.mxu0
    %6731 = vmatpush.bf16.msra.mxu0 %v5957
    %6732 = vmatpush.bf16.msra.mxu0 %v5953
    %6733 = vmatpush.bf16.msra.mxu0 %v5949
    %6734 = vmatpush.bf16.msra.mxu0 %v5945
    %6735 = vmatpush.bf16.msra.mxu0 %v5941
    %6736 = vmatpush.bf16.msra.mxu0 %v5937
    %6737 = vmatpush.bf16.msra.mxu0 %v5933
    %6738 = vmatpush.bf16.msra.mxu0 %v5929
    %6739 = vmatmul.bf16.gmra.mxu0 %v4863
    %v6740 = vpop.f32.mrf.mxu0
    %v6741 = vadd.f32 %v6728, %v6740
    %v6742 = vpop.f32.mrf.mxu0
    %6743 = vdwg.mxu0
    %6744 = vmatpush.bf16.msra.mxu0 %v5989
    %6745 = vmatpush.bf16.msra.mxu0 %v5985
    %6746 = vmatpush.bf16.msra.mxu0 %v5981
    %6747 = vmatpush.bf16.msra.mxu0 %v5977
    %6748 = vmatpush.bf16.msra.mxu0 %v5973
    %6749 = vmatpush.bf16.msra.mxu0 %v5969
    %6750 = vmatpush.bf16.msra.mxu0 %v5965
    %6751 = vmatpush.bf16.msra.mxu0 %v5961
    %6752 = vmatmul.bf16.gmra.mxu0 %v4864
    %v6753 = vpop.f32.mrf.mxu0
    %v6754 = vadd.f32 %v6741, %v6753
    %v6755 = vpop.f32.mrf.mxu0
    %6756 = vdwg.mxu0
    %6757 = vmatpush.bf16.msra.mxu0 %v6021
    %6758 = vmatpush.bf16.msra.mxu0 %v6017
    %6759 = vmatpush.bf16.msra.mxu0 %v6013
    %6760 = vmatpush.bf16.msra.mxu0 %v6009
    %6761 = vmatpush.bf16.msra.mxu0 %v6005
    %6762 = vmatpush.bf16.msra.mxu0 %v6001
    %6763 = vmatpush.bf16.msra.mxu0 %v5997
    %6764 = vmatpush.bf16.msra.mxu0 %v5993
    %6765 = vmatmul.bf16.gmra.mxu0 %v4865
    %v6766 = vpop.f32.mrf.mxu0
    %v6767 = vadd.f32 %v6754, %v6766
    %v6768 = vpop.f32.mrf.mxu0
    %6769 = vdwg.mxu0
    %6770 = vmatpush.bf16.msra.mxu0 %v6053
    %6771 = vmatpush.bf16.msra.mxu0 %v6049
    %6772 = vmatpush.bf16.msra.mxu0 %v6045
    %6773 = vmatpush.bf16.msra.mxu0 %v6041
    %6774 = vmatpush.bf16.msra.mxu0 %v6037
    %6775 = vmatpush.bf16.msra.mxu0 %v6033
    %6776 = vmatpush.bf16.msra.mxu0 %v6029
    %6777 = vmatpush.bf16.msra.mxu0 %v6025
    %6778 = vmatmul.bf16.gmra.mxu0 %v4866
    %v6779 = vpop.f32.mrf.mxu0
    %v6780 = vadd.f32 %v6767, %v6779
    %v6781 = vpop.f32.mrf.mxu0
    %6782 = vdwg.mxu0
    %6783 = vmatpush.bf16.msra.mxu0 %v6085
    %6784 = vmatpush.bf16.msra.mxu0 %v6081
    %6785 = vmatpush.bf16.msra.mxu0 %v6077
    %6786 = vmatpush.bf16.msra.mxu0 %v6073
    %6787 = vmatpush.bf16.msra.mxu0 %v6069
    %6788 = vmatpush.bf16.msra.mxu0 %v6065
    %6789 = vmatpush.bf16.msra.mxu0 %v6061
    %6790 = vmatpush.bf16.msra.mxu0 %v6057
    %6791 = vmatmul.bf16.gmra.mxu0 %v4867
    %v6792 = vpop.f32.mrf.mxu0
    %v6793 = vadd.f32 %v6780, %v6792
    %v6794 = vpop.f32.mrf.mxu0
    %6795 = vdwg.mxu0
    %6796 = vmatpush.bf16.msra.mxu0 %v6117
    %6797 = vmatpush.bf16.msra.mxu0 %v6113
    %6798 = vmatpush.bf16.msra.mxu0 %v6109
    %6799 = vmatpush.bf16.msra.mxu0 %v6105
    %6800 = vmatpush.bf16.msra.mxu0 %v6101
    %6801 = vmatpush.bf16.msra.mxu0 %v6097
    %6802 = vmatpush.bf16.msra.mxu0 %v6093
    %6803 = vmatpush.bf16.msra.mxu0 %v6089
    %6804 = vmatmul.bf16.gmra.mxu0 %v4868
    %v6805 = vpop.f32.mrf.mxu0
    %v6806 = vadd.f32 %v6793, %v6805
    %v6807 = vpop.f32.mrf.mxu0
    %6808 = vdwg.mxu0
    %6809 = vmatpush.bf16.msra.mxu0 %v6149
    %6810 = vmatpush.bf16.msra.mxu0 %v6145
    %6811 = vmatpush.bf16.msra.mxu0 %v6141
    %6812 = vmatpush.bf16.msra.mxu0 %v6137
    %6813 = vmatpush.bf16.msra.mxu0 %v6133
    %6814 = vmatpush.bf16.msra.mxu0 %v6129
    %6815 = vmatpush.bf16.msra.mxu0 %v6125
    %6816 = vmatpush.bf16.msra.mxu0 %v6121
    %6817 = vmatmul.bf16.gmra.mxu0 %v4869
    %v6818 = vpop.f32.mrf.mxu0
    %v6819 = vadd.f32 %v6806, %v6818
    %v6820 = vpop.f32.mrf.mxu0
    %6821 = vdwg.mxu0
    %vm6822 = vcmp.gt.f32.partialorder %v6507, 0.0
    %vm6823 = vcmp.gt.f32.partialorder %v6611, 0.0
    %vm6824 = vcmp.gt.f32.partialorder %v6715, 0.0
    %vm6825 = vcmp.gt.f32.partialorder %v6819, 0.0
    %v6826 = vmul.f32 %v6507, 0.01
    %v6827 = vmul.f32 %v6611, 0.01
    %v6828 = vmul.f32 %v6715, 0.01
    %v6829 = vmul.f32 %v6819, 0.01
    %v6830 = vsel %vm6822, %v6507, %v6826
    %v6831 = vsel %vm6823, %v6611, %v6827
    %v6832 = vsel %vm6824, %v6715, %v6828
    %v6833 = vsel %vm6825, %v6819, %v6829
    %v6834 = vpack.c.bf16 %v6830, %v6830
    %v6835 = vpack.c.bf16 %v6831, %v6831
    %v6836 = vpack.c.bf16 %v6832, %v6832
    %v6837 = vpack.c.bf16 %v6833, %v6833
    %v6838 = vld [vmem:[#allocation19] sm:$0xf]
    %v6839 = vld [vmem:[#allocation19 + $0x4] sm:$0xf]
    %v6840 = vld [vmem:[#allocation19 + $0x8] sm:$0xf]
    %v6841 = vld [vmem:[#allocation19 + $0xc] sm:$0xf]
    %v6842 = vld [vmem:[#allocation19 + $0x10] sm:$0xf]
    %v6843 = vld [vmem:[#allocation19 + $0x14] sm:$0xf]
    %v6844 = vld [vmem:[#allocation19 + $0x18] sm:$0xf]
    %v6845 = vld [vmem:[#allocation19 + $0x1c] sm:$0xf]
    %v6846 = vld [vmem:[#allocation19 + $0x20] sm:$0xf]
    %v6847 = vld [vmem:[#allocation19 + $0x24] sm:$0xf]
    %v6848 = vld [vmem:[#allocation19 + $0x28] sm:$0xf]
    %v6849 = vld [vmem:[#allocation19 + $0x2c] sm:$0xf]
    %v6850 = vld [vmem:[#allocation19 + $0x30] sm:$0xf]
    %v6851 = vld [vmem:[#allocation19 + $0x34] sm:$0xf]
    %v6852 = vld [vmem:[#allocation19 + $0x38] sm:$0xf]
    %v6853 = vld [vmem:[#allocation19 + $0x3c] sm:$0xf]
    %v6854 = vld [vmem:[#allocation19 + $0x40] sm:$0xf]
    %v6855 = vld [vmem:[#allocation19 + $0x44] sm:$0xf]
    %v6856 = vld [vmem:[#allocation19 + $0x48] sm:$0xf]
    %v6857 = vld [vmem:[#allocation19 + $0x4c] sm:$0xf]
    %v6858 = vld [vmem:[#allocation19 + $0x50] sm:$0xf]
    %v6859 = vld [vmem:[#allocation19 + $0x54] sm:$0xf]
    %v6860 = vld [vmem:[#allocation19 + $0x58] sm:$0xf]
    %v6861 = vld [vmem:[#allocation19 + $0x5c] sm:$0xf]
    %v6862 = vld [vmem:[#allocation19 + $0x60] sm:$0xf]
    %v6863 = vld [vmem:[#allocation19 + $0x64] sm:$0xf]
    %v6864 = vld [vmem:[#allocation19 + $0x68] sm:$0xf]
    %v6865 = vld [vmem:[#allocation19 + $0x6c] sm:$0xf]
    %v6866 = vld [vmem:[#allocation19 + $0x70] sm:$0xf]
    %v6867 = vld [vmem:[#allocation19 + $0x74] sm:$0xf]
    %v6868 = vld [vmem:[#allocation19 + $0x78] sm:$0xf]
    %v6869 = vld [vmem:[#allocation19 + $0x7c] sm:$0xf]
    %v6870 = vld [vmem:[#allocation19 + $0x80] sm:$0xf]
    %v6871 = vld [vmem:[#allocation19 + $0x84] sm:$0xf]
    %v6872 = vld [vmem:[#allocation19 + $0x88] sm:$0xf]
    %v6873 = vld [vmem:[#allocation19 + $0x8c] sm:$0xf]
    %v6874 = vld [vmem:[#allocation19 + $0x90] sm:$0xf]
    %v6875 = vld [vmem:[#allocation19 + $0x94] sm:$0xf]
    %v6876 = vld [vmem:[#allocation19 + $0x98] sm:$0xf]
    %v6877 = vld [vmem:[#allocation19 + $0x9c] sm:$0xf]
    %v6878 = vld [vmem:[#allocation19 + $0xa0] sm:$0xf]
    %v6879 = vld [vmem:[#allocation19 + $0xa4] sm:$0xf]
    %v6880 = vld [vmem:[#allocation19 + $0xa8] sm:$0xf]
    %v6881 = vld [vmem:[#allocation19 + $0xac] sm:$0xf]
    %v6882 = vld [vmem:[#allocation19 + $0xb0] sm:$0xf]
    %v6883 = vld [vmem:[#allocation19 + $0xb4] sm:$0xf]
    %v6884 = vld [vmem:[#allocation19 + $0xb8] sm:$0xf]
    %v6885 = vld [vmem:[#allocation19 + $0xbc] sm:$0xf]
    %v6886 = vld [vmem:[#allocation19 + $0xc0] sm:$0xf]
    %v6887 = vld [vmem:[#allocation19 + $0xc4] sm:$0xf]
    %v6888 = vld [vmem:[#allocation19 + $0xc8] sm:$0xf]
    %v6889 = vld [vmem:[#allocation19 + $0xcc] sm:$0xf]
    %v6890 = vld [vmem:[#allocation19 + $0xd0] sm:$0xf]
    %v6891 = vld [vmem:[#allocation19 + $0xd4] sm:$0xf]
    %v6892 = vld [vmem:[#allocation19 + $0xd8] sm:$0xf]
    %v6893 = vld [vmem:[#allocation19 + $0xdc] sm:$0xf]
    %v6894 = vld [vmem:[#allocation19 + $0xe0] sm:$0xf]
    %v6895 = vld [vmem:[#allocation19 + $0xe4] sm:$0xf]
    %v6896 = vld [vmem:[#allocation19 + $0xe8] sm:$0xf]
    %v6897 = vld [vmem:[#allocation19 + $0xec] sm:$0xf]
    %v6898 = vld [vmem:[#allocation19 + $0xf0] sm:$0xf]
    %v6899 = vld [vmem:[#allocation19 + $0xf4] sm:$0xf]
    %v6900 = vld [vmem:[#allocation19 + $0xf8] sm:$0xf]
    %v6901 = vld [vmem:[#allocation19 + $0xfc] sm:$0xf]
    %v6966 = vunpack.c.l.b16 %v6838
    %v6967 = vunpack.c.l.b16 %v6839
    %v6968 = vunpack.c.l.b16 %v6840
    %v6969 = vunpack.c.l.b16 %v6841
    %v6970 = vunpack.c.l.b16 %v6842
    %v6971 = vunpack.c.l.b16 %v6843
    %v6972 = vunpack.c.l.b16 %v6844
    %v6973 = vunpack.c.l.b16 %v6845
    %v6974 = vunpack.c.l.b16 %v6846
    %v6975 = vunpack.c.l.b16 %v6847
    %v6976 = vunpack.c.l.b16 %v6848
    %v6977 = vunpack.c.l.b16 %v6849
    %v6978 = vunpack.c.l.b16 %v6850
    %v6979 = vunpack.c.l.b16 %v6851
    %v6980 = vunpack.c.l.b16 %v6852
    %v6981 = vunpack.c.l.b16 %v6853
    %v6982 = vunpack.c.l.b16 %v6854
    %v6983 = vunpack.c.l.b16 %v6855
    %v6984 = vunpack.c.l.b16 %v6856
    %v6985 = vunpack.c.l.b16 %v6857
    %v6986 = vunpack.c.l.b16 %v6858
    %v6987 = vunpack.c.l.b16 %v6859
    %v6988 = vunpack.c.l.b16 %v6860
    %v6989 = vunpack.c.l.b16 %v6861
    %v6990 = vunpack.c.l.b16 %v6862
    %v6991 = vunpack.c.l.b16 %v6863
    %v6992 = vunpack.c.l.b16 %v6864
    %v6993 = vunpack.c.l.b16 %v6865
    %v6994 = vunpack.c.l.b16 %v6866
    %v6995 = vunpack.c.l.b16 %v6867
    %v6996 = vunpack.c.l.b16 %v6868
    %v6997 = vunpack.c.l.b16 %v6869
    %v6998 = vunpack.c.l.b16 %v6870
    %v6999 = vunpack.c.l.b16 %v6871
    %v7000 = vunpack.c.l.b16 %v6872
    %v7001 = vunpack.c.l.b16 %v6873
    %v7002 = vunpack.c.l.b16 %v6874
    %v7003 = vunpack.c.l.b16 %v6875
    %v7004 = vunpack.c.l.b16 %v6876
    %v7005 = vunpack.c.l.b16 %v6877
    %v7006 = vunpack.c.l.b16 %v6878
    %v7007 = vunpack.c.l.b16 %v6879
    %v7008 = vunpack.c.l.b16 %v6880
    %v7009 = vunpack.c.l.b16 %v6881
    %v7010 = vunpack.c.l.b16 %v6882
    %v7011 = vunpack.c.l.b16 %v6883
    %v7012 = vunpack.c.l.b16 %v6884
    %v7013 = vunpack.c.l.b16 %v6885
    %v7014 = vunpack.c.l.b16 %v6886
    %v7015 = vunpack.c.l.b16 %v6887
    %v7016 = vunpack.c.l.b16 %v6888
    %v7017 = vunpack.c.l.b16 %v6889
    %v7018 = vunpack.c.l.b16 %v6890
    %v7019 = vunpack.c.l.b16 %v6891
    %v7020 = vunpack.c.l.b16 %v6892
    %v7021 = vunpack.c.l.b16 %v6893
    %v7022 = vunpack.c.l.b16 %v6894
    %v7023 = vunpack.c.l.b16 %v6895
    %v7024 = vunpack.c.l.b16 %v6896
    %v7025 = vunpack.c.l.b16 %v6897
    %v7026 = vunpack.c.l.b16 %v6898
    %v7027 = vunpack.c.l.b16 %v6899
    %v7028 = vunpack.c.l.b16 %v6900
    %v7029 = vunpack.c.l.b16 %v6901
    %v7030 = vpack.c.b16 %v6967, %v6966
    %v7031 = vpack.c.b16 %v6969, %v6968
    %v7032 = vpack.c.b16 %v6971, %v6970
    %v7033 = vpack.c.b16 %v6973, %v6972
    %v7034 = vpack.c.b16 %v6975, %v6974
    %v7035 = vpack.c.b16 %v6977, %v6976
    %v7036 = vpack.c.b16 %v6979, %v6978
    %v7037 = vpack.c.b16 %v6981, %v6980
    %v7038 = vpack.c.b16 %v6983, %v6982
    %v7039 = vpack.c.b16 %v6985, %v6984
    %v7040 = vpack.c.b16 %v6987, %v6986
    %v7041 = vpack.c.b16 %v6989, %v6988
    %v7042 = vpack.c.b16 %v6991, %v6990
    %v7043 = vpack.c.b16 %v6993, %v6992
    %v7044 = vpack.c.b16 %v6995, %v6994
    %v7045 = vpack.c.b16 %v6997, %v6996
    %v7046 = vpack.c.b16 %v6999, %v6998
    %v7047 = vpack.c.b16 %v7001, %v7000
    %v7048 = vpack.c.b16 %v7003, %v7002
    %v7049 = vpack.c.b16 %v7005, %v7004
    %v7050 = vpack.c.b16 %v7007, %v7006
    %v7051 = vpack.c.b16 %v7009, %v7008
    %v7052 = vpack.c.b16 %v7011, %v7010
    %v7053 = vpack.c.b16 %v7013, %v7012
    %v7054 = vpack.c.b16 %v7015, %v7014
    %v7055 = vpack.c.b16 %v7017, %v7016
    %v7056 = vpack.c.b16 %v7019, %v7018
    %v7057 = vpack.c.b16 %v7021, %v7020
    %v7058 = vpack.c.b16 %v7023, %v7022
    %v7059 = vpack.c.b16 %v7025, %v7024
    %v7060 = vpack.c.b16 %v7027, %v7026
    %v7061 = vpack.c.b16 %v7029, %v7028
    %7094 = vmatpush.bf16.msra.mxu0 %v7037
    %7095 = vmatpush.bf16.msra.mxu0 %v7036
    %7096 = vmatpush.bf16.msra.mxu0 %v7035
    %7097 = vmatpush.bf16.msra.mxu0 %v7034
    %7098 = vmatpush.bf16.msra.mxu0 %v7033
    %7099 = vmatpush.bf16.msra.mxu0 %v7032
    %7100 = vmatpush.bf16.msra.mxu0 %v7031
    %7101 = vmatpush.bf16.msra.mxu0 %v7030
    %7102 = vmatmul.bf16.gmra.mxu0 %v6834
    %v7103 = vpop.f32.mrf.mxu0
    %v7104 = vadd.f32 0.0, %v7103
    %v7105 = vpop.f32.mrf.mxu0
    %7106 = vdwg.mxu0
    %7107 = vmatpush.bf16.msra.mxu0 %v7045
    %7108 = vmatpush.bf16.msra.mxu0 %v7044
    %7109 = vmatpush.bf16.msra.mxu0 %v7043
    %7110 = vmatpush.bf16.msra.mxu0 %v7042
    %7111 = vmatpush.bf16.msra.mxu0 %v7041
    %7112 = vmatpush.bf16.msra.mxu0 %v7040
    %7113 = vmatpush.bf16.msra.mxu0 %v7039
    %7114 = vmatpush.bf16.msra.mxu0 %v7038
    %7115 = vmatmul.bf16.gmra.mxu0 %v6835
    %v7116 = vpop.f32.mrf.mxu0
    %v7117 = vadd.f32 %v7104, %v7116
    %v7118 = vpop.f32.mrf.mxu0
    %7119 = vdwg.mxu0
    %7120 = vmatpush.bf16.msra.mxu0 %v7053
    %7121 = vmatpush.bf16.msra.mxu0 %v7052
    %7122 = vmatpush.bf16.msra.mxu0 %v7051
    %7123 = vmatpush.bf16.msra.mxu0 %v7050
    %7124 = vmatpush.bf16.msra.mxu0 %v7049
    %7125 = vmatpush.bf16.msra.mxu0 %v7048
    %7126 = vmatpush.bf16.msra.mxu0 %v7047
    %7127 = vmatpush.bf16.msra.mxu0 %v7046
    %7128 = vmatmul.bf16.gmra.mxu0 %v6836
    %v7129 = vpop.f32.mrf.mxu0
    %v7130 = vadd.f32 %v7117, %v7129
    %v7131 = vpop.f32.mrf.mxu0
    %7132 = vdwg.mxu0
    %7133 = vmatpush.bf16.msra.mxu0 %v7061
    %7134 = vmatpush.bf16.msra.mxu0 %v7060
    %7135 = vmatpush.bf16.msra.mxu0 %v7059
    %7136 = vmatpush.bf16.msra.mxu0 %v7058
    %7137 = vmatpush.bf16.msra.mxu0 %v7057
    %7138 = vmatpush.bf16.msra.mxu0 %v7056
    %7139 = vmatpush.bf16.msra.mxu0 %v7055
    %7140 = vmatpush.bf16.msra.mxu0 %v7054
    %7141 = vmatmul.bf16.gmra.mxu0 %v6837
    %v7142 = vpop.f32.mrf.mxu0
    %v7143 = vadd.f32 %v7130, %v7142
    %v7144 = vpop.f32.mrf.mxu0
    %7145 = vdwg.mxu0
    %v7146 = vadd.f32 %v4836, %v7143
    %v7147 = vld [vmem:[#allocation13] sm:$0x77]
    %v7148 = vld [vmem:[#allocation13 + $0x8] sm:$0x77]
    %v7149 = vld [vmem:[#allocation13 + $0x10] sm:$0x77]
    %v7150 = vld [vmem:[#allocation13 + $0x18] sm:$0x77]
    %v7151 = vld [vmem:[#allocation13 + $0x20] sm:$0x77]
    %v7152 = vld [vmem:[#allocation13 + $0x28] sm:$0x77]
    %v7153 = vld [vmem:[%s3] sm:$0x3]
    %7155 = vset.pattern.permute.xlu0 0
    %7156 = vperm.xlu0 %7155, %v7153
    %v7157 = vpop.permute.xlu0 %7156
    %v7165 = vperm.slane %v7147, 0
    %v7166 = vperm.slane %v7147, 4
    %v7167 = vperm.slane %v7148, 0
    %v7168 = vperm.slane %v7148, 4
    %v7169 = vperm.slane %v7149, 0
    %v7170 = vperm.slane %v7149, 4
    %v7171 = vperm.slane %v7150, 0
    %v7172 = vperm.slane %v7150, 4
    %v7173 = vperm.slane %v7151, 0
    %v7174 = vperm.slane %v7151, 4
    %v7175 = vperm.slane %v7152, 0
    %v7176 = vperm.slane %v7152, 4
    %v7189 = vperm.slane %v7165, 0
    %v7190 = vperm.slane %v7166, 0
    %v7191 = vperm.slane %v7167, 0
    %v7192 = vperm.slane %v7168, 0
    %v7193 = vperm.slane %v7169, 0
    %v7194 = vperm.slane %v7170, 0
    %v7195 = vperm.slane %v7171, 0
    %v7196 = vperm.slane %v7172, 0
    %v7197 = vperm.slane %v7173, 0
    %v7198 = vperm.slane %v7174, 0
    %v7199 = vperm.slane %v7175, 0
    %v7200 = vperm.slane %v7176, 0
    %v7201 = vmul.f32 %v7157, %v7189
    %v7202 = vmul.f32 %v7157, %v7190
    %v7203 = vmul.f32 %v7157, %v7191
    %v7204 = vmul.f32 %v7157, %v7192
    %v7205 = vmul.f32 %v7157, %v7193
    %v7206 = vmul.f32 %v7157, %v7194
    %v7207 = vmul.f32 %v7157, %v7195
    %v7208 = vmul.f32 %v7157, %v7196
    %v7209 = vmul.f32 %v7157, %v7197
    %v7210 = vmul.f32 %v7157, %v7198
    %v7211 = vmul.f32 %v7157, %v7199
    %v7212 = vmul.f32 %v7157, %v7200
    %7213 = vset.pattern.permute.xlu0 1
    %7214 = vperm.xlu0 %7213, %v7153
    %v7215 = vpop.permute.xlu0 %7214
    %v7217 = vperm.slane %v7147, 1
    %v7218 = vperm.slane %v7147, 5
    %v7219 = vperm.slane %v7148, 1
    %v7220 = vperm.slane %v7148, 5
    %v7221 = vperm.slane %v7149, 1
    %v7222 = vperm.slane %v7149, 5
    %v7223 = vperm.slane %v7150, 1
    %v7224 = vperm.slane %v7150, 5
    %v7225 = vperm.slane %v7151, 1
    %v7226 = vperm.slane %v7151, 5
    %v7227 = vperm.slane %v7152, 1
    %v7228 = vperm.slane %v7152, 5
    %v7241 = vperm.slane %v7217, 1
    %v7242 = vperm.slane %v7218, 1
    %v7243 = vperm.slane %v7219, 1
    %v7244 = vperm.slane %v7220, 1
    %v7245 = vperm.slane %v7221, 1
    %v7246 = vperm.slane %v7222, 1
    %v7247 = vperm.slane %v7223, 1
    %v7248 = vperm.slane %v7224, 1
    %v7249 = vperm.slane %v7225, 1
    %v7250 = vperm.slane %v7226, 1
    %v7251 = vperm.slane %v7227, 1
    %v7252 = vperm.slane %v7228, 1
    %v7253 = vmul.f32 %v7215, %v7241
    %v7254 = vmul.f32 %v7215, %v7242
    %v7255 = vmul.f32 %v7215, %v7243
    %v7256 = vmul.f32 %v7215, %v7244
    %v7257 = vmul.f32 %v7215, %v7245
    %v7258 = vmul.f32 %v7215, %v7246
    %v7259 = vmul.f32 %v7215, %v7247
    %v7260 = vmul.f32 %v7215, %v7248
    %v7261 = vmul.f32 %v7215, %v7249
    %v7262 = vmul.f32 %v7215, %v7250
    %v7263 = vmul.f32 %v7215, %v7251
    %v7264 = vmul.f32 %v7215, %v7252
    %v7265 = vadd.f32 %v7201, %v7253
    %v7266 = vadd.f32 %v7202, %v7254
    %v7267 = vadd.f32 %v7203, %v7255
    %v7268 = vadd.f32 %v7204, %v7256
    %v7269 = vadd.f32 %v7205, %v7257
    %v7270 = vadd.f32 %v7206, %v7258
    %v7271 = vadd.f32 %v7207, %v7259
    %v7272 = vadd.f32 %v7208, %v7260
    %v7273 = vadd.f32 %v7209, %v7261
    %v7274 = vadd.f32 %v7210, %v7262
    %v7275 = vadd.f32 %v7211, %v7263
    %v7276 = vadd.f32 %v7212, %v7264
    %7277 = vset.pattern.permute.xlu0 2
    %7278 = vperm.xlu0 %7277, %v7153
    %v7279 = vpop.permute.xlu0 %7278
    %v7281 = vperm.slane %v7147, 2
    %v7282 = vperm.slane %v7147, 6
    %v7283 = vperm.slane %v7148, 2
    %v7284 = vperm.slane %v7148, 6
    %v7285 = vperm.slane %v7149, 2
    %v7286 = vperm.slane %v7149, 6
    %v7287 = vperm.slane %v7150, 2
    %v7288 = vperm.slane %v7150, 6
    %v7289 = vperm.slane %v7151, 2
    %v7290 = vperm.slane %v7151, 6
    %v7291 = vperm.slane %v7152, 2
    %v7292 = vperm.slane %v7152, 6
    %v7305 = vperm.slane %v7281, 2
    %v7306 = vperm.slane %v7282, 2
    %v7307 = vperm.slane %v7283, 2
    %v7308 = vperm.slane %v7284, 2
    %v7309 = vperm.slane %v7285, 2
    %v7310 = vperm.slane %v7286, 2
    %v7311 = vperm.slane %v7287, 2
    %v7312 = vperm.slane %v7288, 2
    %v7313 = vperm.slane %v7289, 2
    %v7314 = vperm.slane %v7290, 2
    %v7315 = vperm.slane %v7291, 2
    %v7316 = vperm.slane %v7292, 2
    %v7317 = vmul.f32 %v7279, %v7305
    %v7318 = vmul.f32 %v7279, %v7306
    %v7319 = vmul.f32 %v7279, %v7307
    %v7320 = vmul.f32 %v7279, %v7308
    %v7321 = vmul.f32 %v7279, %v7309
    %v7322 = vmul.f32 %v7279, %v7310
    %v7323 = vmul.f32 %v7279, %v7311
    %v7324 = vmul.f32 %v7279, %v7312
    %v7325 = vmul.f32 %v7279, %v7313
    %v7326 = vmul.f32 %v7279, %v7314
    %v7327 = vmul.f32 %v7279, %v7315
    %v7328 = vmul.f32 %v7279, %v7316
    %v7329 = vadd.f32 %v7265, %v7317
    %v7330 = vadd.f32 %v7266, %v7318
    %v7331 = vadd.f32 %v7267, %v7319
    %v7332 = vadd.f32 %v7268, %v7320
    %v7333 = vadd.f32 %v7269, %v7321
    %v7334 = vadd.f32 %v7270, %v7322
    %v7335 = vadd.f32 %v7271, %v7323
    %v7336 = vadd.f32 %v7272, %v7324
    %v7337 = vadd.f32 %v7273, %v7325
    %v7338 = vadd.f32 %v7274, %v7326
    %v7339 = vadd.f32 %v7275, %v7327
    %v7340 = vadd.f32 %v7276, %v7328
    %v7341 = vld [vmem:[#allocation14] sm:$0xff]
    %v7342 = vld [vmem:[#allocation14 + $0x8] sm:$0xf]
    %v7345 = vperm.slane %v7341, 0
    %v7346 = vperm.slane %v7341, 1
    %v7347 = vperm.slane %v7341, 2
    %v7348 = vperm.slane %v7341, 3
    %v7349 = vperm.slane %v7341, 4
    %v7350 = vperm.slane %v7341, 5
    %v7351 = vperm.slane %v7341, 6
    %v7352 = vperm.slane %v7341, 7
    %v7353 = vperm.slane %v7342, 0
    %v7354 = vperm.slane %v7342, 1
    %v7355 = vperm.slane %v7342, 2
    %v7356 = vperm.slane %v7342, 3
    %v7369 = vadd.f32 %v7329, %v7345
    %v7370 = vadd.f32 %v7330, %v7346
    %v7371 = vadd.f32 %v7331, %v7347
    %v7372 = vadd.f32 %v7332, %v7348
    %v7373 = vadd.f32 %v7333, %v7349
    %v7374 = vadd.f32 %v7334, %v7350
    %v7375 = vadd.f32 %v7335, %v7351
    %v7376 = vadd.f32 %v7336, %v7352
    %v7377 = vadd.f32 %v7337, %v7353
    %v7378 = vadd.f32 %v7338, %v7354
    %v7379 = vadd.f32 %v7339, %v7355
    %v7380 = vadd.f32 %v7340, %v7356
    %vm7381 = vcmp.gt.f32.partialorder %v7369, 0.0
    %vm7382 = vcmp.gt.f32.partialorder %v7370, 0.0
    %vm7383 = vcmp.gt.f32.partialorder %v7371, 0.0
    %vm7384 = vcmp.gt.f32.partialorder %v7372, 0.0
    %vm7385 = vcmp.gt.f32.partialorder %v7373, 0.0
    %vm7386 = vcmp.gt.f32.partialorder %v7374, 0.0
    %vm7387 = vcmp.gt.f32.partialorder %v7375, 0.0
    %vm7388 = vcmp.gt.f32.partialorder %v7376, 0.0
    %vm7389 = vcmp.gt.f32.partialorder %v7377, 0.0
    %vm7390 = vcmp.gt.f32.partialorder %v7378, 0.0
    %vm7391 = vcmp.gt.f32.partialorder %v7379, 0.0
    %vm7392 = vcmp.gt.f32.partialorder %v7380, 0.0
    %v7393 = vmul.f32 %v7369, 0.0001
    %v7394 = vmul.f32 %v7370, 0.0001
    %v7395 = vmul.f32 %v7371, 0.0001
    %v7396 = vmul.f32 %v7372, 0.0001
    %v7397 = vmul.f32 %v7373, 0.0001
    %v7398 = vmul.f32 %v7374, 0.0001
    %v7399 = vmul.f32 %v7375, 0.0001
    %v7400 = vmul.f32 %v7376, 0.0001
    %v7401 = vmul.f32 %v7377, 0.0001
    %v7402 = vmul.f32 %v7378, 0.0001
    %v7403 = vmul.f32 %v7379, 0.0001
    %v7404 = vmul.f32 %v7380, 0.0001
    %v7405 = vsel %vm7381, %v7369, %v7393
    %v7406 = vsel %vm7382, %v7370, %v7394
    %v7407 = vsel %vm7383, %v7371, %v7395
    %v7408 = vsel %vm7384, %v7372, %v7396
    %v7409 = vsel %vm7385, %v7373, %v7397
    %v7410 = vsel %vm7386, %v7374, %v7398
    %v7411 = vsel %vm7387, %v7375, %v7399
    %v7412 = vsel %vm7388, %v7376, %v7400
    %v7413 = vsel %vm7389, %v7377, %v7401
    %v7414 = vsel %vm7390, %v7378, %v7402
    %v7415 = vsel %vm7391, %v7379, %v7403
    %v7416 = vsel %vm7392, %v7380, %v7404
    %v7417 = vpack.c.bf16 %v7405, %v7405
    %v7418 = vpack.c.bf16 %v7406, %v7406
    %v7419 = vpack.c.bf16 %v7407, %v7407
    %v7420 = vpack.c.bf16 %v7408, %v7408
    %v7421 = vpack.c.bf16 %v7409, %v7409
    %v7422 = vpack.c.bf16 %v7410, %v7410
    %v7423 = vpack.c.bf16 %v7411, %v7411
    %v7424 = vpack.c.bf16 %v7412, %v7412
    %v7425 = vpack.c.bf16 %v7413, %v7413
    %v7426 = vpack.c.bf16 %v7414, %v7414
    %v7427 = vpack.c.bf16 %v7415, %v7415
    %v7428 = vpack.c.bf16 %v7416, %v7416
    %v7429 = vld [vmem:[#allocation20] sm:$0xf]
    %v7430 = vld [vmem:[#allocation20 + $0x4] sm:$0xf]
    %v7431 = vld [vmem:[#allocation20 + $0x8] sm:$0xf]
    %v7432 = vld [vmem:[#allocation20 + $0xc] sm:$0xf]
    %v7433 = vld [vmem:[#allocation20 + $0x10] sm:$0xf]
    %v7434 = vld [vmem:[#allocation20 + $0x14] sm:$0xf]
    %v7435 = vld [vmem:[#allocation20 + $0x18] sm:$0xf]
    %v7436 = vld [vmem:[#allocation20 + $0x1c] sm:$0xf]
    %v7437 = vld [vmem:[#allocation20 + $0x20] sm:$0xf]
    %v7438 = vld [vmem:[#allocation20 + $0x24] sm:$0xf]
    %v7439 = vld [vmem:[#allocation20 + $0x28] sm:$0xf]
    %v7440 = vld [vmem:[#allocation20 + $0x2c] sm:$0xf]
    %v7441 = vld [vmem:[#allocation20 + $0x30] sm:$0xf]
    %v7442 = vld [vmem:[#allocation20 + $0x34] sm:$0xf]
    %v7443 = vld [vmem:[#allocation20 + $0x38] sm:$0xf]
    %v7444 = vld [vmem:[#allocation20 + $0x3c] sm:$0xf]
    %v7445 = vld [vmem:[#allocation20 + $0x40] sm:$0xf]
    %v7446 = vld [vmem:[#allocation20 + $0x44] sm:$0xf]
    %v7447 = vld [vmem:[#allocation20 + $0x48] sm:$0xf]
    %v7448 = vld [vmem:[#allocation20 + $0x4c] sm:$0xf]
    %v7449 = vld [vmem:[#allocation20 + $0x50] sm:$0xf]
    %v7450 = vld [vmem:[#allocation20 + $0x54] sm:$0xf]
    %v7451 = vld [vmem:[#allocation20 + $0x58] sm:$0xf]
    %v7452 = vld [vmem:[#allocation20 + $0x5c] sm:$0xf]
    %v7453 = vld [vmem:[#allocation20 + $0x60] sm:$0xf]
    %v7454 = vld [vmem:[#allocation20 + $0x64] sm:$0xf]
    %v7455 = vld [vmem:[#allocation20 + $0x68] sm:$0xf]
    %v7456 = vld [vmem:[#allocation20 + $0x6c] sm:$0xf]
    %v7457 = vld [vmem:[#allocation20 + $0x70] sm:$0xf]
    %v7458 = vld [vmem:[#allocation20 + $0x74] sm:$0xf]
    %v7459 = vld [vmem:[#allocation20 + $0x78] sm:$0xf]
    %v7460 = vld [vmem:[#allocation20 + $0x7c] sm:$0xf]
    %v7461 = vld [vmem:[#allocation20 + $0x80] sm:$0xf]
    %v7462 = vld [vmem:[#allocation20 + $0x84] sm:$0xf]
    %v7463 = vld [vmem:[#allocation20 + $0x88] sm:$0xf]
    %v7464 = vld [vmem:[#allocation20 + $0x8c] sm:$0xf]
    %v7465 = vld [vmem:[#allocation20 + $0x90] sm:$0xf]
    %v7466 = vld [vmem:[#allocation20 + $0x94] sm:$0xf]
    %v7467 = vld [vmem:[#allocation20 + $0x98] sm:$0xf]
    %v7468 = vld [vmem:[#allocation20 + $0x9c] sm:$0xf]
    %v7469 = vld [vmem:[#allocation20 + $0xa0] sm:$0xf]
    %v7470 = vld [vmem:[#allocation20 + $0xa4] sm:$0xf]
    %v7471 = vld [vmem:[#allocation20 + $0xa8] sm:$0xf]
    %v7472 = vld [vmem:[#allocation20 + $0xac] sm:$0xf]
    %v7473 = vld [vmem:[#allocation20 + $0xb0] sm:$0xf]
    %v7474 = vld [vmem:[#allocation20 + $0xb4] sm:$0xf]
    %v7475 = vld [vmem:[#allocation20 + $0xb8] sm:$0xf]
    %v7476 = vld [vmem:[#allocation20 + $0xbc] sm:$0xf]
    %v7477 = vld [vmem:[#allocation20 + $0xc0] sm:$0xf]
    %v7478 = vld [vmem:[#allocation20 + $0xc4] sm:$0xf]
    %v7479 = vld [vmem:[#allocation20 + $0xc8] sm:$0xf]
    %v7480 = vld [vmem:[#allocation20 + $0xcc] sm:$0xf]
    %v7481 = vld [vmem:[#allocation20 + $0xd0] sm:$0xf]
    %v7482 = vld [vmem:[#allocation20 + $0xd4] sm:$0xf]
    %v7483 = vld [vmem:[#allocation20 + $0xd8] sm:$0xf]
    %v7484 = vld [vmem:[#allocation20 + $0xdc] sm:$0xf]
    %v7485 = vld [vmem:[#allocation20 + $0xe0] sm:$0xf]
    %v7486 = vld [vmem:[#allocation20 + $0xe4] sm:$0xf]
    %v7487 = vld [vmem:[#allocation20 + $0xe8] sm:$0xf]
    %v7488 = vld [vmem:[#allocation20 + $0xec] sm:$0xf]
    %v7489 = vld [vmem:[#allocation20 + $0xf0] sm:$0xf]
    %v7490 = vld [vmem:[#allocation20 + $0xf4] sm:$0xf]
    %v7491 = vld [vmem:[#allocation20 + $0xf8] sm:$0xf]
    %v7492 = vld [vmem:[#allocation20 + $0xfc] sm:$0xf]
    %v7493 = vld [vmem:[#allocation20 + $0x100] sm:$0xf]
    %v7494 = vld [vmem:[#allocation20 + $0x104] sm:$0xf]
    %v7495 = vld [vmem:[#allocation20 + $0x108] sm:$0xf]
    %v7496 = vld [vmem:[#allocation20 + $0x10c] sm:$0xf]
    %v7497 = vld [vmem:[#allocation20 + $0x110] sm:$0xf]
    %v7498 = vld [vmem:[#allocation20 + $0x114] sm:$0xf]
    %v7499 = vld [vmem:[#allocation20 + $0x118] sm:$0xf]
    %v7500 = vld [vmem:[#allocation20 + $0x11c] sm:$0xf]
    %v7501 = vld [vmem:[#allocation20 + $0x120] sm:$0xf]
    %v7502 = vld [vmem:[#allocation20 + $0x124] sm:$0xf]
    %v7503 = vld [vmem:[#allocation20 + $0x128] sm:$0xf]
    %v7504 = vld [vmem:[#allocation20 + $0x12c] sm:$0xf]
    %v7505 = vld [vmem:[#allocation20 + $0x130] sm:$0xf]
    %v7506 = vld [vmem:[#allocation20 + $0x134] sm:$0xf]
    %v7507 = vld [vmem:[#allocation20 + $0x138] sm:$0xf]
    %v7508 = vld [vmem:[#allocation20 + $0x13c] sm:$0xf]
    %v7509 = vld [vmem:[#allocation20 + $0x140] sm:$0xf]
    %v7510 = vld [vmem:[#allocation20 + $0x144] sm:$0xf]
    %v7511 = vld [vmem:[#allocation20 + $0x148] sm:$0xf]
    %v7512 = vld [vmem:[#allocation20 + $0x14c] sm:$0xf]
    %v7513 = vld [vmem:[#allocation20 + $0x150] sm:$0xf]
    %v7514 = vld [vmem:[#allocation20 + $0x154] sm:$0xf]
    %v7515 = vld [vmem:[#allocation20 + $0x158] sm:$0xf]
    %v7516 = vld [vmem:[#allocation20 + $0x15c] sm:$0xf]
    %v7517 = vld [vmem:[#allocation20 + $0x160] sm:$0xf]
    %v7518 = vld [vmem:[#allocation20 + $0x164] sm:$0xf]
    %v7519 = vld [vmem:[#allocation20 + $0x168] sm:$0xf]
    %v7520 = vld [vmem:[#allocation20 + $0x16c] sm:$0xf]
    %v7521 = vld [vmem:[#allocation20 + $0x170] sm:$0xf]
    %v7522 = vld [vmem:[#allocation20 + $0x174] sm:$0xf]
    %v7523 = vld [vmem:[#allocation20 + $0x178] sm:$0xf]
    %v7524 = vld [vmem:[#allocation20 + $0x17c] sm:$0xf]
    %v7525 = vld [vmem:[#allocation20 + $0x180] sm:$0xf]
    %v7526 = vld [vmem:[#allocation20 + $0x184] sm:$0xf]
    %v7527 = vld [vmem:[#allocation20 + $0x188] sm:$0xf]
    %v7528 = vld [vmem:[#allocation20 + $0x18c] sm:$0xf]
    %v7529 = vld [vmem:[#allocation20 + $0x190] sm:$0xf]
    %v7530 = vld [vmem:[#allocation20 + $0x194] sm:$0xf]
    %v7531 = vld [vmem:[#allocation20 + $0x198] sm:$0xf]
    %v7532 = vld [vmem:[#allocation20 + $0x19c] sm:$0xf]
    %v7533 = vld [vmem:[#allocation20 + $0x1a0] sm:$0xf]
    %v7534 = vld [vmem:[#allocation20 + $0x1a4] sm:$0xf]
    %v7535 = vld [vmem:[#allocation20 + $0x1a8] sm:$0xf]
    %v7536 = vld [vmem:[#allocation20 + $0x1ac] sm:$0xf]
    %v7537 = vld [vmem:[#allocation20 + $0x1b0] sm:$0xf]
    %v7538 = vld [vmem:[#allocation20 + $0x1b4] sm:$0xf]
    %v7539 = vld [vmem:[#allocation20 + $0x1b8] sm:$0xf]
    %v7540 = vld [vmem:[#allocation20 + $0x1bc] sm:$0xf]
    %v7541 = vld [vmem:[#allocation20 + $0x1c0] sm:$0xf]
    %v7542 = vld [vmem:[#allocation20 + $0x1c4] sm:$0xf]
    %v7543 = vld [vmem:[#allocation20 + $0x1c8] sm:$0xf]
    %v7544 = vld [vmem:[#allocation20 + $0x1cc] sm:$0xf]
    %v7545 = vld [vmem:[#allocation20 + $0x1d0] sm:$0xf]
    %v7546 = vld [vmem:[#allocation20 + $0x1d4] sm:$0xf]
    %v7547 = vld [vmem:[#allocation20 + $0x1d8] sm:$0xf]
    %v7548 = vld [vmem:[#allocation20 + $0x1dc] sm:$0xf]
    %v7549 = vld [vmem:[#allocation20 + $0x1e0] sm:$0xf]
    %v7550 = vld [vmem:[#allocation20 + $0x1e4] sm:$0xf]
    %v7551 = vld [vmem:[#allocation20 + $0x1e8] sm:$0xf]
    %v7552 = vld [vmem:[#allocation20 + $0x1ec] sm:$0xf]
    %v7553 = vld [vmem:[#allocation20 + $0x1f0] sm:$0xf]
    %v7554 = vld [vmem:[#allocation20 + $0x1f4] sm:$0xf]
    %v7555 = vld [vmem:[#allocation20 + $0x1f8] sm:$0xf]
    %v7556 = vld [vmem:[#allocation20 + $0x1fc] sm:$0xf]
    %v7557 = vld [vmem:[#allocation20 + $0x200] sm:$0xf]
    %v7558 = vld [vmem:[#allocation20 + $0x204] sm:$0xf]
    %v7559 = vld [vmem:[#allocation20 + $0x208] sm:$0xf]
    %v7560 = vld [vmem:[#allocation20 + $0x20c] sm:$0xf]
    %v7561 = vld [vmem:[#allocation20 + $0x210] sm:$0xf]
    %v7562 = vld [vmem:[#allocation20 + $0x214] sm:$0xf]
    %v7563 = vld [vmem:[#allocation20 + $0x218] sm:$0xf]
    %v7564 = vld [vmem:[#allocation20 + $0x21c] sm:$0xf]
    %v7565 = vld [vmem:[#allocation20 + $0x220] sm:$0xf]
    %v7566 = vld [vmem:[#allocation20 + $0x224] sm:$0xf]
    %v7567 = vld [vmem:[#allocation20 + $0x228] sm:$0xf]
    %v7568 = vld [vmem:[#allocation20 + $0x22c] sm:$0xf]
    %v7569 = vld [vmem:[#allocation20 + $0x230] sm:$0xf]
    %v7570 = vld [vmem:[#allocation20 + $0x234] sm:$0xf]
    %v7571 = vld [vmem:[#allocation20 + $0x238] sm:$0xf]
    %v7572 = vld [vmem:[#allocation20 + $0x23c] sm:$0xf]
    %v7573 = vld [vmem:[#allocation20 + $0x240] sm:$0xf]
    %v7574 = vld [vmem:[#allocation20 + $0x244] sm:$0xf]
    %v7575 = vld [vmem:[#allocation20 + $0x248] sm:$0xf]
    %v7576 = vld [vmem:[#allocation20 + $0x24c] sm:$0xf]
    %v7577 = vld [vmem:[#allocation20 + $0x250] sm:$0xf]
    %v7578 = vld [vmem:[#allocation20 + $0x254] sm:$0xf]
    %v7579 = vld [vmem:[#allocation20 + $0x258] sm:$0xf]
    %v7580 = vld [vmem:[#allocation20 + $0x25c] sm:$0xf]
    %v7581 = vld [vmem:[#allocation20 + $0x260] sm:$0xf]
    %v7582 = vld [vmem:[#allocation20 + $0x264] sm:$0xf]
    %v7583 = vld [vmem:[#allocation20 + $0x268] sm:$0xf]
    %v7584 = vld [vmem:[#allocation20 + $0x26c] sm:$0xf]
    %v7585 = vld [vmem:[#allocation20 + $0x270] sm:$0xf]
    %v7586 = vld [vmem:[#allocation20 + $0x274] sm:$0xf]
    %v7587 = vld [vmem:[#allocation20 + $0x278] sm:$0xf]
    %v7588 = vld [vmem:[#allocation20 + $0x27c] sm:$0xf]
    %v7589 = vld [vmem:[#allocation20 + $0x280] sm:$0xf]
    %v7590 = vld [vmem:[#allocation20 + $0x284] sm:$0xf]
    %v7591 = vld [vmem:[#allocation20 + $0x288] sm:$0xf]
    %v7592 = vld [vmem:[#allocation20 + $0x28c] sm:$0xf]
    %v7593 = vld [vmem:[#allocation20 + $0x290] sm:$0xf]
    %v7594 = vld [vmem:[#allocation20 + $0x294] sm:$0xf]
    %v7595 = vld [vmem:[#allocation20 + $0x298] sm:$0xf]
    %v7596 = vld [vmem:[#allocation20 + $0x29c] sm:$0xf]
    %v7597 = vld [vmem:[#allocation20 + $0x2a0] sm:$0xf]
    %v7598 = vld [vmem:[#allocation20 + $0x2a4] sm:$0xf]
    %v7599 = vld [vmem:[#allocation20 + $0x2a8] sm:$0xf]
    %v7600 = vld [vmem:[#allocation20 + $0x2ac] sm:$0xf]
    %v7601 = vld [vmem:[#allocation20 + $0x2b0] sm:$0xf]
    %v7602 = vld [vmem:[#allocation20 + $0x2b4] sm:$0xf]
    %v7603 = vld [vmem:[#allocation20 + $0x2b8] sm:$0xf]
    %v7604 = vld [vmem:[#allocation20 + $0x2bc] sm:$0xf]
    %v7605 = vld [vmem:[#allocation20 + $0x2c0] sm:$0xf]
    %v7606 = vld [vmem:[#allocation20 + $0x2c4] sm:$0xf]
    %v7607 = vld [vmem:[#allocation20 + $0x2c8] sm:$0xf]
    %v7608 = vld [vmem:[#allocation20 + $0x2cc] sm:$0xf]
    %v7609 = vld [vmem:[#allocation20 + $0x2d0] sm:$0xf]
    %v7610 = vld [vmem:[#allocation20 + $0x2d4] sm:$0xf]
    %v7611 = vld [vmem:[#allocation20 + $0x2d8] sm:$0xf]
    %v7612 = vld [vmem:[#allocation20 + $0x2dc] sm:$0xf]
    %v7613 = vld [vmem:[#allocation20 + $0x2e0] sm:$0xf]
    %v7614 = vld [vmem:[#allocation20 + $0x2e4] sm:$0xf]
    %v7615 = vld [vmem:[#allocation20 + $0x2e8] sm:$0xf]
    %v7616 = vld [vmem:[#allocation20 + $0x2ec] sm:$0xf]
    %v7617 = vld [vmem:[#allocation20 + $0x2f0] sm:$0xf]
    %v7618 = vld [vmem:[#allocation20 + $0x2f4] sm:$0xf]
    %v7619 = vld [vmem:[#allocation20 + $0x2f8] sm:$0xf]
    %v7620 = vld [vmem:[#allocation20 + $0x2fc] sm:$0xf]
    %v7813 = vunpack.c.l.b16 %v7429
    %v7814 = vunpack.c.l.b16 %v7430
    %v7815 = vunpack.c.l.b16 %v7431
    %v7816 = vunpack.c.l.b16 %v7432
    %v7817 = vunpack.c.l.b16 %v7433
    %v7818 = vunpack.c.l.b16 %v7434
    %v7819 = vunpack.c.l.b16 %v7435
    %v7820 = vunpack.c.l.b16 %v7436
    %v7821 = vunpack.c.l.b16 %v7437
    %v7822 = vunpack.c.l.b16 %v7438
    %v7823 = vunpack.c.l.b16 %v7439
    %v7824 = vunpack.c.l.b16 %v7440
    %v7825 = vunpack.c.l.b16 %v7441
    %v7826 = vunpack.c.l.b16 %v7442
    %v7827 = vunpack.c.l.b16 %v7443
    %v7828 = vunpack.c.l.b16 %v7444
    %v7829 = vunpack.c.l.b16 %v7445
    %v7830 = vunpack.c.l.b16 %v7446
    %v7831 = vunpack.c.l.b16 %v7447
    %v7832 = vunpack.c.l.b16 %v7448
    %v7833 = vunpack.c.l.b16 %v7449
    %v7834 = vunpack.c.l.b16 %v7450
    %v7835 = vunpack.c.l.b16 %v7451
    %v7836 = vunpack.c.l.b16 %v7452
    %v7837 = vunpack.c.l.b16 %v7453
    %v7838 = vunpack.c.l.b16 %v7454
    %v7839 = vunpack.c.l.b16 %v7455
    %v7840 = vunpack.c.l.b16 %v7456
    %v7841 = vunpack.c.l.b16 %v7457
    %v7842 = vunpack.c.l.b16 %v7458
    %v7843 = vunpack.c.l.b16 %v7459
    %v7844 = vunpack.c.l.b16 %v7460
    %v7845 = vunpack.c.l.b16 %v7461
    %v7846 = vunpack.c.l.b16 %v7462
    %v7847 = vunpack.c.l.b16 %v7463
    %v7848 = vunpack.c.l.b16 %v7464
    %v7849 = vunpack.c.l.b16 %v7465
    %v7850 = vunpack.c.l.b16 %v7466
    %v7851 = vunpack.c.l.b16 %v7467
    %v7852 = vunpack.c.l.b16 %v7468
    %v7853 = vunpack.c.l.b16 %v7469
    %v7854 = vunpack.c.l.b16 %v7470
    %v7855 = vunpack.c.l.b16 %v7471
    %v7856 = vunpack.c.l.b16 %v7472
    %v7857 = vunpack.c.l.b16 %v7473
    %v7858 = vunpack.c.l.b16 %v7474
    %v7859 = vunpack.c.l.b16 %v7475
    %v7860 = vunpack.c.l.b16 %v7476
    %v7861 = vunpack.c.l.b16 %v7477
    %v7862 = vunpack.c.l.b16 %v7478
    %v7863 = vunpack.c.l.b16 %v7479
    %v7864 = vunpack.c.l.b16 %v7480
    %v7865 = vunpack.c.l.b16 %v7481
    %v7866 = vunpack.c.l.b16 %v7482
    %v7867 = vunpack.c.l.b16 %v7483
    %v7868 = vunpack.c.l.b16 %v7484
    %v7869 = vunpack.c.l.b16 %v7485
    %v7870 = vunpack.c.l.b16 %v7486
    %v7871 = vunpack.c.l.b16 %v7487
    %v7872 = vunpack.c.l.b16 %v7488
    %v7873 = vunpack.c.l.b16 %v7489
    %v7874 = vunpack.c.l.b16 %v7490
    %v7875 = vunpack.c.l.b16 %v7491
    %v7876 = vunpack.c.l.b16 %v7492
    %v7877 = vunpack.c.l.b16 %v7493
    %v7878 = vunpack.c.l.b16 %v7494
    %v7879 = vunpack.c.l.b16 %v7495
    %v7880 = vunpack.c.l.b16 %v7496
    %v7881 = vunpack.c.l.b16 %v7497
    %v7882 = vunpack.c.l.b16 %v7498
    %v7883 = vunpack.c.l.b16 %v7499
    %v7884 = vunpack.c.l.b16 %v7500
    %v7885 = vunpack.c.l.b16 %v7501
    %v7886 = vunpack.c.l.b16 %v7502
    %v7887 = vunpack.c.l.b16 %v7503
    %v7888 = vunpack.c.l.b16 %v7504
    %v7889 = vunpack.c.l.b16 %v7505
    %v7890 = vunpack.c.l.b16 %v7506
    %v7891 = vunpack.c.l.b16 %v7507
    %v7892 = vunpack.c.l.b16 %v7508
    %v7893 = vunpack.c.l.b16 %v7509
    %v7894 = vunpack.c.l.b16 %v7510
    %v7895 = vunpack.c.l.b16 %v7511
    %v7896 = vunpack.c.l.b16 %v7512
    %v7897 = vunpack.c.l.b16 %v7513
    %v7898 = vunpack.c.l.b16 %v7514
    %v7899 = vunpack.c.l.b16 %v7515
    %v7900 = vunpack.c.l.b16 %v7516
    %v7901 = vunpack.c.l.b16 %v7517
    %v7902 = vunpack.c.l.b16 %v7518
    %v7903 = vunpack.c.l.b16 %v7519
    %v7904 = vunpack.c.l.b16 %v7520
    %v7905 = vunpack.c.l.b16 %v7521
    %v7906 = vunpack.c.l.b16 %v7522
    %v7907 = vunpack.c.l.b16 %v7523
    %v7908 = vunpack.c.l.b16 %v7524
    %v7909 = vunpack.c.l.b16 %v7525
    %v7910 = vunpack.c.l.b16 %v7526
    %v7911 = vunpack.c.l.b16 %v7527
    %v7912 = vunpack.c.l.b16 %v7528
    %v7913 = vunpack.c.l.b16 %v7529
    %v7914 = vunpack.c.l.b16 %v7530
    %v7915 = vunpack.c.l.b16 %v7531
    %v7916 = vunpack.c.l.b16 %v7532
    %v7917 = vunpack.c.l.b16 %v7533
    %v7918 = vunpack.c.l.b16 %v7534
    %v7919 = vunpack.c.l.b16 %v7535
    %v7920 = vunpack.c.l.b16 %v7536
    %v7921 = vunpack.c.l.b16 %v7537
    %v7922 = vunpack.c.l.b16 %v7538
    %v7923 = vunpack.c.l.b16 %v7539
    %v7924 = vunpack.c.l.b16 %v7540
    %v7925 = vunpack.c.l.b16 %v7541
    %v7926 = vunpack.c.l.b16 %v7542
    %v7927 = vunpack.c.l.b16 %v7543
    %v7928 = vunpack.c.l.b16 %v7544
    %v7929 = vunpack.c.l.b16 %v7545
    %v7930 = vunpack.c.l.b16 %v7546
    %v7931 = vunpack.c.l.b16 %v7547
    %v7932 = vunpack.c.l.b16 %v7548
    %v7933 = vunpack.c.l.b16 %v7549
    %v7934 = vunpack.c.l.b16 %v7550
    %v7935 = vunpack.c.l.b16 %v7551
    %v7936 = vunpack.c.l.b16 %v7552
    %v7937 = vunpack.c.l.b16 %v7553
    %v7938 = vunpack.c.l.b16 %v7554
    %v7939 = vunpack.c.l.b16 %v7555
    %v7940 = vunpack.c.l.b16 %v7556
    %v7941 = vunpack.c.l.b16 %v7557
    %v7942 = vunpack.c.l.b16 %v7558
    %v7943 = vunpack.c.l.b16 %v7559
    %v7944 = vunpack.c.l.b16 %v7560
    %v7945 = vunpack.c.l.b16 %v7561
    %v7946 = vunpack.c.l.b16 %v7562
    %v7947 = vunpack.c.l.b16 %v7563
    %v7948 = vunpack.c.l.b16 %v7564
    %v7949 = vunpack.c.l.b16 %v7565
    %v7950 = vunpack.c.l.b16 %v7566
    %v7951 = vunpack.c.l.b16 %v7567
    %v7952 = vunpack.c.l.b16 %v7568
    %v7953 = vunpack.c.l.b16 %v7569
    %v7954 = vunpack.c.l.b16 %v7570
    %v7955 = vunpack.c.l.b16 %v7571
    %v7956 = vunpack.c.l.b16 %v7572
    %v7957 = vunpack.c.l.b16 %v7573
    %v7958 = vunpack.c.l.b16 %v7574
    %v7959 = vunpack.c.l.b16 %v7575
    %v7960 = vunpack.c.l.b16 %v7576
    %v7961 = vunpack.c.l.b16 %v7577
    %v7962 = vunpack.c.l.b16 %v7578
    %v7963 = vunpack.c.l.b16 %v7579
    %v7964 = vunpack.c.l.b16 %v7580
    %v7965 = vunpack.c.l.b16 %v7581
    %v7966 = vunpack.c.l.b16 %v7582
    %v7967 = vunpack.c.l.b16 %v7583
    %v7968 = vunpack.c.l.b16 %v7584
    %v7969 = vunpack.c.l.b16 %v7585
    %v7970 = vunpack.c.l.b16 %v7586
    %v7971 = vunpack.c.l.b16 %v7587
    %v7972 = vunpack.c.l.b16 %v7588
    %v7973 = vunpack.c.l.b16 %v7589
    %v7974 = vunpack.c.l.b16 %v7590
    %v7975 = vunpack.c.l.b16 %v7591
    %v7976 = vunpack.c.l.b16 %v7592
    %v7977 = vunpack.c.l.b16 %v7593
    %v7978 = vunpack.c.l.b16 %v7594
    %v7979 = vunpack.c.l.b16 %v7595
    %v7980 = vunpack.c.l.b16 %v7596
    %v7981 = vunpack.c.l.b16 %v7597
    %v7982 = vunpack.c.l.b16 %v7598
    %v7983 = vunpack.c.l.b16 %v7599
    %v7984 = vunpack.c.l.b16 %v7600
    %v7985 = vunpack.c.l.b16 %v7601
    %v7986 = vunpack.c.l.b16 %v7602
    %v7987 = vunpack.c.l.b16 %v7603
    %v7988 = vunpack.c.l.b16 %v7604
    %v7989 = vunpack.c.l.b16 %v7605
    %v7990 = vunpack.c.l.b16 %v7606
    %v7991 = vunpack.c.l.b16 %v7607
    %v7992 = vunpack.c.l.b16 %v7608
    %v7993 = vunpack.c.l.b16 %v7609
    %v7994 = vunpack.c.l.b16 %v7610
    %v7995 = vunpack.c.l.b16 %v7611
    %v7996 = vunpack.c.l.b16 %v7612
    %v7997 = vunpack.c.l.b16 %v7613
    %v7998 = vunpack.c.l.b16 %v7614
    %v7999 = vunpack.c.l.b16 %v7615
    %v8000 = vunpack.c.l.b16 %v7616
    %v8001 = vunpack.c.l.b16 %v7617
    %v8002 = vunpack.c.l.b16 %v7618
    %v8003 = vunpack.c.l.b16 %v7619
    %v8004 = vunpack.c.l.b16 %v7620
    %v8005 = vpack.c.b16 %v7814, %v7813
    %v8006 = vpack.c.b16 %v7816, %v7815
    %v8007 = vpack.c.b16 %v7818, %v7817
    %v8008 = vpack.c.b16 %v7820, %v7819
    %v8009 = vpack.c.b16 %v7822, %v7821
    %v8010 = vpack.c.b16 %v7824, %v7823
    %v8011 = vpack.c.b16 %v7826, %v7825
    %v8012 = vpack.c.b16 %v7828, %v7827
    %v8013 = vpack.c.b16 %v7830, %v7829
    %v8014 = vpack.c.b16 %v7832, %v7831
    %v8015 = vpack.c.b16 %v7834, %v7833
    %v8016 = vpack.c.b16 %v7836, %v7835
    %v8017 = vpack.c.b16 %v7838, %v7837
    %v8018 = vpack.c.b16 %v7840, %v7839
    %v8019 = vpack.c.b16 %v7842, %v7841
    %v8020 = vpack.c.b16 %v7844, %v7843
    %v8021 = vpack.c.b16 %v7846, %v7845
    %v8022 = vpack.c.b16 %v7848, %v7847
    %v8023 = vpack.c.b16 %v7850, %v7849
    %v8024 = vpack.c.b16 %v7852, %v7851
    %v8025 = vpack.c.b16 %v7854, %v7853
    %v8026 = vpack.c.b16 %v7856, %v7855
    %v8027 = vpack.c.b16 %v7858, %v7857
    %v8028 = vpack.c.b16 %v7860, %v7859
    %v8029 = vpack.c.b16 %v7862, %v7861
    %v8030 = vpack.c.b16 %v7864, %v7863
    %v8031 = vpack.c.b16 %v7866, %v7865
    %v8032 = vpack.c.b16 %v7868, %v7867
    %v8033 = vpack.c.b16 %v7870, %v7869
    %v8034 = vpack.c.b16 %v7872, %v7871
    %v8035 = vpack.c.b16 %v7874, %v7873
    %v8036 = vpack.c.b16 %v7876, %v7875
    %v8037 = vpack.c.b16 %v7878, %v7877
    %v8038 = vpack.c.b16 %v7880, %v7879
    %v8039 = vpack.c.b16 %v7882, %v7881
    %v8040 = vpack.c.b16 %v7884, %v7883
    %v8041 = vpack.c.b16 %v7886, %v7885
    %v8042 = vpack.c.b16 %v7888, %v7887
    %v8043 = vpack.c.b16 %v7890, %v7889
    %v8044 = vpack.c.b16 %v7892, %v7891
    %v8045 = vpack.c.b16 %v7894, %v7893
    %v8046 = vpack.c.b16 %v7896, %v7895
    %v8047 = vpack.c.b16 %v7898, %v7897
    %v8048 = vpack.c.b16 %v7900, %v7899
    %v8049 = vpack.c.b16 %v7902, %v7901
    %v8050 = vpack.c.b16 %v7904, %v7903
    %v8051 = vpack.c.b16 %v7906, %v7905
    %v8052 = vpack.c.b16 %v7908, %v7907
    %v8053 = vpack.c.b16 %v7910, %v7909
    %v8054 = vpack.c.b16 %v7912, %v7911
    %v8055 = vpack.c.b16 %v7914, %v7913
    %v8056 = vpack.c.b16 %v7916, %v7915
    %v8057 = vpack.c.b16 %v7918, %v7917
    %v8058 = vpack.c.b16 %v7920, %v7919
    %v8059 = vpack.c.b16 %v7922, %v7921
    %v8060 = vpack.c.b16 %v7924, %v7923
    %v8061 = vpack.c.b16 %v7926, %v7925
    %v8062 = vpack.c.b16 %v7928, %v7927
    %v8063 = vpack.c.b16 %v7930, %v7929
    %v8064 = vpack.c.b16 %v7932, %v7931
    %v8065 = vpack.c.b16 %v7934, %v7933
    %v8066 = vpack.c.b16 %v7936, %v7935
    %v8067 = vpack.c.b16 %v7938, %v7937
    %v8068 = vpack.c.b16 %v7940, %v7939
    %v8069 = vpack.c.b16 %v7942, %v7941
    %v8070 = vpack.c.b16 %v7944, %v7943
    %v8071 = vpack.c.b16 %v7946, %v7945
    %v8072 = vpack.c.b16 %v7948, %v7947
    %v8073 = vpack.c.b16 %v7950, %v7949
    %v8074 = vpack.c.b16 %v7952, %v7951
    %v8075 = vpack.c.b16 %v7954, %v7953
    %v8076 = vpack.c.b16 %v7956, %v7955
    %v8077 = vpack.c.b16 %v7958, %v7957
    %v8078 = vpack.c.b16 %v7960, %v7959
    %v8079 = vpack.c.b16 %v7962, %v7961
    %v8080 = vpack.c.b16 %v7964, %v7963
    %v8081 = vpack.c.b16 %v7966, %v7965
    %v8082 = vpack.c.b16 %v7968, %v7967
    %v8083 = vpack.c.b16 %v7970, %v7969
    %v8084 = vpack.c.b16 %v7972, %v7971
    %v8085 = vpack.c.b16 %v7974, %v7973
    %v8086 = vpack.c.b16 %v7976, %v7975
    %v8087 = vpack.c.b16 %v7978, %v7977
    %v8088 = vpack.c.b16 %v7980, %v7979
    %v8089 = vpack.c.b16 %v7982, %v7981
    %v8090 = vpack.c.b16 %v7984, %v7983
    %v8091 = vpack.c.b16 %v7986, %v7985
    %v8092 = vpack.c.b16 %v7988, %v7987
    %v8093 = vpack.c.b16 %v7990, %v7989
    %v8094 = vpack.c.b16 %v7992, %v7991
    %v8095 = vpack.c.b16 %v7994, %v7993
    %v8096 = vpack.c.b16 %v7996, %v7995
    %v8097 = vpack.c.b16 %v7998, %v7997
    %v8098 = vpack.c.b16 %v8000, %v7999
    %v8099 = vpack.c.b16 %v8002, %v8001
    %v8100 = vpack.c.b16 %v8004, %v8003
    %8197 = vmatpush.bf16.msra.mxu0 %v8012
    %8198 = vmatpush.bf16.msra.mxu0 %v8011
    %8199 = vmatpush.bf16.msra.mxu0 %v8010
    %8200 = vmatpush.bf16.msra.mxu0 %v8009
    %8201 = vmatpush.bf16.msra.mxu0 %v8008
    %8202 = vmatpush.bf16.msra.mxu0 %v8007
    %8203 = vmatpush.bf16.msra.mxu0 %v8006
    %8204 = vmatpush.bf16.msra.mxu0 %v8005
    %8205 = vmatmul.bf16.gmra.mxu0 %v7417
    %v8206 = vpop.f32.mrf.mxu0
    %v8207 = vadd.f32 0.0, %v8206
    %v8208 = vpop.f32.mrf.mxu0
    %8209 = vdwg.mxu0
    %8210 = vmatpush.bf16.msra.mxu0 %v8020
    %8211 = vmatpush.bf16.msra.mxu0 %v8019
    %8212 = vmatpush.bf16.msra.mxu0 %v8018
    %8213 = vmatpush.bf16.msra.mxu0 %v8017
    %8214 = vmatpush.bf16.msra.mxu0 %v8016
    %8215 = vmatpush.bf16.msra.mxu0 %v8015
    %8216 = vmatpush.bf16.msra.mxu0 %v8014
    %8217 = vmatpush.bf16.msra.mxu0 %v8013
    %8218 = vmatmul.bf16.gmra.mxu0 %v7418
    %v8219 = vpop.f32.mrf.mxu0
    %v8220 = vadd.f32 %v8207, %v8219
    %v8221 = vpop.f32.mrf.mxu0
    %8222 = vdwg.mxu0
    %8223 = vmatpush.bf16.msra.mxu0 %v8028
    %8224 = vmatpush.bf16.msra.mxu0 %v8027
    %8225 = vmatpush.bf16.msra.mxu0 %v8026
    %8226 = vmatpush.bf16.msra.mxu0 %v8025
    %8227 = vmatpush.bf16.msra.mxu0 %v8024
    %8228 = vmatpush.bf16.msra.mxu0 %v8023
    %8229 = vmatpush.bf16.msra.mxu0 %v8022
    %8230 = vmatpush.bf16.msra.mxu0 %v8021
    %8231 = vmatmul.bf16.gmra.mxu0 %v7419
    %v8232 = vpop.f32.mrf.mxu0
    %v8233 = vadd.f32 %v8220, %v8232
    %v8234 = vpop.f32.mrf.mxu0
    %8235 = vdwg.mxu0
    %8236 = vmatpush.bf16.msra.mxu0 %v8036
    %8237 = vmatpush.bf16.msra.mxu0 %v8035
    %8238 = vmatpush.bf16.msra.mxu0 %v8034
    %8239 = vmatpush.bf16.msra.mxu0 %v8033
    %8240 = vmatpush.bf16.msra.mxu0 %v8032
    %8241 = vmatpush.bf16.msra.mxu0 %v8031
    %8242 = vmatpush.bf16.msra.mxu0 %v8030
    %8243 = vmatpush.bf16.msra.mxu0 %v8029
    %8244 = vmatmul.bf16.gmra.mxu0 %v7420
    %v8245 = vpop.f32.mrf.mxu0
    %v8246 = vadd.f32 %v8233, %v8245
    %v8247 = vpop.f32.mrf.mxu0
    %8248 = vdwg.mxu0
    %8249 = vmatpush.bf16.msra.mxu0 %v8044
    %8250 = vmatpush.bf16.msra.mxu0 %v8043
    %8251 = vmatpush.bf16.msra.mxu0 %v8042
    %8252 = vmatpush.bf16.msra.mxu0 %v8041
    %8253 = vmatpush.bf16.msra.mxu0 %v8040
    %8254 = vmatpush.bf16.msra.mxu0 %v8039
    %8255 = vmatpush.bf16.msra.mxu0 %v8038
    %8256 = vmatpush.bf16.msra.mxu0 %v8037
    %8257 = vmatmul.bf16.gmra.mxu0 %v7421
    %v8258 = vpop.f32.mrf.mxu0
    %v8259 = vadd.f32 %v8246, %v8258
    %v8260 = vpop.f32.mrf.mxu0
    %8261 = vdwg.mxu0
    %8262 = vmatpush.bf16.msra.mxu0 %v8052
    %8263 = vmatpush.bf16.msra.mxu0 %v8051
    %8264 = vmatpush.bf16.msra.mxu0 %v8050
    %8265 = vmatpush.bf16.msra.mxu0 %v8049
    %8266 = vmatpush.bf16.msra.mxu0 %v8048
    %8267 = vmatpush.bf16.msra.mxu0 %v8047
    %8268 = vmatpush.bf16.msra.mxu0 %v8046
    %8269 = vmatpush.bf16.msra.mxu0 %v8045
    %8270 = vmatmul.bf16.gmra.mxu0 %v7422
    %v8271 = vpop.f32.mrf.mxu0
    %v8272 = vadd.f32 %v8259, %v8271
    %v8273 = vpop.f32.mrf.mxu0
    %8274 = vdwg.mxu0
    %8275 = vmatpush.bf16.msra.mxu0 %v8060
    %8276 = vmatpush.bf16.msra.mxu0 %v8059
    %8277 = vmatpush.bf16.msra.mxu0 %v8058
    %8278 = vmatpush.bf16.msra.mxu0 %v8057
    %8279 = vmatpush.bf16.msra.mxu0 %v8056
    %8280 = vmatpush.bf16.msra.mxu0 %v8055
    %8281 = vmatpush.bf16.msra.mxu0 %v8054
    %8282 = vmatpush.bf16.msra.mxu0 %v8053
    %8283 = vmatmul.bf16.gmra.mxu0 %v7423
    %v8284 = vpop.f32.mrf.mxu0
    %v8285 = vadd.f32 %v8272, %v8284
    %v8286 = vpop.f32.mrf.mxu0
    %8287 = vdwg.mxu0
    %8288 = vmatpush.bf16.msra.mxu0 %v8068
    %8289 = vmatpush.bf16.msra.mxu0 %v8067
    %8290 = vmatpush.bf16.msra.mxu0 %v8066
    %8291 = vmatpush.bf16.msra.mxu0 %v8065
    %8292 = vmatpush.bf16.msra.mxu0 %v8064
    %8293 = vmatpush.bf16.msra.mxu0 %v8063
    %8294 = vmatpush.bf16.msra.mxu0 %v8062
    %8295 = vmatpush.bf16.msra.mxu0 %v8061
    %8296 = vmatmul.bf16.gmra.mxu0 %v7424
    %v8297 = vpop.f32.mrf.mxu0
    %v8298 = vadd.f32 %v8285, %v8297
    %v8299 = vpop.f32.mrf.mxu0
    %8300 = vdwg.mxu0
    %8301 = vmatpush.bf16.msra.mxu0 %v8076
    %8302 = vmatpush.bf16.msra.mxu0 %v8075
    %8303 = vmatpush.bf16.msra.mxu0 %v8074
    %8304 = vmatpush.bf16.msra.mxu0 %v8073
    %8305 = vmatpush.bf16.msra.mxu0 %v8072
    %8306 = vmatpush.bf16.msra.mxu0 %v8071
    %8307 = vmatpush.bf16.msra.mxu0 %v8070
    %8308 = vmatpush.bf16.msra.mxu0 %v8069
    %8309 = vmatmul.bf16.gmra.mxu0 %v7425
    %v8310 = vpop.f32.mrf.mxu0
    %v8311 = vadd.f32 %v8298, %v8310
    %v8312 = vpop.f32.mrf.mxu0
    %8313 = vdwg.mxu0
    %8314 = vmatpush.bf16.msra.mxu0 %v8084
    %8315 = vmatpush.bf16.msra.mxu0 %v8083
    %8316 = vmatpush.bf16.msra.mxu0 %v8082
    %8317 = vmatpush.bf16.msra.mxu0 %v8081
    %8318 = vmatpush.bf16.msra.mxu0 %v8080
    %8319 = vmatpush.bf16.msra.mxu0 %v8079
    %8320 = vmatpush.bf16.msra.mxu0 %v8078
    %8321 = vmatpush.bf16.msra.mxu0 %v8077
    %8322 = vmatmul.bf16.gmra.mxu0 %v7426
    %v8323 = vpop.f32.mrf.mxu0
    %v8324 = vadd.f32 %v8311, %v8323
    %v8325 = vpop.f32.mrf.mxu0
    %8326 = vdwg.mxu0
    %8327 = vmatpush.bf16.msra.mxu0 %v8092
    %8328 = vmatpush.bf16.msra.mxu0 %v8091
    %8329 = vmatpush.bf16.msra.mxu0 %v8090
    %8330 = vmatpush.bf16.msra.mxu0 %v8089
    %8331 = vmatpush.bf16.msra.mxu0 %v8088
    %8332 = vmatpush.bf16.msra.mxu0 %v8087
    %8333 = vmatpush.bf16.msra.mxu0 %v8086
    %8334 = vmatpush.bf16.msra.mxu0 %v8085
    %8335 = vmatmul.bf16.gmra.mxu0 %v7427
    %v8336 = vpop.f32.mrf.mxu0
    %v8337 = vadd.f32 %v8324, %v8336
    %v8338 = vpop.f32.mrf.mxu0
    %8339 = vdwg.mxu0
    %8340 = vmatpush.bf16.msra.mxu0 %v8100
    %8341 = vmatpush.bf16.msra.mxu0 %v8099
    %8342 = vmatpush.bf16.msra.mxu0 %v8098
    %8343 = vmatpush.bf16.msra.mxu0 %v8097
    %8344 = vmatpush.bf16.msra.mxu0 %v8096
    %8345 = vmatpush.bf16.msra.mxu0 %v8095
    %8346 = vmatpush.bf16.msra.mxu0 %v8094
    %8347 = vmatpush.bf16.msra.mxu0 %v8093
    %8348 = vmatmul.bf16.gmra.mxu0 %v7428
    %v8349 = vpop.f32.mrf.mxu0
    %v8350 = vadd.f32 %v8337, %v8349
    %v8351 = vpop.f32.mrf.mxu0
    %8352 = vdwg.mxu0
    %v8353 = vadd.f32 %v7146, %v8350
    %v8354 = vld [vmem:[%s13] sm:$0x1]
    %v8356 = vperm.slane %v8354, 0
    %v8358 = vadd.f32 %v8353, %v8356
    %8359 = vst [vmem:[#allocation22] sm:$0x3] %v8358
    // Predicated region
    $region106: #{tpu_custom_call.1} parent=1 // pred_check
      _
    $region107: #{tpu_custom_call.1} parent=1 // pred_check_branch
      %8361 = sbr.rel (0) target = $region109
    $region108: #{tpu_custom_call.1} parent=1 // pred_region
      %8363 = vsyncadd [#allocation4], 0
      %s8365 = sshll.u32 [#allocation22], 4
      %s8366 = int_to_ptr.vmem [resolvable:$true] %s8365
      %s8367 = sshll.u32 %s14, 4
      %s8368 = int_to_ptr.hbm [resolvable:$true] %s8367
      %8370 = dma.vmem_to_hbm [thread:$0]  %s8366, 32, %s8368, [#allocation4]
    $region109: #{tpu_custom_call.1} parent=1 // pred_fallthru
      _
    // Predicated region
    $region110: #{tpu_custom_call.1} parent=1 // pred_check
      _
    $region111: #{tpu_custom_call.1} parent=1 // pred_check_branch
      %8372 = sbr.rel (0) target = $region113
    $region112: #{tpu_custom_call.1} parent=1 // pred_region
      %8374 = dma.done [#allocation4], 32
    $region113: #{tpu_custom_call.1} parent=1 // pred_fallthru
      _
    %8375 = vsyncpa [#allocation3], 1
    %8376 = vsyncpa [#allocation6], 1
    %8377 = vsyncpa [#allocation9], 1
    %8378 = vsyncpa [#allocation12], 1
    %8379 = vsyncpa [#allocation15], 1
    %8380 = vsyncpa [#allocation18], 1
    %8381 = vsyncpa [#allocation21], 1
    %8382 = vsyncpa [#allocation4], 1

</llo_original>
